<compile_context>
chip_gen: v5e
topology: v5e:2x2
jax: 0.10.0
libtpu: 0.0.40
codegen_flags: <defaults>
</compile_context>

<pallas_src>
import functools

import jax
import jax.numpy as jnp
from jax.experimental import pallas as pl
from jax.experimental.pallas import tpu as pltpu

# ----------------------------- config (small synthetic BERT) ----------------
VOCAB = 100
TYPE_VOCAB = 2
MAX_POS = 64
H = 32            # hidden size
N_HEADS = 4
D_HEAD = H // N_HEADS
FFN = 64          # intermediate size
N_LAYERS = 6
MAX_CLS_DEPTH = 6
SENT_VEC = 16     # sentence_vector_size (shape of output_linear.bias)
LN_EPS = 1e-12

# TODO(synk): tokenizer / HF checkpoint loading (AutoModel, output_linear.bin)
# has no Pallas equivalent; weights are synthesized deterministically below.


# ----------------------------- fused encoder kernel -------------------------
def _encoder_kernel(emb_ref, mask_ref, hmask_ref, eg_ref, eb_ref,
                    wq_ref, bq_ref, wk_ref, bk_ref, wv_ref, bv_ref,
                    wo_ref, bo_ref, g1_ref, b1_ref,
                    wi_ref, bi_ref, wd_ref, bd_ref, g2_ref, b2_ref,
                    ow_ref, ob_ref,
                    logits_ref, hid_ref, *, B, S):
    M = B * S
    scale = 1.0 / (D_HEAD ** 0.5)

    def ln(x, g, b):
        # Independent lane reductions (E[x] and E[x^2] do not serialize).
        mu = jnp.mean(x, axis=-1, keepdims=True)
        var = jnp.mean(x * x, axis=-1, keepdims=True) - mu * mu
        return (x - mu) * jax.lax.rsqrt(var + LN_EPS) * g + b

    # Hoisted broadcasts (JAX does not CSE broadcast_in_dim inside the loop).
    mask_full = jnp.broadcast_to(mask_ref[...][:, None, :], (B, S, S))
    hmasks = [jnp.broadcast_to(hmask_ref[h], (B, S, H)) for h in range(N_HEADS)]

    # Embedding LayerNorm (hidden_states[0]); no zeros-residual stream.
    x0 = ln(emb_ref[...], eg_ref[...], eb_ref[...])
    hid_ref[0] = x0

    x = x0
    logits = jnp.zeros((B, SENT_VEC), jnp.float32)

    for l in range(N_LAYERS):                     # fully unrolled at trace time
        # ---- self-attention: three full-width projections (no lane slicing) ----
        q = jnp.dot(x, wq_ref[l], preferred_element_type=jnp.float32) + bq_ref[l]
        k = jnp.dot(x, wk_ref[l], preferred_element_type=jnp.float32) + bk_ref[l]
        v = jnp.dot(x, wv_ref[l], preferred_element_type=jnp.float32) + bv_ref[l]
        q3 = q.reshape(B, S, H)
        k3 = k.reshape(B, S, H)
        v3 = v.reshape(B, S, H)

        ctx = None
        for h in range(N_HEADS):                  # no slices / concats / transposes
            # Head restriction via a {0,1} lane mask: the full-32-lane
            # contraction of (q, k*mask_h) equals the per-head 8-lane one.
            s = jnp.einsum("bqd,bkd->bqk", q3, k3 * hmasks[h],
                           preferred_element_type=jnp.float32) * scale
            s = s + mask_full
            # No max-subtraction: scores are small and the pad mask is a
            # finite -1e4, so exp underflows cleanly to 0 (review note).
            p = jnp.exp(s)
            p = p * pl.reciprocal(jnp.sum(p, axis=-1, keepdims=True),
                                  approx=True)
            c = jnp.einsum("bqk,bkd->bqd", p, v3,
                           preferred_element_type=jnp.float32)
            # Keep only head h's lanes; summing the masked contexts rebuilds
            # the concatenated multi-head context without any lane concat.
            c = c * hmasks[h]
            ctx = c if ctx is None else ctx + c

        attn = jnp.dot(ctx.reshape(M, H), wo_ref[l],
                       preferred_element_type=jnp.float32) + bo_ref[l]
        x1 = ln(attn + x, g1_ref[l], b1_ref[l])

        # ---- feed-forward ----
        ff = jnp.dot(x1, wi_ref[l], preferred_element_type=jnp.float32) + bi_ref[l]
        # TODO(synk): HF BERT default activation is erf-GELU; tanh approximation
        # is used here (EUP-friendly, guaranteed Mosaic lowering).
        ff = jax.nn.gelu(ff, approximate=True)
        ff = jnp.dot(ff, wd_ref[l], preferred_element_type=jnp.float32) + bd_ref[l]
        x2 = ln(ff + x1, g2_ref[l], b2_ref[l])

        hid_ref[l + 1] = x2                       # static store index

        # ---- output linear folded into the loop (CLS of last 6 states) ----
        # output_vector chunk c multiplies hidden_states[-(c+1)] (index
        # N_LAYERS - c); this layer produced hidden index l + 1.
        c_idx = N_LAYERS - (l + 1)
        if 0 <= c_idx < MAX_CLS_DEPTH:
            cls = x2.reshape(B, S, H)[:, 0, :]    # [B, H] CLS rows, still live
            logits = logits + jnp.dot(cls, ow_ref[c_idx],
                                      preferred_element_type=jnp.float32)
        x = x2

    logits_ref[...] = (logits + ob_ref[...]).astype(logits_ref.dtype)


def _full_spec(shape):
    nd = len(shape)
    return pl.BlockSpec(shape, lambda i, _nd=nd: (0,) * _nd)


# ----------------------------- parameters -----------------------------------
def init_params(key):
    keys = iter(jax.random.split(key, 32))

    def w(shape, scale=0.02):
        return (scale * jax.random.normal(next(keys), shape)).astype(jnp.float32)

    L = N_LAYERS
    return {
        "word_emb": w((VOCAB, H)),
        "pos_emb": w((MAX_POS, H)),
        "type_emb": w((TYPE_VOCAB, H)),
        "emb_ln_g": jnp.ones((1, H), jnp.float32),
        "emb_ln_b": jnp.zeros((1, H), jnp.float32),
        # Per-layer weights stacked on a leading L axis (static in-kernel index).
        # Q/K/V kept as separate full-width projections (no in-kernel lane split).
        "wq": w((L, H, H)), "bq": w((L, 1, H)),
        "wk": w((L, H, H)), "bk": w((L, 1, H)),
        "wv": w((L, H, H)), "bv": w((L, 1, H)),
        "wo": w((L, H, H)), "bo": w((L, 1, H)),
        "ln1_g": jnp.ones((L, 1, H), jnp.float32),
        "ln1_b": jnp.zeros((L, 1, H), jnp.float32),
        "wi": w((L, H, FFN)), "bi": w((L, 1, FFN)),
        "wd": w((L, FFN, H)), "bd": w((L, 1, H)),
        "ln2_g": jnp.ones((L, 1, H), jnp.float32),
        "ln2_b": jnp.zeros((L, 1, H), jnp.float32),
        # nn.Linear(6*H, SENT_VEC): stored pre-transposed and pre-chunked as
        # [MAX_CLS_DEPTH, H, SENT_VEC]; chunk c multiplies hidden_states[-(c+1)].
        "out_w": w((MAX_CLS_DEPTH, H, SENT_VEC)),
        "out_b": w((1, SENT_VEC)),
    }


# ----------------------------- forward pass ----------------------------------
def clip_text_forward(params, input_ids, attention_mask, token_type_ids):
    B, S = input_ids.shape
    M = B * S

    # Embedding gathers stay in XLA (glue); everything after is one kernel.
    word = jnp.take(params["word_emb"], input_ids, axis=0)          # [B,S,H]
    pos = params["pos_emb"][:S][None, :, :]                         # [1,S,H]
    typ = jnp.take(params["type_emb"], token_type_ids, axis=0)      # [B,S,H]
    emb = (word + pos + typ).reshape(M, H)

    # Additive attention mask (BERT convention).
    add_mask = (1.0 - attention_mask.astype(jnp.float32)) * -10000.0  # [B,S]

    # {0,1} lane masks selecting each head's D_HEAD lanes (constant; XLA folds).
    head_mask = (jnp.arange(H)[None, :] // D_HEAD ==
                 jnp.arange(N_HEADS)[:, None]).astype(jnp.float32)
    head_mask = head_mask.reshape(N_HEADS, 1, 1, H)

    arrays = (emb, add_mask, head_mask,
              params["emb_ln_g"], params["emb_ln_b"],
              params["wq"], params["bq"], params["wk"], params["bk"],
              params["wv"], params["bv"], params["wo"], params["bo"],
              params["ln1_g"], params["ln1_b"],
              params["wi"], params["bi"], params["wd"], params["bd"],
              params["ln2_g"], params["ln2_b"],
              params["out_w"], params["out_b"])

    logits, hid = pl.pallas_call(
        functools.partial(_encoder_kernel, B=B, S=S),
        out_shape=(jax.ShapeDtypeStruct((B, SENT_VEC), jnp.float32),
                   jax.ShapeDtypeStruct((N_LAYERS + 1, M, H), jnp.float32)),
        grid=(1,),
        in_specs=[_full_spec(a.shape) for a in arrays],
        out_specs=(_full_spec((B, SENT_VEC)),
                   _full_spec((N_LAYERS + 1, M, H))),
        compiler_params=pltpu.CompilerParams(
            dimension_semantics=("arbitrary",)),
    )(*arrays)

    hid = hid.reshape(N_LAYERS + 1, B, S, H)
    hidden_states = tuple(hid[i] for i in range(N_LAYERS + 1))

    # Mirrors `(logits,) + output_states[2:]` -> (logits, hidden_states)
    return logits, hidden_states


# ----------------------------- main ------------------------------------------
if __name__ == "__main__":
    key = jax.random.PRNGKey(0)
    pkey, ikey = jax.random.split(key)
    params = init_params(pkey)

    B, S = 2, 8
    input_ids = jax.random.randint(ikey, (B, S), 0, VOCAB, dtype=jnp.int32)
    attention_mask = jnp.array([[1] * S, [1] * (S - 2) + [0] * 2],
                               dtype=jnp.int32)
    token_type_ids = jnp.zeros((B, S), dtype=jnp.int32)

    fwd = jax.jit(clip_text_forward)
    logits, hidden = fwd(params, input_ids, attention_mask, token_type_ids)
    jax.block_until_ready(logits)

    assert logits.shape == (B, SENT_VEC)
    assert len(hidden) == N_LAYERS + 1
    assert all(h.shape == (B, S, H) for h in hidden)
    print("KERNEL_OK")
</pallas_src>

<mosaic_0001>
module attributes {stable_mosaic.version = 11 : i64} {
  func.func @_encoder_kernel(%arg0: i32, %arg1: memref<16x32xf32, #tpu.memory_space<vmem>>, %arg2: memref<2x8xf32, #tpu.memory_space<vmem>>, %arg3: memref<4x1x1x32xf32, #tpu.memory_space<vmem>>, %arg4: memref<1x32xf32, #tpu.memory_space<vmem>>, %arg5: memref<1x32xf32, #tpu.memory_space<vmem>>, %arg6: memref<6x32x32xf32, #tpu.memory_space<vmem>>, %arg7: memref<6x1x32xf32, #tpu.memory_space<vmem>>, %arg8: memref<6x32x32xf32, #tpu.memory_space<vmem>>, %arg9: memref<6x1x32xf32, #tpu.memory_space<vmem>>, %arg10: memref<6x32x32xf32, #tpu.memory_space<vmem>>, %arg11: memref<6x1x32xf32, #tpu.memory_space<vmem>>, %arg12: memref<6x32x32xf32, #tpu.memory_space<vmem>>, %arg13: memref<6x1x32xf32, #tpu.memory_space<vmem>>, %arg14: memref<6x1x32xf32, #tpu.memory_space<vmem>>, %arg15: memref<6x1x32xf32, #tpu.memory_space<vmem>>, %arg16: memref<6x32x64xf32, #tpu.memory_space<vmem>>, %arg17: memref<6x1x64xf32, #tpu.memory_space<vmem>>, %arg18: memref<6x64x32xf32, #tpu.memory_space<vmem>>, %arg19: memref<6x1x32xf32, #tpu.memory_space<vmem>>, %arg20: memref<6x1x32xf32, #tpu.memory_space<vmem>>, %arg21: memref<6x1x32xf32, #tpu.memory_space<vmem>>, %arg22: memref<6x32x16xf32, #tpu.memory_space<vmem>>, %arg23: memref<1x16xf32, #tpu.memory_space<vmem>>, %arg24: memref<2x16xf32, #tpu.memory_space<vmem>>, %arg25: memref<7x16x32xf32, #tpu.memory_space<vmem>>) attributes {dimension_semantics = [#tpu.dimension_semantics<arbitrary>], iteration_bounds = array<i64: 1>, scalar_prefetch = 0 : i64, scratch_operands = 0 : i64, tpu.core_type = #tpu.core_type<tc>, window_params = [{pipeline_mode = #tpu.pipeline_mode<synchronous>, transform_indices = @transform_0, window_bounds = array<i64: 16, 32>}, {pipeline_mode = #tpu.pipeline_mode<synchronous>, transform_indices = @transform_1, window_bounds = array<i64: 2, 8>}, {pipeline_mode = #tpu.pipeline_mode<synchronous>, transform_indices = @transform_2, window_bounds = array<i64: 4, 1, 1, 32>}, {pipeline_mode = #tpu.pipeline_mode<synchronous>, transform_indices = @transform_3, window_bounds = array<i64: 1, 32>}, {pipeline_mode = #tpu.pipeline_mode<synchronous>, transform_indices = @transform_4, window_bounds = array<i64: 1, 32>}, {pipeline_mode = #tpu.pipeline_mode<synchronous>, transform_indices = @transform_5, window_bounds = array<i64: 6, 32, 32>}, {pipeline_mode = #tpu.pipeline_mode<synchronous>, transform_indices = @transform_6, window_bounds = array<i64: 6, 1, 32>}, {pipeline_mode = #tpu.pipeline_mode<synchronous>, transform_indices = @transform_7, window_bounds = array<i64: 6, 32, 32>}, {pipeline_mode = #tpu.pipeline_mode<synchronous>, transform_indices = @transform_8, window_bounds = array<i64: 6, 1, 32>}, {pipeline_mode = #tpu.pipeline_mode<synchronous>, transform_indices = @transform_9, window_bounds = array<i64: 6, 32, 32>}, {pipeline_mode = #tpu.pipeline_mode<synchronous>, transform_indices = @transform_10, window_bounds = array<i64: 6, 1, 32>}, {pipeline_mode = #tpu.pipeline_mode<synchronous>, transform_indices = @transform_11, window_bounds = array<i64: 6, 32, 32>}, {pipeline_mode = #tpu.pipeline_mode<synchronous>, transform_indices = @transform_12, window_bounds = array<i64: 6, 1, 32>}, {pipeline_mode = #tpu.pipeline_mode<synchronous>, transform_indices = @transform_13, window_bounds = array<i64: 6, 1, 32>}, {pipeline_mode = #tpu.pipeline_mode<synchronous>, transform_indices = @transform_14, window_bounds = array<i64: 6, 1, 32>}, {pipeline_mode = #tpu.pipeline_mode<synchronous>, transform_indices = @transform_15, window_bounds = array<i64: 6, 32, 64>}, {pipeline_mode = #tpu.pipeline_mode<synchronous>, transform_indices = @transform_16, window_bounds = array<i64: 6, 1, 64>}, {pipeline_mode = #tpu.pipeline_mode<synchronous>, transform_indices = @transform_17, window_bounds = array<i64: 6, 64, 32>}, {pipeline_mode = #tpu.pipeline_mode<synchronous>, transform_indices = @transform_18, window_bounds = array<i64: 6, 1, 32>}, {pipeline_mode = #tpu.pipeline_mode<synchronous>, transform_indices = @transform_19, window_bounds = array<i64: 6, 1, 32>}, {pipeline_mode = #tpu.pipeline_mode<synchronous>, transform_indices = @transform_20, window_bounds = array<i64: 6, 1, 32>}, {pipeline_mode = #tpu.pipeline_mode<synchronous>, transform_indices = @transform_21, window_bounds = array<i64: 6, 32, 16>}, {pipeline_mode = #tpu.pipeline_mode<synchronous>, transform_indices = @transform_22, window_bounds = array<i64: 1, 16>}, {pipeline_mode = #tpu.pipeline_mode<synchronous>, transform_indices = @transform_23, window_bounds = array<i64: 2, 16>}, {pipeline_mode = #tpu.pipeline_mode<synchronous>, transform_indices = @transform_24, window_bounds = array<i64: 7, 16, 32>}]} {
    %c0 = arith.constant 0 : index
    %c0_0 = arith.constant 0 : index
    %0 = vector.load %arg2[%c0, %c0_0] : memref<2x8xf32, #tpu.memory_space<vmem>>, vector<2x8xf32>
    %1 = vector.shape_cast %0 : vector<2x8xf32> to vector<2x1x8xf32>
    %2 = vector.shape_cast %1 : vector<2x1x8xf32> to vector<2x1x8xf32>
    %3 = vector.broadcast %2 : vector<2x1x8xf32> to vector<2x8x8xf32>
    %c0_1 = arith.constant 0 : index
    %c0_2 = arith.constant 0 : index
    %c0_3 = arith.constant 0 : index
    %c0_4 = arith.constant 0 : index
    %4 = vector.load %arg3[%c0_1, %c0_2, %c0_3, %c0_4] : memref<4x1x1x32xf32, #tpu.memory_space<vmem>>, vector<1x1x1x32xf32>
    %5 = vector.shape_cast %4 : vector<1x1x1x32xf32> to vector<1x1x32xf32>
    %6 = vector.shape_cast %5 : vector<1x1x32xf32> to vector<1x1x32xf32>
    %7 = vector.broadcast %6 : vector<1x1x32xf32> to vector<2x8x32xf32>
    %c1 = arith.constant 1 : index
    %c0_5 = arith.constant 0 : index
    %c0_6 = arith.constant 0 : index
    %c0_7 = arith.constant 0 : index
    %8 = vector.load %arg3[%c1, %c0_5, %c0_6, %c0_7] : memref<4x1x1x32xf32, #tpu.memory_space<vmem>>, vector<1x1x1x32xf32>
    %9 = vector.shape_cast %8 : vector<1x1x1x32xf32> to vector<1x1x32xf32>
    %10 = vector.shape_cast %9 : vector<1x1x32xf32> to vector<1x1x32xf32>
    %11 = vector.broadcast %10 : vector<1x1x32xf32> to vector<2x8x32xf32>
    %c2 = arith.constant 2 : index
    %c0_8 = arith.constant 0 : index
    %c0_9 = arith.constant 0 : index
    %c0_10 = arith.constant 0 : index
    %12 = vector.load %arg3[%c2, %c0_8, %c0_9, %c0_10] : memref<4x1x1x32xf32, #tpu.memory_space<vmem>>, vector<1x1x1x32xf32>
    %13 = vector.shape_cast %12 : vector<1x1x1x32xf32> to vector<1x1x32xf32>
    %14 = vector.shape_cast %13 : vector<1x1x32xf32> to vector<1x1x32xf32>
    %15 = vector.broadcast %14 : vector<1x1x32xf32> to vector<2x8x32xf32>
    %c3 = arith.constant 3 : index
    %c0_11 = arith.constant 0 : index
    %c0_12 = arith.constant 0 : index
    %c0_13 = arith.constant 0 : index
    %16 = vector.load %arg3[%c3, %c0_11, %c0_12, %c0_13] : memref<4x1x1x32xf32, #tpu.memory_space<vmem>>, vector<1x1x1x32xf32>
    %17 = vector.shape_cast %16 : vector<1x1x1x32xf32> to vector<1x1x32xf32>
    %18 = vector.shape_cast %17 : vector<1x1x32xf32> to vector<1x1x32xf32>
    %19 = vector.broadcast %18 : vector<1x1x32xf32> to vector<2x8x32xf32>
    %c0_14 = arith.constant 0 : index
    %c0_15 = arith.constant 0 : index
    %20 = vector.load %arg1[%c0_14, %c0_15] : memref<16x32xf32, #tpu.memory_space<vmem>>, vector<16x32xf32>
    %c0_16 = arith.constant 0 : index
    %c0_17 = arith.constant 0 : index
    %21 = vector.load %arg4[%c0_16, %c0_17] : memref<1x32xf32, #tpu.memory_space<vmem>>, vector<1x32xf32>
    %c0_18 = arith.constant 0 : index
    %c0_19 = arith.constant 0 : index
    %22 = vector.load %arg5[%c0_18, %c0_19] : memref<1x32xf32, #tpu.memory_space<vmem>>, vector<1x32xf32>
    %cst = arith.constant dense<0.000000e+00> : vector<16xf32>
    %23 = vector.multi_reduction <add>, %20, %cst [1] : vector<16x32xf32> to vector<16xf32>
    %24 = vector.shape_cast %23 : vector<16xf32> to vector<16x1xf32>
    %cst_20 = arith.constant 3.200000e+01 : f32
    %25 = vector.broadcast %cst_20 : f32 to vector<16x1xf32>
    %26 = arith.divf %24, %25 : vector<16x1xf32>
    %27 = arith.mulf %20, %20 : vector<16x32xf32>
    %cst_21 = arith.constant dense<0.000000e+00> : vector<16xf32>
    %28 = vector.multi_reduction <add>, %27, %cst_21 [1] : vector<16x32xf32> to vector<16xf32>
    %29 = vector.shape_cast %28 : vector<16xf32> to vector<16x1xf32>
    %cst_22 = arith.constant 3.200000e+01 : f32
    %30 = vector.broadcast %cst_22 : f32 to vector<16x1xf32>
    %31 = arith.divf %29, %30 : vector<16x1xf32>
    %32 = arith.mulf %26, %26 : vector<16x1xf32>
    %33 = arith.subf %31, %32 : vector<16x1xf32>
    %34 = vector.broadcast %26 : vector<16x1xf32> to vector<16x32xf32>
    %35 = arith.subf %20, %34 : vector<16x32xf32>
    %cst_23 = arith.constant 9.99999996E-13 : f32
    %36 = vector.broadcast %cst_23 : f32 to vector<16x1xf32>
    %37 = arith.addf %33, %36 : vector<16x1xf32>
    %38 = math.rsqrt %37 : vector<16x1xf32>
    %39 = vector.broadcast %38 : vector<16x1xf32> to vector<16x32xf32>
    %40 = arith.mulf %35, %39 : vector<16x32xf32>
    %41 = vector.broadcast %21 : vector<1x32xf32> to vector<16x32xf32>
    %42 = arith.mulf %40, %41 : vector<16x32xf32>
    %43 = vector.broadcast %22 : vector<1x32xf32> to vector<16x32xf32>
    %44 = arith.addf %42, %43 : vector<16x32xf32>
    %c0_24 = arith.constant 0 : index
    %c0_25 = arith.constant 0 : index
    %c0_26 = arith.constant 0 : index
    %45 = vector.load %arg25[%c0_24, %c0_25, %c0_26] : memref<7x16x32xf32, #tpu.memory_space<vmem>>, vector<1x16x32xf32>
    %46 = vector.shape_cast %45 : vector<1x16x32xf32> to vector<16x32xf32>
    %47 = vector.shape_cast %44 : vector<16x32xf32> to vector<1x16x32xf32>
    tpu.vector_store %arg25[%c0_24, %c0_25, %c0_26], %47 {strides = array<i32>} : memref<7x16x32xf32, #tpu.memory_space<vmem>>, vector<1x16x32xf32>,
    %cst_27 = arith.constant 0.000000e+00 : f32
    %48 = vector.broadcast %cst_27 : f32 to vector<2x16xf32>
    %c0_28 = arith.constant 0 : index
    %c0_29 = arith.constant 0 : index
    %c0_30 = arith.constant 0 : index
    %49 = vector.load %arg6[%c0_28, %c0_29, %c0_30] : memref<6x32x32xf32, #tpu.memory_space<vmem>>, vector<1x32x32xf32>
    %50 = vector.shape_cast %49 : vector<1x32x32xf32> to vector<32x32xf32>
    %cst_31 = arith.constant dense<0.000000e+00> : vector<16x32xf32>
    %51 = tpu.matmul %44, %50, %cst_31 {dimension_numbers = #tpu.dot_dimension_numbers<[1], [0], [0], [1], [0, 0, 1, 1], [], []>} : vector<16x32xf32>, vector<32x32xf32>, vector<16x32xf32> -> vector<16x32xf32>
    %c0_32 = arith.constant 0 : index
    %c0_33 = arith.constant 0 : index
    %c0_34 = arith.constant 0 : index
    %52 = vector.load %arg7[%c0_32, %c0_33, %c0_34] : memref<6x1x32xf32, #tpu.memory_space<vmem>>, vector<1x1x32xf32>
    %53 = vector.shape_cast %52 : vector<1x1x32xf32> to vector<1x32xf32>
    %54 = vector.broadcast %53 : vector<1x32xf32> to vector<16x32xf32>
    %55 = arith.addf %51, %54 : vector<16x32xf32>
    %c0_35 = arith.constant 0 : index
    %c0_36 = arith.constant 0 : index
    %c0_37 = arith.constant 0 : index
    %56 = vector.load %arg8[%c0_35, %c0_36, %c0_37] : memref<6x32x32xf32, #tpu.memory_space<vmem>>, vector<1x32x32xf32>
    %57 = vector.shape_cast %56 : vector<1x32x32xf32> to vector<32x32xf32>
    %cst_38 = arith.constant dense<0.000000e+00> : vector<16x32xf32>
    %58 = tpu.matmul %44, %57, %cst_38 {dimension_numbers = #tpu.dot_dimension_numbers<[1], [0], [0], [1], [0, 0, 1, 1], [], []>} : vector<16x32xf32>, vector<32x32xf32>, vector<16x32xf32> -> vector<16x32xf32>
    %c0_39 = arith.constant 0 : index
    %c0_40 = arith.constant 0 : index
    %c0_41 = arith.constant 0 : index
    %59 = vector.load %arg9[%c0_39, %c0_40, %c0_41] : memref<6x1x32xf32, #tpu.memory_space<vmem>>, vector<1x1x32xf32>
    %60 = vector.shape_cast %59 : vector<1x1x32xf32> to vector<1x32xf32>
    %61 = vector.broadcast %60 : vector<1x32xf32> to vector<16x32xf32>
    %62 = arith.addf %58, %61 : vector<16x32xf32>
    %c0_42 = arith.constant 0 : index
    %c0_43 = arith.constant 0 : index
    %c0_44 = arith.constant 0 : index
    %63 = vector.load %arg10[%c0_42, %c0_43, %c0_44] : memref<6x32x32xf32, #tpu.memory_space<vmem>>, vector<1x32x32xf32>
    %64 = vector.shape_cast %63 : vector<1x32x32xf32> to vector<32x32xf32>
    %cst_45 = arith.constant dense<0.000000e+00> : vector<16x32xf32>
    %65 = tpu.matmul %44, %64, %cst_45 {dimension_numbers = #tpu.dot_dimension_numbers<[1], [0], [0], [1], [0, 0, 1, 1], [], []>} : vector<16x32xf32>, vector<32x32xf32>, vector<16x32xf32> -> vector<16x32xf32>
    %c0_46 = arith.constant 0 : index
    %c0_47 = arith.constant 0 : index
    %c0_48 = arith.constant 0 : index
    %66 = vector.load %arg11[%c0_46, %c0_47, %c0_48] : memref<6x1x32xf32, #tpu.memory_space<vmem>>, vector<1x1x32xf32>
    %67 = vector.shape_cast %66 : vector<1x1x32xf32> to vector<1x32xf32>
    %68 = vector.broadcast %67 : vector<1x32xf32> to vector<16x32xf32>
    %69 = arith.addf %65, %68 : vector<16x32xf32>
    %70 = vector.shape_cast %55 : vector<16x32xf32> to vector<2x8x32xf32>
    %71 = vector.shape_cast %62 : vector<16x32xf32> to vector<2x8x32xf32>
    %72 = vector.shape_cast %69 : vector<16x32xf32> to vector<2x8x32xf32>
    %73 = arith.mulf %71, %7 : vector<2x8x32xf32>
    "tpu.trace_start"() <{level = 10 : i32, message = "bqd,bkd->bqk"}> : () -> ()
    %cst_49 = arith.constant dense<0.000000e+00> : vector<2x8x8xf32>
    %74 = tpu.matmul %70, %73, %cst_49 {dimension_numbers = #tpu.dot_dimension_numbers<[2], [2], [1], [1], [0, 0, 0, 1, 1, 1], [0], [0]>} : vector<2x8x32xf32>, vector<2x8x32xf32>, vector<2x8x8xf32> -> vector<2x8x8xf32>
    "tpu.trace_stop"() : () -> ()
    %cst_50 = arith.constant 0.353553385 : f32
    %75 = vector.broadcast %cst_50 : f32 to vector<2x8x8xf32>
    %76 = arith.mulf %74, %75 : vector<2x8x8xf32>
    %77 = arith.addf %76, %3 : vector<2x8x8xf32>
    %78 = math.exp %77 : vector<2x8x8xf32>
    %cst_51 = arith.constant dense<0.000000e+00> : vector<2x8xf32>
    %79 = vector.multi_reduction <add>, %78, %cst_51 [2] : vector<2x8x8xf32> to vector<2x8xf32>
    %80 = vector.shape_cast %79 : vector<2x8xf32> to vector<2x8x1xf32>
    %81 = tpu.reciprocal %80 {approx = true} : vector<2x8x1xf32> -> vector<2x8x1xf32>
    %82 = vector.broadcast %81 : vector<2x8x1xf32> to vector<2x8x8xf32>
    %83 = arith.mulf %78, %82 : vector<2x8x8xf32>
    "tpu.trace_start"() <{level = 10 : i32, message = "bqk,bkd->bqd"}> : () -> ()
    %cst_52 = arith.constant dense<0.000000e+00> : vector<2x8x32xf32>
    %84 = tpu.matmul %83, %72, %cst_52 {dimension_numbers = #tpu.dot_dimension_numbers<[2], [1], [1], [2], [0, 0, 0, 1, 1, 2], [0], [0]>} : vector<2x8x8xf32>, vector<2x8x32xf32>, vector<2x8x32xf32> -> vector<2x8x32xf32>
    "tpu.trace_stop"() : () -> ()
    %85 = arith.mulf %84, %7 : vector<2x8x32xf32>
    %86 = arith.mulf %71, %11 : vector<2x8x32xf32>
    "tpu.trace_start"() <{level = 10 : i32, message = "bqd,bkd->bqk"}> : () -> ()
    %cst_53 = arith.constant dense<0.000000e+00> : vector<2x8x8xf32>
    %87 = tpu.matmul %70, %86, %cst_53 {dimension_numbers = #tpu.dot_dimension_numbers<[2], [2], [1], [1], [0, 0, 0, 1, 1, 1], [0], [0]>} : vector<2x8x32xf32>, vector<2x8x32xf32>, vector<2x8x8xf32> -> vector<2x8x8xf32>
    "tpu.trace_stop"() : () -> ()
    %cst_54 = arith.constant 0.353553385 : f32
    %88 = vector.broadcast %cst_54 : f32 to vector<2x8x8xf32>
    %89 = arith.mulf %87, %88 : vector<2x8x8xf32>
    %90 = arith.addf %89, %3 : vector<2x8x8xf32>
    %91 = math.exp %90 : vector<2x8x8xf32>
    %cst_55 = arith.constant dense<0.000000e+00> : vector<2x8xf32>
    %92 = vector.multi_reduction <add>, %91, %cst_55 [2] : vector<2x8x8xf32> to vector<2x8xf32>
    %93 = vector.shape_cast %92 : vector<2x8xf32> to vector<2x8x1xf32>
    %94 = tpu.reciprocal %93 {approx = true} : vector<2x8x1xf32> -> vector<2x8x1xf32>
    %95 = vector.broadcast %94 : vector<2x8x1xf32> to vector<2x8x8xf32>
    %96 = arith.mulf %91, %95 : vector<2x8x8xf32>
    "tpu.trace_start"() <{level = 10 : i32, message = "bqk,bkd->bqd"}> : () -> ()
    %cst_56 = arith.constant dense<0.000000e+00> : vector<2x8x32xf32>
    %97 = tpu.matmul %96, %72, %cst_56 {dimension_numbers = #tpu.dot_dimension_numbers<[2], [1], [1], [2], [0, 0, 0, 1, 1, 2], [0], [0]>} : vector<2x8x8xf32>, vector<2x8x32xf32>, vector<2x8x32xf32> -> vector<2x8x32xf32>
    "tpu.trace_stop"() : () -> ()
    %98 = arith.mulf %97, %11 : vector<2x8x32xf32>
    %99 = arith.addf %85, %98 : vector<2x8x32xf32>
    %100 = arith.mulf %71, %15 : vector<2x8x32xf32>
    "tpu.trace_start"() <{level = 10 : i32, message = "bqd,bkd->bqk"}> : () -> ()
    %cst_57 = arith.constant dense<0.000000e+00> : vector<2x8x8xf32>
    %101 = tpu.matmul %70, %100, %cst_57 {dimension_numbers = #tpu.dot_dimension_numbers<[2], [2], [1], [1], [0, 0, 0, 1, 1, 1], [0], [0]>} : vector<2x8x32xf32>, vector<2x8x32xf32>, vector<2x8x8xf32> -> vector<2x8x8xf32>
    "tpu.trace_stop"() : () -> ()
    %cst_58 = arith.constant 0.353553385 : f32
    %102 = vector.broadcast %cst_58 : f32 to vector<2x8x8xf32>
    %103 = arith.mulf %101, %102 : vector<2x8x8xf32>
    %104 = arith.addf %103, %3 : vector<2x8x8xf32>
    %105 = math.exp %104 : vector<2x8x8xf32>
    %cst_59 = arith.constant dense<0.000000e+00> : vector<2x8xf32>
    %106 = vector.multi_reduction <add>, %105, %cst_59 [2] : vector<2x8x8xf32> to vector<2x8xf32>
    %107 = vector.shape_cast %106 : vector<2x8xf32> to vector<2x8x1xf32>
    %108 = tpu.reciprocal %107 {approx = true} : vector<2x8x1xf32> -> vector<2x8x1xf32>
    %109 = vector.broadcast %108 : vector<2x8x1xf32> to vector<2x8x8xf32>
    %110 = arith.mulf %105, %109 : vector<2x8x8xf32>
    "tpu.trace_start"() <{level = 10 : i32, message = "bqk,bkd->bqd"}> : () -> ()
    %cst_60 = arith.constant dense<0.000000e+00> : vector<2x8x32xf32>
    %111 = tpu.matmul %110, %72, %cst_60 {dimension_numbers = #tpu.dot_dimension_numbers<[2], [1], [1], [2], [0, 0, 0, 1, 1, 2], [0], [0]>} : vector<2x8x8xf32>, vector<2x8x32xf32>, vector<2x8x32xf32> -> vector<2x8x32xf32>
    "tpu.trace_stop"() : () -> ()
    %112 = arith.mulf %111, %15 : vector<2x8x32xf32>
    %113 = arith.addf %99, %112 : vector<2x8x32xf32>
    %114 = arith.mulf %71, %19 : vector<2x8x32xf32>
    "tpu.trace_start"() <{level = 10 : i32, message = "bqd,bkd->bqk"}> : () -> ()
    %cst_61 = arith.constant dense<0.000000e+00> : vector<2x8x8xf32>
    %115 = tpu.matmul %70, %114, %cst_61 {dimension_numbers = #tpu.dot_dimension_numbers<[2], [2], [1], [1], [0, 0, 0, 1, 1, 1], [0], [0]>} : vector<2x8x32xf32>, vector<2x8x32xf32>, vector<2x8x8xf32> -> vector<2x8x8xf32>
    "tpu.trace_stop"() : () -> ()
    %cst_62 = arith.constant 0.353553385 : f32
    %116 = vector.broadcast %cst_62 : f32 to vector<2x8x8xf32>
    %117 = arith.mulf %115, %116 : vector<2x8x8xf32>
    %118 = arith.addf %117, %3 : vector<2x8x8xf32>
    %119 = math.exp %118 : vector<2x8x8xf32>
    %cst_63 = arith.constant dense<0.000000e+00> : vector<2x8xf32>
    %120 = vector.multi_reduction <add>, %119, %cst_63 [2] : vector<2x8x8xf32> to vector<2x8xf32>
    %121 = vector.shape_cast %120 : vector<2x8xf32> to vector<2x8x1xf32>
    %122 = tpu.reciprocal %121 {approx = true} : vector<2x8x1xf32> -> vector<2x8x1xf32>
    %123 = vector.broadcast %122 : vector<2x8x1xf32> to vector<2x8x8xf32>
    %124 = arith.mulf %119, %123 : vector<2x8x8xf32>
    "tpu.trace_start"() <{level = 10 : i32, message = "bqk,bkd->bqd"}> : () -> ()
    %cst_64 = arith.constant dense<0.000000e+00> : vector<2x8x32xf32>
    %125 = tpu.matmul %124, %72, %cst_64 {dimension_numbers = #tpu.dot_dimension_numbers<[2], [1], [1], [2], [0, 0, 0, 1, 1, 2], [0], [0]>} : vector<2x8x8xf32>, vector<2x8x32xf32>, vector<2x8x32xf32> -> vector<2x8x32xf32>
    "tpu.trace_stop"() : () -> ()
    %126 = arith.mulf %125, %19 : vector<2x8x32xf32>
    %127 = arith.addf %113, %126 : vector<2x8x32xf32>
    %128 = vector.shape_cast %127 : vector<2x8x32xf32> to vector<16x32xf32>
    %c0_65 = arith.constant 0 : index
    %c0_66 = arith.constant 0 : index
    %c0_67 = arith.constant 0 : index
    %129 = vector.load %arg12[%c0_65, %c0_66, %c0_67] : memref<6x32x32xf32, #tpu.memory_space<vmem>>, vector<1x32x32xf32>
    %130 = vector.shape_cast %129 : vector<1x32x32xf32> to vector<32x32xf32>
    %cst_68 = arith.constant dense<0.000000e+00> : vector<16x32xf32>
    %131 = tpu.matmul %128, %130, %cst_68 {dimension_numbers = #tpu.dot_dimension_numbers<[1], [0], [0], [1], [0, 0, 1, 1], [], []>} : vector<16x32xf32>, vector<32x32xf32>, vector<16x32xf32> -> vector<16x32xf32>
    %c0_69 = arith.constant 0 : index
    %c0_70 = arith.constant 0 : index
    %c0_71 = arith.constant 0 : index
    %132 = vector.load %arg13[%c0_69, %c0_70, %c0_71] : memref<6x1x32xf32, #tpu.memory_space<vmem>>, vector<1x1x32xf32>
    %133 = vector.shape_cast %132 : vector<1x1x32xf32> to vector<1x32xf32>
    %134 = vector.broadcast %133 : vector<1x32xf32> to vector<16x32xf32>
    %135 = arith.addf %131, %134 : vector<16x32xf32>
    %136 = arith.addf %135, %44 : vector<16x32xf32>
    %c0_72 = arith.constant 0 : index
    %c0_73 = arith.constant 0 : index
    %c0_74 = arith.constant 0 : index
    %137 = vector.load %arg14[%c0_72, %c0_73, %c0_74] : memref<6x1x32xf32, #tpu.memory_space<vmem>>, vector<1x1x32xf32>
    %138 = vector.shape_cast %137 : vector<1x1x32xf32> to vector<1x32xf32>
    %c0_75 = arith.constant 0 : index
    %c0_76 = arith.constant 0 : index
    %c0_77 = arith.constant 0 : index
    %139 = vector.load %arg15[%c0_75, %c0_76, %c0_77] : memref<6x1x32xf32, #tpu.memory_space<vmem>>, vector<1x1x32xf32>
    %140 = vector.shape_cast %139 : vector<1x1x32xf32> to vector<1x32xf32>
    %cst_78 = arith.constant dense<0.000000e+00> : vector<16xf32>
    %141 = vector.multi_reduction <add>, %136, %cst_78 [1] : vector<16x32xf32> to vector<16xf32>
    %142 = vector.shape_cast %141 : vector<16xf32> to vector<16x1xf32>
    %cst_79 = arith.constant 3.200000e+01 : f32
    %143 = vector.broadcast %cst_79 : f32 to vector<16x1xf32>
    %144 = arith.divf %142, %143 : vector<16x1xf32>
    %145 = arith.mulf %136, %136 : vector<16x32xf32>
    %cst_80 = arith.constant dense<0.000000e+00> : vector<16xf32>
    %146 = vector.multi_reduction <add>, %145, %cst_80 [1] : vector<16x32xf32> to vector<16xf32>
    %147 = vector.shape_cast %146 : vector<16xf32> to vector<16x1xf32>
    %cst_81 = arith.constant 3.200000e+01 : f32
    %148 = vector.broadcast %cst_81 : f32 to vector<16x1xf32>
    %149 = arith.divf %147, %148 : vector<16x1xf32>
    %150 = arith.mulf %144, %144 : vector<16x1xf32>
    %151 = arith.subf %149, %150 : vector<16x1xf32>
    %152 = vector.broadcast %144 : vector<16x1xf32> to vector<16x32xf32>
    %153 = arith.subf %136, %152 : vector<16x32xf32>
    %cst_82 = arith.constant 9.99999996E-13 : f32
    %154 = vector.broadcast %cst_82 : f32 to vector<16x1xf32>
    %155 = arith.addf %151, %154 : vector<16x1xf32>
    %156 = math.rsqrt %155 : vector<16x1xf32>
    %157 = vector.broadcast %156 : vector<16x1xf32> to vector<16x32xf32>
    %158 = arith.mulf %153, %157 : vector<16x32xf32>
    %159 = vector.broadcast %138 : vector<1x32xf32> to vector<16x32xf32>
    %160 = arith.mulf %158, %159 : vector<16x32xf32>
    %161 = vector.broadcast %140 : vector<1x32xf32> to vector<16x32xf32>
    %162 = arith.addf %160, %161 : vector<16x32xf32>
    %c0_83 = arith.constant 0 : index
    %c0_84 = arith.constant 0 : index
    %c0_85 = arith.constant 0 : index
    %163 = vector.load %arg16[%c0_83, %c0_84, %c0_85] : memref<6x32x64xf32, #tpu.memory_space<vmem>>, vector<1x32x64xf32>
    %164 = vector.shape_cast %163 : vector<1x32x64xf32> to vector<32x64xf32>
    %cst_86 = arith.constant dense<0.000000e+00> : vector<16x64xf32>
    %165 = tpu.matmul %162, %164, %cst_86 {dimension_numbers = #tpu.dot_dimension_numbers<[1], [0], [0], [1], [0, 0, 1, 1], [], []>} : vector<16x32xf32>, vector<32x64xf32>, vector<16x64xf32> -> vector<16x64xf32>
    %c0_87 = arith.constant 0 : index
    %c0_88 = arith.constant 0 : index
    %c0_89 = arith.constant 0 : index
    %166 = vector.load %arg17[%c0_87, %c0_88, %c0_89] : memref<6x1x64xf32, #tpu.memory_space<vmem>>, vector<1x1x64xf32>
    %167 = vector.shape_cast %166 : vector<1x1x64xf32> to vector<1x64xf32>
    %168 = vector.broadcast %167 : vector<1x64xf32> to vector<16x64xf32>
    %169 = arith.addf %165, %168 : vector<16x64xf32>
    %170 = arith.mulf %169, %169 : vector<16x64xf32>
    %171 = arith.mulf %169, %170 : vector<16x64xf32>
    %cst_90 = arith.constant 4.471500e-02 : f32
    %172 = vector.broadcast %cst_90 : f32 to vector<16x64xf32>
    %173 = arith.mulf %172, %171 : vector<16x64xf32>
    %174 = arith.addf %169, %173 : vector<16x64xf32>
    %cst_91 = arith.constant 0.797884583 : f32
    %175 = vector.broadcast %cst_91 : f32 to vector<16x64xf32>
    %176 = arith.mulf %175, %174 : vector<16x64xf32>
    %177 = math.tanh %176 : vector<16x64xf32>
    %cst_92 = arith.constant 1.000000e+00 : f32
    %178 = vector.broadcast %cst_92 : f32 to vector<16x64xf32>
    %179 = arith.addf %178, %177 : vector<16x64xf32>
    %cst_93 = arith.constant 5.000000e-01 : f32
    %180 = vector.broadcast %cst_93 : f32 to vector<16x64xf32>
    %181 = arith.mulf %180, %179 : vector<16x64xf32>
    %182 = arith.mulf %169, %181 : vector<16x64xf32>
    %c0_94 = arith.constant 0 : index
    %c0_95 = arith.constant 0 : index
    %c0_96 = arith.constant 0 : index
    %183 = vector.load %arg18[%c0_94, %c0_95, %c0_96] : memref<6x64x32xf32, #tpu.memory_space<vmem>>, vector<1x64x32xf32>
    %184 = vector.shape_cast %183 : vector<1x64x32xf32> to vector<64x32xf32>
    %cst_97 = arith.constant dense<0.000000e+00> : vector<16x32xf32>
    %185 = tpu.matmul %182, %184, %cst_97 {dimension_numbers = #tpu.dot_dimension_numbers<[1], [0], [0], [1], [0, 0, 1, 1], [], []>} : vector<16x64xf32>, vector<64x32xf32>, vector<16x32xf32> -> vector<16x32xf32>
    %c0_98 = arith.constant 0 : index
    %c0_99 = arith.constant 0 : index
    %c0_100 = arith.constant 0 : index
    %186 = vector.load %arg19[%c0_98, %c0_99, %c0_100] : memref<6x1x32xf32, #tpu.memory_space<vmem>>, vector<1x1x32xf32>
    %187 = vector.shape_cast %186 : vector<1x1x32xf32> to vector<1x32xf32>
    %188 = vector.broadcast %187 : vector<1x32xf32> to vector<16x32xf32>
    %189 = arith.addf %185, %188 : vector<16x32xf32>
    %190 = arith.addf %189, %162 : vector<16x32xf32>
    %c0_101 = arith.constant 0 : index
    %c0_102 = arith.constant 0 : index
    %c0_103 = arith.constant 0 : index
    %191 = vector.load %arg20[%c0_101, %c0_102, %c0_103] : memref<6x1x32xf32, #tpu.memory_space<vmem>>, vector<1x1x32xf32>
    %192 = vector.shape_cast %191 : vector<1x1x32xf32> to vector<1x32xf32>
    %c0_104 = arith.constant 0 : index
    %c0_105 = arith.constant 0 : index
    %c0_106 = arith.constant 0 : index
    %193 = vector.load %arg21[%c0_104, %c0_105, %c0_106] : memref<6x1x32xf32, #tpu.memory_space<vmem>>, vector<1x1x32xf32>
    %194 = vector.shape_cast %193 : vector<1x1x32xf32> to vector<1x32xf32>
    %cst_107 = arith.constant dense<0.000000e+00> : vector<16xf32>
    %195 = vector.multi_reduction <add>, %190, %cst_107 [1] : vector<16x32xf32> to vector<16xf32>
    %196 = vector.shape_cast %195 : vector<16xf32> to vector<16x1xf32>
    %cst_108 = arith.constant 3.200000e+01 : f32
    %197 = vector.broadcast %cst_108 : f32 to vector<16x1xf32>
    %198 = arith.divf %196, %197 : vector<16x1xf32>
    %199 = arith.mulf %190, %190 : vector<16x32xf32>
    %cst_109 = arith.constant dense<0.000000e+00> : vector<16xf32>
    %200 = vector.multi_reduction <add>, %199, %cst_109 [1] : vector<16x32xf32> to vector<16xf32>
    %201 = vector.shape_cast %200 : vector<16xf32> to vector<16x1xf32>
    %cst_110 = arith.constant 3.200000e+01 : f32
    %202 = vector.broadcast %cst_110 : f32 to vector<16x1xf32>
    %203 = arith.divf %201, %202 : vector<16x1xf32>
    %204 = arith.mulf %198, %198 : vector<16x1xf32>
    %205 = arith.subf %203, %204 : vector<16x1xf32>
    %206 = vector.broadcast %198 : vector<16x1xf32> to vector<16x32xf32>
    %207 = arith.subf %190, %206 : vector<16x32xf32>
    %cst_111 = arith.constant 9.99999996E-13 : f32
    %208 = vector.broadcast %cst_111 : f32 to vector<16x1xf32>
    %209 = arith.addf %205, %208 : vector<16x1xf32>
    %210 = math.rsqrt %209 : vector<16x1xf32>
    %211 = vector.broadcast %210 : vector<16x1xf32> to vector<16x32xf32>
    %212 = arith.mulf %207, %211 : vector<16x32xf32>
    %213 = vector.broadcast %192 : vector<1x32xf32> to vector<16x32xf32>
    %214 = arith.mulf %212, %213 : vector<16x32xf32>
    %215 = vector.broadcast %194 : vector<1x32xf32> to vector<16x32xf32>
    %216 = arith.addf %214, %215 : vector<16x32xf32>
    %c1_112 = arith.constant 1 : index
    %c0_113 = arith.constant 0 : index
    %c0_114 = arith.constant 0 : index
    %217 = vector.load %arg25[%c1_112, %c0_113, %c0_114] : memref<7x16x32xf32, #tpu.memory_space<vmem>>, vector<1x16x32xf32>
    %218 = vector.shape_cast %217 : vector<1x16x32xf32> to vector<16x32xf32>
    %219 = vector.shape_cast %216 : vector<16x32xf32> to vector<1x16x32xf32>
    tpu.vector_store %arg25[%c1_112, %c0_113, %c0_114], %219 {strides = array<i32>} : memref<7x16x32xf32, #tpu.memory_space<vmem>>, vector<1x16x32xf32>,
    %220 = vector.shape_cast %216 : vector<16x32xf32> to vector<2x8x32xf32>
    %221 = vector.extract_strided_slice %220 {offsets = [0, 0, 0], sizes = [2, 1, 32], strides = [1, 1, 1]} : vector<2x8x32xf32> to vector<2x1x32xf32>
    %222 = vector.shape_cast %221 : vector<2x1x32xf32> to vector<2x32xf32>
    %c5 = arith.constant 5 : index
    %c0_115 = arith.constant 0 : index
    %c0_116 = arith.constant 0 : index
    %223 = vector.load %arg22[%c5, %c0_115, %c0_116] : memref<6x32x16xf32, #tpu.memory_space<vmem>>, vector<1x32x16xf32>
    %224 = vector.shape_cast %223 : vector<1x32x16xf32> to vector<32x16xf32>
    %cst_117 = arith.constant dense<0.000000e+00> : vector<2x16xf32>
    %225 = tpu.matmul %222, %224, %cst_117 {dimension_numbers = #tpu.dot_dimension_numbers<[1], [0], [0], [1], [0, 0, 1, 1], [], []>} : vector<2x32xf32>, vector<32x16xf32>, vector<2x16xf32> -> vector<2x16xf32>
    %226 = arith.addf %48, %225 : vector<2x16xf32>
    %c1_118 = arith.constant 1 : index
    %c0_119 = arith.constant 0 : index
    %c0_120 = arith.constant 0 : index
    %227 = vector.load %arg6[%c1_118, %c0_119, %c0_120] : memref<6x32x32xf32, #tpu.memory_space<vmem>>, vector<1x32x32xf32>
    %228 = vector.shape_cast %227 : vector<1x32x32xf32> to vector<32x32xf32>
    %cst_121 = arith.constant dense<0.000000e+00> : vector<16x32xf32>
    %229 = tpu.matmul %216, %228, %cst_121 {dimension_numbers = #tpu.dot_dimension_numbers<[1], [0], [0], [1], [0, 0, 1, 1], [], []>} : vector<16x32xf32>, vector<32x32xf32>, vector<16x32xf32> -> vector<16x32xf32>
    %c1_122 = arith.constant 1 : index
    %c0_123 = arith.constant 0 : index
    %c0_124 = arith.constant 0 : index
    %230 = vector.load %arg7[%c1_122, %c0_123, %c0_124] : memref<6x1x32xf32, #tpu.memory_space<vmem>>, vector<1x1x32xf32>
    %231 = vector.shape_cast %230 : vector<1x1x32xf32> to vector<1x32xf32>
    %232 = vector.broadcast %231 : vector<1x32xf32> to vector<16x32xf32>
    %233 = arith.addf %229, %232 : vector<16x32xf32>
    %c1_125 = arith.constant 1 : index
    %c0_126 = arith.constant 0 : index
    %c0_127 = arith.constant 0 : index
    %234 = vector.load %arg8[%c1_125, %c0_126, %c0_127] : memref<6x32x32xf32, #tpu.memory_space<vmem>>, vector<1x32x32xf32>
    %235 = vector.shape_cast %234 : vector<1x32x32xf32> to vector<32x32xf32>
    %cst_128 = arith.constant dense<0.000000e+00> : vector<16x32xf32>
    %236 = tpu.matmul %216, %235, %cst_128 {dimension_numbers = #tpu.dot_dimension_numbers<[1], [0], [0], [1], [0, 0, 1, 1], [], []>} : vector<16x32xf32>, vector<32x32xf32>, vector<16x32xf32> -> vector<16x32xf32>
    %c1_129 = arith.constant 1 : index
    %c0_130 = arith.constant 0 : index
    %c0_131 = arith.constant 0 : index
    %237 = vector.load %arg9[%c1_129, %c0_130, %c0_131] : memref<6x1x32xf32, #tpu.memory_space<vmem>>, vector<1x1x32xf32>
    %238 = vector.shape_cast %237 : vector<1x1x32xf32> to vector<1x32xf32>
    %239 = vector.broadcast %238 : vector<1x32xf32> to vector<16x32xf32>
    %240 = arith.addf %236, %239 : vector<16x32xf32>
    %c1_132 = arith.constant 1 : index
    %c0_133 = arith.constant 0 : index
    %c0_134 = arith.constant 0 : index
    %241 = vector.load %arg10[%c1_132, %c0_133, %c0_134] : memref<6x32x32xf32, #tpu.memory_space<vmem>>, vector<1x32x32xf32>
    %242 = vector.shape_cast %241 : vector<1x32x32xf32> to vector<32x32xf32>
    %cst_135 = arith.constant dense<0.000000e+00> : vector<16x32xf32>
    %243 = tpu.matmul %216, %242, %cst_135 {dimension_numbers = #tpu.dot_dimension_numbers<[1], [0], [0], [1], [0, 0, 1, 1], [], []>} : vector<16x32xf32>, vector<32x32xf32>, vector<16x32xf32> -> vector<16x32xf32>
    %c1_136 = arith.constant 1 : index
    %c0_137 = arith.constant 0 : index
    %c0_138 = arith.constant 0 : index
    %244 = vector.load %arg11[%c1_136, %c0_137, %c0_138] : memref<6x1x32xf32, #tpu.memory_space<vmem>>, vector<1x1x32xf32>
    %245 = vector.shape_cast %244 : vector<1x1x32xf32> to vector<1x32xf32>
    %246 = vector.broadcast %245 : vector<1x32xf32> to vector<16x32xf32>
    %247 = arith.addf %243, %246 : vector<16x32xf32>
    %248 = vector.shape_cast %233 : vector<16x32xf32> to vector<2x8x32xf32>
    %249 = vector.shape_cast %240 : vector<16x32xf32> to vector<2x8x32xf32>
    %250 = vector.shape_cast %247 : vector<16x32xf32> to vector<2x8x32xf32>
    %251 = arith.mulf %249, %7 : vector<2x8x32xf32>
    "tpu.trace_start"() <{level = 10 : i32, message = "bqd,bkd->bqk"}> : () -> ()
    %cst_139 = arith.constant dense<0.000000e+00> : vector<2x8x8xf32>
    %252 = tpu.matmul %248, %251, %cst_139 {dimension_numbers = #tpu.dot_dimension_numbers<[2], [2], [1], [1], [0, 0, 0, 1, 1, 1], [0], [0]>} : vector<2x8x32xf32>, vector<2x8x32xf32>, vector<2x8x8xf32> -> vector<2x8x8xf32>
    "tpu.trace_stop"() : () -> ()
    %cst_140 = arith.constant 0.353553385 : f32
    %253 = vector.broadcast %cst_140 : f32 to vector<2x8x8xf32>
    %254 = arith.mulf %252, %253 : vector<2x8x8xf32>
    %255 = arith.addf %254, %3 : vector<2x8x8xf32>
    %256 = math.exp %255 : vector<2x8x8xf32>
    %cst_141 = arith.constant dense<0.000000e+00> : vector<2x8xf32>
    %257 = vector.multi_reduction <add>, %256, %cst_141 [2] : vector<2x8x8xf32> to vector<2x8xf32>
    %258 = vector.shape_cast %257 : vector<2x8xf32> to vector<2x8x1xf32>
    %259 = tpu.reciprocal %258 {approx = true} : vector<2x8x1xf32> -> vector<2x8x1xf32>
    %260 = vector.broadcast %259 : vector<2x8x1xf32> to vector<2x8x8xf32>
    %261 = arith.mulf %256, %260 : vector<2x8x8xf32>
    "tpu.trace_start"() <{level = 10 : i32, message = "bqk,bkd->bqd"}> : () -> ()
    %cst_142 = arith.constant dense<0.000000e+00> : vector<2x8x32xf32>
    %262 = tpu.matmul %261, %250, %cst_142 {dimension_numbers = #tpu.dot_dimension_numbers<[2], [1], [1], [2], [0, 0, 0, 1, 1, 2], [0], [0]>} : vector<2x8x8xf32>, vector<2x8x32xf32>, vector<2x8x32xf32> -> vector<2x8x32xf32>
    "tpu.trace_stop"() : () -> ()
    %263 = arith.mulf %262, %7 : vector<2x8x32xf32>
    %264 = arith.mulf %249, %11 : vector<2x8x32xf32>
    "tpu.trace_start"() <{level = 10 : i32, message = "bqd,bkd->bqk"}> : () -> ()
    %cst_143 = arith.constant dense<0.000000e+00> : vector<2x8x8xf32>
    %265 = tpu.matmul %248, %264, %cst_143 {dimension_numbers = #tpu.dot_dimension_numbers<[2], [2], [1], [1], [0, 0, 0, 1, 1, 1], [0], [0]>} : vector<2x8x32xf32>, vector<2x8x32xf32>, vector<2x8x8xf32> -> vector<2x8x8xf32>
    "tpu.trace_stop"() : () -> ()
    %cst_144 = arith.constant 0.353553385 : f32
    %266 = vector.broadcast %cst_144 : f32 to vector<2x8x8xf32>
    %267 = arith.mulf %265, %266 : vector<2x8x8xf32>
    %268 = arith.addf %267, %3 : vector<2x8x8xf32>
    %269 = math.exp %268 : vector<2x8x8xf32>
    %cst_145 = arith.constant dense<0.000000e+00> : vector<2x8xf32>
    %270 = vector.multi_reduction <add>, %269, %cst_145 [2] : vector<2x8x8xf32> to vector<2x8xf32>
    %271 = vector.shape_cast %270 : vector<2x8xf32> to vector<2x8x1xf32>
    %272 = tpu.reciprocal %271 {approx = true} : vector<2x8x1xf32> -> vector<2x8x1xf32>
    %273 = vector.broadcast %272 : vector<2x8x1xf32> to vector<2x8x8xf32>
    %274 = arith.mulf %269, %273 : vector<2x8x8xf32>
    "tpu.trace_start"() <{level = 10 : i32, message = "bqk,bkd->bqd"}> : () -> ()
    %cst_146 = arith.constant dense<0.000000e+00> : vector<2x8x32xf32>
    %275 = tpu.matmul %274, %250, %cst_146 {dimension_numbers = #tpu.dot_dimension_numbers<[2], [1], [1], [2], [0, 0, 0, 1, 1, 2], [0], [0]>} : vector<2x8x8xf32>, vector<2x8x32xf32>, vector<2x8x32xf32> -> vector<2x8x32xf32>
    "tpu.trace_stop"() : () -> ()
    %276 = arith.mulf %275, %11 : vector<2x8x32xf32>
    %277 = arith.addf %263, %276 : vector<2x8x32xf32>
    %278 = arith.mulf %249, %15 : vector<2x8x32xf32>
    "tpu.trace_start"() <{level = 10 : i32, message = "bqd,bkd->bqk"}> : () -> ()
    %cst_147 = arith.constant dense<0.000000e+00> : vector<2x8x8xf32>
    %279 = tpu.matmul %248, %278, %cst_147 {dimension_numbers = #tpu.dot_dimension_numbers<[2], [2], [1], [1], [0, 0, 0, 1, 1, 1], [0], [0]>} : vector<2x8x32xf32>, vector<2x8x32xf32>, vector<2x8x8xf32> -> vector<2x8x8xf32>
    "tpu.trace_stop"() : () -> ()
    %cst_148 = arith.constant 0.353553385 : f32
    %280 = vector.broadcast %cst_148 : f32 to vector<2x8x8xf32>
    %281 = arith.mulf %279, %280 : vector<2x8x8xf32>
    %282 = arith.addf %281, %3 : vector<2x8x8xf32>
    %283 = math.exp %282 : vector<2x8x8xf32>
    %cst_149 = arith.constant dense<0.000000e+00> : vector<2x8xf32>
    %284 = vector.multi_reduction <add>, %283, %cst_149 [2] : vector<2x8x8xf32> to vector<2x8xf32>
    %285 = vector.shape_cast %284 : vector<2x8xf32> to vector<2x8x1xf32>
    %286 = tpu.reciprocal %285 {approx = true} : vector<2x8x1xf32> -> vector<2x8x1xf32>
    %287 = vector.broadcast %286 : vector<2x8x1xf32> to vector<2x8x8xf32>
    %288 = arith.mulf %283, %287 : vector<2x8x8xf32>
    "tpu.trace_start"() <{level = 10 : i32, message = "bqk,bkd->bqd"}> : () -> ()
    %cst_150 = arith.constant dense<0.000000e+00> : vector<2x8x32xf32>
    %289 = tpu.matmul %288, %250, %cst_150 {dimension_numbers = #tpu.dot_dimension_numbers<[2], [1], [1], [2], [0, 0, 0, 1, 1, 2], [0], [0]>} : vector<2x8x8xf32>, vector<2x8x32xf32>, vector<2x8x32xf32> -> vector<2x8x32xf32>
    "tpu.trace_stop"() : () -> ()
    %290 = arith.mulf %289, %15 : vector<2x8x32xf32>
    %291 = arith.addf %277, %290 : vector<2x8x32xf32>
    %292 = arith.mulf %249, %19 : vector<2x8x32xf32>
    "tpu.trace_start"() <{level = 10 : i32, message = "bqd,bkd->bqk"}> : () -> ()
    %cst_151 = arith.constant dense<0.000000e+00> : vector<2x8x8xf32>
    %293 = tpu.matmul %248, %292, %cst_151 {dimension_numbers = #tpu.dot_dimension_numbers<[2], [2], [1], [1], [0, 0, 0, 1, 1, 1], [0], [0]>} : vector<2x8x32xf32>, vector<2x8x32xf32>, vector<2x8x8xf32> -> vector<2x8x8xf32>
    "tpu.trace_stop"() : () -> ()
    %cst_152 = arith.constant 0.353553385 : f32
    %294 = vector.broadcast %cst_152 : f32 to vector<2x8x8xf32>
    %295 = arith.mulf %293, %294 : vector<2x8x8xf32>
    %296 = arith.addf %295, %3 : vector<2x8x8xf32>
    %297 = math.exp %296 : vector<2x8x8xf32>
    %cst_153 = arith.constant dense<0.000000e+00> : vector<2x8xf32>
    %298 = vector.multi_reduction <add>, %297, %cst_153 [2] : vector<2x8x8xf32> to vector<2x8xf32>
    %299 = vector.shape_cast %298 : vector<2x8xf32> to vector<2x8x1xf32>
    %300 = tpu.reciprocal %299 {approx = true} : vector<2x8x1xf32> -> vector<2x8x1xf32>
    %301 = vector.broadcast %300 : vector<2x8x1xf32> to vector<2x8x8xf32>
    %302 = arith.mulf %297, %301 : vector<2x8x8xf32>
    "tpu.trace_start"() <{level = 10 : i32, message = "bqk,bkd->bqd"}> : () -> ()
    %cst_154 = arith.constant dense<0.000000e+00> : vector<2x8x32xf32>
    %303 = tpu.matmul %302, %250, %cst_154 {dimension_numbers = #tpu.dot_dimension_numbers<[2], [1], [1], [2], [0, 0, 0, 1, 1, 2], [0], [0]>} : vector<2x8x8xf32>, vector<2x8x32xf32>, vector<2x8x32xf32> -> vector<2x8x32xf32>
    "tpu.trace_stop"() : () -> ()
    %304 = arith.mulf %303, %19 : vector<2x8x32xf32>
    %305 = arith.addf %291, %304 : vector<2x8x32xf32>
    %306 = vector.shape_cast %305 : vector<2x8x32xf32> to vector<16x32xf32>
    %c1_155 = arith.constant 1 : index
    %c0_156 = arith.constant 0 : index
    %c0_157 = arith.constant 0 : index
    %307 = vector.load %arg12[%c1_155, %c0_156, %c0_157] : memref<6x32x32xf32, #tpu.memory_space<vmem>>, vector<1x32x32xf32>
    %308 = vector.shape_cast %307 : vector<1x32x32xf32> to vector<32x32xf32>
    %cst_158 = arith.constant dense<0.000000e+00> : vector<16x32xf32>
    %309 = tpu.matmul %306, %308, %cst_158 {dimension_numbers = #tpu.dot_dimension_numbers<[1], [0], [0], [1], [0, 0, 1, 1], [], []>} : vector<16x32xf32>, vector<32x32xf32>, vector<16x32xf32> -> vector<16x32xf32>
    %c1_159 = arith.constant 1 : index
    %c0_160 = arith.constant 0 : index
    %c0_161 = arith.constant 0 : index
    %310 = vector.load %arg13[%c1_159, %c0_160, %c0_161] : memref<6x1x32xf32, #tpu.memory_space<vmem>>, vector<1x1x32xf32>
    %311 = vector.shape_cast %310 : vector<1x1x32xf32> to vector<1x32xf32>
    %312 = vector.broadcast %311 : vector<1x32xf32> to vector<16x32xf32>
    %313 = arith.addf %309, %312 : vector<16x32xf32>
    %314 = arith.addf %313, %216 : vector<16x32xf32>
    %c1_162 = arith.constant 1 : index
    %c0_163 = arith.constant 0 : index
    %c0_164 = arith.constant 0 : index
    %315 = vector.load %arg14[%c1_162, %c0_163, %c0_164] : memref<6x1x32xf32, #tpu.memory_space<vmem>>, vector<1x1x32xf32>
    %316 = vector.shape_cast %315 : vector<1x1x32xf32> to vector<1x32xf32>
    %c1_165 = arith.constant 1 : index
    %c0_166 = arith.constant 0 : index
    %c0_167 = arith.constant 0 : index
    %317 = vector.load %arg15[%c1_165, %c0_166, %c0_167] : memref<6x1x32xf32, #tpu.memory_space<vmem>>, vector<1x1x32xf32>
    %318 = vector.shape_cast %317 : vector<1x1x32xf32> to vector<1x32xf32>
    %cst_168 = arith.constant dense<0.000000e+00> : vector<16xf32>
    %319 = vector.multi_reduction <add>, %314, %cst_168 [1] : vector<16x32xf32> to vector<16xf32>
    %320 = vector.shape_cast %319 : vector<16xf32> to vector<16x1xf32>
    %cst_169 = arith.constant 3.200000e+01 : f32
    %321 = vector.broadcast %cst_169 : f32 to vector<16x1xf32>
    %322 = arith.divf %320, %321 : vector<16x1xf32>
    %323 = arith.mulf %314, %314 : vector<16x32xf32>
    %cst_170 = arith.constant dense<0.000000e+00> : vector<16xf32>
    %324 = vector.multi_reduction <add>, %323, %cst_170 [1] : vector<16x32xf32> to vector<16xf32>
    %325 = vector.shape_cast %324 : vector<16xf32> to vector<16x1xf32>
    %cst_171 = arith.constant 3.200000e+01 : f32
    %326 = vector.broadcast %cst_171 : f32 to vector<16x1xf32>
    %327 = arith.divf %325, %326 : vector<16x1xf32>
    %328 = arith.mulf %322, %322 : vector<16x1xf32>
    %329 = arith.subf %327, %328 : vector<16x1xf32>
    %330 = vector.broadcast %322 : vector<16x1xf32> to vector<16x32xf32>
    %331 = arith.subf %314, %330 : vector<16x32xf32>
    %cst_172 = arith.constant 9.99999996E-13 : f32
    %332 = vector.broadcast %cst_172 : f32 to vector<16x1xf32>
    %333 = arith.addf %329, %332 : vector<16x1xf32>
    %334 = math.rsqrt %333 : vector<16x1xf32>
    %335 = vector.broadcast %334 : vector<16x1xf32> to vector<16x32xf32>
    %336 = arith.mulf %331, %335 : vector<16x32xf32>
    %337 = vector.broadcast %316 : vector<1x32xf32> to vector<16x32xf32>
    %338 = arith.mulf %336, %337 : vector<16x32xf32>
    %339 = vector.broadcast %318 : vector<1x32xf32> to vector<16x32xf32>
    %340 = arith.addf %338, %339 : vector<16x32xf32>
    %c1_173 = arith.constant 1 : index
    %c0_174 = arith.constant 0 : index
    %c0_175 = arith.constant 0 : index
    %341 = vector.load %arg16[%c1_173, %c0_174, %c0_175] : memref<6x32x64xf32, #tpu.memory_space<vmem>>, vector<1x32x64xf32>
    %342 = vector.shape_cast %341 : vector<1x32x64xf32> to vector<32x64xf32>
    %cst_176 = arith.constant dense<0.000000e+00> : vector<16x64xf32>
    %343 = tpu.matmul %340, %342, %cst_176 {dimension_numbers = #tpu.dot_dimension_numbers<[1], [0], [0], [1], [0, 0, 1, 1], [], []>} : vector<16x32xf32>, vector<32x64xf32>, vector<16x64xf32> -> vector<16x64xf32>
    %c1_177 = arith.constant 1 : index
    %c0_178 = arith.constant 0 : index
    %c0_179 = arith.constant 0 : index
    %344 = vector.load %arg17[%c1_177, %c0_178, %c0_179] : memref<6x1x64xf32, #tpu.memory_space<vmem>>, vector<1x1x64xf32>
    %345 = vector.shape_cast %344 : vector<1x1x64xf32> to vector<1x64xf32>
    %346 = vector.broadcast %345 : vector<1x64xf32> to vector<16x64xf32>
    %347 = arith.addf %343, %346 : vector<16x64xf32>
    %348 = arith.mulf %347, %347 : vector<16x64xf32>
    %349 = arith.mulf %347, %348 : vector<16x64xf32>
    %cst_180 = arith.constant 4.471500e-02 : f32
    %350 = vector.broadcast %cst_180 : f32 to vector<16x64xf32>
    %351 = arith.mulf %350, %349 : vector<16x64xf32>
    %352 = arith.addf %347, %351 : vector<16x64xf32>
    %cst_181 = arith.constant 0.797884583 : f32
    %353 = vector.broadcast %cst_181 : f32 to vector<16x64xf32>
    %354 = arith.mulf %353, %352 : vector<16x64xf32>
    %355 = math.tanh %354 : vector<16x64xf32>
    %cst_182 = arith.constant 1.000000e+00 : f32
    %356 = vector.broadcast %cst_182 : f32 to vector<16x64xf32>
    %357 = arith.addf %356, %355 : vector<16x64xf32>
    %cst_183 = arith.constant 5.000000e-01 : f32
    %358 = vector.broadcast %cst_183 : f32 to vector<16x64xf32>
    %359 = arith.mulf %358, %357 : vector<16x64xf32>
    %360 = arith.mulf %347, %359 : vector<16x64xf32>
    %c1_184 = arith.constant 1 : index
    %c0_185 = arith.constant 0 : index
    %c0_186 = arith.constant 0 : index
    %361 = vector.load %arg18[%c1_184, %c0_185, %c0_186] : memref<6x64x32xf32, #tpu.memory_space<vmem>>, vector<1x64x32xf32>
    %362 = vector.shape_cast %361 : vector<1x64x32xf32> to vector<64x32xf32>
    %cst_187 = arith.constant dense<0.000000e+00> : vector<16x32xf32>
    %363 = tpu.matmul %360, %362, %cst_187 {dimension_numbers = #tpu.dot_dimension_numbers<[1], [0], [0], [1], [0, 0, 1, 1], [], []>} : vector<16x64xf32>, vector<64x32xf32>, vector<16x32xf32> -> vector<16x32xf32>
    %c1_188 = arith.constant 1 : index
    %c0_189 = arith.constant 0 : index
    %c0_190 = arith.constant 0 : index
    %364 = vector.load %arg19[%c1_188, %c0_189, %c0_190] : memref<6x1x32xf32, #tpu.memory_space<vmem>>, vector<1x1x32xf32>
    %365 = vector.shape_cast %364 : vector<1x1x32xf32> to vector<1x32xf32>
    %366 = vector.broadcast %365 : vector<1x32xf32> to vector<16x32xf32>
    %367 = arith.addf %363, %366 : vector<16x32xf32>
    %368 = arith.addf %367, %340 : vector<16x32xf32>
    %c1_191 = arith.constant 1 : index
    %c0_192 = arith.constant 0 : index
    %c0_193 = arith.constant 0 : index
    %369 = vector.load %arg20[%c1_191, %c0_192, %c0_193] : memref<6x1x32xf32, #tpu.memory_space<vmem>>, vector<1x1x32xf32>
    %370 = vector.shape_cast %369 : vector<1x1x32xf32> to vector<1x32xf32>
    %c1_194 = arith.constant 1 : index
    %c0_195 = arith.constant 0 : index
    %c0_196 = arith.constant 0 : index
    %371 = vector.load %arg21[%c1_194, %c0_195, %c0_196] : memref<6x1x32xf32, #tpu.memory_space<vmem>>, vector<1x1x32xf32>
    %372 = vector.shape_cast %371 : vector<1x1x32xf32> to vector<1x32xf32>
    %cst_197 = arith.constant dense<0.000000e+00> : vector<16xf32>
    %373 = vector.multi_reduction <add>, %368, %cst_197 [1] : vector<16x32xf32> to vector<16xf32>
    %374 = vector.shape_cast %373 : vector<16xf32> to vector<16x1xf32>
    %cst_198 = arith.constant 3.200000e+01 : f32
    %375 = vector.broadcast %cst_198 : f32 to vector<16x1xf32>
    %376 = arith.divf %374, %375 : vector<16x1xf32>
    %377 = arith.mulf %368, %368 : vector<16x32xf32>
    %cst_199 = arith.constant dense<0.000000e+00> : vector<16xf32>
    %378 = vector.multi_reduction <add>, %377, %cst_199 [1] : vector<16x32xf32> to vector<16xf32>
    %379 = vector.shape_cast %378 : vector<16xf32> to vector<16x1xf32>
    %cst_200 = arith.constant 3.200000e+01 : f32
    %380 = vector.broadcast %cst_200 : f32 to vector<16x1xf32>
    %381 = arith.divf %379, %380 : vector<16x1xf32>
    %382 = arith.mulf %376, %376 : vector<16x1xf32>
    %383 = arith.subf %381, %382 : vector<16x1xf32>
    %384 = vector.broadcast %376 : vector<16x1xf32> to vector<16x32xf32>
    %385 = arith.subf %368, %384 : vector<16x32xf32>
    %cst_201 = arith.constant 9.99999996E-13 : f32
    %386 = vector.broadcast %cst_201 : f32 to vector<16x1xf32>
    %387 = arith.addf %383, %386 : vector<16x1xf32>
    %388 = math.rsqrt %387 : vector<16x1xf32>
    %389 = vector.broadcast %388 : vector<16x1xf32> to vector<16x32xf32>
    %390 = arith.mulf %385, %389 : vector<16x32xf32>
    %391 = vector.broadcast %370 : vector<1x32xf32> to vector<16x32xf32>
    %392 = arith.mulf %390, %391 : vector<16x32xf32>
    %393 = vector.broadcast %372 : vector<1x32xf32> to vector<16x32xf32>
    %394 = arith.addf %392, %393 : vector<16x32xf32>
    %c2_202 = arith.constant 2 : index
    %c0_203 = arith.constant 0 : index
    %c0_204 = arith.constant 0 : index
    %395 = vector.load %arg25[%c2_202, %c0_203, %c0_204] : memref<7x16x32xf32, #tpu.memory_space<vmem>>, vector<1x16x32xf32>
    %396 = vector.shape_cast %395 : vector<1x16x32xf32> to vector<16x32xf32>
    %397 = vector.shape_cast %394 : vector<16x32xf32> to vector<1x16x32xf32>
    tpu.vector_store %arg25[%c2_202, %c0_203, %c0_204], %397 {strides = array<i32>} : memref<7x16x32xf32, #tpu.memory_space<vmem>>, vector<1x16x32xf32>,
    %398 = vector.shape_cast %394 : vector<16x32xf32> to vector<2x8x32xf32>
    %399 = vector.extract_strided_slice %398 {offsets = [0, 0, 0], sizes = [2, 1, 32], strides = [1, 1, 1]} : vector<2x8x32xf32> to vector<2x1x32xf32>
    %400 = vector.shape_cast %399 : vector<2x1x32xf32> to vector<2x32xf32>
    %c4 = arith.constant 4 : index
    %c0_205 = arith.constant 0 : index
    %c0_206 = arith.constant 0 : index
    %401 = vector.load %arg22[%c4, %c0_205, %c0_206] : memref<6x32x16xf32, #tpu.memory_space<vmem>>, vector<1x32x16xf32>
    %402 = vector.shape_cast %401 : vector<1x32x16xf32> to vector<32x16xf32>
    %cst_207 = arith.constant dense<0.000000e+00> : vector<2x16xf32>
    %403 = tpu.matmul %400, %402, %cst_207 {dimension_numbers = #tpu.dot_dimension_numbers<[1], [0], [0], [1], [0, 0, 1, 1], [], []>} : vector<2x32xf32>, vector<32x16xf32>, vector<2x16xf32> -> vector<2x16xf32>
    %404 = arith.addf %226, %403 : vector<2x16xf32>
    %c2_208 = arith.constant 2 : index
    %c0_209 = arith.constant 0 : index
    %c0_210 = arith.constant 0 : index
    %405 = vector.load %arg6[%c2_208, %c0_209, %c0_210] : memref<6x32x32xf32, #tpu.memory_space<vmem>>, vector<1x32x32xf32>
    %406 = vector.shape_cast %405 : vector<1x32x32xf32> to vector<32x32xf32>
    %cst_211 = arith.constant dense<0.000000e+00> : vector<16x32xf32>
    %407 = tpu.matmul %394, %406, %cst_211 {dimension_numbers = #tpu.dot_dimension_numbers<[1], [0], [0], [1], [0, 0, 1, 1], [], []>} : vector<16x32xf32>, vector<32x32xf32>, vector<16x32xf32> -> vector<16x32xf32>
    %c2_212 = arith.constant 2 : index
    %c0_213 = arith.constant 0 : index
    %c0_214 = arith.constant 0 : index
    %408 = vector.load %arg7[%c2_212, %c0_213, %c0_214] : memref<6x1x32xf32, #tpu.memory_space<vmem>>, vector<1x1x32xf32>
    %409 = vector.shape_cast %408 : vector<1x1x32xf32> to vector<1x32xf32>
    %410 = vector.broadcast %409 : vector<1x32xf32> to vector<16x32xf32>
    %411 = arith.addf %407, %410 : vector<16x32xf32>
    %c2_215 = arith.constant 2 : index
    %c0_216 = arith.constant 0 : index
    %c0_217 = arith.constant 0 : index
    %412 = vector.load %arg8[%c2_215, %c0_216, %c0_217] : memref<6x32x32xf32, #tpu.memory_space<vmem>>, vector<1x32x32xf32>
    %413 = vector.shape_cast %412 : vector<1x32x32xf32> to vector<32x32xf32>
    %cst_218 = arith.constant dense<0.000000e+00> : vector<16x32xf32>
    %414 = tpu.matmul %394, %413, %cst_218 {dimension_numbers = #tpu.dot_dimension_numbers<[1], [0], [0], [1], [0, 0, 1, 1], [], []>} : vector<16x32xf32>, vector<32x32xf32>, vector<16x32xf32> -> vector<16x32xf32>
    %c2_219 = arith.constant 2 : index
    %c0_220 = arith.constant 0 : index
    %c0_221 = arith.constant 0 : index
    %415 = vector.load %arg9[%c2_219, %c0_220, %c0_221] : memref<6x1x32xf32, #tpu.memory_space<vmem>>, vector<1x1x32xf32>
    %416 = vector.shape_cast %415 : vector<1x1x32xf32> to vector<1x32xf32>
    %417 = vector.broadcast %416 : vector<1x32xf32> to vector<16x32xf32>
    %418 = arith.addf %414, %417 : vector<16x32xf32>
    %c2_222 = arith.constant 2 : index
    %c0_223 = arith.constant 0 : index
    %c0_224 = arith.constant 0 : index
    %419 = vector.load %arg10[%c2_222, %c0_223, %c0_224] : memref<6x32x32xf32, #tpu.memory_space<vmem>>, vector<1x32x32xf32>
    %420 = vector.shape_cast %419 : vector<1x32x32xf32> to vector<32x32xf32>
    %cst_225 = arith.constant dense<0.000000e+00> : vector<16x32xf32>
    %421 = tpu.matmul %394, %420, %cst_225 {dimension_numbers = #tpu.dot_dimension_numbers<[1], [0], [0], [1], [0, 0, 1, 1], [], []>} : vector<16x32xf32>, vector<32x32xf32>, vector<16x32xf32> -> vector<16x32xf32>
    %c2_226 = arith.constant 2 : index
    %c0_227 = arith.constant 0 : index
    %c0_228 = arith.constant 0 : index
    %422 = vector.load %arg11[%c2_226, %c0_227, %c0_228] : memref<6x1x32xf32, #tpu.memory_space<vmem>>, vector<1x1x32xf32>
    %423 = vector.shape_cast %422 : vector<1x1x32xf32> to vector<1x32xf32>
    %424 = vector.broadcast %423 : vector<1x32xf32> to vector<16x32xf32>
    %425 = arith.addf %421, %424 : vector<16x32xf32>
    %426 = vector.shape_cast %411 : vector<16x32xf32> to vector<2x8x32xf32>
    %427 = vector.shape_cast %418 : vector<16x32xf32> to vector<2x8x32xf32>
    %428 = vector.shape_cast %425 : vector<16x32xf32> to vector<2x8x32xf32>
    %429 = arith.mulf %427, %7 : vector<2x8x32xf32>
    "tpu.trace_start"() <{level = 10 : i32, message = "bqd,bkd->bqk"}> : () -> ()
    %cst_229 = arith.constant dense<0.000000e+00> : vector<2x8x8xf32>
    %430 = tpu.matmul %426, %429, %cst_229 {dimension_numbers = #tpu.dot_dimension_numbers<[2], [2], [1], [1], [0, 0, 0, 1, 1, 1], [0], [0]>} : vector<2x8x32xf32>, vector<2x8x32xf32>, vector<2x8x8xf32> -> vector<2x8x8xf32>
    "tpu.trace_stop"() : () -> ()
    %cst_230 = arith.constant 0.353553385 : f32
    %431 = vector.broadcast %cst_230 : f32 to vector<2x8x8xf32>
    %432 = arith.mulf %430, %431 : vector<2x8x8xf32>
    %433 = arith.addf %432, %3 : vector<2x8x8xf32>
    %434 = math.exp %433 : vector<2x8x8xf32>
    %cst_231 = arith.constant dense<0.000000e+00> : vector<2x8xf32>
    %435 = vector.multi_reduction <add>, %434, %cst_231 [2] : vector<2x8x8xf32> to vector<2x8xf32>
    %436 = vector.shape_cast %435 : vector<2x8xf32> to vector<2x8x1xf32>
    %437 = tpu.reciprocal %436 {approx = true} : vector<2x8x1xf32> -> vector<2x8x1xf32>
    %438 = vector.broadcast %437 : vector<2x8x1xf32> to vector<2x8x8xf32>
    %439 = arith.mulf %434, %438 : vector<2x8x8xf32>
    "tpu.trace_start"() <{level = 10 : i32, message = "bqk,bkd->bqd"}> : () -> ()
    %cst_232 = arith.constant dense<0.000000e+00> : vector<2x8x32xf32>
    %440 = tpu.matmul %439, %428, %cst_232 {dimension_numbers = #tpu.dot_dimension_numbers<[2], [1], [1], [2], [0, 0, 0, 1, 1, 2], [0], [0]>} : vector<2x8x8xf32>, vector<2x8x32xf32>, vector<2x8x32xf32> -> vector<2x8x32xf32>
    "tpu.trace_stop"() : () -> ()
    %441 = arith.mulf %440, %7 : vector<2x8x32xf32>
    %442 = arith.mulf %427, %11 : vector<2x8x32xf32>
    "tpu.trace_start"() <{level = 10 : i32, message = "bqd,bkd->bqk"}> : () -> ()
    %cst_233 = arith.constant dense<0.000000e+00> : vector<2x8x8xf32>
    %443 = tpu.matmul %426, %442, %cst_233 {dimension_numbers = #tpu.dot_dimension_numbers<[2], [2], [1], [1], [0, 0, 0, 1, 1, 1], [0], [0]>} : vector<2x8x32xf32>, vector<2x8x32xf32>, vector<2x8x8xf32> -> vector<2x8x8xf32>
    "tpu.trace_stop"() : () -> ()
    %cst_234 = arith.constant 0.353553385 : f32
    %444 = vector.broadcast %cst_234 : f32 to vector<2x8x8xf32>
    %445 = arith.mulf %443, %444 : vector<2x8x8xf32>
    %446 = arith.addf %445, %3 : vector<2x8x8xf32>
    %447 = math.exp %446 : vector<2x8x8xf32>
    %cst_235 = arith.constant dense<0.000000e+00> : vector<2x8xf32>
    %448 = vector.multi_reduction <add>, %447, %cst_235 [2] : vector<2x8x8xf32> to vector<2x8xf32>
    %449 = vector.shape_cast %448 : vector<2x8xf32> to vector<2x8x1xf32>
    %450 = tpu.reciprocal %449 {approx = true} : vector<2x8x1xf32> -> vector<2x8x1xf32>
    %451 = vector.broadcast %450 : vector<2x8x1xf32> to vector<2x8x8xf32>
    %452 = arith.mulf %447, %451 : vector<2x8x8xf32>
    "tpu.trace_start"() <{level = 10 : i32, message = "bqk,bkd->bqd"}> : () -> ()
    %cst_236 = arith.constant dense<0.000000e+00> : vector<2x8x32xf32>
    %453 = tpu.matmul %452, %428, %cst_236 {dimension_numbers = #tpu.dot_dimension_numbers<[2], [1], [1], [2], [0, 0, 0, 1, 1, 2], [0], [0]>} : vector<2x8x8xf32>, vector<2x8x32xf32>, vector<2x8x32xf32> -> vector<2x8x32xf32>
    "tpu.trace_stop"() : () -> ()
    %454 = arith.mulf %453, %11 : vector<2x8x32xf32>
    %455 = arith.addf %441, %454 : vector<2x8x32xf32>
    %456 = arith.mulf %427, %15 : vector<2x8x32xf32>
    "tpu.trace_start"() <{level = 10 : i32, message = "bqd,bkd->bqk"}> : () -> ()
    %cst_237 = arith.constant dense<0.000000e+00> : vector<2x8x8xf32>
    %457 = tpu.matmul %426, %456, %cst_237 {dimension_numbers = #tpu.dot_dimension_numbers<[2], [2], [1], [1], [0, 0, 0, 1, 1, 1], [0], [0]>} : vector<2x8x32xf32>, vector<2x8x32xf32>, vector<2x8x8xf32> -> vector<2x8x8xf32>
    "tpu.trace_stop"() : () -> ()
    %cst_238 = arith.constant 0.353553385 : f32
    %458 = vector.broadcast %cst_238 : f32 to vector<2x8x8xf32>
    %459 = arith.mulf %457, %458 : vector<2x8x8xf32>
    %460 = arith.addf %459, %3 : vector<2x8x8xf32>
    %461 = math.exp %460 : vector<2x8x8xf32>
    %cst_239 = arith.constant dense<0.000000e+00> : vector<2x8xf32>
    %462 = vector.multi_reduction <add>, %461, %cst_239 [2] : vector<2x8x8xf32> to vector<2x8xf32>
    %463 = vector.shape_cast %462 : vector<2x8xf32> to vector<2x8x1xf32>
    %464 = tpu.reciprocal %463 {approx = true} : vector<2x8x1xf32> -> vector<2x8x1xf32>
    %465 = vector.broadcast %464 : vector<2x8x1xf32> to vector<2x8x8xf32>
    %466 = arith.mulf %461, %465 : vector<2x8x8xf32>
    "tpu.trace_start"() <{level = 10 : i32, message = "bqk,bkd->bqd"}> : () -> ()
    %cst_240 = arith.constant dense<0.000000e+00> : vector<2x8x32xf32>
    %467 = tpu.matmul %466, %428, %cst_240 {dimension_numbers = #tpu.dot_dimension_numbers<[2], [1], [1], [2], [0, 0, 0, 1, 1, 2], [0], [0]>} : vector<2x8x8xf32>, vector<2x8x32xf32>, vector<2x8x32xf32> -> vector<2x8x32xf32>
    "tpu.trace_stop"() : () -> ()
    %468 = arith.mulf %467, %15 : vector<2x8x32xf32>
    %469 = arith.addf %455, %468 : vector<2x8x32xf32>
    %470 = arith.mulf %427, %19 : vector<2x8x32xf32>
    "tpu.trace_start"() <{level = 10 : i32, message = "bqd,bkd->bqk"}> : () -> ()
    %cst_241 = arith.constant dense<0.000000e+00> : vector<2x8x8xf32>
    %471 = tpu.matmul %426, %470, %cst_241 {dimension_numbers = #tpu.dot_dimension_numbers<[2], [2], [1], [1], [0, 0, 0, 1, 1, 1], [0], [0]>} : vector<2x8x32xf32>, vector<2x8x32xf32>, vector<2x8x8xf32> -> vector<2x8x8xf32>
    "tpu.trace_stop"() : () -> ()
    %cst_242 = arith.constant 0.353553385 : f32
    %472 = vector.broadcast %cst_242 : f32 to vector<2x8x8xf32>
    %473 = arith.mulf %471, %472 : vector<2x8x8xf32>
    %474 = arith.addf %473, %3 : vector<2x8x8xf32>
    %475 = math.exp %474 : vector<2x8x8xf32>
    %cst_243 = arith.constant dense<0.000000e+00> : vector<2x8xf32>
    %476 = vector.multi_reduction <add>, %475, %cst_243 [2] : vector<2x8x8xf32> to vector<2x8xf32>
    %477 = vector.shape_cast %476 : vector<2x8xf32> to vector<2x8x1xf32>
    %478 = tpu.reciprocal %477 {approx = true} : vector<2x8x1xf32> -> vector<2x8x1xf32>
    %479 = vector.broadcast %478 : vector<2x8x1xf32> to vector<2x8x8xf32>
    %480 = arith.mulf %475, %479 : vector<2x8x8xf32>
    "tpu.trace_start"() <{level = 10 : i32, message = "bqk,bkd->bqd"}> : () -> ()
    %cst_244 = arith.constant dense<0.000000e+00> : vector<2x8x32xf32>
    %481 = tpu.matmul %480, %428, %cst_244 {dimension_numbers = #tpu.dot_dimension_numbers<[2], [1], [1], [2], [0, 0, 0, 1, 1, 2], [0], [0]>} : vector<2x8x8xf32>, vector<2x8x32xf32>, vector<2x8x32xf32> -> vector<2x8x32xf32>
    "tpu.trace_stop"() : () -> ()
    %482 = arith.mulf %481, %19 : vector<2x8x32xf32>
    %483 = arith.addf %469, %482 : vector<2x8x32xf32>
    %484 = vector.shape_cast %483 : vector<2x8x32xf32> to vector<16x32xf32>
    %c2_245 = arith.constant 2 : index
    %c0_246 = arith.constant 0 : index
    %c0_247 = arith.constant 0 : index
    %485 = vector.load %arg12[%c2_245, %c0_246, %c0_247] : memref<6x32x32xf32, #tpu.memory_space<vmem>>, vector<1x32x32xf32>
    %486 = vector.shape_cast %485 : vector<1x32x32xf32> to vector<32x32xf32>
    %cst_248 = arith.constant dense<0.000000e+00> : vector<16x32xf32>
    %487 = tpu.matmul %484, %486, %cst_248 {dimension_numbers = #tpu.dot_dimension_numbers<[1], [0], [0], [1], [0, 0, 1, 1], [], []>} : vector<16x32xf32>, vector<32x32xf32>, vector<16x32xf32> -> vector<16x32xf32>
    %c2_249 = arith.constant 2 : index
    %c0_250 = arith.constant 0 : index
    %c0_251 = arith.constant 0 : index
    %488 = vector.load %arg13[%c2_249, %c0_250, %c0_251] : memref<6x1x32xf32, #tpu.memory_space<vmem>>, vector<1x1x32xf32>
    %489 = vector.shape_cast %488 : vector<1x1x32xf32> to vector<1x32xf32>
    %490 = vector.broadcast %489 : vector<1x32xf32> to vector<16x32xf32>
    %491 = arith.addf %487, %490 : vector<16x32xf32>
    %492 = arith.addf %491, %394 : vector<16x32xf32>
    %c2_252 = arith.constant 2 : index
    %c0_253 = arith.constant 0 : index
    %c0_254 = arith.constant 0 : index
    %493 = vector.load %arg14[%c2_252, %c0_253, %c0_254] : memref<6x1x32xf32, #tpu.memory_space<vmem>>, vector<1x1x32xf32>
    %494 = vector.shape_cast %493 : vector<1x1x32xf32> to vector<1x32xf32>
    %c2_255 = arith.constant 2 : index
    %c0_256 = arith.constant 0 : index
    %c0_257 = arith.constant 0 : index
    %495 = vector.load %arg15[%c2_255, %c0_256, %c0_257] : memref<6x1x32xf32, #tpu.memory_space<vmem>>, vector<1x1x32xf32>
    %496 = vector.shape_cast %495 : vector<1x1x32xf32> to vector<1x32xf32>
    %cst_258 = arith.constant dense<0.000000e+00> : vector<16xf32>
    %497 = vector.multi_reduction <add>, %492, %cst_258 [1] : vector<16x32xf32> to vector<16xf32>
    %498 = vector.shape_cast %497 : vector<16xf32> to vector<16x1xf32>
    %cst_259 = arith.constant 3.200000e+01 : f32
    %499 = vector.broadcast %cst_259 : f32 to vector<16x1xf32>
    %500 = arith.divf %498, %499 : vector<16x1xf32>
    %501 = arith.mulf %492, %492 : vector<16x32xf32>
    %cst_260 = arith.constant dense<0.000000e+00> : vector<16xf32>
    %502 = vector.multi_reduction <add>, %501, %cst_260 [1] : vector<16x32xf32> to vector<16xf32>
    %503 = vector.shape_cast %502 : vector<16xf32> to vector<16x1xf32>
    %cst_261 = arith.constant 3.200000e+01 : f32
    %504 = vector.broadcast %cst_261 : f32 to vector<16x1xf32>
    %505 = arith.divf %503, %504 : vector<16x1xf32>
    %506 = arith.mulf %500, %500 : vector<16x1xf32>
    %507 = arith.subf %505, %506 : vector<16x1xf32>
    %508 = vector.broadcast %500 : vector<16x1xf32> to vector<16x32xf32>
    %509 = arith.subf %492, %508 : vector<16x32xf32>
    %cst_262 = arith.constant 9.99999996E-13 : f32
    %510 = vector.broadcast %cst_262 : f32 to vector<16x1xf32>
    %511 = arith.addf %507, %510 : vector<16x1xf32>
    %512 = math.rsqrt %511 : vector<16x1xf32>
    %513 = vector.broadcast %512 : vector<16x1xf32> to vector<16x32xf32>
    %514 = arith.mulf %509, %513 : vector<16x32xf32>
    %515 = vector.broadcast %494 : vector<1x32xf32> to vector<16x32xf32>
    %516 = arith.mulf %514, %515 : vector<16x32xf32>
    %517 = vector.broadcast %496 : vector<1x32xf32> to vector<16x32xf32>
    %518 = arith.addf %516, %517 : vector<16x32xf32>
    %c2_263 = arith.constant 2 : index
    %c0_264 = arith.constant 0 : index
    %c0_265 = arith.constant 0 : index
    %519 = vector.load %arg16[%c2_263, %c0_264, %c0_265] : memref<6x32x64xf32, #tpu.memory_space<vmem>>, vector<1x32x64xf32>
    %520 = vector.shape_cast %519 : vector<1x32x64xf32> to vector<32x64xf32>
    %cst_266 = arith.constant dense<0.000000e+00> : vector<16x64xf32>
    %521 = tpu.matmul %518, %520, %cst_266 {dimension_numbers = #tpu.dot_dimension_numbers<[1], [0], [0], [1], [0, 0, 1, 1], [], []>} : vector<16x32xf32>, vector<32x64xf32>, vector<16x64xf32> -> vector<16x64xf32>
    %c2_267 = arith.constant 2 : index
    %c0_268 = arith.constant 0 : index
    %c0_269 = arith.constant 0 : index
    %522 = vector.load %arg17[%c2_267, %c0_268, %c0_269] : memref<6x1x64xf32, #tpu.memory_space<vmem>>, vector<1x1x64xf32>
    %523 = vector.shape_cast %522 : vector<1x1x64xf32> to vector<1x64xf32>
    %524 = vector.broadcast %523 : vector<1x64xf32> to vector<16x64xf32>
    %525 = arith.addf %521, %524 : vector<16x64xf32>
    %526 = arith.mulf %525, %525 : vector<16x64xf32>
    %527 = arith.mulf %525, %526 : vector<16x64xf32>
    %cst_270 = arith.constant 4.471500e-02 : f32
    %528 = vector.broadcast %cst_270 : f32 to vector<16x64xf32>
    %529 = arith.mulf %528, %527 : vector<16x64xf32>
    %530 = arith.addf %525, %529 : vector<16x64xf32>
    %cst_271 = arith.constant 0.797884583 : f32
    %531 = vector.broadcast %cst_271 : f32 to vector<16x64xf32>
    %532 = arith.mulf %531, %530 : vector<16x64xf32>
    %533 = math.tanh %532 : vector<16x64xf32>
    %cst_272 = arith.constant 1.000000e+00 : f32
    %534 = vector.broadcast %cst_272 : f32 to vector<16x64xf32>
    %535 = arith.addf %534, %533 : vector<16x64xf32>
    %cst_273 = arith.constant 5.000000e-01 : f32
    %536 = vector.broadcast %cst_273 : f32 to vector<16x64xf32>
    %537 = arith.mulf %536, %535 : vector<16x64xf32>
    %538 = arith.mulf %525, %537 : vector<16x64xf32>
    %c2_274 = arith.constant 2 : index
    %c0_275 = arith.constant 0 : index
    %c0_276 = arith.constant 0 : index
    %539 = vector.load %arg18[%c2_274, %c0_275, %c0_276] : memref<6x64x32xf32, #tpu.memory_space<vmem>>, vector<1x64x32xf32>
    %540 = vector.shape_cast %539 : vector<1x64x32xf32> to vector<64x32xf32>
    %cst_277 = arith.constant dense<0.000000e+00> : vector<16x32xf32>
    %541 = tpu.matmul %538, %540, %cst_277 {dimension_numbers = #tpu.dot_dimension_numbers<[1], [0], [0], [1], [0, 0, 1, 1], [], []>} : vector<16x64xf32>, vector<64x32xf32>, vector<16x32xf32> -> vector<16x32xf32>
    %c2_278 = arith.constant 2 : index
    %c0_279 = arith.constant 0 : index
    %c0_280 = arith.constant 0 : index
    %542 = vector.load %arg19[%c2_278, %c0_279, %c0_280] : memref<6x1x32xf32, #tpu.memory_space<vmem>>, vector<1x1x32xf32>
    %543 = vector.shape_cast %542 : vector<1x1x32xf32> to vector<1x32xf32>
    %544 = vector.broadcast %543 : vector<1x32xf32> to vector<16x32xf32>
    %545 = arith.addf %541, %544 : vector<16x32xf32>
    %546 = arith.addf %545, %518 : vector<16x32xf32>
    %c2_281 = arith.constant 2 : index
    %c0_282 = arith.constant 0 : index
    %c0_283 = arith.constant 0 : index
    %547 = vector.load %arg20[%c2_281, %c0_282, %c0_283] : memref<6x1x32xf32, #tpu.memory_space<vmem>>, vector<1x1x32xf32>
    %548 = vector.shape_cast %547 : vector<1x1x32xf32> to vector<1x32xf32>
    %c2_284 = arith.constant 2 : index
    %c0_285 = arith.constant 0 : index
    %c0_286 = arith.constant 0 : index
    %549 = vector.load %arg21[%c2_284, %c0_285, %c0_286] : memref<6x1x32xf32, #tpu.memory_space<vmem>>, vector<1x1x32xf32>
    %550 = vector.shape_cast %549 : vector<1x1x32xf32> to vector<1x32xf32>
    %cst_287 = arith.constant dense<0.000000e+00> : vector<16xf32>
    %551 = vector.multi_reduction <add>, %546, %cst_287 [1] : vector<16x32xf32> to vector<16xf32>
    %552 = vector.shape_cast %551 : vector<16xf32> to vector<16x1xf32>
    %cst_288 = arith.constant 3.200000e+01 : f32
    %553 = vector.broadcast %cst_288 : f32 to vector<16x1xf32>
    %554 = arith.divf %552, %553 : vector<16x1xf32>
    %555 = arith.mulf %546, %546 : vector<16x32xf32>
    %cst_289 = arith.constant dense<0.000000e+00> : vector<16xf32>
    %556 = vector.multi_reduction <add>, %555, %cst_289 [1] : vector<16x32xf32> to vector<16xf32>
    %557 = vector.shape_cast %556 : vector<16xf32> to vector<16x1xf32>
    %cst_290 = arith.constant 3.200000e+01 : f32
    %558 = vector.broadcast %cst_290 : f32 to vector<16x1xf32>
    %559 = arith.divf %557, %558 : vector<16x1xf32>
    %560 = arith.mulf %554, %554 : vector<16x1xf32>
    %561 = arith.subf %559, %560 : vector<16x1xf32>
    %562 = vector.broadcast %554 : vector<16x1xf32> to vector<16x32xf32>
    %563 = arith.subf %546, %562 : vector<16x32xf32>
    %cst_291 = arith.constant 9.99999996E-13 : f32
    %564 = vector.broadcast %cst_291 : f32 to vector<16x1xf32>
    %565 = arith.addf %561, %564 : vector<16x1xf32>
    %566 = math.rsqrt %565 : vector<16x1xf32>
    %567 = vector.broadcast %566 : vector<16x1xf32> to vector<16x32xf32>
    %568 = arith.mulf %563, %567 : vector<16x32xf32>
    %569 = vector.broadcast %548 : vector<1x32xf32> to vector<16x32xf32>
    %570 = arith.mulf %568, %569 : vector<16x32xf32>
    %571 = vector.broadcast %550 : vector<1x32xf32> to vector<16x32xf32>
    %572 = arith.addf %570, %571 : vector<16x32xf32>
    %c3_292 = arith.constant 3 : index
    %c0_293 = arith.constant 0 : index
    %c0_294 = arith.constant 0 : index
    %573 = vector.load %arg25[%c3_292, %c0_293, %c0_294] : memref<7x16x32xf32, #tpu.memory_space<vmem>>, vector<1x16x32xf32>
    %574 = vector.shape_cast %573 : vector<1x16x32xf32> to vector<16x32xf32>
    %575 = vector.shape_cast %572 : vector<16x32xf32> to vector<1x16x32xf32>
    tpu.vector_store %arg25[%c3_292, %c0_293, %c0_294], %575 {strides = array<i32>} : memref<7x16x32xf32, #tpu.memory_space<vmem>>, vector<1x16x32xf32>,
    %576 = vector.shape_cast %572 : vector<16x32xf32> to vector<2x8x32xf32>
    %577 = vector.extract_strided_slice %576 {offsets = [0, 0, 0], sizes = [2, 1, 32], strides = [1, 1, 1]} : vector<2x8x32xf32> to vector<2x1x32xf32>
    %578 = vector.shape_cast %577 : vector<2x1x32xf32> to vector<2x32xf32>
    %c3_295 = arith.constant 3 : index
    %c0_296 = arith.constant 0 : index
    %c0_297 = arith.constant 0 : index
    %579 = vector.load %arg22[%c3_295, %c0_296, %c0_297] : memref<6x32x16xf32, #tpu.memory_space<vmem>>, vector<1x32x16xf32>
    %580 = vector.shape_cast %579 : vector<1x32x16xf32> to vector<32x16xf32>
    %cst_298 = arith.constant dense<0.000000e+00> : vector<2x16xf32>
    %581 = tpu.matmul %578, %580, %cst_298 {dimension_numbers = #tpu.dot_dimension_numbers<[1], [0], [0], [1], [0, 0, 1, 1], [], []>} : vector<2x32xf32>, vector<32x16xf32>, vector<2x16xf32> -> vector<2x16xf32>
    %582 = arith.addf %404, %581 : vector<2x16xf32>
    %c3_299 = arith.constant 3 : index
    %c0_300 = arith.constant 0 : index
    %c0_301 = arith.constant 0 : index
    %583 = vector.load %arg6[%c3_299, %c0_300, %c0_301] : memref<6x32x32xf32, #tpu.memory_space<vmem>>, vector<1x32x32xf32>
    %584 = vector.shape_cast %583 : vector<1x32x32xf32> to vector<32x32xf32>
    %cst_302 = arith.constant dense<0.000000e+00> : vector<16x32xf32>
    %585 = tpu.matmul %572, %584, %cst_302 {dimension_numbers = #tpu.dot_dimension_numbers<[1], [0], [0], [1], [0, 0, 1, 1], [], []>} : vector<16x32xf32>, vector<32x32xf32>, vector<16x32xf32> -> vector<16x32xf32>
    %c3_303 = arith.constant 3 : index
    %c0_304 = arith.constant 0 : index
    %c0_305 = arith.constant 0 : index
    %586 = vector.load %arg7[%c3_303, %c0_304, %c0_305] : memref<6x1x32xf32, #tpu.memory_space<vmem>>, vector<1x1x32xf32>
    %587 = vector.shape_cast %586 : vector<1x1x32xf32> to vector<1x32xf32>
    %588 = vector.broadcast %587 : vector<1x32xf32> to vector<16x32xf32>
    %589 = arith.addf %585, %588 : vector<16x32xf32>
    %c3_306 = arith.constant 3 : index
    %c0_307 = arith.constant 0 : index
    %c0_308 = arith.constant 0 : index
    %590 = vector.load %arg8[%c3_306, %c0_307, %c0_308] : memref<6x32x32xf32, #tpu.memory_space<vmem>>, vector<1x32x32xf32>
    %591 = vector.shape_cast %590 : vector<1x32x32xf32> to vector<32x32xf32>
    %cst_309 = arith.constant dense<0.000000e+00> : vector<16x32xf32>
    %592 = tpu.matmul %572, %591, %cst_309 {dimension_numbers = #tpu.dot_dimension_numbers<[1], [0], [0], [1], [0, 0, 1, 1], [], []>} : vector<16x32xf32>, vector<32x32xf32>, vector<16x32xf32> -> vector<16x32xf32>
    %c3_310 = arith.constant 3 : index
    %c0_311 = arith.constant 0 : index
    %c0_312 = arith.constant 0 : index
    %593 = vector.load %arg9[%c3_310, %c0_311, %c0_312] : memref<6x1x32xf32, #tpu.memory_space<vmem>>, vector<1x1x32xf32>
    %594 = vector.shape_cast %593 : vector<1x1x32xf32> to vector<1x32xf32>
    %595 = vector.broadcast %594 : vector<1x32xf32> to vector<16x32xf32>
    %596 = arith.addf %592, %595 : vector<16x32xf32>
    %c3_313 = arith.constant 3 : index
    %c0_314 = arith.constant 0 : index
    %c0_315 = arith.constant 0 : index
    %597 = vector.load %arg10[%c3_313, %c0_314, %c0_315] : memref<6x32x32xf32, #tpu.memory_space<vmem>>, vector<1x32x32xf32>
    %598 = vector.shape_cast %597 : vector<1x32x32xf32> to vector<32x32xf32>
    %cst_316 = arith.constant dense<0.000000e+00> : vector<16x32xf32>
    %599 = tpu.matmul %572, %598, %cst_316 {dimension_numbers = #tpu.dot_dimension_numbers<[1], [0], [0], [1], [0, 0, 1, 1], [], []>} : vector<16x32xf32>, vector<32x32xf32>, vector<16x32xf32> -> vector<16x32xf32>
    %c3_317 = arith.constant 3 : index
    %c0_318 = arith.constant 0 : index
    %c0_319 = arith.constant 0 : index
    %600 = vector.load %arg11[%c3_317, %c0_318, %c0_319] : memref<6x1x32xf32, #tpu.memory_space<vmem>>, vector<1x1x32xf32>
    %601 = vector.shape_cast %600 : vector<1x1x32xf32> to vector<1x32xf32>
    %602 = vector.broadcast %601 : vector<1x32xf32> to vector<16x32xf32>
    %603 = arith.addf %599, %602 : vector<16x32xf32>
    %604 = vector.shape_cast %589 : vector<16x32xf32> to vector<2x8x32xf32>
    %605 = vector.shape_cast %596 : vector<16x32xf32> to vector<2x8x32xf32>
    %606 = vector.shape_cast %603 : vector<16x32xf32> to vector<2x8x32xf32>
    %607 = arith.mulf %605, %7 : vector<2x8x32xf32>
    "tpu.trace_start"() <{level = 10 : i32, message = "bqd,bkd->bqk"}> : () -> ()
    %cst_320 = arith.constant dense<0.000000e+00> : vector<2x8x8xf32>
    %608 = tpu.matmul %604, %607, %cst_320 {dimension_numbers = #tpu.dot_dimension_numbers<[2], [2], [1], [1], [0, 0, 0, 1, 1, 1], [0], [0]>} : vector<2x8x32xf32>, vector<2x8x32xf32>, vector<2x8x8xf32> -> vector<2x8x8xf32>
    "tpu.trace_stop"() : () -> ()
    %cst_321 = arith.constant 0.353553385 : f32
    %609 = vector.broadcast %cst_321 : f32 to vector<2x8x8xf32>
    %610 = arith.mulf %608, %609 : vector<2x8x8xf32>
    %611 = arith.addf %610, %3 : vector<2x8x8xf32>
    %612 = math.exp %611 : vector<2x8x8xf32>
    %cst_322 = arith.constant dense<0.000000e+00> : vector<2x8xf32>
    %613 = vector.multi_reduction <add>, %612, %cst_322 [2] : vector<2x8x8xf32> to vector<2x8xf32>
    %614 = vector.shape_cast %613 : vector<2x8xf32> to vector<2x8x1xf32>
    %615 = tpu.reciprocal %614 {approx = true} : vector<2x8x1xf32> -> vector<2x8x1xf32>
    %616 = vector.broadcast %615 : vector<2x8x1xf32> to vector<2x8x8xf32>
    %617 = arith.mulf %612, %616 : vector<2x8x8xf32>
    "tpu.trace_start"() <{level = 10 : i32, message = "bqk,bkd->bqd"}> : () -> ()
    %cst_323 = arith.constant dense<0.000000e+00> : vector<2x8x32xf32>
    %618 = tpu.matmul %617, %606, %cst_323 {dimension_numbers = #tpu.dot_dimension_numbers<[2], [1], [1], [2], [0, 0, 0, 1, 1, 2], [0], [0]>} : vector<2x8x8xf32>, vector<2x8x32xf32>, vector<2x8x32xf32> -> vector<2x8x32xf32>
    "tpu.trace_stop"() : () -> ()
    %619 = arith.mulf %618, %7 : vector<2x8x32xf32>
    %620 = arith.mulf %605, %11 : vector<2x8x32xf32>
    "tpu.trace_start"() <{level = 10 : i32, message = "bqd,bkd->bqk"}> : () -> ()
    %cst_324 = arith.constant dense<0.000000e+00> : vector<2x8x8xf32>
    %621 = tpu.matmul %604, %620, %cst_324 {dimension_numbers = #tpu.dot_dimension_numbers<[2], [2], [1], [1], [0, 0, 0, 1, 1, 1], [0], [0]>} : vector<2x8x32xf32>, vector<2x8x32xf32>, vector<2x8x8xf32> -> vector<2x8x8xf32>
    "tpu.trace_stop"() : () -> ()
    %cst_325 = arith.constant 0.353553385 : f32
    %622 = vector.broadcast %cst_325 : f32 to vector<2x8x8xf32>
    %623 = arith.mulf %621, %622 : vector<2x8x8xf32>
    %624 = arith.addf %623, %3 : vector<2x8x8xf32>
    %625 = math.exp %624 : vector<2x8x8xf32>
    %cst_326 = arith.constant dense<0.000000e+00> : vector<2x8xf32>
    %626 = vector.multi_reduction <add>, %625, %cst_326 [2] : vector<2x8x8xf32> to vector<2x8xf32>
    %627 = vector.shape_cast %626 : vector<2x8xf32> to vector<2x8x1xf32>
    %628 = tpu.reciprocal %627 {approx = true} : vector<2x8x1xf32> -> vector<2x8x1xf32>
    %629 = vector.broadcast %628 : vector<2x8x1xf32> to vector<2x8x8xf32>
    %630 = arith.mulf %625, %629 : vector<2x8x8xf32>
    "tpu.trace_start"() <{level = 10 : i32, message = "bqk,bkd->bqd"}> : () -> ()
    %cst_327 = arith.constant dense<0.000000e+00> : vector<2x8x32xf32>
    %631 = tpu.matmul %630, %606, %cst_327 {dimension_numbers = #tpu.dot_dimension_numbers<[2], [1], [1], [2], [0, 0, 0, 1, 1, 2], [0], [0]>} : vector<2x8x8xf32>, vector<2x8x32xf32>, vector<2x8x32xf32> -> vector<2x8x32xf32>
    "tpu.trace_stop"() : () -> ()
    %632 = arith.mulf %631, %11 : vector<2x8x32xf32>
    %633 = arith.addf %619, %632 : vector<2x8x32xf32>
    %634 = arith.mulf %605, %15 : vector<2x8x32xf32>
    "tpu.trace_start"() <{level = 10 : i32, message = "bqd,bkd->bqk"}> : () -> ()
    %cst_328 = arith.constant dense<0.000000e+00> : vector<2x8x8xf32>
    %635 = tpu.matmul %604, %634, %cst_328 {dimension_numbers = #tpu.dot_dimension_numbers<[2], [2], [1], [1], [0, 0, 0, 1, 1, 1], [0], [0]>} : vector<2x8x32xf32>, vector<2x8x32xf32>, vector<2x8x8xf32> -> vector<2x8x8xf32>
    "tpu.trace_stop"() : () -> ()
    %cst_329 = arith.constant 0.353553385 : f32
    %636 = vector.broadcast %cst_329 : f32 to vector<2x8x8xf32>
    %637 = arith.mulf %635, %636 : vector<2x8x8xf32>
    %638 = arith.addf %637, %3 : vector<2x8x8xf32>
    %639 = math.exp %638 : vector<2x8x8xf32>
    %cst_330 = arith.constant dense<0.000000e+00> : vector<2x8xf32>
    %640 = vector.multi_reduction <add>, %639, %cst_330 [2] : vector<2x8x8xf32> to vector<2x8xf32>
    %641 = vector.shape_cast %640 : vector<2x8xf32> to vector<2x8x1xf32>
    %642 = tpu.reciprocal %641 {approx = true} : vector<2x8x1xf32> -> vector<2x8x1xf32>
    %643 = vector.broadcast %642 : vector<2x8x1xf32> to vector<2x8x8xf32>
    %644 = arith.mulf %639, %643 : vector<2x8x8xf32>
    "tpu.trace_start"() <{level = 10 : i32, message = "bqk,bkd->bqd"}> : () -> ()
    %cst_331 = arith.constant dense<0.000000e+00> : vector<2x8x32xf32>
    %645 = tpu.matmul %644, %606, %cst_331 {dimension_numbers = #tpu.dot_dimension_numbers<[2], [1], [1], [2], [0, 0, 0, 1, 1, 2], [0], [0]>} : vector<2x8x8xf32>, vector<2x8x32xf32>, vector<2x8x32xf32> -> vector<2x8x32xf32>
    "tpu.trace_stop"() : () -> ()
    %646 = arith.mulf %645, %15 : vector<2x8x32xf32>
    %647 = arith.addf %633, %646 : vector<2x8x32xf32>
    %648 = arith.mulf %605, %19 : vector<2x8x32xf32>
    "tpu.trace_start"() <{level = 10 : i32, message = "bqd,bkd->bqk"}> : () -> ()
    %cst_332 = arith.constant dense<0.000000e+00> : vector<2x8x8xf32>
    %649 = tpu.matmul %604, %648, %cst_332 {dimension_numbers = #tpu.dot_dimension_numbers<[2], [2], [1], [1], [0, 0, 0, 1, 1, 1], [0], [0]>} : vector<2x8x32xf32>, vector<2x8x32xf32>, vector<2x8x8xf32> -> vector<2x8x8xf32>
    "tpu.trace_stop"() : () -> ()
    %cst_333 = arith.constant 0.353553385 : f32
    %650 = vector.broadcast %cst_333 : f32 to vector<2x8x8xf32>
    %651 = arith.mulf %649, %650 : vector<2x8x8xf32>
    %652 = arith.addf %651, %3 : vector<2x8x8xf32>
    %653 = math.exp %652 : vector<2x8x8xf32>
    %cst_334 = arith.constant dense<0.000000e+00> : vector<2x8xf32>
    %654 = vector.multi_reduction <add>, %653, %cst_334 [2] : vector<2x8x8xf32> to vector<2x8xf32>
    %655 = vector.shape_cast %654 : vector<2x8xf32> to vector<2x8x1xf32>
    %656 = tpu.reciprocal %655 {approx = true} : vector<2x8x1xf32> -> vector<2x8x1xf32>
    %657 = vector.broadcast %656 : vector<2x8x1xf32> to vector<2x8x8xf32>
    %658 = arith.mulf %653, %657 : vector<2x8x8xf32>
    "tpu.trace_start"() <{level = 10 : i32, message = "bqk,bkd->bqd"}> : () -> ()
    %cst_335 = arith.constant dense<0.000000e+00> : vector<2x8x32xf32>
    %659 = tpu.matmul %658, %606, %cst_335 {dimension_numbers = #tpu.dot_dimension_numbers<[2], [1], [1], [2], [0, 0, 0, 1, 1, 2], [0], [0]>} : vector<2x8x8xf32>, vector<2x8x32xf32>, vector<2x8x32xf32> -> vector<2x8x32xf32>
    "tpu.trace_stop"() : () -> ()
    %660 = arith.mulf %659, %19 : vector<2x8x32xf32>
    %661 = arith.addf %647, %660 : vector<2x8x32xf32>
    %662 = vector.shape_cast %661 : vector<2x8x32xf32> to vector<16x32xf32>
    %c3_336 = arith.constant 3 : index
    %c0_337 = arith.constant 0 : index
    %c0_338 = arith.constant 0 : index
    %663 = vector.load %arg12[%c3_336, %c0_337, %c0_338] : memref<6x32x32xf32, #tpu.memory_space<vmem>>, vector<1x32x32xf32>
    %664 = vector.shape_cast %663 : vector<1x32x32xf32> to vector<32x32xf32>
    %cst_339 = arith.constant dense<0.000000e+00> : vector<16x32xf32>
    %665 = tpu.matmul %662, %664, %cst_339 {dimension_numbers = #tpu.dot_dimension_numbers<[1], [0], [0], [1], [0, 0, 1, 1], [], []>} : vector<16x32xf32>, vector<32x32xf32>, vector<16x32xf32> -> vector<16x32xf32>
    %c3_340 = arith.constant 3 : index
    %c0_341 = arith.constant 0 : index
    %c0_342 = arith.constant 0 : index
    %666 = vector.load %arg13[%c3_340, %c0_341, %c0_342] : memref<6x1x32xf32, #tpu.memory_space<vmem>>, vector<1x1x32xf32>
    %667 = vector.shape_cast %666 : vector<1x1x32xf32> to vector<1x32xf32>
    %668 = vector.broadcast %667 : vector<1x32xf32> to vector<16x32xf32>
    %669 = arith.addf %665, %668 : vector<16x32xf32>
    %670 = arith.addf %669, %572 : vector<16x32xf32>
    %c3_343 = arith.constant 3 : index
    %c0_344 = arith.constant 0 : index
    %c0_345 = arith.constant 0 : index
    %671 = vector.load %arg14[%c3_343, %c0_344, %c0_345] : memref<6x1x32xf32, #tpu.memory_space<vmem>>, vector<1x1x32xf32>
    %672 = vector.shape_cast %671 : vector<1x1x32xf32> to vector<1x32xf32>
    %c3_346 = arith.constant 3 : index
    %c0_347 = arith.constant 0 : index
    %c0_348 = arith.constant 0 : index
    %673 = vector.load %arg15[%c3_346, %c0_347, %c0_348] : memref<6x1x32xf32, #tpu.memory_space<vmem>>, vector<1x1x32xf32>
    %674 = vector.shape_cast %673 : vector<1x1x32xf32> to vector<1x32xf32>
    %cst_349 = arith.constant dense<0.000000e+00> : vector<16xf32>
    %675 = vector.multi_reduction <add>, %670, %cst_349 [1] : vector<16x32xf32> to vector<16xf32>
    %676 = vector.shape_cast %675 : vector<16xf32> to vector<16x1xf32>
    %cst_350 = arith.constant 3.200000e+01 : f32
    %677 = vector.broadcast %cst_350 : f32 to vector<16x1xf32>
    %678 = arith.divf %676, %677 : vector<16x1xf32>
    %679 = arith.mulf %670, %670 : vector<16x32xf32>
    %cst_351 = arith.constant dense<0.000000e+00> : vector<16xf32>
    %680 = vector.multi_reduction <add>, %679, %cst_351 [1] : vector<16x32xf32> to vector<16xf32>
    %681 = vector.shape_cast %680 : vector<16xf32> to vector<16x1xf32>
    %cst_352 = arith.constant 3.200000e+01 : f32
    %682 = vector.broadcast %cst_352 : f32 to vector<16x1xf32>
    %683 = arith.divf %681, %682 : vector<16x1xf32>
    %684 = arith.mulf %678, %678 : vector<16x1xf32>
    %685 = arith.subf %683, %684 : vector<16x1xf32>
    %686 = vector.broadcast %678 : vector<16x1xf32> to vector<16x32xf32>
    %687 = arith.subf %670, %686 : vector<16x32xf32>
    %cst_353 = arith.constant 9.99999996E-13 : f32
    %688 = vector.broadcast %cst_353 : f32 to vector<16x1xf32>
    %689 = arith.addf %685, %688 : vector<16x1xf32>
    %690 = math.rsqrt %689 : vector<16x1xf32>
    %691 = vector.broadcast %690 : vector<16x1xf32> to vector<16x32xf32>
    %692 = arith.mulf %687, %691 : vector<16x32xf32>
    %693 = vector.broadcast %672 : vector<1x32xf32> to vector<16x32xf32>
    %694 = arith.mulf %692, %693 : vector<16x32xf32>
    %695 = vector.broadcast %674 : vector<1x32xf32> to vector<16x32xf32>
    %696 = arith.addf %694, %695 : vector<16x32xf32>
    %c3_354 = arith.constant 3 : index
    %c0_355 = arith.constant 0 : index
    %c0_356 = arith.constant 0 : index
    %697 = vector.load %arg16[%c3_354, %c0_355, %c0_356] : memref<6x32x64xf32, #tpu.memory_space<vmem>>, vector<1x32x64xf32>
    %698 = vector.shape_cast %697 : vector<1x32x64xf32> to vector<32x64xf32>
    %cst_357 = arith.constant dense<0.000000e+00> : vector<16x64xf32>
    %699 = tpu.matmul %696, %698, %cst_357 {dimension_numbers = #tpu.dot_dimension_numbers<[1], [0], [0], [1], [0, 0, 1, 1], [], []>} : vector<16x32xf32>, vector<32x64xf32>, vector<16x64xf32> -> vector<16x64xf32>
    %c3_358 = arith.constant 3 : index
    %c0_359 = arith.constant 0 : index
    %c0_360 = arith.constant 0 : index
    %700 = vector.load %arg17[%c3_358, %c0_359, %c0_360] : memref<6x1x64xf32, #tpu.memory_space<vmem>>, vector<1x1x64xf32>
    %701 = vector.shape_cast %700 : vector<1x1x64xf32> to vector<1x64xf32>
    %702 = vector.broadcast %701 : vector<1x64xf32> to vector<16x64xf32>
    %703 = arith.addf %699, %702 : vector<16x64xf32>
    %704 = arith.mulf %703, %703 : vector<16x64xf32>
    %705 = arith.mulf %703, %704 : vector<16x64xf32>
    %cst_361 = arith.constant 4.471500e-02 : f32
    %706 = vector.broadcast %cst_361 : f32 to vector<16x64xf32>
    %707 = arith.mulf %706, %705 : vector<16x64xf32>
    %708 = arith.addf %703, %707 : vector<16x64xf32>
    %cst_362 = arith.constant 0.797884583 : f32
    %709 = vector.broadcast %cst_362 : f32 to vector<16x64xf32>
    %710 = arith.mulf %709, %708 : vector<16x64xf32>
    %711 = math.tanh %710 : vector<16x64xf32>
    %cst_363 = arith.constant 1.000000e+00 : f32
    %712 = vector.broadcast %cst_363 : f32 to vector<16x64xf32>
    %713 = arith.addf %712, %711 : vector<16x64xf32>
    %cst_364 = arith.constant 5.000000e-01 : f32
    %714 = vector.broadcast %cst_364 : f32 to vector<16x64xf32>
    %715 = arith.mulf %714, %713 : vector<16x64xf32>
    %716 = arith.mulf %703, %715 : vector<16x64xf32>
    %c3_365 = arith.constant 3 : index
    %c0_366 = arith.constant 0 : index
    %c0_367 = arith.constant 0 : index
    %717 = vector.load %arg18[%c3_365, %c0_366, %c0_367] : memref<6x64x32xf32, #tpu.memory_space<vmem>>, vector<1x64x32xf32>
    %718 = vector.shape_cast %717 : vector<1x64x32xf32> to vector<64x32xf32>
    %cst_368 = arith.constant dense<0.000000e+00> : vector<16x32xf32>
    %719 = tpu.matmul %716, %718, %cst_368 {dimension_numbers = #tpu.dot_dimension_numbers<[1], [0], [0], [1], [0, 0, 1, 1], [], []>} : vector<16x64xf32>, vector<64x32xf32>, vector<16x32xf32> -> vector<16x32xf32>
    %c3_369 = arith.constant 3 : index
    %c0_370 = arith.constant 0 : index
    %c0_371 = arith.constant 0 : index
    %720 = vector.load %arg19[%c3_369, %c0_370, %c0_371] : memref<6x1x32xf32, #tpu.memory_space<vmem>>, vector<1x1x32xf32>
    %721 = vector.shape_cast %720 : vector<1x1x32xf32> to vector<1x32xf32>
    %722 = vector.broadcast %721 : vector<1x32xf32> to vector<16x32xf32>
    %723 = arith.addf %719, %722 : vector<16x32xf32>
    %724 = arith.addf %723, %696 : vector<16x32xf32>
    %c3_372 = arith.constant 3 : index
    %c0_373 = arith.constant 0 : index
    %c0_374 = arith.constant 0 : index
    %725 = vector.load %arg20[%c3_372, %c0_373, %c0_374] : memref<6x1x32xf32, #tpu.memory_space<vmem>>, vector<1x1x32xf32>
    %726 = vector.shape_cast %725 : vector<1x1x32xf32> to vector<1x32xf32>
    %c3_375 = arith.constant 3 : index
    %c0_376 = arith.constant 0 : index
    %c0_377 = arith.constant 0 : index
    %727 = vector.load %arg21[%c3_375, %c0_376, %c0_377] : memref<6x1x32xf32, #tpu.memory_space<vmem>>, vector<1x1x32xf32>
    %728 = vector.shape_cast %727 : vector<1x1x32xf32> to vector<1x32xf32>
    %cst_378 = arith.constant dense<0.000000e+00> : vector<16xf32>
    %729 = vector.multi_reduction <add>, %724, %cst_378 [1] : vector<16x32xf32> to vector<16xf32>
    %730 = vector.shape_cast %729 : vector<16xf32> to vector<16x1xf32>
    %cst_379 = arith.constant 3.200000e+01 : f32
    %731 = vector.broadcast %cst_379 : f32 to vector<16x1xf32>
    %732 = arith.divf %730, %731 : vector<16x1xf32>
    %733 = arith.mulf %724, %724 : vector<16x32xf32>
    %cst_380 = arith.constant dense<0.000000e+00> : vector<16xf32>
    %734 = vector.multi_reduction <add>, %733, %cst_380 [1] : vector<16x32xf32> to vector<16xf32>
    %735 = vector.shape_cast %734 : vector<16xf32> to vector<16x1xf32>
    %cst_381 = arith.constant 3.200000e+01 : f32
    %736 = vector.broadcast %cst_381 : f32 to vector<16x1xf32>
    %737 = arith.divf %735, %736 : vector<16x1xf32>
    %738 = arith.mulf %732, %732 : vector<16x1xf32>
    %739 = arith.subf %737, %738 : vector<16x1xf32>
    %740 = vector.broadcast %732 : vector<16x1xf32> to vector<16x32xf32>
    %741 = arith.subf %724, %740 : vector<16x32xf32>
    %cst_382 = arith.constant 9.99999996E-13 : f32
    %742 = vector.broadcast %cst_382 : f32 to vector<16x1xf32>
    %743 = arith.addf %739, %742 : vector<16x1xf32>
    %744 = math.rsqrt %743 : vector<16x1xf32>
    %745 = vector.broadcast %744 : vector<16x1xf32> to vector<16x32xf32>
    %746 = arith.mulf %741, %745 : vector<16x32xf32>
    %747 = vector.broadcast %726 : vector<1x32xf32> to vector<16x32xf32>
    %748 = arith.mulf %746, %747 : vector<16x32xf32>
    %749 = vector.broadcast %728 : vector<1x32xf32> to vector<16x32xf32>
    %750 = arith.addf %748, %749 : vector<16x32xf32>
    %c4_383 = arith.constant 4 : index
    %c0_384 = arith.constant 0 : index
    %c0_385 = arith.constant 0 : index
    %751 = vector.load %arg25[%c4_383, %c0_384, %c0_385] : memref<7x16x32xf32, #tpu.memory_space<vmem>>, vector<1x16x32xf32>
    %752 = vector.shape_cast %751 : vector<1x16x32xf32> to vector<16x32xf32>
    %753 = vector.shape_cast %750 : vector<16x32xf32> to vector<1x16x32xf32>
    tpu.vector_store %arg25[%c4_383, %c0_384, %c0_385], %753 {strides = array<i32>} : memref<7x16x32xf32, #tpu.memory_space<vmem>>, vector<1x16x32xf32>,
    %754 = vector.shape_cast %750 : vector<16x32xf32> to vector<2x8x32xf32>
    %755 = vector.extract_strided_slice %754 {offsets = [0, 0, 0], sizes = [2, 1, 32], strides = [1, 1, 1]} : vector<2x8x32xf32> to vector<2x1x32xf32>
    %756 = vector.shape_cast %755 : vector<2x1x32xf32> to vector<2x32xf32>
    %c2_386 = arith.constant 2 : index
    %c0_387 = arith.constant 0 : index
    %c0_388 = arith.constant 0 : index
    %757 = vector.load %arg22[%c2_386, %c0_387, %c0_388] : memref<6x32x16xf32, #tpu.memory_space<vmem>>, vector<1x32x16xf32>
    %758 = vector.shape_cast %757 : vector<1x32x16xf32> to vector<32x16xf32>
    %cst_389 = arith.constant dense<0.000000e+00> : vector<2x16xf32>
    %759 = tpu.matmul %756, %758, %cst_389 {dimension_numbers = #tpu.dot_dimension_numbers<[1], [0], [0], [1], [0, 0, 1, 1], [], []>} : vector<2x32xf32>, vector<32x16xf32>, vector<2x16xf32> -> vector<2x16xf32>
    %760 = arith.addf %582, %759 : vector<2x16xf32>
    %c4_390 = arith.constant 4 : index
    %c0_391 = arith.constant 0 : index
    %c0_392 = arith.constant 0 : index
    %761 = vector.load %arg6[%c4_390, %c0_391, %c0_392] : memref<6x32x32xf32, #tpu.memory_space<vmem>>, vector<1x32x32xf32>
    %762 = vector.shape_cast %761 : vector<1x32x32xf32> to vector<32x32xf32>
    %cst_393 = arith.constant dense<0.000000e+00> : vector<16x32xf32>
    %763 = tpu.matmul %750, %762, %cst_393 {dimension_numbers = #tpu.dot_dimension_numbers<[1], [0], [0], [1], [0, 0, 1, 1], [], []>} : vector<16x32xf32>, vector<32x32xf32>, vector<16x32xf32> -> vector<16x32xf32>
    %c4_394 = arith.constant 4 : index
    %c0_395 = arith.constant 0 : index
    %c0_396 = arith.constant 0 : index
    %764 = vector.load %arg7[%c4_394, %c0_395, %c0_396] : memref<6x1x32xf32, #tpu.memory_space<vmem>>, vector<1x1x32xf32>
    %765 = vector.shape_cast %764 : vector<1x1x32xf32> to vector<1x32xf32>
    %766 = vector.broadcast %765 : vector<1x32xf32> to vector<16x32xf32>
    %767 = arith.addf %763, %766 : vector<16x32xf32>
    %c4_397 = arith.constant 4 : index
    %c0_398 = arith.constant 0 : index
    %c0_399 = arith.constant 0 : index
    %768 = vector.load %arg8[%c4_397, %c0_398, %c0_399] : memref<6x32x32xf32, #tpu.memory_space<vmem>>, vector<1x32x32xf32>
    %769 = vector.shape_cast %768 : vector<1x32x32xf32> to vector<32x32xf32>
    %cst_400 = arith.constant dense<0.000000e+00> : vector<16x32xf32>
    %770 = tpu.matmul %750, %769, %cst_400 {dimension_numbers = #tpu.dot_dimension_numbers<[1], [0], [0], [1], [0, 0, 1, 1], [], []>} : vector<16x32xf32>, vector<32x32xf32>, vector<16x32xf32> -> vector<16x32xf32>
    %c4_401 = arith.constant 4 : index
    %c0_402 = arith.constant 0 : index
    %c0_403 = arith.constant 0 : index
    %771 = vector.load %arg9[%c4_401, %c0_402, %c0_403] : memref<6x1x32xf32, #tpu.memory_space<vmem>>, vector<1x1x32xf32>
    %772 = vector.shape_cast %771 : vector<1x1x32xf32> to vector<1x32xf32>
    %773 = vector.broadcast %772 : vector<1x32xf32> to vector<16x32xf32>
    %774 = arith.addf %770, %773 : vector<16x32xf32>
    %c4_404 = arith.constant 4 : index
    %c0_405 = arith.constant 0 : index
    %c0_406 = arith.constant 0 : index
    %775 = vector.load %arg10[%c4_404, %c0_405, %c0_406] : memref<6x32x32xf32, #tpu.memory_space<vmem>>, vector<1x32x32xf32>
    %776 = vector.shape_cast %775 : vector<1x32x32xf32> to vector<32x32xf32>
    %cst_407 = arith.constant dense<0.000000e+00> : vector<16x32xf32>
    %777 = tpu.matmul %750, %776, %cst_407 {dimension_numbers = #tpu.dot_dimension_numbers<[1], [0], [0], [1], [0, 0, 1, 1], [], []>} : vector<16x32xf32>, vector<32x32xf32>, vector<16x32xf32> -> vector<16x32xf32>
    %c4_408 = arith.constant 4 : index
    %c0_409 = arith.constant 0 : index
    %c0_410 = arith.constant 0 : index
    %778 = vector.load %arg11[%c4_408, %c0_409, %c0_410] : memref<6x1x32xf32, #tpu.memory_space<vmem>>, vector<1x1x32xf32>
    %779 = vector.shape_cast %778 : vector<1x1x32xf32> to vector<1x32xf32>
    %780 = vector.broadcast %779 : vector<1x32xf32> to vector<16x32xf32>
    %781 = arith.addf %777, %780 : vector<16x32xf32>
    %782 = vector.shape_cast %767 : vector<16x32xf32> to vector<2x8x32xf32>
    %783 = vector.shape_cast %774 : vector<16x32xf32> to vector<2x8x32xf32>
    %784 = vector.shape_cast %781 : vector<16x32xf32> to vector<2x8x32xf32>
    %785 = arith.mulf %783, %7 : vector<2x8x32xf32>
    "tpu.trace_start"() <{level = 10 : i32, message = "bqd,bkd->bqk"}> : () -> ()
    %cst_411 = arith.constant dense<0.000000e+00> : vector<2x8x8xf32>
    %786 = tpu.matmul %782, %785, %cst_411 {dimension_numbers = #tpu.dot_dimension_numbers<[2], [2], [1], [1], [0, 0, 0, 1, 1, 1], [0], [0]>} : vector<2x8x32xf32>, vector<2x8x32xf32>, vector<2x8x8xf32> -> vector<2x8x8xf32>
    "tpu.trace_stop"() : () -> ()
    %cst_412 = arith.constant 0.353553385 : f32
    %787 = vector.broadcast %cst_412 : f32 to vector<2x8x8xf32>
    %788 = arith.mulf %786, %787 : vector<2x8x8xf32>
    %789 = arith.addf %788, %3 : vector<2x8x8xf32>
    %790 = math.exp %789 : vector<2x8x8xf32>
    %cst_413 = arith.constant dense<0.000000e+00> : vector<2x8xf32>
    %791 = vector.multi_reduction <add>, %790, %cst_413 [2] : vector<2x8x8xf32> to vector<2x8xf32>
    %792 = vector.shape_cast %791 : vector<2x8xf32> to vector<2x8x1xf32>
    %793 = tpu.reciprocal %792 {approx = true} : vector<2x8x1xf32> -> vector<2x8x1xf32>
    %794 = vector.broadcast %793 : vector<2x8x1xf32> to vector<2x8x8xf32>
    %795 = arith.mulf %790, %794 : vector<2x8x8xf32>
    "tpu.trace_start"() <{level = 10 : i32, message = "bqk,bkd->bqd"}> : () -> ()
    %cst_414 = arith.constant dense<0.000000e+00> : vector<2x8x32xf32>
    %796 = tpu.matmul %795, %784, %cst_414 {dimension_numbers = #tpu.dot_dimension_numbers<[2], [1], [1], [2], [0, 0, 0, 1, 1, 2], [0], [0]>} : vector<2x8x8xf32>, vector<2x8x32xf32>, vector<2x8x32xf32> -> vector<2x8x32xf32>
    "tpu.trace_stop"() : () -> ()
    %797 = arith.mulf %796, %7 : vector<2x8x32xf32>
    %798 = arith.mulf %783, %11 : vector<2x8x32xf32>
    "tpu.trace_start"() <{level = 10 : i32, message = "bqd,bkd->bqk"}> : () -> ()
    %cst_415 = arith.constant dense<0.000000e+00> : vector<2x8x8xf32>
    %799 = tpu.matmul %782, %798, %cst_415 {dimension_numbers = #tpu.dot_dimension_numbers<[2], [2], [1], [1], [0, 0, 0, 1, 1, 1], [0], [0]>} : vector<2x8x32xf32>, vector<2x8x32xf32>, vector<2x8x8xf32> -> vector<2x8x8xf32>
    "tpu.trace_stop"() : () -> ()
    %cst_416 = arith.constant 0.353553385 : f32
    %800 = vector.broadcast %cst_416 : f32 to vector<2x8x8xf32>
    %801 = arith.mulf %799, %800 : vector<2x8x8xf32>
    %802 = arith.addf %801, %3 : vector<2x8x8xf32>
    %803 = math.exp %802 : vector<2x8x8xf32>
    %cst_417 = arith.constant dense<0.000000e+00> : vector<2x8xf32>
    %804 = vector.multi_reduction <add>, %803, %cst_417 [2] : vector<2x8x8xf32> to vector<2x8xf32>
    %805 = vector.shape_cast %804 : vector<2x8xf32> to vector<2x8x1xf32>
    %806 = tpu.reciprocal %805 {approx = true} : vector<2x8x1xf32> -> vector<2x8x1xf32>
    %807 = vector.broadcast %806 : vector<2x8x1xf32> to vector<2x8x8xf32>
    %808 = arith.mulf %803, %807 : vector<2x8x8xf32>
    "tpu.trace_start"() <{level = 10 : i32, message = "bqk,bkd->bqd"}> : () -> ()
    %cst_418 = arith.constant dense<0.000000e+00> : vector<2x8x32xf32>
    %809 = tpu.matmul %808, %784, %cst_418 {dimension_numbers = #tpu.dot_dimension_numbers<[2], [1], [1], [2], [0, 0, 0, 1, 1, 2], [0], [0]>} : vector<2x8x8xf32>, vector<2x8x32xf32>, vector<2x8x32xf32> -> vector<2x8x32xf32>
    "tpu.trace_stop"() : () -> ()
    %810 = arith.mulf %809, %11 : vector<2x8x32xf32>
    %811 = arith.addf %797, %810 : vector<2x8x32xf32>
    %812 = arith.mulf %783, %15 : vector<2x8x32xf32>
    "tpu.trace_start"() <{level = 10 : i32, message = "bqd,bkd->bqk"}> : () -> ()
    %cst_419 = arith.constant dense<0.000000e+00> : vector<2x8x8xf32>
    %813 = tpu.matmul %782, %812, %cst_419 {dimension_numbers = #tpu.dot_dimension_numbers<[2], [2], [1], [1], [0, 0, 0, 1, 1, 1], [0], [0]>} : vector<2x8x32xf32>, vector<2x8x32xf32>, vector<2x8x8xf32> -> vector<2x8x8xf32>
    "tpu.trace_stop"() : () -> ()
    %cst_420 = arith.constant 0.353553385 : f32
    %814 = vector.broadcast %cst_420 : f32 to vector<2x8x8xf32>
    %815 = arith.mulf %813, %814 : vector<2x8x8xf32>
    %816 = arith.addf %815, %3 : vector<2x8x8xf32>
    %817 = math.exp %816 : vector<2x8x8xf32>
    %cst_421 = arith.constant dense<0.000000e+00> : vector<2x8xf32>
    %818 = vector.multi_reduction <add>, %817, %cst_421 [2] : vector<2x8x8xf32> to vector<2x8xf32>
    %819 = vector.shape_cast %818 : vector<2x8xf32> to vector<2x8x1xf32>
    %820 = tpu.reciprocal %819 {approx = true} : vector<2x8x1xf32> -> vector<2x8x1xf32>
    %821 = vector.broadcast %820 : vector<2x8x1xf32> to vector<2x8x8xf32>
    %822 = arith.mulf %817, %821 : vector<2x8x8xf32>
    "tpu.trace_start"() <{level = 10 : i32, message = "bqk,bkd->bqd"}> : () -> ()
    %cst_422 = arith.constant dense<0.000000e+00> : vector<2x8x32xf32>
    %823 = tpu.matmul %822, %784, %cst_422 {dimension_numbers = #tpu.dot_dimension_numbers<[2], [1], [1], [2], [0, 0, 0, 1, 1, 2], [0], [0]>} : vector<2x8x8xf32>, vector<2x8x32xf32>, vector<2x8x32xf32> -> vector<2x8x32xf32>
    "tpu.trace_stop"() : () -> ()
    %824 = arith.mulf %823, %15 : vector<2x8x32xf32>
    %825 = arith.addf %811, %824 : vector<2x8x32xf32>
    %826 = arith.mulf %783, %19 : vector<2x8x32xf32>
    "tpu.trace_start"() <{level = 10 : i32, message = "bqd,bkd->bqk"}> : () -> ()
    %cst_423 = arith.constant dense<0.000000e+00> : vector<2x8x8xf32>
    %827 = tpu.matmul %782, %826, %cst_423 {dimension_numbers = #tpu.dot_dimension_numbers<[2], [2], [1], [1], [0, 0, 0, 1, 1, 1], [0], [0]>} : vector<2x8x32xf32>, vector<2x8x32xf32>, vector<2x8x8xf32> -> vector<2x8x8xf32>
    "tpu.trace_stop"() : () -> ()
    %cst_424 = arith.constant 0.353553385 : f32
    %828 = vector.broadcast %cst_424 : f32 to vector<2x8x8xf32>
    %829 = arith.mulf %827, %828 : vector<2x8x8xf32>
    %830 = arith.addf %829, %3 : vector<2x8x8xf32>
    %831 = math.exp %830 : vector<2x8x8xf32>
    %cst_425 = arith.constant dense<0.000000e+00> : vector<2x8xf32>
    %832 = vector.multi_reduction <add>, %831, %cst_425 [2] : vector<2x8x8xf32> to vector<2x8xf32>
    %833 = vector.shape_cast %832 : vector<2x8xf32> to vector<2x8x1xf32>
    %834 = tpu.reciprocal %833 {approx = true} : vector<2x8x1xf32> -> vector<2x8x1xf32>
    %835 = vector.broadcast %834 : vector<2x8x1xf32> to vector<2x8x8xf32>
    %836 = arith.mulf %831, %835 : vector<2x8x8xf32>
    "tpu.trace_start"() <{level = 10 : i32, message = "bqk,bkd->bqd"}> : () -> ()
    %cst_426 = arith.constant dense<0.000000e+00> : vector<2x8x32xf32>
    %837 = tpu.matmul %836, %784, %cst_426 {dimension_numbers = #tpu.dot_dimension_numbers<[2], [1], [1], [2], [0, 0, 0, 1, 1, 2], [0], [0]>} : vector<2x8x8xf32>, vector<2x8x32xf32>, vector<2x8x32xf32> -> vector<2x8x32xf32>
    "tpu.trace_stop"() : () -> ()
    %838 = arith.mulf %837, %19 : vector<2x8x32xf32>
    %839 = arith.addf %825, %838 : vector<2x8x32xf32>
    %840 = vector.shape_cast %839 : vector<2x8x32xf32> to vector<16x32xf32>
    %c4_427 = arith.constant 4 : index
    %c0_428 = arith.constant 0 : index
    %c0_429 = arith.constant 0 : index
    %841 = vector.load %arg12[%c4_427, %c0_428, %c0_429] : memref<6x32x32xf32, #tpu.memory_space<vmem>>, vector<1x32x32xf32>
    %842 = vector.shape_cast %841 : vector<1x32x32xf32> to vector<32x32xf32>
    %cst_430 = arith.constant dense<0.000000e+00> : vector<16x32xf32>
    %843 = tpu.matmul %840, %842, %cst_430 {dimension_numbers = #tpu.dot_dimension_numbers<[1], [0], [0], [1], [0, 0, 1, 1], [], []>} : vector<16x32xf32>, vector<32x32xf32>, vector<16x32xf32> -> vector<16x32xf32>
    %c4_431 = arith.constant 4 : index
    %c0_432 = arith.constant 0 : index
    %c0_433 = arith.constant 0 : index
    %844 = vector.load %arg13[%c4_431, %c0_432, %c0_433] : memref<6x1x32xf32, #tpu.memory_space<vmem>>, vector<1x1x32xf32>
    %845 = vector.shape_cast %844 : vector<1x1x32xf32> to vector<1x32xf32>
    %846 = vector.broadcast %845 : vector<1x32xf32> to vector<16x32xf32>
    %847 = arith.addf %843, %846 : vector<16x32xf32>
    %848 = arith.addf %847, %750 : vector<16x32xf32>
    %c4_434 = arith.constant 4 : index
    %c0_435 = arith.constant 0 : index
    %c0_436 = arith.constant 0 : index
    %849 = vector.load %arg14[%c4_434, %c0_435, %c0_436] : memref<6x1x32xf32, #tpu.memory_space<vmem>>, vector<1x1x32xf32>
    %850 = vector.shape_cast %849 : vector<1x1x32xf32> to vector<1x32xf32>
    %c4_437 = arith.constant 4 : index
    %c0_438 = arith.constant 0 : index
    %c0_439 = arith.constant 0 : index
    %851 = vector.load %arg15[%c4_437, %c0_438, %c0_439] : memref<6x1x32xf32, #tpu.memory_space<vmem>>, vector<1x1x32xf32>
    %852 = vector.shape_cast %851 : vector<1x1x32xf32> to vector<1x32xf32>
    %cst_440 = arith.constant dense<0.000000e+00> : vector<16xf32>
    %853 = vector.multi_reduction <add>, %848, %cst_440 [1] : vector<16x32xf32> to vector<16xf32>
    %854 = vector.shape_cast %853 : vector<16xf32> to vector<16x1xf32>
    %cst_441 = arith.constant 3.200000e+01 : f32
    %855 = vector.broadcast %cst_441 : f32 to vector<16x1xf32>
    %856 = arith.divf %854, %855 : vector<16x1xf32>
    %857 = arith.mulf %848, %848 : vector<16x32xf32>
    %cst_442 = arith.constant dense<0.000000e+00> : vector<16xf32>
    %858 = vector.multi_reduction <add>, %857, %cst_442 [1] : vector<16x32xf32> to vector<16xf32>
    %859 = vector.shape_cast %858 : vector<16xf32> to vector<16x1xf32>
    %cst_443 = arith.constant 3.200000e+01 : f32
    %860 = vector.broadcast %cst_443 : f32 to vector<16x1xf32>
    %861 = arith.divf %859, %860 : vector<16x1xf32>
    %862 = arith.mulf %856, %856 : vector<16x1xf32>
    %863 = arith.subf %861, %862 : vector<16x1xf32>
    %864 = vector.broadcast %856 : vector<16x1xf32> to vector<16x32xf32>
    %865 = arith.subf %848, %864 : vector<16x32xf32>
    %cst_444 = arith.constant 9.99999996E-13 : f32
    %866 = vector.broadcast %cst_444 : f32 to vector<16x1xf32>
    %867 = arith.addf %863, %866 : vector<16x1xf32>
    %868 = math.rsqrt %867 : vector<16x1xf32>
    %869 = vector.broadcast %868 : vector<16x1xf32> to vector<16x32xf32>
    %870 = arith.mulf %865, %869 : vector<16x32xf32>
    %871 = vector.broadcast %850 : vector<1x32xf32> to vector<16x32xf32>
    %872 = arith.mulf %870, %871 : vector<16x32xf32>
    %873 = vector.broadcast %852 : vector<1x32xf32> to vector<16x32xf32>
    %874 = arith.addf %872, %873 : vector<16x32xf32>
    %c4_445 = arith.constant 4 : index
    %c0_446 = arith.constant 0 : index
    %c0_447 = arith.constant 0 : index
    %875 = vector.load %arg16[%c4_445, %c0_446, %c0_447] : memref<6x32x64xf32, #tpu.memory_space<vmem>>, vector<1x32x64xf32>
    %876 = vector.shape_cast %875 : vector<1x32x64xf32> to vector<32x64xf32>
    %cst_448 = arith.constant dense<0.000000e+00> : vector<16x64xf32>
    %877 = tpu.matmul %874, %876, %cst_448 {dimension_numbers = #tpu.dot_dimension_numbers<[1], [0], [0], [1], [0, 0, 1, 1], [], []>} : vector<16x32xf32>, vector<32x64xf32>, vector<16x64xf32> -> vector<16x64xf32>
    %c4_449 = arith.constant 4 : index
    %c0_450 = arith.constant 0 : index
    %c0_451 = arith.constant 0 : index
    %878 = vector.load %arg17[%c4_449, %c0_450, %c0_451] : memref<6x1x64xf32, #tpu.memory_space<vmem>>, vector<1x1x64xf32>
    %879 = vector.shape_cast %878 : vector<1x1x64xf32> to vector<1x64xf32>
    %880 = vector.broadcast %879 : vector<1x64xf32> to vector<16x64xf32>
    %881 = arith.addf %877, %880 : vector<16x64xf32>
    %882 = arith.mulf %881, %881 : vector<16x64xf32>
    %883 = arith.mulf %881, %882 : vector<16x64xf32>
    %cst_452 = arith.constant 4.471500e-02 : f32
    %884 = vector.broadcast %cst_452 : f32 to vector<16x64xf32>
    %885 = arith.mulf %884, %883 : vector<16x64xf32>
    %886 = arith.addf %881, %885 : vector<16x64xf32>
    %cst_453 = arith.constant 0.797884583 : f32
    %887 = vector.broadcast %cst_453 : f32 to vector<16x64xf32>
    %888 = arith.mulf %887, %886 : vector<16x64xf32>
    %889 = math.tanh %888 : vector<16x64xf32>
    %cst_454 = arith.constant 1.000000e+00 : f32
    %890 = vector.broadcast %cst_454 : f32 to vector<16x64xf32>
    %891 = arith.addf %890, %889 : vector<16x64xf32>
    %cst_455 = arith.constant 5.000000e-01 : f32
    %892 = vector.broadcast %cst_455 : f32 to vector<16x64xf32>
    %893 = arith.mulf %892, %891 : vector<16x64xf32>
    %894 = arith.mulf %881, %893 : vector<16x64xf32>
    %c4_456 = arith.constant 4 : index
    %c0_457 = arith.constant 0 : index
    %c0_458 = arith.constant 0 : index
    %895 = vector.load %arg18[%c4_456, %c0_457, %c0_458] : memref<6x64x32xf32, #tpu.memory_space<vmem>>, vector<1x64x32xf32>
    %896 = vector.shape_cast %895 : vector<1x64x32xf32> to vector<64x32xf32>
    %cst_459 = arith.constant dense<0.000000e+00> : vector<16x32xf32>
    %897 = tpu.matmul %894, %896, %cst_459 {dimension_numbers = #tpu.dot_dimension_numbers<[1], [0], [0], [1], [0, 0, 1, 1], [], []>} : vector<16x64xf32>, vector<64x32xf32>, vector<16x32xf32> -> vector<16x32xf32>
    %c4_460 = arith.constant 4 : index
    %c0_461 = arith.constant 0 : index
    %c0_462 = arith.constant 0 : index
    %898 = vector.load %arg19[%c4_460, %c0_461, %c0_462] : memref<6x1x32xf32, #tpu.memory_space<vmem>>, vector<1x1x32xf32>
    %899 = vector.shape_cast %898 : vector<1x1x32xf32> to vector<1x32xf32>
    %900 = vector.broadcast %899 : vector<1x32xf32> to vector<16x32xf32>
    %901 = arith.addf %897, %900 : vector<16x32xf32>
    %902 = arith.addf %901, %874 : vector<16x32xf32>
    %c4_463 = arith.constant 4 : index
    %c0_464 = arith.constant 0 : index
    %c0_465 = arith.constant 0 : index
    %903 = vector.load %arg20[%c4_463, %c0_464, %c0_465] : memref<6x1x32xf32, #tpu.memory_space<vmem>>, vector<1x1x32xf32>
    %904 = vector.shape_cast %903 : vector<1x1x32xf32> to vector<1x32xf32>
    %c4_466 = arith.constant 4 : index
    %c0_467 = arith.constant 0 : index
    %c0_468 = arith.constant 0 : index
    %905 = vector.load %arg21[%c4_466, %c0_467, %c0_468] : memref<6x1x32xf32, #tpu.memory_space<vmem>>, vector<1x1x32xf32>
    %906 = vector.shape_cast %905 : vector<1x1x32xf32> to vector<1x32xf32>
    %cst_469 = arith.constant dense<0.000000e+00> : vector<16xf32>
    %907 = vector.multi_reduction <add>, %902, %cst_469 [1] : vector<16x32xf32> to vector<16xf32>
    %908 = vector.shape_cast %907 : vector<16xf32> to vector<16x1xf32>
    %cst_470 = arith.constant 3.200000e+01 : f32
    %909 = vector.broadcast %cst_470 : f32 to vector<16x1xf32>
    %910 = arith.divf %908, %909 : vector<16x1xf32>
    %911 = arith.mulf %902, %902 : vector<16x32xf32>
    %cst_471 = arith.constant dense<0.000000e+00> : vector<16xf32>
    %912 = vector.multi_reduction <add>, %911, %cst_471 [1] : vector<16x32xf32> to vector<16xf32>
    %913 = vector.shape_cast %912 : vector<16xf32> to vector<16x1xf32>
    %cst_472 = arith.constant 3.200000e+01 : f32
    %914 = vector.broadcast %cst_472 : f32 to vector<16x1xf32>
    %915 = arith.divf %913, %914 : vector<16x1xf32>
    %916 = arith.mulf %910, %910 : vector<16x1xf32>
    %917 = arith.subf %915, %916 : vector<16x1xf32>
    %918 = vector.broadcast %910 : vector<16x1xf32> to vector<16x32xf32>
    %919 = arith.subf %902, %918 : vector<16x32xf32>
    %cst_473 = arith.constant 9.99999996E-13 : f32
    %920 = vector.broadcast %cst_473 : f32 to vector<16x1xf32>
    %921 = arith.addf %917, %920 : vector<16x1xf32>
    %922 = math.rsqrt %921 : vector<16x1xf32>
    %923 = vector.broadcast %922 : vector<16x1xf32> to vector<16x32xf32>
    %924 = arith.mulf %919, %923 : vector<16x32xf32>
    %925 = vector.broadcast %904 : vector<1x32xf32> to vector<16x32xf32>
    %926 = arith.mulf %924, %925 : vector<16x32xf32>
    %927 = vector.broadcast %906 : vector<1x32xf32> to vector<16x32xf32>
    %928 = arith.addf %926, %927 : vector<16x32xf32>
    %c5_474 = arith.constant 5 : index
    %c0_475 = arith.constant 0 : index
    %c0_476 = arith.constant 0 : index
    %929 = vector.load %arg25[%c5_474, %c0_475, %c0_476] : memref<7x16x32xf32, #tpu.memory_space<vmem>>, vector<1x16x32xf32>
    %930 = vector.shape_cast %929 : vector<1x16x32xf32> to vector<16x32xf32>
    %931 = vector.shape_cast %928 : vector<16x32xf32> to vector<1x16x32xf32>
    tpu.vector_store %arg25[%c5_474, %c0_475, %c0_476], %931 {strides = array<i32>} : memref<7x16x32xf32, #tpu.memory_space<vmem>>, vector<1x16x32xf32>,
    %932 = vector.shape_cast %928 : vector<16x32xf32> to vector<2x8x32xf32>
    %933 = vector.extract_strided_slice %932 {offsets = [0, 0, 0], sizes = [2, 1, 32], strides = [1, 1, 1]} : vector<2x8x32xf32> to vector<2x1x32xf32>
    %934 = vector.shape_cast %933 : vector<2x1x32xf32> to vector<2x32xf32>
    %c1_477 = arith.constant 1 : index
    %c0_478 = arith.constant 0 : index
    %c0_479 = arith.constant 0 : index
    %935 = vector.load %arg22[%c1_477, %c0_478, %c0_479] : memref<6x32x16xf32, #tpu.memory_space<vmem>>, vector<1x32x16xf32>
    %936 = vector.shape_cast %935 : vector<1x32x16xf32> to vector<32x16xf32>
    %cst_480 = arith.constant dense<0.000000e+00> : vector<2x16xf32>
    %937 = tpu.matmul %934, %936, %cst_480 {dimension_numbers = #tpu.dot_dimension_numbers<[1], [0], [0], [1], [0, 0, 1, 1], [], []>} : vector<2x32xf32>, vector<32x16xf32>, vector<2x16xf32> -> vector<2x16xf32>
    %938 = arith.addf %760, %937 : vector<2x16xf32>
    %c5_481 = arith.constant 5 : index
    %c0_482 = arith.constant 0 : index
    %c0_483 = arith.constant 0 : index
    %939 = vector.load %arg6[%c5_481, %c0_482, %c0_483] : memref<6x32x32xf32, #tpu.memory_space<vmem>>, vector<1x32x32xf32>
    %940 = vector.shape_cast %939 : vector<1x32x32xf32> to vector<32x32xf32>
    %cst_484 = arith.constant dense<0.000000e+00> : vector<16x32xf32>
    %941 = tpu.matmul %928, %940, %cst_484 {dimension_numbers = #tpu.dot_dimension_numbers<[1], [0], [0], [1], [0, 0, 1, 1], [], []>} : vector<16x32xf32>, vector<32x32xf32>, vector<16x32xf32> -> vector<16x32xf32>
    %c5_485 = arith.constant 5 : index
    %c0_486 = arith.constant 0 : index
    %c0_487 = arith.constant 0 : index
    %942 = vector.load %arg7[%c5_485, %c0_486, %c0_487] : memref<6x1x32xf32, #tpu.memory_space<vmem>>, vector<1x1x32xf32>
    %943 = vector.shape_cast %942 : vector<1x1x32xf32> to vector<1x32xf32>
    %944 = vector.broadcast %943 : vector<1x32xf32> to vector<16x32xf32>
    %945 = arith.addf %941, %944 : vector<16x32xf32>
    %c5_488 = arith.constant 5 : index
    %c0_489 = arith.constant 0 : index
    %c0_490 = arith.constant 0 : index
    %946 = vector.load %arg8[%c5_488, %c0_489, %c0_490] : memref<6x32x32xf32, #tpu.memory_space<vmem>>, vector<1x32x32xf32>
    %947 = vector.shape_cast %946 : vector<1x32x32xf32> to vector<32x32xf32>
    %cst_491 = arith.constant dense<0.000000e+00> : vector<16x32xf32>
    %948 = tpu.matmul %928, %947, %cst_491 {dimension_numbers = #tpu.dot_dimension_numbers<[1], [0], [0], [1], [0, 0, 1, 1], [], []>} : vector<16x32xf32>, vector<32x32xf32>, vector<16x32xf32> -> vector<16x32xf32>
    %c5_492 = arith.constant 5 : index
    %c0_493 = arith.constant 0 : index
    %c0_494 = arith.constant 0 : index
    %949 = vector.load %arg9[%c5_492, %c0_493, %c0_494] : memref<6x1x32xf32, #tpu.memory_space<vmem>>, vector<1x1x32xf32>
    %950 = vector.shape_cast %949 : vector<1x1x32xf32> to vector<1x32xf32>
    %951 = vector.broadcast %950 : vector<1x32xf32> to vector<16x32xf32>
    %952 = arith.addf %948, %951 : vector<16x32xf32>
    %c5_495 = arith.constant 5 : index
    %c0_496 = arith.constant 0 : index
    %c0_497 = arith.constant 0 : index
    %953 = vector.load %arg10[%c5_495, %c0_496, %c0_497] : memref<6x32x32xf32, #tpu.memory_space<vmem>>, vector<1x32x32xf32>
    %954 = vector.shape_cast %953 : vector<1x32x32xf32> to vector<32x32xf32>
    %cst_498 = arith.constant dense<0.000000e+00> : vector<16x32xf32>
    %955 = tpu.matmul %928, %954, %cst_498 {dimension_numbers = #tpu.dot_dimension_numbers<[1], [0], [0], [1], [0, 0, 1, 1], [], []>} : vector<16x32xf32>, vector<32x32xf32>, vector<16x32xf32> -> vector<16x32xf32>
    %c5_499 = arith.constant 5 : index
    %c0_500 = arith.constant 0 : index
    %c0_501 = arith.constant 0 : index
    %956 = vector.load %arg11[%c5_499, %c0_500, %c0_501] : memref<6x1x32xf32, #tpu.memory_space<vmem>>, vector<1x1x32xf32>
    %957 = vector.shape_cast %956 : vector<1x1x32xf32> to vector<1x32xf32>
    %958 = vector.broadcast %957 : vector<1x32xf32> to vector<16x32xf32>
    %959 = arith.addf %955, %958 : vector<16x32xf32>
    %960 = vector.shape_cast %945 : vector<16x32xf32> to vector<2x8x32xf32>
    %961 = vector.shape_cast %952 : vector<16x32xf32> to vector<2x8x32xf32>
    %962 = vector.shape_cast %959 : vector<16x32xf32> to vector<2x8x32xf32>
    %963 = arith.mulf %961, %7 : vector<2x8x32xf32>
    "tpu.trace_start"() <{level = 10 : i32, message = "bqd,bkd->bqk"}> : () -> ()
    %cst_502 = arith.constant dense<0.000000e+00> : vector<2x8x8xf32>
    %964 = tpu.matmul %960, %963, %cst_502 {dimension_numbers = #tpu.dot_dimension_numbers<[2], [2], [1], [1], [0, 0, 0, 1, 1, 1], [0], [0]>} : vector<2x8x32xf32>, vector<2x8x32xf32>, vector<2x8x8xf32> -> vector<2x8x8xf32>
    "tpu.trace_stop"() : () -> ()
    %cst_503 = arith.constant 0.353553385 : f32
    %965 = vector.broadcast %cst_503 : f32 to vector<2x8x8xf32>
    %966 = arith.mulf %964, %965 : vector<2x8x8xf32>
    %967 = arith.addf %966, %3 : vector<2x8x8xf32>
    %968 = math.exp %967 : vector<2x8x8xf32>
    %cst_504 = arith.constant dense<0.000000e+00> : vector<2x8xf32>
    %969 = vector.multi_reduction <add>, %968, %cst_504 [2] : vector<2x8x8xf32> to vector<2x8xf32>
    %970 = vector.shape_cast %969 : vector<2x8xf32> to vector<2x8x1xf32>
    %971 = tpu.reciprocal %970 {approx = true} : vector<2x8x1xf32> -> vector<2x8x1xf32>
    %972 = vector.broadcast %971 : vector<2x8x1xf32> to vector<2x8x8xf32>
    %973 = arith.mulf %968, %972 : vector<2x8x8xf32>
    "tpu.trace_start"() <{level = 10 : i32, message = "bqk,bkd->bqd"}> : () -> ()
    %cst_505 = arith.constant dense<0.000000e+00> : vector<2x8x32xf32>
    %974 = tpu.matmul %973, %962, %cst_505 {dimension_numbers = #tpu.dot_dimension_numbers<[2], [1], [1], [2], [0, 0, 0, 1, 1, 2], [0], [0]>} : vector<2x8x8xf32>, vector<2x8x32xf32>, vector<2x8x32xf32> -> vector<2x8x32xf32>
    "tpu.trace_stop"() : () -> ()
    %975 = arith.mulf %974, %7 : vector<2x8x32xf32>
    %976 = arith.mulf %961, %11 : vector<2x8x32xf32>
    "tpu.trace_start"() <{level = 10 : i32, message = "bqd,bkd->bqk"}> : () -> ()
    %cst_506 = arith.constant dense<0.000000e+00> : vector<2x8x8xf32>
    %977 = tpu.matmul %960, %976, %cst_506 {dimension_numbers = #tpu.dot_dimension_numbers<[2], [2], [1], [1], [0, 0, 0, 1, 1, 1], [0], [0]>} : vector<2x8x32xf32>, vector<2x8x32xf32>, vector<2x8x8xf32> -> vector<2x8x8xf32>
    "tpu.trace_stop"() : () -> ()
    %cst_507 = arith.constant 0.353553385 : f32
    %978 = vector.broadcast %cst_507 : f32 to vector<2x8x8xf32>
    %979 = arith.mulf %977, %978 : vector<2x8x8xf32>
    %980 = arith.addf %979, %3 : vector<2x8x8xf32>
    %981 = math.exp %980 : vector<2x8x8xf32>
    %cst_508 = arith.constant dense<0.000000e+00> : vector<2x8xf32>
    %982 = vector.multi_reduction <add>, %981, %cst_508 [2] : vector<2x8x8xf32> to vector<2x8xf32>
    %983 = vector.shape_cast %982 : vector<2x8xf32> to vector<2x8x1xf32>
    %984 = tpu.reciprocal %983 {approx = true} : vector<2x8x1xf32> -> vector<2x8x1xf32>
    %985 = vector.broadcast %984 : vector<2x8x1xf32> to vector<2x8x8xf32>
    %986 = arith.mulf %981, %985 : vector<2x8x8xf32>
    "tpu.trace_start"() <{level = 10 : i32, message = "bqk,bkd->bqd"}> : () -> ()
    %cst_509 = arith.constant dense<0.000000e+00> : vector<2x8x32xf32>
    %987 = tpu.matmul %986, %962, %cst_509 {dimension_numbers = #tpu.dot_dimension_numbers<[2], [1], [1], [2], [0, 0, 0, 1, 1, 2], [0], [0]>} : vector<2x8x8xf32>, vector<2x8x32xf32>, vector<2x8x32xf32> -> vector<2x8x32xf32>
    "tpu.trace_stop"() : () -> ()
    %988 = arith.mulf %987, %11 : vector<2x8x32xf32>
    %989 = arith.addf %975, %988 : vector<2x8x32xf32>
    %990 = arith.mulf %961, %15 : vector<2x8x32xf32>
    "tpu.trace_start"() <{level = 10 : i32, message = "bqd,bkd->bqk"}> : () -> ()
    %cst_510 = arith.constant dense<0.000000e+00> : vector<2x8x8xf32>
    %991 = tpu.matmul %960, %990, %cst_510 {dimension_numbers = #tpu.dot_dimension_numbers<[2], [2], [1], [1], [0, 0, 0, 1, 1, 1], [0], [0]>} : vector<2x8x32xf32>, vector<2x8x32xf32>, vector<2x8x8xf32> -> vector<2x8x8xf32>
    "tpu.trace_stop"() : () -> ()
    %cst_511 = arith.constant 0.353553385 : f32
    %992 = vector.broadcast %cst_511 : f32 to vector<2x8x8xf32>
    %993 = arith.mulf %991, %992 : vector<2x8x8xf32>
    %994 = arith.addf %993, %3 : vector<2x8x8xf32>
    %995 = math.exp %994 : vector<2x8x8xf32>
    %cst_512 = arith.constant dense<0.000000e+00> : vector<2x8xf32>
    %996 = vector.multi_reduction <add>, %995, %cst_512 [2] : vector<2x8x8xf32> to vector<2x8xf32>
    %997 = vector.shape_cast %996 : vector<2x8xf32> to vector<2x8x1xf32>
    %998 = tpu.reciprocal %997 {approx = true} : vector<2x8x1xf32> -> vector<2x8x1xf32>
    %999 = vector.broadcast %998 : vector<2x8x1xf32> to vector<2x8x8xf32>
    %1000 = arith.mulf %995, %999 : vector<2x8x8xf32>
    "tpu.trace_start"() <{level = 10 : i32, message = "bqk,bkd->bqd"}> : () -> ()
    %cst_513 = arith.constant dense<0.000000e+00> : vector<2x8x32xf32>
    %1001 = tpu.matmul %1000, %962, %cst_513 {dimension_numbers = #tpu.dot_dimension_numbers<[2], [1], [1], [2], [0, 0, 0, 1, 1, 2], [0], [0]>} : vector<2x8x8xf32>, vector<2x8x32xf32>, vector<2x8x32xf32> -> vector<2x8x32xf32>
    "tpu.trace_stop"() : () -> ()
    %1002 = arith.mulf %1001, %15 : vector<2x8x32xf32>
    %1003 = arith.addf %989, %1002 : vector<2x8x32xf32>
    %1004 = arith.mulf %961, %19 : vector<2x8x32xf32>
    "tpu.trace_start"() <{level = 10 : i32, message = "bqd,bkd->bqk"}> : () -> ()
    %cst_514 = arith.constant dense<0.000000e+00> : vector<2x8x8xf32>
    %1005 = tpu.matmul %960, %1004, %cst_514 {dimension_numbers = #tpu.dot_dimension_numbers<[2], [2], [1], [1], [0, 0, 0, 1, 1, 1], [0], [0]>} : vector<2x8x32xf32>, vector<2x8x32xf32>, vector<2x8x8xf32> -> vector<2x8x8xf32>
    "tpu.trace_stop"() : () -> ()
    %cst_515 = arith.constant 0.353553385 : f32
    %1006 = vector.broadcast %cst_515 : f32 to vector<2x8x8xf32>
    %1007 = arith.mulf %1005, %1006 : vector<2x8x8xf32>
    %1008 = arith.addf %1007, %3 : vector<2x8x8xf32>
    %1009 = math.exp %1008 : vector<2x8x8xf32>
    %cst_516 = arith.constant dense<0.000000e+00> : vector<2x8xf32>
    %1010 = vector.multi_reduction <add>, %1009, %cst_516 [2] : vector<2x8x8xf32> to vector<2x8xf32>
    %1011 = vector.shape_cast %1010 : vector<2x8xf32> to vector<2x8x1xf32>
    %1012 = tpu.reciprocal %1011 {approx = true} : vector<2x8x1xf32> -> vector<2x8x1xf32>
    %1013 = vector.broadcast %1012 : vector<2x8x1xf32> to vector<2x8x8xf32>
    %1014 = arith.mulf %1009, %1013 : vector<2x8x8xf32>
    "tpu.trace_start"() <{level = 10 : i32, message = "bqk,bkd->bqd"}> : () -> ()
    %cst_517 = arith.constant dense<0.000000e+00> : vector<2x8x32xf32>
    %1015 = tpu.matmul %1014, %962, %cst_517 {dimension_numbers = #tpu.dot_dimension_numbers<[2], [1], [1], [2], [0, 0, 0, 1, 1, 2], [0], [0]>} : vector<2x8x8xf32>, vector<2x8x32xf32>, vector<2x8x32xf32> -> vector<2x8x32xf32>
    "tpu.trace_stop"() : () -> ()
    %1016 = arith.mulf %1015, %19 : vector<2x8x32xf32>
    %1017 = arith.addf %1003, %1016 : vector<2x8x32xf32>
    %1018 = vector.shape_cast %1017 : vector<2x8x32xf32> to vector<16x32xf32>
    %c5_518 = arith.constant 5 : index
    %c0_519 = arith.constant 0 : index
    %c0_520 = arith.constant 0 : index
    %1019 = vector.load %arg12[%c5_518, %c0_519, %c0_520] : memref<6x32x32xf32, #tpu.memory_space<vmem>>, vector<1x32x32xf32>
    %1020 = vector.shape_cast %1019 : vector<1x32x32xf32> to vector<32x32xf32>
    %cst_521 = arith.constant dense<0.000000e+00> : vector<16x32xf32>
    %1021 = tpu.matmul %1018, %1020, %cst_521 {dimension_numbers = #tpu.dot_dimension_numbers<[1], [0], [0], [1], [0, 0, 1, 1], [], []>} : vector<16x32xf32>, vector<32x32xf32>, vector<16x32xf32> -> vector<16x32xf32>
    %c5_522 = arith.constant 5 : index
    %c0_523 = arith.constant 0 : index
    %c0_524 = arith.constant 0 : index
    %1022 = vector.load %arg13[%c5_522, %c0_523, %c0_524] : memref<6x1x32xf32, #tpu.memory_space<vmem>>, vector<1x1x32xf32>
    %1023 = vector.shape_cast %1022 : vector<1x1x32xf32> to vector<1x32xf32>
    %1024 = vector.broadcast %1023 : vector<1x32xf32> to vector<16x32xf32>
    %1025 = arith.addf %1021, %1024 : vector<16x32xf32>
    %1026 = arith.addf %1025, %928 : vector<16x32xf32>
    %c5_525 = arith.constant 5 : index
    %c0_526 = arith.constant 0 : index
    %c0_527 = arith.constant 0 : index
    %1027 = vector.load %arg14[%c5_525, %c0_526, %c0_527] : memref<6x1x32xf32, #tpu.memory_space<vmem>>, vector<1x1x32xf32>
    %1028 = vector.shape_cast %1027 : vector<1x1x32xf32> to vector<1x32xf32>
    %c5_528 = arith.constant 5 : index
    %c0_529 = arith.constant 0 : index
    %c0_530 = arith.constant 0 : index
    %1029 = vector.load %arg15[%c5_528, %c0_529, %c0_530] : memref<6x1x32xf32, #tpu.memory_space<vmem>>, vector<1x1x32xf32>
    %1030 = vector.shape_cast %1029 : vector<1x1x32xf32> to vector<1x32xf32>
    %cst_531 = arith.constant dense<0.000000e+00> : vector<16xf32>
    %1031 = vector.multi_reduction <add>, %1026, %cst_531 [1] : vector<16x32xf32> to vector<16xf32>
    %1032 = vector.shape_cast %1031 : vector<16xf32> to vector<16x1xf32>
    %cst_532 = arith.constant 3.200000e+01 : f32
    %1033 = vector.broadcast %cst_532 : f32 to vector<16x1xf32>
    %1034 = arith.divf %1032, %1033 : vector<16x1xf32>
    %1035 = arith.mulf %1026, %1026 : vector<16x32xf32>
    %cst_533 = arith.constant dense<0.000000e+00> : vector<16xf32>
    %1036 = vector.multi_reduction <add>, %1035, %cst_533 [1] : vector<16x32xf32> to vector<16xf32>
    %1037 = vector.shape_cast %1036 : vector<16xf32> to vector<16x1xf32>
    %cst_534 = arith.constant 3.200000e+01 : f32
    %1038 = vector.broadcast %cst_534 : f32 to vector<16x1xf32>
    %1039 = arith.divf %1037, %1038 : vector<16x1xf32>
    %1040 = arith.mulf %1034, %1034 : vector<16x1xf32>
    %1041 = arith.subf %1039, %1040 : vector<16x1xf32>
    %1042 = vector.broadcast %1034 : vector<16x1xf32> to vector<16x32xf32>
    %1043 = arith.subf %1026, %1042 : vector<16x32xf32>
    %cst_535 = arith.constant 9.99999996E-13 : f32
    %1044 = vector.broadcast %cst_535 : f32 to vector<16x1xf32>
    %1045 = arith.addf %1041, %1044 : vector<16x1xf32>
    %1046 = math.rsqrt %1045 : vector<16x1xf32>
    %1047 = vector.broadcast %1046 : vector<16x1xf32> to vector<16x32xf32>
    %1048 = arith.mulf %1043, %1047 : vector<16x32xf32>
    %1049 = vector.broadcast %1028 : vector<1x32xf32> to vector<16x32xf32>
    %1050 = arith.mulf %1048, %1049 : vector<16x32xf32>
    %1051 = vector.broadcast %1030 : vector<1x32xf32> to vector<16x32xf32>
    %1052 = arith.addf %1050, %1051 : vector<16x32xf32>
    %c5_536 = arith.constant 5 : index
    %c0_537 = arith.constant 0 : index
    %c0_538 = arith.constant 0 : index
    %1053 = vector.load %arg16[%c5_536, %c0_537, %c0_538] : memref<6x32x64xf32, #tpu.memory_space<vmem>>, vector<1x32x64xf32>
    %1054 = vector.shape_cast %1053 : vector<1x32x64xf32> to vector<32x64xf32>
    %cst_539 = arith.constant dense<0.000000e+00> : vector<16x64xf32>
    %1055 = tpu.matmul %1052, %1054, %cst_539 {dimension_numbers = #tpu.dot_dimension_numbers<[1], [0], [0], [1], [0, 0, 1, 1], [], []>} : vector<16x32xf32>, vector<32x64xf32>, vector<16x64xf32> -> vector<16x64xf32>
    %c5_540 = arith.constant 5 : index
    %c0_541 = arith.constant 0 : index
    %c0_542 = arith.constant 0 : index
    %1056 = vector.load %arg17[%c5_540, %c0_541, %c0_542] : memref<6x1x64xf32, #tpu.memory_space<vmem>>, vector<1x1x64xf32>
    %1057 = vector.shape_cast %1056 : vector<1x1x64xf32> to vector<1x64xf32>
    %1058 = vector.broadcast %1057 : vector<1x64xf32> to vector<16x64xf32>
    %1059 = arith.addf %1055, %1058 : vector<16x64xf32>
    %1060 = arith.mulf %1059, %1059 : vector<16x64xf32>
    %1061 = arith.mulf %1059, %1060 : vector<16x64xf32>
    %cst_543 = arith.constant 4.471500e-02 : f32
    %1062 = vector.broadcast %cst_543 : f32 to vector<16x64xf32>
    %1063 = arith.mulf %1062, %1061 : vector<16x64xf32>
    %1064 = arith.addf %1059, %1063 : vector<16x64xf32>
    %cst_544 = arith.constant 0.797884583 : f32
    %1065 = vector.broadcast %cst_544 : f32 to vector<16x64xf32>
    %1066 = arith.mulf %1065, %1064 : vector<16x64xf32>
    %1067 = math.tanh %1066 : vector<16x64xf32>
    %cst_545 = arith.constant 1.000000e+00 : f32
    %1068 = vector.broadcast %cst_545 : f32 to vector<16x64xf32>
    %1069 = arith.addf %1068, %1067 : vector<16x64xf32>
    %cst_546 = arith.constant 5.000000e-01 : f32
    %1070 = vector.broadcast %cst_546 : f32 to vector<16x64xf32>
    %1071 = arith.mulf %1070, %1069 : vector<16x64xf32>
    %1072 = arith.mulf %1059, %1071 : vector<16x64xf32>
    %c5_547 = arith.constant 5 : index
    %c0_548 = arith.constant 0 : index
    %c0_549 = arith.constant 0 : index
    %1073 = vector.load %arg18[%c5_547, %c0_548, %c0_549] : memref<6x64x32xf32, #tpu.memory_space<vmem>>, vector<1x64x32xf32>
    %1074 = vector.shape_cast %1073 : vector<1x64x32xf32> to vector<64x32xf32>
    %cst_550 = arith.constant dense<0.000000e+00> : vector<16x32xf32>
    %1075 = tpu.matmul %1072, %1074, %cst_550 {dimension_numbers = #tpu.dot_dimension_numbers<[1], [0], [0], [1], [0, 0, 1, 1], [], []>} : vector<16x64xf32>, vector<64x32xf32>, vector<16x32xf32> -> vector<16x32xf32>
    %c5_551 = arith.constant 5 : index
    %c0_552 = arith.constant 0 : index
    %c0_553 = arith.constant 0 : index
    %1076 = vector.load %arg19[%c5_551, %c0_552, %c0_553] : memref<6x1x32xf32, #tpu.memory_space<vmem>>, vector<1x1x32xf32>
    %1077 = vector.shape_cast %1076 : vector<1x1x32xf32> to vector<1x32xf32>
    %1078 = vector.broadcast %1077 : vector<1x32xf32> to vector<16x32xf32>
    %1079 = arith.addf %1075, %1078 : vector<16x32xf32>
    %1080 = arith.addf %1079, %1052 : vector<16x32xf32>
    %c5_554 = arith.constant 5 : index
    %c0_555 = arith.constant 0 : index
    %c0_556 = arith.constant 0 : index
    %1081 = vector.load %arg20[%c5_554, %c0_555, %c0_556] : memref<6x1x32xf32, #tpu.memory_space<vmem>>, vector<1x1x32xf32>
    %1082 = vector.shape_cast %1081 : vector<1x1x32xf32> to vector<1x32xf32>
    %c5_557 = arith.constant 5 : index
    %c0_558 = arith.constant 0 : index
    %c0_559 = arith.constant 0 : index
    %1083 = vector.load %arg21[%c5_557, %c0_558, %c0_559] : memref<6x1x32xf32, #tpu.memory_space<vmem>>, vector<1x1x32xf32>
    %1084 = vector.shape_cast %1083 : vector<1x1x32xf32> to vector<1x32xf32>
    %cst_560 = arith.constant dense<0.000000e+00> : vector<16xf32>
    %1085 = vector.multi_reduction <add>, %1080, %cst_560 [1] : vector<16x32xf32> to vector<16xf32>
    %1086 = vector.shape_cast %1085 : vector<16xf32> to vector<16x1xf32>
    %cst_561 = arith.constant 3.200000e+01 : f32
    %1087 = vector.broadcast %cst_561 : f32 to vector<16x1xf32>
    %1088 = arith.divf %1086, %1087 : vector<16x1xf32>
    %1089 = arith.mulf %1080, %1080 : vector<16x32xf32>
    %cst_562 = arith.constant dense<0.000000e+00> : vector<16xf32>
    %1090 = vector.multi_reduction <add>, %1089, %cst_562 [1] : vector<16x32xf32> to vector<16xf32>
    %1091 = vector.shape_cast %1090 : vector<16xf32> to vector<16x1xf32>
    %cst_563 = arith.constant 3.200000e+01 : f32
    %1092 = vector.broadcast %cst_563 : f32 to vector<16x1xf32>
    %1093 = arith.divf %1091, %1092 : vector<16x1xf32>
    %1094 = arith.mulf %1088, %1088 : vector<16x1xf32>
    %1095 = arith.subf %1093, %1094 : vector<16x1xf32>
    %1096 = vector.broadcast %1088 : vector<16x1xf32> to vector<16x32xf32>
    %1097 = arith.subf %1080, %1096 : vector<16x32xf32>
    %cst_564 = arith.constant 9.99999996E-13 : f32
    %1098 = vector.broadcast %cst_564 : f32 to vector<16x1xf32>
    %1099 = arith.addf %1095, %1098 : vector<16x1xf32>
    %1100 = math.rsqrt %1099 : vector<16x1xf32>
    %1101 = vector.broadcast %1100 : vector<16x1xf32> to vector<16x32xf32>
    %1102 = arith.mulf %1097, %1101 : vector<16x32xf32>
    %1103 = vector.broadcast %1082 : vector<1x32xf32> to vector<16x32xf32>
    %1104 = arith.mulf %1102, %1103 : vector<16x32xf32>
    %1105 = vector.broadcast %1084 : vector<1x32xf32> to vector<16x32xf32>
    %1106 = arith.addf %1104, %1105 : vector<16x32xf32>
    %c6 = arith.constant 6 : index
    %c0_565 = arith.constant 0 : index
    %c0_566 = arith.constant 0 : index
    %1107 = vector.load %arg25[%c6, %c0_565, %c0_566] : memref<7x16x32xf32, #tpu.memory_space<vmem>>, vector<1x16x32xf32>
    %1108 = vector.shape_cast %1107 : vector<1x16x32xf32> to vector<16x32xf32>
    %1109 = vector.shape_cast %1106 : vector<16x32xf32> to vector<1x16x32xf32>
    tpu.vector_store %arg25[%c6, %c0_565, %c0_566], %1109 {strides = array<i32>} : memref<7x16x32xf32, #tpu.memory_space<vmem>>, vector<1x16x32xf32>,
    %1110 = vector.shape_cast %1106 : vector<16x32xf32> to vector<2x8x32xf32>
    %1111 = vector.extract_strided_slice %1110 {offsets = [0, 0, 0], sizes = [2, 1, 32], strides = [1, 1, 1]} : vector<2x8x32xf32> to vector<2x1x32xf32>
    %1112 = vector.shape_cast %1111 : vector<2x1x32xf32> to vector<2x32xf32>
    %c0_567 = arith.constant 0 : index
    %c0_568 = arith.constant 0 : index
    %c0_569 = arith.constant 0 : index
    %1113 = vector.load %arg22[%c0_567, %c0_568, %c0_569] : memref<6x32x16xf32, #tpu.memory_space<vmem>>, vector<1x32x16xf32>
    %1114 = vector.shape_cast %1113 : vector<1x32x16xf32> to vector<32x16xf32>
    %cst_570 = arith.constant dense<0.000000e+00> : vector<2x16xf32>
    %1115 = tpu.matmul %1112, %1114, %cst_570 {dimension_numbers = #tpu.dot_dimension_numbers<[1], [0], [0], [1], [0, 0, 1, 1], [], []>} : vector<2x32xf32>, vector<32x16xf32>, vector<2x16xf32> -> vector<2x16xf32>
    %1116 = arith.addf %938, %1115 : vector<2x16xf32>
    %c0_571 = arith.constant 0 : index
    %c0_572 = arith.constant 0 : index
    %1117 = vector.load %arg23[%c0_571, %c0_572] : memref<1x16xf32, #tpu.memory_space<vmem>>, vector<1x16xf32>
    %1118 = vector.broadcast %1117 : vector<1x16xf32> to vector<2x16xf32>
    %1119 = arith.addf %1116, %1118 : vector<2x16xf32>
    %c0_573 = arith.constant 0 : index
    %c0_574 = arith.constant 0 : index
    %1120 = vector.load %arg24[%c0_573, %c0_574] : memref<2x16xf32, #tpu.memory_space<vmem>>, vector<2x16xf32>
    tpu.vector_store %arg24[%c0_573, %c0_574], %1119 {strides = array<i32>} : memref<2x16xf32, #tpu.memory_space<vmem>>, vector<2x16xf32>,
    return
  }
  func.func @transform_0(%arg0: i32) -> (i32, i32) {
    %c0_i32 = arith.constant 0 : i32
    %c0_i32_0 = arith.constant 0 : i32
    %c0_i32_1 = arith.constant 0 : i32
    return %c0_i32, %c0_i32_0 : i32, i32
  }
  func.func @transform_1(%arg0: i32) -> (i32, i32) {
    %c0_i32 = arith.constant 0 : i32
    %c0_i32_0 = arith.constant 0 : i32
    %c0_i32_1 = arith.constant 0 : i32
    return %c0_i32, %c0_i32_0 : i32, i32
  }
  func.func @transform_2(%arg0: i32) -> (i32, i32, i32, i32) {
    %c0_i32 = arith.constant 0 : i32
    %c0_i32_0 = arith.constant 0 : i32
    %c0_i32_1 = arith.constant 0 : i32
    %c0_i32_2 = arith.constant 0 : i32
    %c0_i32_3 = arith.constant 0 : i32
    return %c0_i32, %c0_i32_0, %c0_i32_1, %c0_i32_2 : i32, i32, i32, i32
  }
  func.func @transform_3(%arg0: i32) -> (i32, i32) {
    %c0_i32 = arith.constant 0 : i32
    %c0_i32_0 = arith.constant 0 : i32
    %c0_i32_1 = arith.constant 0 : i32
    return %c0_i32, %c0_i32_0 : i32, i32
  }
  func.func @transform_4(%arg0: i32) -> (i32, i32) {
    %c0_i32 = arith.constant 0 : i32
    %c0_i32_0 = arith.constant 0 : i32
    %c0_i32_1 = arith.constant 0 : i32
    return %c0_i32, %c0_i32_0 : i32, i32
  }
  func.func @transform_5(%arg0: i32) -> (i32, i32, i32) {
    %c0_i32 = arith.constant 0 : i32
    %c0_i32_0 = arith.constant 0 : i32
    %c0_i32_1 = arith.constant 0 : i32
    %c0_i32_2 = arith.constant 0 : i32
    return %c0_i32, %c0_i32_0, %c0_i32_1 : i32, i32, i32
  }
  func.func @transform_6(%arg0: i32) -> (i32, i32, i32) {
    %c0_i32 = arith.constant 0 : i32
    %c0_i32_0 = arith.constant 0 : i32
    %c0_i32_1 = arith.constant 0 : i32
    %c0_i32_2 = arith.constant 0 : i32
    return %c0_i32, %c0_i32_0, %c0_i32_1 : i32, i32, i32
  }
  func.func @transform_7(%arg0: i32) -> (i32, i32, i32) {
    %c0_i32 = arith.constant 0 : i32
    %c0_i32_0 = arith.constant 0 : i32
    %c0_i32_1 = arith.constant 0 : i32
    %c0_i32_2 = arith.constant 0 : i32
    return %c0_i32, %c0_i32_0, %c0_i32_1 : i32, i32, i32
  }
  func.func @transform_8(%arg0: i32) -> (i32, i32, i32) {
    %c0_i32 = arith.constant 0 : i32
    %c0_i32_0 = arith.constant 0 : i32
    %c0_i32_1 = arith.constant 0 : i32
    %c0_i32_2 = arith.constant 0 : i32
    return %c0_i32, %c0_i32_0, %c0_i32_1 : i32, i32, i32
  }
  func.func @transform_9(%arg0: i32) -> (i32, i32, i32) {
    %c0_i32 = arith.constant 0 : i32
    %c0_i32_0 = arith.constant 0 : i32
    %c0_i32_1 = arith.constant 0 : i32
    %c0_i32_2 = arith.constant 0 : i32
    return %c0_i32, %c0_i32_0, %c0_i32_1 : i32, i32, i32
  }
  func.func @transform_10(%arg0: i32) -> (i32, i32, i32) {
    %c0_i32 = arith.constant 0 : i32
    %c0_i32_0 = arith.constant 0 : i32
    %c0_i32_1 = arith.constant 0 : i32
    %c0_i32_2 = arith.constant 0 : i32
    return %c0_i32, %c0_i32_0, %c0_i32_1 : i32, i32, i32
  }
  func.func @transform_11(%arg0: i32) -> (i32, i32, i32) {
    %c0_i32 = arith.constant 0 : i32
    %c0_i32_0 = arith.constant 0 : i32
    %c0_i32_1 = arith.constant 0 : i32
    %c0_i32_2 = arith.constant 0 : i32
    return %c0_i32, %c0_i32_0, %c0_i32_1 : i32, i32, i32
  }
  func.func @transform_12(%arg0: i32) -> (i32, i32, i32) {
    %c0_i32 = arith.constant 0 : i32
    %c0_i32_0 = arith.constant 0 : i32
    %c0_i32_1 = arith.constant 0 : i32
    %c0_i32_2 = arith.constant 0 : i32
    return %c0_i32, %c0_i32_0, %c0_i32_1 : i32, i32, i32
  }
  func.func @transform_13(%arg0: i32) -> (i32, i32, i32) {
    %c0_i32 = arith.constant 0 : i32
    %c0_i32_0 = arith.constant 0 : i32
    %c0_i32_1 = arith.constant 0 : i32
    %c0_i32_2 = arith.constant 0 : i32
    return %c0_i32, %c0_i32_0, %c0_i32_1 : i32, i32, i32
  }
  func.func @transform_14(%arg0: i32) -> (i32, i32, i32) {
    %c0_i32 = arith.constant 0 : i32
    %c0_i32_0 = arith.constant 0 : i32
    %c0_i32_1 = arith.constant 0 : i32
    %c0_i32_2 = arith.constant 0 : i32
    return %c0_i32, %c0_i32_0, %c0_i32_1 : i32, i32, i32
  }
  func.func @transform_15(%arg0: i32) -> (i32, i32, i32) {
    %c0_i32 = arith.constant 0 : i32
    %c0_i32_0 = arith.constant 0 : i32
    %c0_i32_1 = arith.constant 0 : i32
    %c0_i32_2 = arith.constant 0 : i32
    return %c0_i32, %c0_i32_0, %c0_i32_1 : i32, i32, i32
  }
  func.func @transform_16(%arg0: i32) -> (i32, i32, i32) {
    %c0_i32 = arith.constant 0 : i32
    %c0_i32_0 = arith.constant 0 : i32
    %c0_i32_1 = arith.constant 0 : i32
    %c0_i32_2 = arith.constant 0 : i32
    return %c0_i32, %c0_i32_0, %c0_i32_1 : i32, i32, i32
  }
  func.func @transform_17(%arg0: i32) -> (i32, i32, i32) {
    %c0_i32 = arith.constant 0 : i32
    %c0_i32_0 = arith.constant 0 : i32
    %c0_i32_1 = arith.constant 0 : i32
    %c0_i32_2 = arith.constant 0 : i32
    return %c0_i32, %c0_i32_0, %c0_i32_1 : i32, i32, i32
  }
  func.func @transform_18(%arg0: i32) -> (i32, i32, i32) {
    %c0_i32 = arith.constant 0 : i32
    %c0_i32_0 = arith.constant 0 : i32
    %c0_i32_1 = arith.constant 0 : i32
    %c0_i32_2 = arith.constant 0 : i32
    return %c0_i32, %c0_i32_0, %c0_i32_1 : i32, i32, i32
  }
  func.func @transform_19(%arg0: i32) -> (i32, i32, i32) {
    %c0_i32 = arith.constant 0 : i32
    %c0_i32_0 = arith.constant 0 : i32
    %c0_i32_1 = arith.constant 0 : i32
    %c0_i32_2 = arith.constant 0 : i32
    return %c0_i32, %c0_i32_0, %c0_i32_1 : i32, i32, i32
  }
  func.func @transform_20(%arg0: i32) -> (i32, i32, i32) {
    %c0_i32 = arith.constant 0 : i32
    %c0_i32_0 = arith.constant 0 : i32
    %c0_i32_1 = arith.constant 0 : i32
    %c0_i32_2 = arith.constant 0 : i32
    return %c0_i32, %c0_i32_0, %c0_i32_1 : i32, i32, i32
  }
  func.func @transform_21(%arg0: i32) -> (i32, i32, i32) {
    %c0_i32 = arith.constant 0 : i32
    %c0_i32_0 = arith.constant 0 : i32
    %c0_i32_1 = arith.constant 0 : i32
    %c0_i32_2 = arith.constant 0 : i32
    return %c0_i32, %c0_i32_0, %c0_i32_1 : i32, i32, i32
  }
  func.func @transform_22(%arg0: i32) -> (i32, i32) {
    %c0_i32 = arith.constant 0 : i32
    %c0_i32_0 = arith.constant 0 : i32
    %c0_i32_1 = arith.constant 0 : i32
    return %c0_i32, %c0_i32_0 : i32, i32
  }
  func.func @transform_23(%arg0: i32) -> (i32, i32) {
    %c0_i32 = arith.constant 0 : i32
    %c0_i32_0 = arith.constant 0 : i32
    %c0_i32_1 = arith.constant 0 : i32
    return %c0_i32, %c0_i32_0 : i32, i32
  }
  func.func @transform_24(%arg0: i32) -> (i32, i32, i32) {
    %c0_i32 = arith.constant 0 : i32
    %c0_i32_0 = arith.constant 0 : i32
    %c0_i32_1 = arith.constant 0 : i32
    %c0_i32_2 = arith.constant 0 : i32
    return %c0_i32, %c0_i32_0, %c0_i32_1 : i32, i32, i32
  }
}

</mosaic_0001>

<llo_original>
// kernel: clip_text_forward.1
$region0: #{clip_text_forward.1}
  #allocation0 [shape = 'u32[]', space=smem, size = 0x4, offset = 0x4, fixed_abs, tag = 'smem constant byte address 0x4 - core index']
  #allocation1 [shape = 'u32[72,128]{1,0:T(1,128)}', space=vmem, size = 0x9000, scoped, tag = 'internal scratch']
  %s0 = inlined_call_operand.vmem [shape: f32[16,32], index: 0, kind: input, shape index: {}]
  %s1 = inlined_call_operand.vmem [shape: f32[2,8], index: 1, kind: input, shape index: {}]
  %s2 = inlined_call_operand.vmem [shape: f32[4,1,1,32], index: 2, kind: input, shape index: {}]
  %s3 = inlined_call_operand.vmem [shape: f32[1,32], index: 3, kind: input, shape index: {}]
  %s4 = inlined_call_operand.vmem [shape: f32[1,32], index: 4, kind: input, shape index: {}]
  %s5 = inlined_call_operand.vmem [shape: f32[6,32,32], index: 5, kind: input, shape index: {}]
  %s6 = inlined_call_operand.vmem [shape: f32[6,1,32], index: 6, kind: input, shape index: {}]
  %s7 = inlined_call_operand.vmem [shape: f32[6,32,32], index: 7, kind: input, shape index: {}]
  %s8 = inlined_call_operand.vmem [shape: f32[6,1,32], index: 8, kind: input, shape index: {}]
  %s9 = inlined_call_operand.vmem [shape: f32[6,32,32], index: 9, kind: input, shape index: {}]
  %s10 = inlined_call_operand.vmem [shape: f32[6,1,32], index: 10, kind: input, shape index: {}]
  %s11 = inlined_call_operand.vmem [shape: f32[6,32,32], index: 11, kind: input, shape index: {}]
  %s12 = inlined_call_operand.vmem [shape: f32[6,1,32], index: 12, kind: input, shape index: {}]
  %s13 = inlined_call_operand.vmem [shape: f32[6,1,32], index: 13, kind: input, shape index: {}]
  %s14 = inlined_call_operand.vmem [shape: f32[6,1,32], index: 14, kind: input, shape index: {}]
  %s15 = inlined_call_operand.hbm [shape: f32[6,32,64], index: 15, kind: input, shape index: {}]
  %s16 = inlined_call_operand.vmem [shape: f32[6,1,64], index: 16, kind: input, shape index: {}]
  %s17 = inlined_call_operand.vmem [shape: f32[6,64,32], index: 17, kind: input, shape index: {}]
  %s18 = inlined_call_operand.vmem [shape: f32[6,1,32], index: 18, kind: input, shape index: {}]
  %s19 = inlined_call_operand.vmem [shape: f32[6,1,32], index: 19, kind: input, shape index: {}]
  %s20 = inlined_call_operand.vmem [shape: f32[6,1,32], index: 20, kind: input, shape index: {}]
  %s21 = inlined_call_operand.vmem [shape: f32[6,32,16], index: 21, kind: input, shape index: {}]
  %s22 = inlined_call_operand.vmem [shape: f32[1,16], index: 22, kind: input, shape index: {}]
  %s23 = inlined_call_operand.hbm [shape: f32[2,16], index: 23, kind: output, shape index: {0}]
  %s24 = inlined_call_operand.vmem [shape: f32[7,16,32], index: 24, kind: output, shape index: {1}]
  %25 = xla_tuple %s23, %s24
  %s26 = sld [smem:[#allocation0]]
  $region114: #{clip_text_forward.1} parent=0
    _
  %s28 = ssub.s32 1, %s26
  %s29 = scalar_select 0, %s28, %s26
  $region1: #{clip_text_forward.1} parent=0
    #allocation2 [shape = 'u8[98304]{0}', space=vmem, size = 0x18000, scoped, tag = 'input window, operand 15, single buffered']
    #allocation3 [shape = 's32[1]{0}', space=sflag, size = 0x4, scoped, tag = 'scoped memory for clip_text_forward.1']
    #allocation4 [shape = 's32[1]{0}', space=sflag, size = 0x4, scoped, tag = 'scoped memory for clip_text_forward.1']
    #allocation5 [shape = 'u8[1024]{0}', space=vmem, size = 0x400, scoped, tag = 'output window, operand 0, single buffered']
    %30 = vsyncpa [#allocation3], 0
    %31 = vsyncpa [#allocation4], 0
    // Predicated region
    $region2: #{clip_text_forward.1} parent=1 // pred_check
      _
    $region3: #{clip_text_forward.1} parent=1 // pred_check_branch
      %33 = sbr.rel (0) target = $region5
    $region4: #{clip_text_forward.1} parent=1 // pred_region
      _
    $region5: #{clip_text_forward.1} parent=1 // pred_fallthru
      _
    // Predicated region
    $region6: #{clip_text_forward.1} parent=1 // pred_check
      _
    $region7: #{clip_text_forward.1} parent=1 // pred_check_branch
      %35 = sbr.rel (0) target = $region9
    $region8: #{clip_text_forward.1} parent=1 // pred_region
      _
    $region9: #{clip_text_forward.1} parent=1 // pred_fallthru
      _
    // Predicated region
    $region10: #{clip_text_forward.1} parent=1 // pred_check
      _
    $region11: #{clip_text_forward.1} parent=1 // pred_check_branch
      %37 = sbr.rel (0) target = $region13
    $region12: #{clip_text_forward.1} parent=1 // pred_region
      _
    $region13: #{clip_text_forward.1} parent=1 // pred_fallthru
      _
    // Predicated region
    $region14: #{clip_text_forward.1} parent=1 // pred_check
      _
    $region15: #{clip_text_forward.1} parent=1 // pred_check_branch
      %39 = sbr.rel (0) target = $region17
    $region16: #{clip_text_forward.1} parent=1 // pred_region
      _
    $region17: #{clip_text_forward.1} parent=1 // pred_fallthru
      _
    // Predicated region
    $region18: #{clip_text_forward.1} parent=1 // pred_check
      _
    $region19: #{clip_text_forward.1} parent=1 // pred_check_branch
      %41 = sbr.rel (0) target = $region21
    $region20: #{clip_text_forward.1} parent=1 // pred_region
      _
    $region21: #{clip_text_forward.1} parent=1 // pred_fallthru
      _
    // Predicated region
    $region22: #{clip_text_forward.1} parent=1 // pred_check
      _
    $region23: #{clip_text_forward.1} parent=1 // pred_check_branch
      %43 = sbr.rel (0) target = $region25
    $region24: #{clip_text_forward.1} parent=1 // pred_region
      _
    $region25: #{clip_text_forward.1} parent=1 // pred_fallthru
      _
    // Predicated region
    $region26: #{clip_text_forward.1} parent=1 // pred_check
      _
    $region27: #{clip_text_forward.1} parent=1 // pred_check_branch
      %45 = sbr.rel (0) target = $region29
    $region28: #{clip_text_forward.1} parent=1 // pred_region
      _
    $region29: #{clip_text_forward.1} parent=1 // pred_fallthru
      _
    // Predicated region
    $region30: #{clip_text_forward.1} parent=1 // pred_check
      _
    $region31: #{clip_text_forward.1} parent=1 // pred_check_branch
      %47 = sbr.rel (0) target = $region33
    $region32: #{clip_text_forward.1} parent=1 // pred_region
      _
    $region33: #{clip_text_forward.1} parent=1 // pred_fallthru
      _
    // Predicated region
    $region34: #{clip_text_forward.1} parent=1 // pred_check
      _
    $region35: #{clip_text_forward.1} parent=1 // pred_check_branch
      %49 = sbr.rel (0) target = $region37
    $region36: #{clip_text_forward.1} parent=1 // pred_region
      _
    $region37: #{clip_text_forward.1} parent=1 // pred_fallthru
      _
    // Predicated region
    $region38: #{clip_text_forward.1} parent=1 // pred_check
      _
    $region39: #{clip_text_forward.1} parent=1 // pred_check_branch
      %51 = sbr.rel (0) target = $region41
    $region40: #{clip_text_forward.1} parent=1 // pred_region
      _
    $region41: #{clip_text_forward.1} parent=1 // pred_fallthru
      _
    // Predicated region
    $region42: #{clip_text_forward.1} parent=1 // pred_check
      _
    $region43: #{clip_text_forward.1} parent=1 // pred_check_branch
      %53 = sbr.rel (0) target = $region45
    $region44: #{clip_text_forward.1} parent=1 // pred_region
      _
    $region45: #{clip_text_forward.1} parent=1 // pred_fallthru
      _
    // Predicated region
    $region46: #{clip_text_forward.1} parent=1 // pred_check
      _
    $region47: #{clip_text_forward.1} parent=1 // pred_check_branch
      %55 = sbr.rel (0) target = $region49
    $region48: #{clip_text_forward.1} parent=1 // pred_region
      _
    $region49: #{clip_text_forward.1} parent=1 // pred_fallthru
      _
    // Predicated region
    $region50: #{clip_text_forward.1} parent=1 // pred_check
      _
    $region51: #{clip_text_forward.1} parent=1 // pred_check_branch
      %57 = sbr.rel (0) target = $region53
    $region52: #{clip_text_forward.1} parent=1 // pred_region
      _
    $region53: #{clip_text_forward.1} parent=1 // pred_fallthru
      _
    // Predicated region
    $region54: #{clip_text_forward.1} parent=1 // pred_check
      _
    $region55: #{clip_text_forward.1} parent=1 // pred_check_branch
      %59 = sbr.rel (0) target = $region57
    $region56: #{clip_text_forward.1} parent=1 // pred_region
      _
    $region57: #{clip_text_forward.1} parent=1 // pred_fallthru
      _
    // Predicated region
    $region58: #{clip_text_forward.1} parent=1 // pred_check
      _
    $region59: #{clip_text_forward.1} parent=1 // pred_check_branch
      %61 = sbr.rel (0) target = $region61
    $region60: #{clip_text_forward.1} parent=1 // pred_region
      _
    $region61: #{clip_text_forward.1} parent=1 // pred_fallthru
      _
    // Predicated region
    $region62: #{clip_text_forward.1} parent=1 // pred_check
      _
    $region63: #{clip_text_forward.1} parent=1 // pred_check_branch
      %63 = sbr.rel (0) target = $region65
    $region64: #{clip_text_forward.1} parent=1 // pred_region
      %65 = vsyncadd [#allocation3], 0
      %s66 = sshll.u32 %s15, 4
      %s67 = int_to_ptr.hbm [resolvable:$true] %s66
      %s68 = sshll.u32 [#allocation2], 4
      %s69 = int_to_ptr.vmem [resolvable:$true] %s68
      %74 = dma.hbm_to_vmem [thread:$0]  %s67, 3072, %s69, [#allocation3], 128, 128, 8
    $region65: #{clip_text_forward.1} parent=1 // pred_fallthru
      _
    // Predicated region
    $region66: #{clip_text_forward.1} parent=1 // pred_check
      _
    $region67: #{clip_text_forward.1} parent=1 // pred_check_branch
      %76 = sbr.rel (0) target = $region69
    $region68: #{clip_text_forward.1} parent=1 // pred_region
      _
    $region69: #{clip_text_forward.1} parent=1 // pred_fallthru
      _
    // Predicated region
    $region70: #{clip_text_forward.1} parent=1 // pred_check
      _
    $region71: #{clip_text_forward.1} parent=1 // pred_check_branch
      %78 = sbr.rel (0) target = $region73
    $region72: #{clip_text_forward.1} parent=1 // pred_region
      _
    $region73: #{clip_text_forward.1} parent=1 // pred_fallthru
      _
    // Predicated region
    $region74: #{clip_text_forward.1} parent=1 // pred_check
      _
    $region75: #{clip_text_forward.1} parent=1 // pred_check_branch
      %80 = sbr.rel (0) target = $region77
    $region76: #{clip_text_forward.1} parent=1 // pred_region
      _
    $region77: #{clip_text_forward.1} parent=1 // pred_fallthru
      _
    // Predicated region
    $region78: #{clip_text_forward.1} parent=1 // pred_check
      _
    $region79: #{clip_text_forward.1} parent=1 // pred_check_branch
      %82 = sbr.rel (0) target = $region81
    $region80: #{clip_text_forward.1} parent=1 // pred_region
      _
    $region81: #{clip_text_forward.1} parent=1 // pred_fallthru
      _
    // Predicated region
    $region82: #{clip_text_forward.1} parent=1 // pred_check
      _
    $region83: #{clip_text_forward.1} parent=1 // pred_check_branch
      %84 = sbr.rel (0) target = $region85
    $region84: #{clip_text_forward.1} parent=1 // pred_region
      _
    $region85: #{clip_text_forward.1} parent=1 // pred_fallthru
      _
    // Predicated region
    $region86: #{clip_text_forward.1} parent=1 // pred_check
      _
    $region87: #{clip_text_forward.1} parent=1 // pred_check_branch
      %86 = sbr.rel (0) target = $region89
    $region88: #{clip_text_forward.1} parent=1 // pred_region
      _
    $region89: #{clip_text_forward.1} parent=1 // pred_fallthru
      _
    // Predicated region
    $region90: #{clip_text_forward.1} parent=1 // pred_check
      _
    $region91: #{clip_text_forward.1} parent=1 // pred_check_branch
      %88 = sbr.rel (0) target = $region93
    $region92: #{clip_text_forward.1} parent=1 // pred_region
      _
    $region93: #{clip_text_forward.1} parent=1 // pred_fallthru
      _
    // Predicated region
    $region94: #{clip_text_forward.1} parent=1 // pred_check
      _
    $region95: #{clip_text_forward.1} parent=1 // pred_check_branch
      %90 = sbr.rel (0) target = $region97
    $region96: #{clip_text_forward.1} parent=1 // pred_region
      %92 = dma.done [#allocation3], 3072
    $region97: #{clip_text_forward.1} parent=1 // pred_fallthru
      _
    %v93 = vld [vmem:[%s1] sm:$0x3]
    %v95 = vrot.slane %v93, 1
    %v96 = vperm.slane %v93, 0
    %v97 = vperm.slane %v95, 0
    %v100 = vld [vmem:[%s2] sm:$0x1]
    %v102 = vperm.slane %v100, 0
    %s104 = scalar_lea.vmem %s2, 1
    %v105 = vld [vmem:[%s104] sm:$0x1]
    %v107 = vperm.slane %v105, 0
    %s109 = scalar_lea.vmem %s2, 2
    %v110 = vld [vmem:[%s109] sm:$0x1]
    %v112 = vperm.slane %v110, 0
    %s114 = scalar_lea.vmem %s2, 3
    %v115 = vld [vmem:[%s114] sm:$0x1]
    %v117 = vperm.slane %v115, 0
    %v119 = vld [vmem:[%s0] sm:$0xff]
    %v120 = vld [vmem:[%s0 + $0x8] sm:$0xff]
    %v121 = vld [vmem:[%s3] sm:$0x1]
    %v122 = vld [vmem:[%s4] sm:$0x1]
    %vm123 = vcmask 261120
    %v124 = vsel %vm123, %v119, 0.0
    %125 = vadd.xlane.f32.xlu0 %v124
    %v126 = vpop.xlane.xlu0 %125
    %v127 = vsel %vm123, %v120, 0.0
    %128 = vadd.xlane.f32.xlu0 %v127
    %v129 = vpop.xlane.xlu0 %128
    %v130 = vrcp.pop 32.0
    %v131 = vmul.f32 32.0, %v130
    %v132 = vsub.f32 1.0, %v131
    %v133 = vmul.f32 %v130, %v132
    %v134 = vadd.f32 %v130, %v133
    %vm135 = vweird.f32 %v130
    %v136 = vsel %vm135, %v130, %v134
    %v137 = vmul.f32 %v126, %v136
    %v138 = vmul.f32 %v129, %v136
    %v139 = vmul.f32 %v119, %v119
    %v140 = vmul.f32 %v120, %v120
    %v141 = vsel %vm123, %v139, 0.0
    %142 = vadd.xlane.f32.xlu0 %v141
    %v143 = vpop.xlane.xlu0 %142
    %v144 = vsel %vm123, %v140, 0.0
    %145 = vadd.xlane.f32.xlu0 %v144
    %v146 = vpop.xlane.xlu0 %145
    %v147 = vmul.f32 %v143, %v136
    %v148 = vmul.f32 %v146, %v136
    %v149 = vmul.f32 %v137, %v137
    %v150 = vmul.f32 %v138, %v138
    %v151 = vsub.f32 %v147, %v149
    %v152 = vsub.f32 %v148, %v150
    %v153 = vsub.f32 %v119, %v137
    %v154 = vsub.f32 %v120, %v138
    %v155 = vadd.f32 %v151, 1e-12
    %v156 = vadd.f32 %v152, 1e-12
    %v157 = vrsqrt.pop %v155
    %v158 = vmul.f32 %v157, %v155
    %v159 = vmul.f32 %v158, %v157
    %v160 = vmul.f32 0.5, %v159
    %v161 = vsub.f32 1.5, %v160
    %v162 = vmul.f32 %v157, %v161
    %vm163 = vweird.f32 %v155
    %vm164 = vweird.f32 %v157
    %vm165 = vmor %vm163, %vm164
    %v166 = vsel %vm165, %v157, %v162
    %v167 = vrsqrt.pop %v156
    %v168 = vmul.f32 %v167, %v156
    %v169 = vmul.f32 %v168, %v167
    %v170 = vmul.f32 0.5, %v169
    %v171 = vsub.f32 1.5, %v170
    %v172 = vmul.f32 %v167, %v171
    %vm173 = vweird.f32 %v156
    %vm174 = vweird.f32 %v167
    %vm175 = vmor %vm173, %vm174
    %v176 = vsel %vm175, %v167, %v172
    %v177 = vmul.f32 %v153, %v166
    %v178 = vmul.f32 %v154, %v176
    %v180 = vperm.slane %v121, 0
    %v182 = vmul.f32 %v177, %v180
    %v183 = vmul.f32 %v178, %v180
    %v185 = vperm.slane %v122, 0
    %v187 = vadd.f32 %v182, %v185
    %v188 = vadd.f32 %v183, %v185
    %189 = vst.msk [vmem:[%s24] sm:$0xff] %vm123, %v187
    %190 = vst.msk [vmem:[%s24 + $0x8] sm:$0xff] %vm123, %v188
    %v191 = vld [vmem:[%s5] sm:$0xff]
    %v192 = vld [vmem:[%s5 + $0x8] sm:$0xff]
    %v193 = vld [vmem:[%s5 + $0x10] sm:$0xff]
    %v194 = vld [vmem:[%s5 + $0x18] sm:$0xff]
    %v195 = vld [vmem:[%s6] sm:$0x1]
    %v197 = vperm.slane %v195, 0
    %v200 = vsel %vm123, %v187, 0
    %v203 = vsel %vm123, %v188, 0
    %205 = vmatpush.msra.mxu0 0.0
    %206 = vmatpush.msra.mxu0 0.0
    %207 = vmatpush.msra.mxu0 0.0
    %208 = vmatpush.msra.mxu0 0.0
    %209 = vmatpush.msra.mxu0 0.0
    %210 = vmatpush.msra.mxu0 0.0
    %211 = vmatpush.msra.mxu0 0.0
    %212 = vmatpush.msra.mxu0 0.0
    %213 = vmatpush.msra.mxu0 0.0
    %214 = vmatpush.msra.mxu0 0.0
    %215 = vmatpush.msra.mxu0 0.0
    %216 = vmatpush.msra.mxu0 0.0
    %217 = vmatpush.msra.mxu0 %v194
    %218 = vmatpush.msra.mxu0 %v193
    %219 = vmatpush.msra.mxu0 %v192
    %220 = vmatpush.msra.mxu0 %v191
    %221 = vmatmul.f32.gmra.mxu0 %v200
    %v222 = vpop.f32.mrf.mxu0
    %v223 = vadd.f32 %v197, %v222
    %224 = vmatmul.f32.gmra.mxu0 %v203
    %v225 = vpop.f32.mrf.mxu0
    %v226 = vadd.f32 %v197, %v225
    %227 = vdwg.mxu0
    %v228 = vld [vmem:[%s7] sm:$0xff]
    %v229 = vld [vmem:[%s7 + $0x8] sm:$0xff]
    %v230 = vld [vmem:[%s7 + $0x10] sm:$0xff]
    %v231 = vld [vmem:[%s7 + $0x18] sm:$0xff]
    %v232 = vld [vmem:[%s8] sm:$0x1]
    %v234 = vperm.slane %v232, 0
    %236 = vmatpush.msra.mxu0 0.0
    %237 = vmatpush.msra.mxu0 0.0
    %238 = vmatpush.msra.mxu0 0.0
    %239 = vmatpush.msra.mxu0 0.0
    %240 = vmatpush.msra.mxu0 0.0
    %241 = vmatpush.msra.mxu0 0.0
    %242 = vmatpush.msra.mxu0 0.0
    %243 = vmatpush.msra.mxu0 0.0
    %244 = vmatpush.msra.mxu0 0.0
    %245 = vmatpush.msra.mxu0 0.0
    %246 = vmatpush.msra.mxu0 0.0
    %247 = vmatpush.msra.mxu0 0.0
    %248 = vmatpush.msra.mxu0 %v231
    %249 = vmatpush.msra.mxu0 %v230
    %250 = vmatpush.msra.mxu0 %v229
    %251 = vmatpush.msra.mxu0 %v228
    %252 = vmatmul.f32.gmra.mxu0 %v200
    %v253 = vpop.f32.mrf.mxu0
    %v254 = vadd.f32 %v234, %v253
    %255 = vmatmul.f32.gmra.mxu0 %v203
    %v256 = vpop.f32.mrf.mxu0
    %v257 = vadd.f32 %v234, %v256
    %258 = vdwg.mxu0
    %v259 = vld [vmem:[%s9] sm:$0xff]
    %v260 = vld [vmem:[%s9 + $0x8] sm:$0xff]
    %v261 = vld [vmem:[%s9 + $0x10] sm:$0xff]
    %v262 = vld [vmem:[%s9 + $0x18] sm:$0xff]
    %v263 = vld [vmem:[%s10] sm:$0x1]
    %v265 = vperm.slane %v263, 0
    %267 = vmatpush.msra.mxu0 0.0
    %268 = vmatpush.msra.mxu0 0.0
    %269 = vmatpush.msra.mxu0 0.0
    %270 = vmatpush.msra.mxu0 0.0
    %271 = vmatpush.msra.mxu0 0.0
    %272 = vmatpush.msra.mxu0 0.0
    %273 = vmatpush.msra.mxu0 0.0
    %274 = vmatpush.msra.mxu0 0.0
    %275 = vmatpush.msra.mxu0 0.0
    %276 = vmatpush.msra.mxu0 0.0
    %277 = vmatpush.msra.mxu0 0.0
    %278 = vmatpush.msra.mxu0 0.0
    %279 = vmatpush.msra.mxu0 %v262
    %280 = vmatpush.msra.mxu0 %v261
    %281 = vmatpush.msra.mxu0 %v260
    %282 = vmatpush.msra.mxu0 %v259
    %283 = vmatmul.f32.gmra.mxu0 %v200
    %v284 = vpop.f32.mrf.mxu0
    %v285 = vadd.f32 %v265, %v284
    %286 = vmatmul.f32.gmra.mxu0 %v203
    %v287 = vpop.f32.mrf.mxu0
    %v288 = vadd.f32 %v265, %v287
    %289 = vdwg.mxu0
    %v290 = vmul.f32 %v254, %v102
    %v291 = vmul.f32 %v257, %v102
    %v293 = vsel %vm123, %v223, 0
    %v296 = vsel %vm123, %v290, 0
    %298 = vmatpush.xpose.msra.mxu0 0.0
    %299 = vmatpush.xpose.msra.mxu0 0.0
    %300 = vmatpush.xpose.msra.mxu0 0.0
    %301 = vmatpush.xpose.msra.mxu0 0.0
    %302 = vmatpush.xpose.msra.mxu0 0.0
    %303 = vmatpush.xpose.msra.mxu0 0.0
    %304 = vmatpush.xpose.msra.mxu0 0.0
    %305 = vmatpush.xpose.msra.mxu0 0.0
    %306 = vmatpush.xpose.msra.mxu0 0.0
    %307 = vmatpush.xpose.msra.mxu0 0.0
    %308 = vmatpush.xpose.msra.mxu0 0.0
    %309 = vmatpush.xpose.msra.mxu0 0.0
    %310 = vmatpush.xpose.msra.mxu0 0.0
    %311 = vmatpush.xpose.msra.mxu0 0.0
    %312 = vmatpush.xpose.msra.mxu0 0.0
    %313 = vmatpush.xpose.msra.mxu0 %v296
    %314 = vmatmul.f32.gmra.mxu0 %v293
    %v315 = vpop.f32.mrf.mxu0
    %v316 = vadd.f32 0.0, %v315
    %317 = vdwg.mxu0
    %v319 = vsel %vm123, %v226, 0
    %v322 = vsel %vm123, %v291, 0
    %324 = vmatpush.xpose.msra.mxu0 0.0
    %325 = vmatpush.xpose.msra.mxu0 0.0
    %326 = vmatpush.xpose.msra.mxu0 0.0
    %327 = vmatpush.xpose.msra.mxu0 0.0
    %328 = vmatpush.xpose.msra.mxu0 0.0
    %329 = vmatpush.xpose.msra.mxu0 0.0
    %330 = vmatpush.xpose.msra.mxu0 0.0
    %331 = vmatpush.xpose.msra.mxu0 0.0
    %332 = vmatpush.xpose.msra.mxu0 0.0
    %333 = vmatpush.xpose.msra.mxu0 0.0
    %334 = vmatpush.xpose.msra.mxu0 0.0
    %335 = vmatpush.xpose.msra.mxu0 0.0
    %336 = vmatpush.xpose.msra.mxu0 0.0
    %337 = vmatpush.xpose.msra.mxu0 0.0
    %338 = vmatpush.xpose.msra.mxu0 0.0
    %339 = vmatpush.xpose.msra.mxu0 %v322
    %340 = vmatmul.f32.gmra.mxu0 %v319
    %v341 = vpop.f32.mrf.mxu0
    %v342 = vadd.f32 0.0, %v341
    %343 = vdwg.mxu0
    %v344 = vmul.f32 %v316, 0.35355338
    %v345 = vmul.f32 %v342, 0.35355338
    %v346 = vadd.f32 %v344, %v96
    %v347 = vadd.f32 %v345, %v97
    %v348 = vmul.f32 %v346, 1.442695
    %v349 = vpow.pop %v348
    %v350 = vmul.f32 %v347, 1.442695
    %v351 = vpow.pop %v350
    %vm352 = vcmask 64512
    %v353 = vsel %vm352, %v349, 0.0
    %354 = vadd.xlane.f32.xlu0 %v353
    %v355 = vpop.xlane.xlu0 %354
    %v356 = vsel %vm352, %v351, 0.0
    %357 = vadd.xlane.f32.xlu0 %v356
    %v358 = vpop.xlane.xlu0 %357
    %v359 = vrcp.pop %v355
    %v360 = vrcp.pop %v358
    %v361 = vmul.f32 %v349, %v359
    %v362 = vmul.f32 %v351, %v360
    %v364 = vsel %vm352, %v361, 0
    %366 = vmatpush.msra.mxu0 0.0
    %367 = vmatpush.msra.mxu0 0.0
    %368 = vmatpush.msra.mxu0 0.0
    %369 = vmatpush.msra.mxu0 0.0
    %370 = vmatpush.msra.mxu0 0.0
    %371 = vmatpush.msra.mxu0 0.0
    %372 = vmatpush.msra.mxu0 0.0
    %373 = vmatpush.msra.mxu0 0.0
    %374 = vmatpush.msra.mxu0 0.0
    %375 = vmatpush.msra.mxu0 0.0
    %376 = vmatpush.msra.mxu0 0.0
    %377 = vmatpush.msra.mxu0 0.0
    %378 = vmatpush.msra.mxu0 0.0
    %379 = vmatpush.msra.mxu0 0.0
    %380 = vmatpush.msra.mxu0 0.0
    %381 = vmatpush.msra.mxu0 %v285
    %382 = vmatmul.f32.gmra.mxu0 %v364
    %v383 = vpop.f32.mrf.mxu0
    %v384 = vadd.f32 0.0, %v383
    %385 = vdwg.mxu0
    %v387 = vsel %vm352, %v362, 0
    %389 = vmatpush.msra.mxu0 0.0
    %390 = vmatpush.msra.mxu0 0.0
    %391 = vmatpush.msra.mxu0 0.0
    %392 = vmatpush.msra.mxu0 0.0
    %393 = vmatpush.msra.mxu0 0.0
    %394 = vmatpush.msra.mxu0 0.0
    %395 = vmatpush.msra.mxu0 0.0
    %396 = vmatpush.msra.mxu0 0.0
    %397 = vmatpush.msra.mxu0 0.0
    %398 = vmatpush.msra.mxu0 0.0
    %399 = vmatpush.msra.mxu0 0.0
    %400 = vmatpush.msra.mxu0 0.0
    %401 = vmatpush.msra.mxu0 0.0
    %402 = vmatpush.msra.mxu0 0.0
    %403 = vmatpush.msra.mxu0 0.0
    %404 = vmatpush.msra.mxu0 %v288
    %405 = vmatmul.f32.gmra.mxu0 %v387
    %v406 = vpop.f32.mrf.mxu0
    %v407 = vadd.f32 0.0, %v406
    %408 = vdwg.mxu0
    %v409 = vmul.f32 %v384, %v102
    %v410 = vmul.f32 %v407, %v102
    %v411 = vmul.f32 %v254, %v107
    %v412 = vmul.f32 %v257, %v107
    %v414 = vsel %vm123, %v411, 0
    %416 = vmatpush.xpose.msra.mxu0 0.0
    %417 = vmatpush.xpose.msra.mxu0 0.0
    %418 = vmatpush.xpose.msra.mxu0 0.0
    %419 = vmatpush.xpose.msra.mxu0 0.0
    %420 = vmatpush.xpose.msra.mxu0 0.0
    %421 = vmatpush.xpose.msra.mxu0 0.0
    %422 = vmatpush.xpose.msra.mxu0 0.0
    %423 = vmatpush.xpose.msra.mxu0 0.0
    %424 = vmatpush.xpose.msra.mxu0 0.0
    %425 = vmatpush.xpose.msra.mxu0 0.0
    %426 = vmatpush.xpose.msra.mxu0 0.0
    %427 = vmatpush.xpose.msra.mxu0 0.0
    %428 = vmatpush.xpose.msra.mxu0 0.0
    %429 = vmatpush.xpose.msra.mxu0 0.0
    %430 = vmatpush.xpose.msra.mxu0 0.0
    %431 = vmatpush.xpose.msra.mxu0 %v414
    %432 = vmatmul.f32.gmra.mxu0 %v293
    %v433 = vpop.f32.mrf.mxu0
    %v434 = vadd.f32 0.0, %v433
    %435 = vdwg.mxu0
    %v437 = vsel %vm123, %v412, 0
    %439 = vmatpush.xpose.msra.mxu0 0.0
    %440 = vmatpush.xpose.msra.mxu0 0.0
    %441 = vmatpush.xpose.msra.mxu0 0.0
    %442 = vmatpush.xpose.msra.mxu0 0.0
    %443 = vmatpush.xpose.msra.mxu0 0.0
    %444 = vmatpush.xpose.msra.mxu0 0.0
    %445 = vmatpush.xpose.msra.mxu0 0.0
    %446 = vmatpush.xpose.msra.mxu0 0.0
    %447 = vmatpush.xpose.msra.mxu0 0.0
    %448 = vmatpush.xpose.msra.mxu0 0.0
    %449 = vmatpush.xpose.msra.mxu0 0.0
    %450 = vmatpush.xpose.msra.mxu0 0.0
    %451 = vmatpush.xpose.msra.mxu0 0.0
    %452 = vmatpush.xpose.msra.mxu0 0.0
    %453 = vmatpush.xpose.msra.mxu0 0.0
    %454 = vmatpush.xpose.msra.mxu0 %v437
    %455 = vmatmul.f32.gmra.mxu0 %v319
    %v456 = vpop.f32.mrf.mxu0
    %v457 = vadd.f32 0.0, %v456
    %458 = vdwg.mxu0
    %v459 = vmul.f32 %v434, 0.35355338
    %v460 = vmul.f32 %v457, 0.35355338
    %v461 = vadd.f32 %v459, %v96
    %v462 = vadd.f32 %v460, %v97
    %v463 = vmul.f32 %v461, 1.442695
    %v464 = vpow.pop %v463
    %v465 = vmul.f32 %v462, 1.442695
    %v466 = vpow.pop %v465
    %v467 = vsel %vm352, %v464, 0.0
    %468 = vadd.xlane.f32.xlu0 %v467
    %v469 = vpop.xlane.xlu0 %468
    %v470 = vsel %vm352, %v466, 0.0
    %471 = vadd.xlane.f32.xlu0 %v470
    %v472 = vpop.xlane.xlu0 %471
    %v473 = vrcp.pop %v469
    %v474 = vrcp.pop %v472
    %v475 = vmul.f32 %v464, %v473
    %v476 = vmul.f32 %v466, %v474
    %v478 = vsel %vm352, %v475, 0
    %480 = vmatpush.msra.mxu0 0.0
    %481 = vmatpush.msra.mxu0 0.0
    %482 = vmatpush.msra.mxu0 0.0
    %483 = vmatpush.msra.mxu0 0.0
    %484 = vmatpush.msra.mxu0 0.0
    %485 = vmatpush.msra.mxu0 0.0
    %486 = vmatpush.msra.mxu0 0.0
    %487 = vmatpush.msra.mxu0 0.0
    %488 = vmatpush.msra.mxu0 0.0
    %489 = vmatpush.msra.mxu0 0.0
    %490 = vmatpush.msra.mxu0 0.0
    %491 = vmatpush.msra.mxu0 0.0
    %492 = vmatpush.msra.mxu0 0.0
    %493 = vmatpush.msra.mxu0 0.0
    %494 = vmatpush.msra.mxu0 0.0
    %495 = vmatpush.msra.mxu0 %v285
    %496 = vmatmul.f32.gmra.mxu0 %v478
    %v497 = vpop.f32.mrf.mxu0
    %v498 = vadd.f32 0.0, %v497
    %499 = vdwg.mxu0
    %v501 = vsel %vm352, %v476, 0
    %503 = vmatpush.msra.mxu0 0.0
    %504 = vmatpush.msra.mxu0 0.0
    %505 = vmatpush.msra.mxu0 0.0
    %506 = vmatpush.msra.mxu0 0.0
    %507 = vmatpush.msra.mxu0 0.0
    %508 = vmatpush.msra.mxu0 0.0
    %509 = vmatpush.msra.mxu0 0.0
    %510 = vmatpush.msra.mxu0 0.0
    %511 = vmatpush.msra.mxu0 0.0
    %512 = vmatpush.msra.mxu0 0.0
    %513 = vmatpush.msra.mxu0 0.0
    %514 = vmatpush.msra.mxu0 0.0
    %515 = vmatpush.msra.mxu0 0.0
    %516 = vmatpush.msra.mxu0 0.0
    %517 = vmatpush.msra.mxu0 0.0
    %518 = vmatpush.msra.mxu0 %v288
    %519 = vmatmul.f32.gmra.mxu0 %v501
    %v520 = vpop.f32.mrf.mxu0
    %v521 = vadd.f32 0.0, %v520
    %522 = vdwg.mxu0
    %v523 = vmul.f32 %v498, %v107
    %v524 = vmul.f32 %v521, %v107
    %v525 = vadd.f32 %v409, %v523
    %v526 = vadd.f32 %v410, %v524
    %v527 = vmul.f32 %v254, %v112
    %v528 = vmul.f32 %v257, %v112
    %v530 = vsel %vm123, %v527, 0
    %532 = vmatpush.xpose.msra.mxu0 0.0
    %533 = vmatpush.xpose.msra.mxu0 0.0
    %534 = vmatpush.xpose.msra.mxu0 0.0
    %535 = vmatpush.xpose.msra.mxu0 0.0
    %536 = vmatpush.xpose.msra.mxu0 0.0
    %537 = vmatpush.xpose.msra.mxu0 0.0
    %538 = vmatpush.xpose.msra.mxu0 0.0
    %539 = vmatpush.xpose.msra.mxu0 0.0
    %540 = vmatpush.xpose.msra.mxu0 0.0
    %541 = vmatpush.xpose.msra.mxu0 0.0
    %542 = vmatpush.xpose.msra.mxu0 0.0
    %543 = vmatpush.xpose.msra.mxu0 0.0
    %544 = vmatpush.xpose.msra.mxu0 0.0
    %545 = vmatpush.xpose.msra.mxu0 0.0
    %546 = vmatpush.xpose.msra.mxu0 0.0
    %547 = vmatpush.xpose.msra.mxu0 %v530
    %548 = vmatmul.f32.gmra.mxu0 %v293
    %v549 = vpop.f32.mrf.mxu0
    %v550 = vadd.f32 0.0, %v549
    %551 = vdwg.mxu0
    %v553 = vsel %vm123, %v528, 0
    %555 = vmatpush.xpose.msra.mxu0 0.0
    %556 = vmatpush.xpose.msra.mxu0 0.0
    %557 = vmatpush.xpose.msra.mxu0 0.0
    %558 = vmatpush.xpose.msra.mxu0 0.0
    %559 = vmatpush.xpose.msra.mxu0 0.0
    %560 = vmatpush.xpose.msra.mxu0 0.0
    %561 = vmatpush.xpose.msra.mxu0 0.0
    %562 = vmatpush.xpose.msra.mxu0 0.0
    %563 = vmatpush.xpose.msra.mxu0 0.0
    %564 = vmatpush.xpose.msra.mxu0 0.0
    %565 = vmatpush.xpose.msra.mxu0 0.0
    %566 = vmatpush.xpose.msra.mxu0 0.0
    %567 = vmatpush.xpose.msra.mxu0 0.0
    %568 = vmatpush.xpose.msra.mxu0 0.0
    %569 = vmatpush.xpose.msra.mxu0 0.0
    %570 = vmatpush.xpose.msra.mxu0 %v553
    %571 = vmatmul.f32.gmra.mxu0 %v319
    %v572 = vpop.f32.mrf.mxu0
    %v573 = vadd.f32 0.0, %v572
    %574 = vdwg.mxu0
    %v575 = vmul.f32 %v550, 0.35355338
    %v576 = vmul.f32 %v573, 0.35355338
    %v577 = vadd.f32 %v575, %v96
    %v578 = vadd.f32 %v576, %v97
    %v579 = vmul.f32 %v577, 1.442695
    %v580 = vpow.pop %v579
    %v581 = vmul.f32 %v578, 1.442695
    %v582 = vpow.pop %v581
    %v583 = vsel %vm352, %v580, 0.0
    %584 = vadd.xlane.f32.xlu0 %v583
    %v585 = vpop.xlane.xlu0 %584
    %v586 = vsel %vm352, %v582, 0.0
    %587 = vadd.xlane.f32.xlu0 %v586
    %v588 = vpop.xlane.xlu0 %587
    %v589 = vrcp.pop %v585
    %v590 = vrcp.pop %v588
    %v591 = vmul.f32 %v580, %v589
    %v592 = vmul.f32 %v582, %v590
    %v594 = vsel %vm352, %v591, 0
    %596 = vmatpush.msra.mxu0 0.0
    %597 = vmatpush.msra.mxu0 0.0
    %598 = vmatpush.msra.mxu0 0.0
    %599 = vmatpush.msra.mxu0 0.0
    %600 = vmatpush.msra.mxu0 0.0
    %601 = vmatpush.msra.mxu0 0.0
    %602 = vmatpush.msra.mxu0 0.0
    %603 = vmatpush.msra.mxu0 0.0
    %604 = vmatpush.msra.mxu0 0.0
    %605 = vmatpush.msra.mxu0 0.0
    %606 = vmatpush.msra.mxu0 0.0
    %607 = vmatpush.msra.mxu0 0.0
    %608 = vmatpush.msra.mxu0 0.0
    %609 = vmatpush.msra.mxu0 0.0
    %610 = vmatpush.msra.mxu0 0.0
    %611 = vmatpush.msra.mxu0 %v285
    %612 = vmatmul.f32.gmra.mxu0 %v594
    %v613 = vpop.f32.mrf.mxu0
    %v614 = vadd.f32 0.0, %v613
    %615 = vdwg.mxu0
    %v617 = vsel %vm352, %v592, 0
    %619 = vmatpush.msra.mxu0 0.0
    %620 = vmatpush.msra.mxu0 0.0
    %621 = vmatpush.msra.mxu0 0.0
    %622 = vmatpush.msra.mxu0 0.0
    %623 = vmatpush.msra.mxu0 0.0
    %624 = vmatpush.msra.mxu0 0.0
    %625 = vmatpush.msra.mxu0 0.0
    %626 = vmatpush.msra.mxu0 0.0
    %627 = vmatpush.msra.mxu0 0.0
    %628 = vmatpush.msra.mxu0 0.0
    %629 = vmatpush.msra.mxu0 0.0
    %630 = vmatpush.msra.mxu0 0.0
    %631 = vmatpush.msra.mxu0 0.0
    %632 = vmatpush.msra.mxu0 0.0
    %633 = vmatpush.msra.mxu0 0.0
    %634 = vmatpush.msra.mxu0 %v288
    %635 = vmatmul.f32.gmra.mxu0 %v617
    %v636 = vpop.f32.mrf.mxu0
    %v637 = vadd.f32 0.0, %v636
    %638 = vdwg.mxu0
    %v639 = vmul.f32 %v614, %v112
    %v640 = vmul.f32 %v637, %v112
    %v641 = vadd.f32 %v525, %v639
    %v642 = vadd.f32 %v526, %v640
    %v643 = vmul.f32 %v254, %v117
    %v644 = vmul.f32 %v257, %v117
    %v646 = vsel %vm123, %v643, 0
    %648 = vmatpush.xpose.msra.mxu0 0.0
    %649 = vmatpush.xpose.msra.mxu0 0.0
    %650 = vmatpush.xpose.msra.mxu0 0.0
    %651 = vmatpush.xpose.msra.mxu0 0.0
    %652 = vmatpush.xpose.msra.mxu0 0.0
    %653 = vmatpush.xpose.msra.mxu0 0.0
    %654 = vmatpush.xpose.msra.mxu0 0.0
    %655 = vmatpush.xpose.msra.mxu0 0.0
    %656 = vmatpush.xpose.msra.mxu0 0.0
    %657 = vmatpush.xpose.msra.mxu0 0.0
    %658 = vmatpush.xpose.msra.mxu0 0.0
    %659 = vmatpush.xpose.msra.mxu0 0.0
    %660 = vmatpush.xpose.msra.mxu0 0.0
    %661 = vmatpush.xpose.msra.mxu0 0.0
    %662 = vmatpush.xpose.msra.mxu0 0.0
    %663 = vmatpush.xpose.msra.mxu0 %v646
    %664 = vmatmul.f32.gmra.mxu0 %v293
    %v665 = vpop.f32.mrf.mxu0
    %v666 = vadd.f32 0.0, %v665
    %667 = vdwg.mxu0
    %v669 = vsel %vm123, %v644, 0
    %671 = vmatpush.xpose.msra.mxu0 0.0
    %672 = vmatpush.xpose.msra.mxu0 0.0
    %673 = vmatpush.xpose.msra.mxu0 0.0
    %674 = vmatpush.xpose.msra.mxu0 0.0
    %675 = vmatpush.xpose.msra.mxu0 0.0
    %676 = vmatpush.xpose.msra.mxu0 0.0
    %677 = vmatpush.xpose.msra.mxu0 0.0
    %678 = vmatpush.xpose.msra.mxu0 0.0
    %679 = vmatpush.xpose.msra.mxu0 0.0
    %680 = vmatpush.xpose.msra.mxu0 0.0
    %681 = vmatpush.xpose.msra.mxu0 0.0
    %682 = vmatpush.xpose.msra.mxu0 0.0
    %683 = vmatpush.xpose.msra.mxu0 0.0
    %684 = vmatpush.xpose.msra.mxu0 0.0
    %685 = vmatpush.xpose.msra.mxu0 0.0
    %686 = vmatpush.xpose.msra.mxu0 %v669
    %687 = vmatmul.f32.gmra.mxu0 %v319
    %v688 = vpop.f32.mrf.mxu0
    %v689 = vadd.f32 0.0, %v688
    %690 = vdwg.mxu0
    %v691 = vmul.f32 %v666, 0.35355338
    %v692 = vmul.f32 %v689, 0.35355338
    %v693 = vadd.f32 %v691, %v96
    %v694 = vadd.f32 %v692, %v97
    %v695 = vmul.f32 %v693, 1.442695
    %v696 = vpow.pop %v695
    %v697 = vmul.f32 %v694, 1.442695
    %v698 = vpow.pop %v697
    %v699 = vsel %vm352, %v696, 0.0
    %700 = vadd.xlane.f32.xlu0 %v699
    %v701 = vpop.xlane.xlu0 %700
    %v702 = vsel %vm352, %v698, 0.0
    %703 = vadd.xlane.f32.xlu0 %v702
    %v704 = vpop.xlane.xlu0 %703
    %v705 = vrcp.pop %v701
    %v706 = vrcp.pop %v704
    %v707 = vmul.f32 %v696, %v705
    %v708 = vmul.f32 %v698, %v706
    %v710 = vsel %vm352, %v707, 0
    %712 = vmatpush.msra.mxu0 0.0
    %713 = vmatpush.msra.mxu0 0.0
    %714 = vmatpush.msra.mxu0 0.0
    %715 = vmatpush.msra.mxu0 0.0
    %716 = vmatpush.msra.mxu0 0.0
    %717 = vmatpush.msra.mxu0 0.0
    %718 = vmatpush.msra.mxu0 0.0
    %719 = vmatpush.msra.mxu0 0.0
    %720 = vmatpush.msra.mxu0 0.0
    %721 = vmatpush.msra.mxu0 0.0
    %722 = vmatpush.msra.mxu0 0.0
    %723 = vmatpush.msra.mxu0 0.0
    %724 = vmatpush.msra.mxu0 0.0
    %725 = vmatpush.msra.mxu0 0.0
    %726 = vmatpush.msra.mxu0 0.0
    %727 = vmatpush.msra.mxu0 %v285
    %728 = vmatmul.f32.gmra.mxu0 %v710
    %v729 = vpop.f32.mrf.mxu0
    %v730 = vadd.f32 0.0, %v729
    %731 = vdwg.mxu0
    %v733 = vsel %vm352, %v708, 0
    %735 = vmatpush.msra.mxu0 0.0
    %736 = vmatpush.msra.mxu0 0.0
    %737 = vmatpush.msra.mxu0 0.0
    %738 = vmatpush.msra.mxu0 0.0
    %739 = vmatpush.msra.mxu0 0.0
    %740 = vmatpush.msra.mxu0 0.0
    %741 = vmatpush.msra.mxu0 0.0
    %742 = vmatpush.msra.mxu0 0.0
    %743 = vmatpush.msra.mxu0 0.0
    %744 = vmatpush.msra.mxu0 0.0
    %745 = vmatpush.msra.mxu0 0.0
    %746 = vmatpush.msra.mxu0 0.0
    %747 = vmatpush.msra.mxu0 0.0
    %748 = vmatpush.msra.mxu0 0.0
    %749 = vmatpush.msra.mxu0 0.0
    %750 = vmatpush.msra.mxu0 %v288
    %751 = vmatmul.f32.gmra.mxu0 %v733
    %v752 = vpop.f32.mrf.mxu0
    %v753 = vadd.f32 0.0, %v752
    %754 = vdwg.mxu0
    %v755 = vmul.f32 %v730, %v117
    %v756 = vmul.f32 %v753, %v117
    %v757 = vadd.f32 %v641, %v755
    %v758 = vadd.f32 %v642, %v756
    %v759 = vld [vmem:[%s11] sm:$0xff]
    %v760 = vld [vmem:[%s11 + $0x8] sm:$0xff]
    %v761 = vld [vmem:[%s11 + $0x10] sm:$0xff]
    %v762 = vld [vmem:[%s11 + $0x18] sm:$0xff]
    %v763 = vld [vmem:[%s12] sm:$0x1]
    %v765 = vperm.slane %v763, 0
    %v768 = vsel %vm123, %v757, 0
    %v771 = vsel %vm123, %v758, 0
    %773 = vmatpush.msra.mxu0 0.0
    %774 = vmatpush.msra.mxu0 0.0
    %775 = vmatpush.msra.mxu0 0.0
    %776 = vmatpush.msra.mxu0 0.0
    %777 = vmatpush.msra.mxu0 0.0
    %778 = vmatpush.msra.mxu0 0.0
    %779 = vmatpush.msra.mxu0 0.0
    %780 = vmatpush.msra.mxu0 0.0
    %781 = vmatpush.msra.mxu0 0.0
    %782 = vmatpush.msra.mxu0 0.0
    %783 = vmatpush.msra.mxu0 0.0
    %784 = vmatpush.msra.mxu0 0.0
    %785 = vmatpush.msra.mxu0 %v762
    %786 = vmatpush.msra.mxu0 %v761
    %787 = vmatpush.msra.mxu0 %v760
    %788 = vmatpush.msra.mxu0 %v759
    %789 = vmatmul.f32.gmra.mxu0 %v768
    %v790 = vpop.f32.mrf.mxu0
    %v791 = vadd.f32 %v765, %v790
    %792 = vmatmul.f32.gmra.mxu0 %v771
    %v793 = vpop.f32.mrf.mxu0
    %v794 = vadd.f32 %v765, %v793
    %795 = vdwg.mxu0
    %v796 = vadd.f32 %v791, %v187
    %v797 = vadd.f32 %v794, %v188
    %v798 = vld [vmem:[%s13] sm:$0x1]
    %v799 = vld [vmem:[%s14] sm:$0x1]
    %v800 = vsel %vm123, %v796, 0.0
    %801 = vadd.xlane.f32.xlu0 %v800
    %v802 = vpop.xlane.xlu0 %801
    %v803 = vsel %vm123, %v797, 0.0
    %804 = vadd.xlane.f32.xlu0 %v803
    %v805 = vpop.xlane.xlu0 %804
    %v806 = vmul.f32 %v802, %v136
    %v807 = vmul.f32 %v805, %v136
    %v808 = vmul.f32 %v796, %v796
    %v809 = vmul.f32 %v797, %v797
    %v810 = vsel %vm123, %v808, 0.0
    %811 = vadd.xlane.f32.xlu0 %v810
    %v812 = vpop.xlane.xlu0 %811
    %v813 = vsel %vm123, %v809, 0.0
    %814 = vadd.xlane.f32.xlu0 %v813
    %v815 = vpop.xlane.xlu0 %814
    %v816 = vmul.f32 %v812, %v136
    %v817 = vmul.f32 %v815, %v136
    %v818 = vmul.f32 %v806, %v806
    %v819 = vmul.f32 %v807, %v807
    %v820 = vsub.f32 %v816, %v818
    %v821 = vsub.f32 %v817, %v819
    %v822 = vsub.f32 %v796, %v806
    %v823 = vsub.f32 %v797, %v807
    %v824 = vadd.f32 %v820, 1e-12
    %v825 = vadd.f32 %v821, 1e-12
    %v826 = vrsqrt.pop %v824
    %v827 = vmul.f32 %v826, %v824
    %v828 = vmul.f32 %v827, %v826
    %v829 = vmul.f32 0.5, %v828
    %v830 = vsub.f32 1.5, %v829
    %v831 = vmul.f32 %v826, %v830
    %vm832 = vweird.f32 %v824
    %vm833 = vweird.f32 %v826
    %vm834 = vmor %vm832, %vm833
    %v835 = vsel %vm834, %v826, %v831
    %v836 = vrsqrt.pop %v825
    %v837 = vmul.f32 %v836, %v825
    %v838 = vmul.f32 %v837, %v836
    %v839 = vmul.f32 0.5, %v838
    %v840 = vsub.f32 1.5, %v839
    %v841 = vmul.f32 %v836, %v840
    %vm842 = vweird.f32 %v825
    %vm843 = vweird.f32 %v836
    %vm844 = vmor %vm842, %vm843
    %v845 = vsel %vm844, %v836, %v841
    %v846 = vmul.f32 %v822, %v835
    %v847 = vmul.f32 %v823, %v845
    %v849 = vperm.slane %v798, 0
    %v851 = vmul.f32 %v846, %v849
    %v852 = vmul.f32 %v847, %v849
    %v854 = vperm.slane %v799, 0
    %v856 = vadd.f32 %v851, %v854
    %v857 = vadd.f32 %v852, %v854
    %v858 = vld [vmem:[#allocation2] sm:$0xff]
    %v859 = vld [vmem:[#allocation2 + $0x8] sm:$0xff]
    %v860 = vld [vmem:[#allocation2 + $0x10] sm:$0xff]
    %v861 = vld [vmem:[#allocation2 + $0x18] sm:$0xff]
    %v862 = vld [vmem:[%s16] sm:$0x1]
    %v864 = vperm.slane %v862, 0
    %v867 = vsel %vm123, %v856, 0
    %v870 = vsel %vm123, %v857, 0
    %872 = vmatpush.msra.mxu0 0.0
    %873 = vmatpush.msra.mxu0 0.0
    %874 = vmatpush.msra.mxu0 0.0
    %875 = vmatpush.msra.mxu0 0.0
    %876 = vmatpush.msra.mxu0 0.0
    %877 = vmatpush.msra.mxu0 0.0
    %878 = vmatpush.msra.mxu0 0.0
    %879 = vmatpush.msra.mxu0 0.0
    %880 = vmatpush.msra.mxu0 0.0
    %881 = vmatpush.msra.mxu0 0.0
    %882 = vmatpush.msra.mxu0 0.0
    %883 = vmatpush.msra.mxu0 0.0
    %884 = vmatpush.msra.mxu0 %v861
    %885 = vmatpush.msra.mxu0 %v860
    %886 = vmatpush.msra.mxu0 %v859
    %887 = vmatpush.msra.mxu0 %v858
    %888 = vmatmul.f32.gmra.mxu0 %v867
    %v889 = vpop.f32.mrf.mxu0
    %v890 = vadd.f32 %v864, %v889
    %891 = vmatmul.f32.gmra.mxu0 %v870
    %v892 = vpop.f32.mrf.mxu0
    %v893 = vadd.f32 %v864, %v892
    %894 = vdwg.mxu0
    %v895 = vmul.f32 %v890, %v890
    %v896 = vmul.f32 %v893, %v893
    %v897 = vmul.f32 %v890, %v895
    %v898 = vmul.f32 %v893, %v896
    %v899 = vmul.f32 %v897, 0.044715
    %v900 = vmul.f32 %v898, 0.044715
    %v901 = vadd.f32 %v890, %v899
    %v902 = vadd.f32 %v893, %v900
    %v903 = vmul.f32 %v901, 0.7978846
    %v904 = vmul.f32 %v902, 0.7978846
    %v905 = vtanh.pop %v903
    %v906 = vtanh.pop %v904
    %v907 = vadd.f32 %v905, 1.0
    %v908 = vadd.f32 %v906, 1.0
    %v909 = vmul.f32 %v907, 0.5
    %v910 = vmul.f32 %v908, 0.5
    %v911 = vmul.f32 %v890, %v909
    %v912 = vmul.f32 %v893, %v910
    %v913 = vld [vmem:[%s17] sm:$0xff]
    %v914 = vld [vmem:[%s17 + $0x8] sm:$0xff]
    %v915 = vld [vmem:[%s17 + $0x10] sm:$0xff]
    %v916 = vld [vmem:[%s17 + $0x18] sm:$0xff]
    %v917 = vld [vmem:[%s17 + $0x20] sm:$0xff]
    %v918 = vld [vmem:[%s17 + $0x28] sm:$0xff]
    %v919 = vld [vmem:[%s17 + $0x30] sm:$0xff]
    %v920 = vld [vmem:[%s17 + $0x38] sm:$0xff]
    %v921 = vld [vmem:[%s18] sm:$0x1]
    %v923 = vperm.slane %v921, 0
    %vm925 = vcmask 523264
    %v927 = vsel %vm925, %v911, 0
    %v930 = vsel %vm925, %v912, 0
    %932 = vmatpush.msra.mxu0 0.0
    %933 = vmatpush.msra.mxu0 0.0
    %934 = vmatpush.msra.mxu0 0.0
    %935 = vmatpush.msra.mxu0 0.0
    %936 = vmatpush.msra.mxu0 0.0
    %937 = vmatpush.msra.mxu0 0.0
    %938 = vmatpush.msra.mxu0 0.0
    %939 = vmatpush.msra.mxu0 0.0
    %940 = vmatpush.msra.mxu0 %v920
    %941 = vmatpush.msra.mxu0 %v919
    %942 = vmatpush.msra.mxu0 %v918
    %943 = vmatpush.msra.mxu0 %v917
    %944 = vmatpush.msra.mxu0 %v916
    %945 = vmatpush.msra.mxu0 %v915
    %946 = vmatpush.msra.mxu0 %v914
    %947 = vmatpush.msra.mxu0 %v913
    %948 = vmatmul.f32.gmra.mxu0 %v927
    %v949 = vpop.f32.mrf.mxu0
    %v950 = vadd.f32 %v923, %v949
    %951 = vmatmul.f32.gmra.mxu0 %v930
    %v952 = vpop.f32.mrf.mxu0
    %v953 = vadd.f32 %v923, %v952
    %954 = vdwg.mxu0
    %v955 = vadd.f32 %v950, %v856
    %v956 = vadd.f32 %v953, %v857
    %v957 = vld [vmem:[%s19] sm:$0x1]
    %v958 = vld [vmem:[%s20] sm:$0x1]
    %v959 = vsel %vm123, %v955, 0.0
    %960 = vadd.xlane.f32.xlu0 %v959
    %v961 = vpop.xlane.xlu0 %960
    %v962 = vsel %vm123, %v956, 0.0
    %963 = vadd.xlane.f32.xlu0 %v962
    %v964 = vpop.xlane.xlu0 %963
    %v965 = vmul.f32 %v961, %v136
    %v966 = vmul.f32 %v964, %v136
    %v967 = vmul.f32 %v955, %v955
    %v968 = vmul.f32 %v956, %v956
    %v969 = vsel %vm123, %v967, 0.0
    %970 = vadd.xlane.f32.xlu0 %v969
    %v971 = vpop.xlane.xlu0 %970
    %v972 = vsel %vm123, %v968, 0.0
    %973 = vadd.xlane.f32.xlu0 %v972
    %v974 = vpop.xlane.xlu0 %973
    %v975 = vmul.f32 %v971, %v136
    %v976 = vmul.f32 %v974, %v136
    %v977 = vmul.f32 %v965, %v965
    %v978 = vmul.f32 %v966, %v966
    %v979 = vsub.f32 %v975, %v977
    %v980 = vsub.f32 %v976, %v978
    %v981 = vsub.f32 %v955, %v965
    %v982 = vsub.f32 %v956, %v966
    %v983 = vadd.f32 %v979, 1e-12
    %v984 = vadd.f32 %v980, 1e-12
    %v985 = vrsqrt.pop %v983
    %v986 = vmul.f32 %v985, %v983
    %v987 = vmul.f32 %v986, %v985
    %v988 = vmul.f32 0.5, %v987
    %v989 = vsub.f32 1.5, %v988
    %v990 = vmul.f32 %v985, %v989
    %vm991 = vweird.f32 %v983
    %vm992 = vweird.f32 %v985
    %vm993 = vmor %vm991, %vm992
    %v994 = vsel %vm993, %v985, %v990
    %v995 = vrsqrt.pop %v984
    %v996 = vmul.f32 %v995, %v984
    %v997 = vmul.f32 %v996, %v995
    %v998 = vmul.f32 0.5, %v997
    %v999 = vsub.f32 1.5, %v998
    %v1000 = vmul.f32 %v995, %v999
    %vm1001 = vweird.f32 %v984
    %vm1002 = vweird.f32 %v995
    %vm1003 = vmor %vm1001, %vm1002
    %v1004 = vsel %vm1003, %v995, %v1000
    %v1005 = vmul.f32 %v981, %v994
    %v1006 = vmul.f32 %v982, %v1004
    %v1008 = vperm.slane %v957, 0
    %v1010 = vmul.f32 %v1005, %v1008
    %v1011 = vmul.f32 %v1006, %v1008
    %v1013 = vperm.slane %v958, 0
    %v1015 = vadd.f32 %v1010, %v1013
    %v1016 = vadd.f32 %v1011, %v1013
    %s1017 = scalar_lea.vmem %s24, 16
    %1018 = vst.msk [vmem:[%s1017] sm:$0xff] %vm123, %v1015
    %1019 = vst.msk [vmem:[%s1017 + $0x8] sm:$0xff] %vm123, %v1016
    %s1020 = scalar_lea.vmem %s21, 160
    %v1021 = vld [vmem:[%s1020] sm:$0xff]
    %v1022 = vld [vmem:[%s1020 + $0x8] sm:$0xff]
    %v1023 = vld [vmem:[%s1020 + $0x10] sm:$0xff]
    %v1024 = vld [vmem:[%s1020 + $0x18] sm:$0xff]
    %s1025 = scalar_lea.vmem %s5, 32
    %v1026 = vld [vmem:[%s1025] sm:$0xff]
    %v1027 = vld [vmem:[%s1025 + $0x8] sm:$0xff]
    %v1028 = vld [vmem:[%s1025 + $0x10] sm:$0xff]
    %v1029 = vld [vmem:[%s1025 + $0x18] sm:$0xff]
    %s1030 = scalar_lea.vmem %s6, 1
    %v1031 = vld [vmem:[%s1030] sm:$0x1]
    %v1033 = vperm.slane %v1031, 0
    %v1036 = vsel %vm123, %v1015, 0
    %v1039 = vsel %vm123, %v1016, 0
    %1041 = vmatpush.msra.mxu0 0.0
    %1042 = vmatpush.msra.mxu0 0.0
    %1043 = vmatpush.msra.mxu0 0.0
    %1044 = vmatpush.msra.mxu0 0.0
    %1045 = vmatpush.msra.mxu0 0.0
    %1046 = vmatpush.msra.mxu0 0.0
    %1047 = vmatpush.msra.mxu0 0.0
    %1048 = vmatpush.msra.mxu0 0.0
    %1049 = vmatpush.msra.mxu0 0.0
    %1050 = vmatpush.msra.mxu0 0.0
    %1051 = vmatpush.msra.mxu0 0.0
    %1052 = vmatpush.msra.mxu0 0.0
    %1053 = vmatpush.msra.mxu0 %v1029
    %1054 = vmatpush.msra.mxu0 %v1028
    %1055 = vmatpush.msra.mxu0 %v1027
    %1056 = vmatpush.msra.mxu0 %v1026
    %1057 = vmatmul.f32.gmra.mxu0 %v1036
    %v1058 = vpop.f32.mrf.mxu0
    %v1059 = vadd.f32 %v1033, %v1058
    %1060 = vmatmul.f32.gmra.mxu0 %v1039
    %v1061 = vpop.f32.mrf.mxu0
    %v1062 = vadd.f32 %v1033, %v1061
    %1063 = vdwg.mxu0
    %s1064 = scalar_lea.vmem %s7, 32
    %v1065 = vld [vmem:[%s1064] sm:$0xff]
    %v1066 = vld [vmem:[%s1064 + $0x8] sm:$0xff]
    %v1067 = vld [vmem:[%s1064 + $0x10] sm:$0xff]
    %v1068 = vld [vmem:[%s1064 + $0x18] sm:$0xff]
    %s1069 = scalar_lea.vmem %s8, 1
    %v1070 = vld [vmem:[%s1069] sm:$0x1]
    %v1072 = vperm.slane %v1070, 0
    %1074 = vmatpush.msra.mxu0 0.0
    %1075 = vmatpush.msra.mxu0 0.0
    %1076 = vmatpush.msra.mxu0 0.0
    %1077 = vmatpush.msra.mxu0 0.0
    %1078 = vmatpush.msra.mxu0 0.0
    %1079 = vmatpush.msra.mxu0 0.0
    %1080 = vmatpush.msra.mxu0 0.0
    %1081 = vmatpush.msra.mxu0 0.0
    %1082 = vmatpush.msra.mxu0 0.0
    %1083 = vmatpush.msra.mxu0 0.0
    %1084 = vmatpush.msra.mxu0 0.0
    %1085 = vmatpush.msra.mxu0 0.0
    %1086 = vmatpush.msra.mxu0 %v1068
    %1087 = vmatpush.msra.mxu0 %v1067
    %1088 = vmatpush.msra.mxu0 %v1066
    %1089 = vmatpush.msra.mxu0 %v1065
    %1090 = vmatmul.f32.gmra.mxu0 %v1036
    %v1091 = vpop.f32.mrf.mxu0
    %v1092 = vadd.f32 %v1072, %v1091
    %1093 = vmatmul.f32.gmra.mxu0 %v1039
    %v1094 = vpop.f32.mrf.mxu0
    %v1095 = vadd.f32 %v1072, %v1094
    %1096 = vdwg.mxu0
    %s1097 = scalar_lea.vmem %s9, 32
    %v1098 = vld [vmem:[%s1097] sm:$0xff]
    %v1099 = vld [vmem:[%s1097 + $0x8] sm:$0xff]
    %v1100 = vld [vmem:[%s1097 + $0x10] sm:$0xff]
    %v1101 = vld [vmem:[%s1097 + $0x18] sm:$0xff]
    %s1102 = scalar_lea.vmem %s10, 1
    %v1103 = vld [vmem:[%s1102] sm:$0x1]
    %v1105 = vperm.slane %v1103, 0
    %1107 = vmatpush.msra.mxu0 0.0
    %1108 = vmatpush.msra.mxu0 0.0
    %1109 = vmatpush.msra.mxu0 0.0
    %1110 = vmatpush.msra.mxu0 0.0
    %1111 = vmatpush.msra.mxu0 0.0
    %1112 = vmatpush.msra.mxu0 0.0
    %1113 = vmatpush.msra.mxu0 0.0
    %1114 = vmatpush.msra.mxu0 0.0
    %1115 = vmatpush.msra.mxu0 0.0
    %1116 = vmatpush.msra.mxu0 0.0
    %1117 = vmatpush.msra.mxu0 0.0
    %1118 = vmatpush.msra.mxu0 0.0
    %1119 = vmatpush.msra.mxu0 %v1101
    %1120 = vmatpush.msra.mxu0 %v1100
    %1121 = vmatpush.msra.mxu0 %v1099
    %1122 = vmatpush.msra.mxu0 %v1098
    %1123 = vmatmul.f32.gmra.mxu0 %v1036
    %v1124 = vpop.f32.mrf.mxu0
    %v1125 = vadd.f32 %v1105, %v1124
    %1126 = vmatmul.f32.gmra.mxu0 %v1039
    %v1127 = vpop.f32.mrf.mxu0
    %v1128 = vadd.f32 %v1105, %v1127
    %1129 = vdwg.mxu0
    %v1130 = vmul.f32 %v1092, %v102
    %v1131 = vmul.f32 %v1095, %v102
    %v1133 = vsel %vm123, %v1059, 0
    %v1136 = vsel %vm123, %v1130, 0
    %1138 = vmatpush.xpose.msra.mxu0 0.0
    %1139 = vmatpush.xpose.msra.mxu0 0.0
    %1140 = vmatpush.xpose.msra.mxu0 0.0
    %1141 = vmatpush.xpose.msra.mxu0 0.0
    %1142 = vmatpush.xpose.msra.mxu0 0.0
    %1143 = vmatpush.xpose.msra.mxu0 0.0
    %1144 = vmatpush.xpose.msra.mxu0 0.0
    %1145 = vmatpush.xpose.msra.mxu0 0.0
    %1146 = vmatpush.xpose.msra.mxu0 0.0
    %1147 = vmatpush.xpose.msra.mxu0 0.0
    %1148 = vmatpush.xpose.msra.mxu0 0.0
    %1149 = vmatpush.xpose.msra.mxu0 0.0
    %1150 = vmatpush.xpose.msra.mxu0 0.0
    %1151 = vmatpush.xpose.msra.mxu0 0.0
    %1152 = vmatpush.xpose.msra.mxu0 0.0
    %1153 = vmatpush.xpose.msra.mxu0 %v1136
    %1154 = vmatmul.f32.gmra.mxu0 %v1133
    %v1155 = vpop.f32.mrf.mxu0
    %v1156 = vadd.f32 0.0, %v1155
    %1157 = vdwg.mxu0
    %v1159 = vsel %vm123, %v1062, 0
    %v1162 = vsel %vm123, %v1131, 0
    %1164 = vmatpush.xpose.msra.mxu0 0.0
    %1165 = vmatpush.xpose.msra.mxu0 0.0
    %1166 = vmatpush.xpose.msra.mxu0 0.0
    %1167 = vmatpush.xpose.msra.mxu0 0.0
    %1168 = vmatpush.xpose.msra.mxu0 0.0
    %1169 = vmatpush.xpose.msra.mxu0 0.0
    %1170 = vmatpush.xpose.msra.mxu0 0.0
    %1171 = vmatpush.xpose.msra.mxu0 0.0
    %1172 = vmatpush.xpose.msra.mxu0 0.0
    %1173 = vmatpush.xpose.msra.mxu0 0.0
    %1174 = vmatpush.xpose.msra.mxu0 0.0
    %1175 = vmatpush.xpose.msra.mxu0 0.0
    %1176 = vmatpush.xpose.msra.mxu0 0.0
    %1177 = vmatpush.xpose.msra.mxu0 0.0
    %1178 = vmatpush.xpose.msra.mxu0 0.0
    %1179 = vmatpush.xpose.msra.mxu0 %v1162
    %1180 = vmatmul.f32.gmra.mxu0 %v1159
    %v1181 = vpop.f32.mrf.mxu0
    %v1182 = vadd.f32 0.0, %v1181
    %1183 = vdwg.mxu0
    %v1184 = vmul.f32 %v1156, 0.35355338
    %v1185 = vmul.f32 %v1182, 0.35355338
    %v1186 = vadd.f32 %v1184, %v96
    %v1187 = vadd.f32 %v1185, %v97
    %v1188 = vmul.f32 %v1186, 1.442695
    %v1189 = vpow.pop %v1188
    %v1190 = vmul.f32 %v1187, 1.442695
    %v1191 = vpow.pop %v1190
    %v1192 = vsel %vm352, %v1189, 0.0
    %1193 = vadd.xlane.f32.xlu0 %v1192
    %v1194 = vpop.xlane.xlu0 %1193
    %v1195 = vsel %vm352, %v1191, 0.0
    %1196 = vadd.xlane.f32.xlu0 %v1195
    %v1197 = vpop.xlane.xlu0 %1196
    %v1198 = vrcp.pop %v1194
    %v1199 = vrcp.pop %v1197
    %v1200 = vmul.f32 %v1189, %v1198
    %v1201 = vmul.f32 %v1191, %v1199
    %v1203 = vsel %vm352, %v1200, 0
    %1205 = vmatpush.msra.mxu0 0.0
    %1206 = vmatpush.msra.mxu0 0.0
    %1207 = vmatpush.msra.mxu0 0.0
    %1208 = vmatpush.msra.mxu0 0.0
    %1209 = vmatpush.msra.mxu0 0.0
    %1210 = vmatpush.msra.mxu0 0.0
    %1211 = vmatpush.msra.mxu0 0.0
    %1212 = vmatpush.msra.mxu0 0.0
    %1213 = vmatpush.msra.mxu0 0.0
    %1214 = vmatpush.msra.mxu0 0.0
    %1215 = vmatpush.msra.mxu0 0.0
    %1216 = vmatpush.msra.mxu0 0.0
    %1217 = vmatpush.msra.mxu0 0.0
    %1218 = vmatpush.msra.mxu0 0.0
    %1219 = vmatpush.msra.mxu0 0.0
    %1220 = vmatpush.msra.mxu0 %v1125
    %1221 = vmatmul.f32.gmra.mxu0 %v1203
    %v1222 = vpop.f32.mrf.mxu0
    %v1223 = vadd.f32 0.0, %v1222
    %1224 = vdwg.mxu0
    %v1226 = vsel %vm352, %v1201, 0
    %1228 = vmatpush.msra.mxu0 0.0
    %1229 = vmatpush.msra.mxu0 0.0
    %1230 = vmatpush.msra.mxu0 0.0
    %1231 = vmatpush.msra.mxu0 0.0
    %1232 = vmatpush.msra.mxu0 0.0
    %1233 = vmatpush.msra.mxu0 0.0
    %1234 = vmatpush.msra.mxu0 0.0
    %1235 = vmatpush.msra.mxu0 0.0
    %1236 = vmatpush.msra.mxu0 0.0
    %1237 = vmatpush.msra.mxu0 0.0
    %1238 = vmatpush.msra.mxu0 0.0
    %1239 = vmatpush.msra.mxu0 0.0
    %1240 = vmatpush.msra.mxu0 0.0
    %1241 = vmatpush.msra.mxu0 0.0
    %1242 = vmatpush.msra.mxu0 0.0
    %1243 = vmatpush.msra.mxu0 %v1128
    %1244 = vmatmul.f32.gmra.mxu0 %v1226
    %v1245 = vpop.f32.mrf.mxu0
    %v1246 = vadd.f32 0.0, %v1245
    %1247 = vdwg.mxu0
    %v1248 = vmul.f32 %v1223, %v102
    %v1249 = vmul.f32 %v1246, %v102
    %v1250 = vmul.f32 %v1092, %v107
    %v1251 = vmul.f32 %v1095, %v107
    %v1253 = vsel %vm123, %v1250, 0
    %1255 = vmatpush.xpose.msra.mxu0 0.0
    %1256 = vmatpush.xpose.msra.mxu0 0.0
    %1257 = vmatpush.xpose.msra.mxu0 0.0
    %1258 = vmatpush.xpose.msra.mxu0 0.0
    %1259 = vmatpush.xpose.msra.mxu0 0.0
    %1260 = vmatpush.xpose.msra.mxu0 0.0
    %1261 = vmatpush.xpose.msra.mxu0 0.0
    %1262 = vmatpush.xpose.msra.mxu0 0.0
    %1263 = vmatpush.xpose.msra.mxu0 0.0
    %1264 = vmatpush.xpose.msra.mxu0 0.0
    %1265 = vmatpush.xpose.msra.mxu0 0.0
    %1266 = vmatpush.xpose.msra.mxu0 0.0
    %1267 = vmatpush.xpose.msra.mxu0 0.0
    %1268 = vmatpush.xpose.msra.mxu0 0.0
    %1269 = vmatpush.xpose.msra.mxu0 0.0
    %1270 = vmatpush.xpose.msra.mxu0 %v1253
    %1271 = vmatmul.f32.gmra.mxu0 %v1133
    %v1272 = vpop.f32.mrf.mxu0
    %v1273 = vadd.f32 0.0, %v1272
    %1274 = vdwg.mxu0
    %v1276 = vsel %vm123, %v1251, 0
    %1278 = vmatpush.xpose.msra.mxu0 0.0
    %1279 = vmatpush.xpose.msra.mxu0 0.0
    %1280 = vmatpush.xpose.msra.mxu0 0.0
    %1281 = vmatpush.xpose.msra.mxu0 0.0
    %1282 = vmatpush.xpose.msra.mxu0 0.0
    %1283 = vmatpush.xpose.msra.mxu0 0.0
    %1284 = vmatpush.xpose.msra.mxu0 0.0
    %1285 = vmatpush.xpose.msra.mxu0 0.0
    %1286 = vmatpush.xpose.msra.mxu0 0.0
    %1287 = vmatpush.xpose.msra.mxu0 0.0
    %1288 = vmatpush.xpose.msra.mxu0 0.0
    %1289 = vmatpush.xpose.msra.mxu0 0.0
    %1290 = vmatpush.xpose.msra.mxu0 0.0
    %1291 = vmatpush.xpose.msra.mxu0 0.0
    %1292 = vmatpush.xpose.msra.mxu0 0.0
    %1293 = vmatpush.xpose.msra.mxu0 %v1276
    %1294 = vmatmul.f32.gmra.mxu0 %v1159
    %v1295 = vpop.f32.mrf.mxu0
    %v1296 = vadd.f32 0.0, %v1295
    %1297 = vdwg.mxu0
    %v1298 = vmul.f32 %v1273, 0.35355338
    %v1299 = vmul.f32 %v1296, 0.35355338
    %v1300 = vadd.f32 %v1298, %v96
    %v1301 = vadd.f32 %v1299, %v97
    %v1302 = vmul.f32 %v1300, 1.442695
    %v1303 = vpow.pop %v1302
    %v1304 = vmul.f32 %v1301, 1.442695
    %v1305 = vpow.pop %v1304
    %v1306 = vsel %vm352, %v1303, 0.0
    %1307 = vadd.xlane.f32.xlu0 %v1306
    %v1308 = vpop.xlane.xlu0 %1307
    %v1309 = vsel %vm352, %v1305, 0.0
    %1310 = vadd.xlane.f32.xlu0 %v1309
    %v1311 = vpop.xlane.xlu0 %1310
    %v1312 = vrcp.pop %v1308
    %v1313 = vrcp.pop %v1311
    %v1314 = vmul.f32 %v1303, %v1312
    %v1315 = vmul.f32 %v1305, %v1313
    %v1317 = vsel %vm352, %v1314, 0
    %1319 = vmatpush.msra.mxu0 0.0
    %1320 = vmatpush.msra.mxu0 0.0
    %1321 = vmatpush.msra.mxu0 0.0
    %1322 = vmatpush.msra.mxu0 0.0
    %1323 = vmatpush.msra.mxu0 0.0
    %1324 = vmatpush.msra.mxu0 0.0
    %1325 = vmatpush.msra.mxu0 0.0
    %1326 = vmatpush.msra.mxu0 0.0
    %1327 = vmatpush.msra.mxu0 0.0
    %1328 = vmatpush.msra.mxu0 0.0
    %1329 = vmatpush.msra.mxu0 0.0
    %1330 = vmatpush.msra.mxu0 0.0
    %1331 = vmatpush.msra.mxu0 0.0
    %1332 = vmatpush.msra.mxu0 0.0
    %1333 = vmatpush.msra.mxu0 0.0
    %1334 = vmatpush.msra.mxu0 %v1125
    %1335 = vmatmul.f32.gmra.mxu0 %v1317
    %v1336 = vpop.f32.mrf.mxu0
    %v1337 = vadd.f32 0.0, %v1336
    %1338 = vdwg.mxu0
    %v1340 = vsel %vm352, %v1315, 0
    %1342 = vmatpush.msra.mxu0 0.0
    %1343 = vmatpush.msra.mxu0 0.0
    %1344 = vmatpush.msra.mxu0 0.0
    %1345 = vmatpush.msra.mxu0 0.0
    %1346 = vmatpush.msra.mxu0 0.0
    %1347 = vmatpush.msra.mxu0 0.0
    %1348 = vmatpush.msra.mxu0 0.0
    %1349 = vmatpush.msra.mxu0 0.0
    %1350 = vmatpush.msra.mxu0 0.0
    %1351 = vmatpush.msra.mxu0 0.0
    %1352 = vmatpush.msra.mxu0 0.0
    %1353 = vmatpush.msra.mxu0 0.0
    %1354 = vmatpush.msra.mxu0 0.0
    %1355 = vmatpush.msra.mxu0 0.0
    %1356 = vmatpush.msra.mxu0 0.0
    %1357 = vmatpush.msra.mxu0 %v1128
    %1358 = vmatmul.f32.gmra.mxu0 %v1340
    %v1359 = vpop.f32.mrf.mxu0
    %v1360 = vadd.f32 0.0, %v1359
    %1361 = vdwg.mxu0
    %v1362 = vmul.f32 %v1337, %v107
    %v1363 = vmul.f32 %v1360, %v107
    %v1364 = vadd.f32 %v1248, %v1362
    %v1365 = vadd.f32 %v1249, %v1363
    %v1366 = vmul.f32 %v1092, %v112
    %v1367 = vmul.f32 %v1095, %v112
    %v1369 = vsel %vm123, %v1366, 0
    %1371 = vmatpush.xpose.msra.mxu0 0.0
    %1372 = vmatpush.xpose.msra.mxu0 0.0
    %1373 = vmatpush.xpose.msra.mxu0 0.0
    %1374 = vmatpush.xpose.msra.mxu0 0.0
    %1375 = vmatpush.xpose.msra.mxu0 0.0
    %1376 = vmatpush.xpose.msra.mxu0 0.0
    %1377 = vmatpush.xpose.msra.mxu0 0.0
    %1378 = vmatpush.xpose.msra.mxu0 0.0
    %1379 = vmatpush.xpose.msra.mxu0 0.0
    %1380 = vmatpush.xpose.msra.mxu0 0.0
    %1381 = vmatpush.xpose.msra.mxu0 0.0
    %1382 = vmatpush.xpose.msra.mxu0 0.0
    %1383 = vmatpush.xpose.msra.mxu0 0.0
    %1384 = vmatpush.xpose.msra.mxu0 0.0
    %1385 = vmatpush.xpose.msra.mxu0 0.0
    %1386 = vmatpush.xpose.msra.mxu0 %v1369
    %1387 = vmatmul.f32.gmra.mxu0 %v1133
    %v1388 = vpop.f32.mrf.mxu0
    %v1389 = vadd.f32 0.0, %v1388
    %1390 = vdwg.mxu0
    %v1392 = vsel %vm123, %v1367, 0
    %1394 = vmatpush.xpose.msra.mxu0 0.0
    %1395 = vmatpush.xpose.msra.mxu0 0.0
    %1396 = vmatpush.xpose.msra.mxu0 0.0
    %1397 = vmatpush.xpose.msra.mxu0 0.0
    %1398 = vmatpush.xpose.msra.mxu0 0.0
    %1399 = vmatpush.xpose.msra.mxu0 0.0
    %1400 = vmatpush.xpose.msra.mxu0 0.0
    %1401 = vmatpush.xpose.msra.mxu0 0.0
    %1402 = vmatpush.xpose.msra.mxu0 0.0
    %1403 = vmatpush.xpose.msra.mxu0 0.0
    %1404 = vmatpush.xpose.msra.mxu0 0.0
    %1405 = vmatpush.xpose.msra.mxu0 0.0
    %1406 = vmatpush.xpose.msra.mxu0 0.0
    %1407 = vmatpush.xpose.msra.mxu0 0.0
    %1408 = vmatpush.xpose.msra.mxu0 0.0
    %1409 = vmatpush.xpose.msra.mxu0 %v1392
    %1410 = vmatmul.f32.gmra.mxu0 %v1159
    %v1411 = vpop.f32.mrf.mxu0
    %v1412 = vadd.f32 0.0, %v1411
    %1413 = vdwg.mxu0
    %v1414 = vmul.f32 %v1389, 0.35355338
    %v1415 = vmul.f32 %v1412, 0.35355338
    %v1416 = vadd.f32 %v1414, %v96
    %v1417 = vadd.f32 %v1415, %v97
    %v1418 = vmul.f32 %v1416, 1.442695
    %v1419 = vpow.pop %v1418
    %v1420 = vmul.f32 %v1417, 1.442695
    %v1421 = vpow.pop %v1420
    %v1422 = vsel %vm352, %v1419, 0.0
    %1423 = vadd.xlane.f32.xlu0 %v1422
    %v1424 = vpop.xlane.xlu0 %1423
    %v1425 = vsel %vm352, %v1421, 0.0
    %1426 = vadd.xlane.f32.xlu0 %v1425
    %v1427 = vpop.xlane.xlu0 %1426
    %v1428 = vrcp.pop %v1424
    %v1429 = vrcp.pop %v1427
    %v1430 = vmul.f32 %v1419, %v1428
    %v1431 = vmul.f32 %v1421, %v1429
    %v1433 = vsel %vm352, %v1430, 0
    %1435 = vmatpush.msra.mxu0 0.0
    %1436 = vmatpush.msra.mxu0 0.0
    %1437 = vmatpush.msra.mxu0 0.0
    %1438 = vmatpush.msra.mxu0 0.0
    %1439 = vmatpush.msra.mxu0 0.0
    %1440 = vmatpush.msra.mxu0 0.0
    %1441 = vmatpush.msra.mxu0 0.0
    %1442 = vmatpush.msra.mxu0 0.0
    %1443 = vmatpush.msra.mxu0 0.0
    %1444 = vmatpush.msra.mxu0 0.0
    %1445 = vmatpush.msra.mxu0 0.0
    %1446 = vmatpush.msra.mxu0 0.0
    %1447 = vmatpush.msra.mxu0 0.0
    %1448 = vmatpush.msra.mxu0 0.0
    %1449 = vmatpush.msra.mxu0 0.0
    %1450 = vmatpush.msra.mxu0 %v1125
    %1451 = vmatmul.f32.gmra.mxu0 %v1433
    %v1452 = vpop.f32.mrf.mxu0
    %v1453 = vadd.f32 0.0, %v1452
    %1454 = vdwg.mxu0
    %v1456 = vsel %vm352, %v1431, 0
    %1458 = vmatpush.msra.mxu0 0.0
    %1459 = vmatpush.msra.mxu0 0.0
    %1460 = vmatpush.msra.mxu0 0.0
    %1461 = vmatpush.msra.mxu0 0.0
    %1462 = vmatpush.msra.mxu0 0.0
    %1463 = vmatpush.msra.mxu0 0.0
    %1464 = vmatpush.msra.mxu0 0.0
    %1465 = vmatpush.msra.mxu0 0.0
    %1466 = vmatpush.msra.mxu0 0.0
    %1467 = vmatpush.msra.mxu0 0.0
    %1468 = vmatpush.msra.mxu0 0.0
    %1469 = vmatpush.msra.mxu0 0.0
    %1470 = vmatpush.msra.mxu0 0.0
    %1471 = vmatpush.msra.mxu0 0.0
    %1472 = vmatpush.msra.mxu0 0.0
    %1473 = vmatpush.msra.mxu0 %v1128
    %1474 = vmatmul.f32.gmra.mxu0 %v1456
    %v1475 = vpop.f32.mrf.mxu0
    %v1476 = vadd.f32 0.0, %v1475
    %1477 = vdwg.mxu0
    %v1478 = vmul.f32 %v1453, %v112
    %v1479 = vmul.f32 %v1476, %v112
    %v1480 = vadd.f32 %v1364, %v1478
    %v1481 = vadd.f32 %v1365, %v1479
    %v1482 = vmul.f32 %v1092, %v117
    %v1483 = vmul.f32 %v1095, %v117
    %v1485 = vsel %vm123, %v1482, 0
    %1487 = vmatpush.xpose.msra.mxu0 0.0
    %1488 = vmatpush.xpose.msra.mxu0 0.0
    %1489 = vmatpush.xpose.msra.mxu0 0.0
    %1490 = vmatpush.xpose.msra.mxu0 0.0
    %1491 = vmatpush.xpose.msra.mxu0 0.0
    %1492 = vmatpush.xpose.msra.mxu0 0.0
    %1493 = vmatpush.xpose.msra.mxu0 0.0
    %1494 = vmatpush.xpose.msra.mxu0 0.0
    %1495 = vmatpush.xpose.msra.mxu0 0.0
    %1496 = vmatpush.xpose.msra.mxu0 0.0
    %1497 = vmatpush.xpose.msra.mxu0 0.0
    %1498 = vmatpush.xpose.msra.mxu0 0.0
    %1499 = vmatpush.xpose.msra.mxu0 0.0
    %1500 = vmatpush.xpose.msra.mxu0 0.0
    %1501 = vmatpush.xpose.msra.mxu0 0.0
    %1502 = vmatpush.xpose.msra.mxu0 %v1485
    %1503 = vmatmul.f32.gmra.mxu0 %v1133
    %v1504 = vpop.f32.mrf.mxu0
    %v1505 = vadd.f32 0.0, %v1504
    %1506 = vdwg.mxu0
    %v1508 = vsel %vm123, %v1483, 0
    %1510 = vmatpush.xpose.msra.mxu0 0.0
    %1511 = vmatpush.xpose.msra.mxu0 0.0
    %1512 = vmatpush.xpose.msra.mxu0 0.0
    %1513 = vmatpush.xpose.msra.mxu0 0.0
    %1514 = vmatpush.xpose.msra.mxu0 0.0
    %1515 = vmatpush.xpose.msra.mxu0 0.0
    %1516 = vmatpush.xpose.msra.mxu0 0.0
    %1517 = vmatpush.xpose.msra.mxu0 0.0
    %1518 = vmatpush.xpose.msra.mxu0 0.0
    %1519 = vmatpush.xpose.msra.mxu0 0.0
    %1520 = vmatpush.xpose.msra.mxu0 0.0
    %1521 = vmatpush.xpose.msra.mxu0 0.0
    %1522 = vmatpush.xpose.msra.mxu0 0.0
    %1523 = vmatpush.xpose.msra.mxu0 0.0
    %1524 = vmatpush.xpose.msra.mxu0 0.0
    %1525 = vmatpush.xpose.msra.mxu0 %v1508
    %1526 = vmatmul.f32.gmra.mxu0 %v1159
    %v1527 = vpop.f32.mrf.mxu0
    %v1528 = vadd.f32 0.0, %v1527
    %1529 = vdwg.mxu0
    %v1530 = vmul.f32 %v1505, 0.35355338
    %v1531 = vmul.f32 %v1528, 0.35355338
    %v1532 = vadd.f32 %v1530, %v96
    %v1533 = vadd.f32 %v1531, %v97
    %v1534 = vmul.f32 %v1532, 1.442695
    %v1535 = vpow.pop %v1534
    %v1536 = vmul.f32 %v1533, 1.442695
    %v1537 = vpow.pop %v1536
    %v1538 = vsel %vm352, %v1535, 0.0
    %1539 = vadd.xlane.f32.xlu0 %v1538
    %v1540 = vpop.xlane.xlu0 %1539
    %v1541 = vsel %vm352, %v1537, 0.0
    %1542 = vadd.xlane.f32.xlu0 %v1541
    %v1543 = vpop.xlane.xlu0 %1542
    %v1544 = vrcp.pop %v1540
    %v1545 = vrcp.pop %v1543
    %v1546 = vmul.f32 %v1535, %v1544
    %v1547 = vmul.f32 %v1537, %v1545
    %v1549 = vsel %vm352, %v1546, 0
    %1551 = vmatpush.msra.mxu0 0.0
    %1552 = vmatpush.msra.mxu0 0.0
    %1553 = vmatpush.msra.mxu0 0.0
    %1554 = vmatpush.msra.mxu0 0.0
    %1555 = vmatpush.msra.mxu0 0.0
    %1556 = vmatpush.msra.mxu0 0.0
    %1557 = vmatpush.msra.mxu0 0.0
    %1558 = vmatpush.msra.mxu0 0.0
    %1559 = vmatpush.msra.mxu0 0.0
    %1560 = vmatpush.msra.mxu0 0.0
    %1561 = vmatpush.msra.mxu0 0.0
    %1562 = vmatpush.msra.mxu0 0.0
    %1563 = vmatpush.msra.mxu0 0.0
    %1564 = vmatpush.msra.mxu0 0.0
    %1565 = vmatpush.msra.mxu0 0.0
    %1566 = vmatpush.msra.mxu0 %v1125
    %1567 = vmatmul.f32.gmra.mxu0 %v1549
    %v1568 = vpop.f32.mrf.mxu0
    %v1569 = vadd.f32 0.0, %v1568
    %1570 = vdwg.mxu0
    %v1572 = vsel %vm352, %v1547, 0
    %1574 = vmatpush.msra.mxu0 0.0
    %1575 = vmatpush.msra.mxu0 0.0
    %1576 = vmatpush.msra.mxu0 0.0
    %1577 = vmatpush.msra.mxu0 0.0
    %1578 = vmatpush.msra.mxu0 0.0
    %1579 = vmatpush.msra.mxu0 0.0
    %1580 = vmatpush.msra.mxu0 0.0
    %1581 = vmatpush.msra.mxu0 0.0
    %1582 = vmatpush.msra.mxu0 0.0
    %1583 = vmatpush.msra.mxu0 0.0
    %1584 = vmatpush.msra.mxu0 0.0
    %1585 = vmatpush.msra.mxu0 0.0
    %1586 = vmatpush.msra.mxu0 0.0
    %1587 = vmatpush.msra.mxu0 0.0
    %1588 = vmatpush.msra.mxu0 0.0
    %1589 = vmatpush.msra.mxu0 %v1128
    %1590 = vmatmul.f32.gmra.mxu0 %v1572
    %v1591 = vpop.f32.mrf.mxu0
    %v1592 = vadd.f32 0.0, %v1591
    %1593 = vdwg.mxu0
    %v1594 = vmul.f32 %v1569, %v117
    %v1595 = vmul.f32 %v1592, %v117
    %v1596 = vadd.f32 %v1480, %v1594
    %v1597 = vadd.f32 %v1481, %v1595
    %s1598 = scalar_lea.vmem %s11, 32
    %v1599 = vld [vmem:[%s1598] sm:$0xff]
    %v1600 = vld [vmem:[%s1598 + $0x8] sm:$0xff]
    %v1601 = vld [vmem:[%s1598 + $0x10] sm:$0xff]
    %v1602 = vld [vmem:[%s1598 + $0x18] sm:$0xff]
    %s1603 = scalar_lea.vmem %s12, 1
    %v1604 = vld [vmem:[%s1603] sm:$0x1]
    %v1606 = vperm.slane %v1604, 0
    %v1609 = vsel %vm123, %v1596, 0
    %v1612 = vsel %vm123, %v1597, 0
    %1614 = vmatpush.msra.mxu0 0.0
    %1615 = vmatpush.msra.mxu0 0.0
    %1616 = vmatpush.msra.mxu0 0.0
    %1617 = vmatpush.msra.mxu0 0.0
    %1618 = vmatpush.msra.mxu0 0.0
    %1619 = vmatpush.msra.mxu0 0.0
    %1620 = vmatpush.msra.mxu0 0.0
    %1621 = vmatpush.msra.mxu0 0.0
    %1622 = vmatpush.msra.mxu0 0.0
    %1623 = vmatpush.msra.mxu0 0.0
    %1624 = vmatpush.msra.mxu0 0.0
    %1625 = vmatpush.msra.mxu0 0.0
    %1626 = vmatpush.msra.mxu0 %v1602
    %1627 = vmatpush.msra.mxu0 %v1601
    %1628 = vmatpush.msra.mxu0 %v1600
    %1629 = vmatpush.msra.mxu0 %v1599
    %1630 = vmatmul.f32.gmra.mxu0 %v1609
    %v1631 = vpop.f32.mrf.mxu0
    %v1632 = vadd.f32 %v1606, %v1631
    %1633 = vmatmul.f32.gmra.mxu0 %v1612
    %v1634 = vpop.f32.mrf.mxu0
    %v1635 = vadd.f32 %v1606, %v1634
    %1636 = vdwg.mxu0
    %v1637 = vadd.f32 %v1632, %v1015
    %v1638 = vadd.f32 %v1635, %v1016
    %s1639 = scalar_lea.vmem %s13, 1
    %v1640 = vld [vmem:[%s1639] sm:$0x1]
    %s1641 = scalar_lea.vmem %s14, 1
    %v1642 = vld [vmem:[%s1641] sm:$0x1]
    %v1643 = vsel %vm123, %v1637, 0.0
    %1644 = vadd.xlane.f32.xlu0 %v1643
    %v1645 = vpop.xlane.xlu0 %1644
    %v1646 = vsel %vm123, %v1638, 0.0
    %1647 = vadd.xlane.f32.xlu0 %v1646
    %v1648 = vpop.xlane.xlu0 %1647
    %v1649 = vmul.f32 %v1645, %v136
    %v1650 = vmul.f32 %v1648, %v136
    %v1651 = vmul.f32 %v1637, %v1637
    %v1652 = vmul.f32 %v1638, %v1638
    %v1653 = vsel %vm123, %v1651, 0.0
    %1654 = vadd.xlane.f32.xlu0 %v1653
    %v1655 = vpop.xlane.xlu0 %1654
    %v1656 = vsel %vm123, %v1652, 0.0
    %1657 = vadd.xlane.f32.xlu0 %v1656
    %v1658 = vpop.xlane.xlu0 %1657
    %v1659 = vmul.f32 %v1655, %v136
    %v1660 = vmul.f32 %v1658, %v136
    %v1661 = vmul.f32 %v1649, %v1649
    %v1662 = vmul.f32 %v1650, %v1650
    %v1663 = vsub.f32 %v1659, %v1661
    %v1664 = vsub.f32 %v1660, %v1662
    %v1665 = vsub.f32 %v1637, %v1649
    %v1666 = vsub.f32 %v1638, %v1650
    %v1667 = vadd.f32 %v1663, 1e-12
    %v1668 = vadd.f32 %v1664, 1e-12
    %v1669 = vrsqrt.pop %v1667
    %v1670 = vmul.f32 %v1669, %v1667
    %v1671 = vmul.f32 %v1670, %v1669
    %v1672 = vmul.f32 0.5, %v1671
    %v1673 = vsub.f32 1.5, %v1672
    %v1674 = vmul.f32 %v1669, %v1673
    %vm1675 = vweird.f32 %v1667
    %vm1676 = vweird.f32 %v1669
    %vm1677 = vmor %vm1675, %vm1676
    %v1678 = vsel %vm1677, %v1669, %v1674
    %v1679 = vrsqrt.pop %v1668
    %v1680 = vmul.f32 %v1679, %v1668
    %v1681 = vmul.f32 %v1680, %v1679
    %v1682 = vmul.f32 0.5, %v1681
    %v1683 = vsub.f32 1.5, %v1682
    %v1684 = vmul.f32 %v1679, %v1683
    %vm1685 = vweird.f32 %v1668
    %vm1686 = vweird.f32 %v1679
    %vm1687 = vmor %vm1685, %vm1686
    %v1688 = vsel %vm1687, %v1679, %v1684
    %v1689 = vmul.f32 %v1665, %v1678
    %v1690 = vmul.f32 %v1666, %v1688
    %v1692 = vperm.slane %v1640, 0
    %v1694 = vmul.f32 %v1689, %v1692
    %v1695 = vmul.f32 %v1690, %v1692
    %v1697 = vperm.slane %v1642, 0
    %v1699 = vadd.f32 %v1694, %v1697
    %v1700 = vadd.f32 %v1695, %v1697
    %s1701 = scalar_lea.vmem [#allocation2], 32
    %v1702 = vld [vmem:[%s1701] sm:$0xff]
    %v1703 = vld [vmem:[%s1701 + $0x8] sm:$0xff]
    %v1704 = vld [vmem:[%s1701 + $0x10] sm:$0xff]
    %v1705 = vld [vmem:[%s1701 + $0x18] sm:$0xff]
    %s1706 = scalar_lea.vmem %s16, 1
    %v1707 = vld [vmem:[%s1706] sm:$0x1]
    %v1709 = vperm.slane %v1707, 0
    %v1712 = vsel %vm123, %v1699, 0
    %v1715 = vsel %vm123, %v1700, 0
    %1717 = vmatpush.msra.mxu0 0.0
    %1718 = vmatpush.msra.mxu0 0.0
    %1719 = vmatpush.msra.mxu0 0.0
    %1720 = vmatpush.msra.mxu0 0.0
    %1721 = vmatpush.msra.mxu0 0.0
    %1722 = vmatpush.msra.mxu0 0.0
    %1723 = vmatpush.msra.mxu0 0.0
    %1724 = vmatpush.msra.mxu0 0.0
    %1725 = vmatpush.msra.mxu0 0.0
    %1726 = vmatpush.msra.mxu0 0.0
    %1727 = vmatpush.msra.mxu0 0.0
    %1728 = vmatpush.msra.mxu0 0.0
    %1729 = vmatpush.msra.mxu0 %v1705
    %1730 = vmatpush.msra.mxu0 %v1704
    %1731 = vmatpush.msra.mxu0 %v1703
    %1732 = vmatpush.msra.mxu0 %v1702
    %1733 = vmatmul.f32.gmra.mxu0 %v1712
    %v1734 = vpop.f32.mrf.mxu0
    %v1735 = vadd.f32 %v1709, %v1734
    %1736 = vmatmul.f32.gmra.mxu0 %v1715
    %v1737 = vpop.f32.mrf.mxu0
    %v1738 = vadd.f32 %v1709, %v1737
    %1739 = vdwg.mxu0
    %v1740 = vmul.f32 %v1735, %v1735
    %v1741 = vmul.f32 %v1738, %v1738
    %v1742 = vmul.f32 %v1735, %v1740
    %v1743 = vmul.f32 %v1738, %v1741
    %v1744 = vmul.f32 %v1742, 0.044715
    %v1745 = vmul.f32 %v1743, 0.044715
    %v1746 = vadd.f32 %v1735, %v1744
    %v1747 = vadd.f32 %v1738, %v1745
    %v1748 = vmul.f32 %v1746, 0.7978846
    %v1749 = vmul.f32 %v1747, 0.7978846
    %v1750 = vtanh.pop %v1748
    %v1751 = vtanh.pop %v1749
    %v1752 = vadd.f32 %v1750, 1.0
    %v1753 = vadd.f32 %v1751, 1.0
    %v1754 = vmul.f32 %v1752, 0.5
    %v1755 = vmul.f32 %v1753, 0.5
    %v1756 = vmul.f32 %v1735, %v1754
    %v1757 = vmul.f32 %v1738, %v1755
    %s1758 = scalar_lea.vmem %s17, 64
    %v1759 = vld [vmem:[%s1758] sm:$0xff]
    %v1760 = vld [vmem:[%s1758 + $0x8] sm:$0xff]
    %v1761 = vld [vmem:[%s1758 + $0x10] sm:$0xff]
    %v1762 = vld [vmem:[%s1758 + $0x18] sm:$0xff]
    %v1763 = vld [vmem:[%s1758 + $0x20] sm:$0xff]
    %v1764 = vld [vmem:[%s1758 + $0x28] sm:$0xff]
    %v1765 = vld [vmem:[%s1758 + $0x30] sm:$0xff]
    %v1766 = vld [vmem:[%s1758 + $0x38] sm:$0xff]
    %s1767 = scalar_lea.vmem %s18, 1
    %v1768 = vld [vmem:[%s1767] sm:$0x1]
    %v1770 = vperm.slane %v1768, 0
    %v1773 = vsel %vm925, %v1756, 0
    %v1776 = vsel %vm925, %v1757, 0
    %1778 = vmatpush.msra.mxu0 0.0
    %1779 = vmatpush.msra.mxu0 0.0
    %1780 = vmatpush.msra.mxu0 0.0
    %1781 = vmatpush.msra.mxu0 0.0
    %1782 = vmatpush.msra.mxu0 0.0
    %1783 = vmatpush.msra.mxu0 0.0
    %1784 = vmatpush.msra.mxu0 0.0
    %1785 = vmatpush.msra.mxu0 0.0
    %1786 = vmatpush.msra.mxu0 %v1766
    %1787 = vmatpush.msra.mxu0 %v1765
    %1788 = vmatpush.msra.mxu0 %v1764
    %1789 = vmatpush.msra.mxu0 %v1763
    %1790 = vmatpush.msra.mxu0 %v1762
    %1791 = vmatpush.msra.mxu0 %v1761
    %1792 = vmatpush.msra.mxu0 %v1760
    %1793 = vmatpush.msra.mxu0 %v1759
    %1794 = vmatmul.f32.gmra.mxu0 %v1773
    %v1795 = vpop.f32.mrf.mxu0
    %v1796 = vadd.f32 %v1770, %v1795
    %1797 = vmatmul.f32.gmra.mxu0 %v1776
    %v1798 = vpop.f32.mrf.mxu0
    %v1799 = vadd.f32 %v1770, %v1798
    %1800 = vdwg.mxu0
    %v1801 = vadd.f32 %v1796, %v1699
    %v1802 = vadd.f32 %v1799, %v1700
    %s1803 = scalar_lea.vmem %s19, 1
    %v1804 = vld [vmem:[%s1803] sm:$0x1]
    %s1805 = scalar_lea.vmem %s20, 1
    %v1806 = vld [vmem:[%s1805] sm:$0x1]
    %v1807 = vsel %vm123, %v1801, 0.0
    %1808 = vadd.xlane.f32.xlu0 %v1807
    %v1809 = vpop.xlane.xlu0 %1808
    %v1810 = vsel %vm123, %v1802, 0.0
    %1811 = vadd.xlane.f32.xlu0 %v1810
    %v1812 = vpop.xlane.xlu0 %1811
    %v1813 = vmul.f32 %v1809, %v136
    %v1814 = vmul.f32 %v1812, %v136
    %v1815 = vmul.f32 %v1801, %v1801
    %v1816 = vmul.f32 %v1802, %v1802
    %v1817 = vsel %vm123, %v1815, 0.0
    %1818 = vadd.xlane.f32.xlu0 %v1817
    %v1819 = vpop.xlane.xlu0 %1818
    %v1820 = vsel %vm123, %v1816, 0.0
    %1821 = vadd.xlane.f32.xlu0 %v1820
    %v1822 = vpop.xlane.xlu0 %1821
    %v1823 = vmul.f32 %v1819, %v136
    %v1824 = vmul.f32 %v1822, %v136
    %v1825 = vmul.f32 %v1813, %v1813
    %v1826 = vmul.f32 %v1814, %v1814
    %v1827 = vsub.f32 %v1823, %v1825
    %v1828 = vsub.f32 %v1824, %v1826
    %v1829 = vsub.f32 %v1801, %v1813
    %v1830 = vsub.f32 %v1802, %v1814
    %v1831 = vadd.f32 %v1827, 1e-12
    %v1832 = vadd.f32 %v1828, 1e-12
    %v1833 = vrsqrt.pop %v1831
    %v1834 = vmul.f32 %v1833, %v1831
    %v1835 = vmul.f32 %v1834, %v1833
    %v1836 = vmul.f32 0.5, %v1835
    %v1837 = vsub.f32 1.5, %v1836
    %v1838 = vmul.f32 %v1833, %v1837
    %vm1839 = vweird.f32 %v1831
    %vm1840 = vweird.f32 %v1833
    %vm1841 = vmor %vm1839, %vm1840
    %v1842 = vsel %vm1841, %v1833, %v1838
    %v1843 = vrsqrt.pop %v1832
    %v1844 = vmul.f32 %v1843, %v1832
    %v1845 = vmul.f32 %v1844, %v1843
    %v1846 = vmul.f32 0.5, %v1845
    %v1847 = vsub.f32 1.5, %v1846
    %v1848 = vmul.f32 %v1843, %v1847
    %vm1849 = vweird.f32 %v1832
    %vm1850 = vweird.f32 %v1843
    %vm1851 = vmor %vm1849, %vm1850
    %v1852 = vsel %vm1851, %v1843, %v1848
    %v1853 = vmul.f32 %v1829, %v1842
    %v1854 = vmul.f32 %v1830, %v1852
    %v1856 = vperm.slane %v1804, 0
    %v1858 = vmul.f32 %v1853, %v1856
    %v1859 = vmul.f32 %v1854, %v1856
    %v1861 = vperm.slane %v1806, 0
    %v1863 = vadd.f32 %v1858, %v1861
    %v1864 = vadd.f32 %v1859, %v1861
    %s1865 = scalar_lea.vmem %s24, 32
    %1866 = vst.msk [vmem:[%s1865] sm:$0xff] %vm123, %v1863
    %1867 = vst.msk [vmem:[%s1865 + $0x8] sm:$0xff] %vm123, %v1864
    %s1868 = scalar_lea.vmem %s21, 128
    %v1869 = vld [vmem:[%s1868] sm:$0xff]
    %v1870 = vld [vmem:[%s1868 + $0x8] sm:$0xff]
    %v1871 = vld [vmem:[%s1868 + $0x10] sm:$0xff]
    %v1872 = vld [vmem:[%s1868 + $0x18] sm:$0xff]
    %v1875 = vrot.slane %v1864, 7
    %vm1876 = vcmask 1041409
    %v1877 = vsel %vm1876, %v1875, %v1863
    %v1878 = vsel %vm123, %v1877, 0
    %1880 = vmatpush.msra.mxu0 0.0
    %1881 = vmatpush.msra.mxu0 0.0
    %1882 = vmatpush.msra.mxu0 0.0
    %1883 = vmatpush.msra.mxu0 0.0
    %1884 = vmatpush.msra.mxu0 0.0
    %1885 = vmatpush.msra.mxu0 0.0
    %1886 = vmatpush.msra.mxu0 0.0
    %1887 = vmatpush.msra.mxu0 0.0
    %1888 = vmatpush.msra.mxu0 0.0
    %1889 = vmatpush.msra.mxu0 0.0
    %1890 = vmatpush.msra.mxu0 0.0
    %1891 = vmatpush.msra.mxu0 0.0
    %1892 = vmatpush.msra.mxu0 %v1872
    %1893 = vmatpush.msra.mxu0 %v1871
    %1894 = vmatpush.msra.mxu0 %v1870
    %1895 = vmatpush.msra.mxu0 %v1869
    %1896 = vmatmul.f32.gmra.mxu0 %v1878
    %v1897 = vpop.f32.mrf.mxu0
    %v1898 = vadd.f32 0.0, %v1897
    %1899 = vdwg.mxu0
    %v1900 = vrot.slane %v1016, 7
    %v1901 = vsel %vm1876, %v1900, %v1015
    %v1902 = vsel %vm123, %v1901, 0
    %1904 = vmatpush.msra.mxu0 0.0
    %1905 = vmatpush.msra.mxu0 0.0
    %1906 = vmatpush.msra.mxu0 0.0
    %1907 = vmatpush.msra.mxu0 0.0
    %1908 = vmatpush.msra.mxu0 0.0
    %1909 = vmatpush.msra.mxu0 0.0
    %1910 = vmatpush.msra.mxu0 0.0
    %1911 = vmatpush.msra.mxu0 0.0
    %1912 = vmatpush.msra.mxu0 0.0
    %1913 = vmatpush.msra.mxu0 0.0
    %1914 = vmatpush.msra.mxu0 0.0
    %1915 = vmatpush.msra.mxu0 0.0
    %1916 = vmatpush.msra.mxu0 %v1024
    %1917 = vmatpush.msra.mxu0 %v1023
    %1918 = vmatpush.msra.mxu0 %v1022
    %1919 = vmatpush.msra.mxu0 %v1021
    %1920 = vmatmul.f32.gmra.mxu0 %v1902
    %v1921 = vpop.f32.mrf.mxu0
    %v1922 = vadd.f32 %v1898, %v1921
    %1923 = vdwg.mxu0
    %s1924 = scalar_lea.vmem %s5, 64
    %v1925 = vld [vmem:[%s1924] sm:$0xff]
    %v1926 = vld [vmem:[%s1924 + $0x8] sm:$0xff]
    %v1927 = vld [vmem:[%s1924 + $0x10] sm:$0xff]
    %v1928 = vld [vmem:[%s1924 + $0x18] sm:$0xff]
    %s1929 = scalar_lea.vmem %s6, 2
    %v1930 = vld [vmem:[%s1929] sm:$0x1]
    %v1932 = vperm.slane %v1930, 0
    %v1934 = vsel %vm123, %v1863, 0
    %v1936 = vsel %vm123, %v1864, 0
    %1938 = vmatpush.msra.mxu0 0.0
    %1939 = vmatpush.msra.mxu0 0.0
    %1940 = vmatpush.msra.mxu0 0.0
    %1941 = vmatpush.msra.mxu0 0.0
    %1942 = vmatpush.msra.mxu0 0.0
    %1943 = vmatpush.msra.mxu0 0.0
    %1944 = vmatpush.msra.mxu0 0.0
    %1945 = vmatpush.msra.mxu0 0.0
    %1946 = vmatpush.msra.mxu0 0.0
    %1947 = vmatpush.msra.mxu0 0.0
    %1948 = vmatpush.msra.mxu0 0.0
    %1949 = vmatpush.msra.mxu0 0.0
    %1950 = vmatpush.msra.mxu0 %v1928
    %1951 = vmatpush.msra.mxu0 %v1927
    %1952 = vmatpush.msra.mxu0 %v1926
    %1953 = vmatpush.msra.mxu0 %v1925
    %1954 = vmatmul.f32.gmra.mxu0 %v1934
    %v1955 = vpop.f32.mrf.mxu0
    %v1956 = vadd.f32 %v1932, %v1955
    %1957 = vmatmul.f32.gmra.mxu0 %v1936
    %v1958 = vpop.f32.mrf.mxu0
    %v1959 = vadd.f32 %v1932, %v1958
    %1960 = vdwg.mxu0
    %s1961 = scalar_lea.vmem %s7, 64
    %v1962 = vld [vmem:[%s1961] sm:$0xff]
    %v1963 = vld [vmem:[%s1961 + $0x8] sm:$0xff]
    %v1964 = vld [vmem:[%s1961 + $0x10] sm:$0xff]
    %v1965 = vld [vmem:[%s1961 + $0x18] sm:$0xff]
    %s1966 = scalar_lea.vmem %s8, 2
    %v1967 = vld [vmem:[%s1966] sm:$0x1]
    %v1969 = vperm.slane %v1967, 0
    %1971 = vmatpush.msra.mxu0 0.0
    %1972 = vmatpush.msra.mxu0 0.0
    %1973 = vmatpush.msra.mxu0 0.0
    %1974 = vmatpush.msra.mxu0 0.0
    %1975 = vmatpush.msra.mxu0 0.0
    %1976 = vmatpush.msra.mxu0 0.0
    %1977 = vmatpush.msra.mxu0 0.0
    %1978 = vmatpush.msra.mxu0 0.0
    %1979 = vmatpush.msra.mxu0 0.0
    %1980 = vmatpush.msra.mxu0 0.0
    %1981 = vmatpush.msra.mxu0 0.0
    %1982 = vmatpush.msra.mxu0 0.0
    %1983 = vmatpush.msra.mxu0 %v1965
    %1984 = vmatpush.msra.mxu0 %v1964
    %1985 = vmatpush.msra.mxu0 %v1963
    %1986 = vmatpush.msra.mxu0 %v1962
    %1987 = vmatmul.f32.gmra.mxu0 %v1934
    %v1988 = vpop.f32.mrf.mxu0
    %v1989 = vadd.f32 %v1969, %v1988
    %1990 = vmatmul.f32.gmra.mxu0 %v1936
    %v1991 = vpop.f32.mrf.mxu0
    %v1992 = vadd.f32 %v1969, %v1991
    %1993 = vdwg.mxu0
    %s1994 = scalar_lea.vmem %s9, 64
    %v1995 = vld [vmem:[%s1994] sm:$0xff]
    %v1996 = vld [vmem:[%s1994 + $0x8] sm:$0xff]
    %v1997 = vld [vmem:[%s1994 + $0x10] sm:$0xff]
    %v1998 = vld [vmem:[%s1994 + $0x18] sm:$0xff]
    %s1999 = scalar_lea.vmem %s10, 2
    %v2000 = vld [vmem:[%s1999] sm:$0x1]
    %v2002 = vperm.slane %v2000, 0
    %2004 = vmatpush.msra.mxu0 0.0
    %2005 = vmatpush.msra.mxu0 0.0
    %2006 = vmatpush.msra.mxu0 0.0
    %2007 = vmatpush.msra.mxu0 0.0
    %2008 = vmatpush.msra.mxu0 0.0
    %2009 = vmatpush.msra.mxu0 0.0
    %2010 = vmatpush.msra.mxu0 0.0
    %2011 = vmatpush.msra.mxu0 0.0
    %2012 = vmatpush.msra.mxu0 0.0
    %2013 = vmatpush.msra.mxu0 0.0
    %2014 = vmatpush.msra.mxu0 0.0
    %2015 = vmatpush.msra.mxu0 0.0
    %2016 = vmatpush.msra.mxu0 %v1998
    %2017 = vmatpush.msra.mxu0 %v1997
    %2018 = vmatpush.msra.mxu0 %v1996
    %2019 = vmatpush.msra.mxu0 %v1995
    %2020 = vmatmul.f32.gmra.mxu0 %v1934
    %v2021 = vpop.f32.mrf.mxu0
    %v2022 = vadd.f32 %v2002, %v2021
    %2023 = vmatmul.f32.gmra.mxu0 %v1936
    %v2024 = vpop.f32.mrf.mxu0
    %v2025 = vadd.f32 %v2002, %v2024
    %2026 = vdwg.mxu0
    %v2027 = vmul.f32 %v1989, %v102
    %v2028 = vmul.f32 %v1992, %v102
    %v2030 = vsel %vm123, %v1956, 0
    %v2033 = vsel %vm123, %v2027, 0
    %2035 = vmatpush.xpose.msra.mxu0 0.0
    %2036 = vmatpush.xpose.msra.mxu0 0.0
    %2037 = vmatpush.xpose.msra.mxu0 0.0
    %2038 = vmatpush.xpose.msra.mxu0 0.0
    %2039 = vmatpush.xpose.msra.mxu0 0.0
    %2040 = vmatpush.xpose.msra.mxu0 0.0
    %2041 = vmatpush.xpose.msra.mxu0 0.0
    %2042 = vmatpush.xpose.msra.mxu0 0.0
    %2043 = vmatpush.xpose.msra.mxu0 0.0
    %2044 = vmatpush.xpose.msra.mxu0 0.0
    %2045 = vmatpush.xpose.msra.mxu0 0.0
    %2046 = vmatpush.xpose.msra.mxu0 0.0
    %2047 = vmatpush.xpose.msra.mxu0 0.0
    %2048 = vmatpush.xpose.msra.mxu0 0.0
    %2049 = vmatpush.xpose.msra.mxu0 0.0
    %2050 = vmatpush.xpose.msra.mxu0 %v2033
    %2051 = vmatmul.f32.gmra.mxu0 %v2030
    %v2052 = vpop.f32.mrf.mxu0
    %v2053 = vadd.f32 0.0, %v2052
    %2054 = vdwg.mxu0
    %v2056 = vsel %vm123, %v1959, 0
    %v2059 = vsel %vm123, %v2028, 0
    %2061 = vmatpush.xpose.msra.mxu0 0.0
    %2062 = vmatpush.xpose.msra.mxu0 0.0
    %2063 = vmatpush.xpose.msra.mxu0 0.0
    %2064 = vmatpush.xpose.msra.mxu0 0.0
    %2065 = vmatpush.xpose.msra.mxu0 0.0
    %2066 = vmatpush.xpose.msra.mxu0 0.0
    %2067 = vmatpush.xpose.msra.mxu0 0.0
    %2068 = vmatpush.xpose.msra.mxu0 0.0
    %2069 = vmatpush.xpose.msra.mxu0 0.0
    %2070 = vmatpush.xpose.msra.mxu0 0.0
    %2071 = vmatpush.xpose.msra.mxu0 0.0
    %2072 = vmatpush.xpose.msra.mxu0 0.0
    %2073 = vmatpush.xpose.msra.mxu0 0.0
    %2074 = vmatpush.xpose.msra.mxu0 0.0
    %2075 = vmatpush.xpose.msra.mxu0 0.0
    %2076 = vmatpush.xpose.msra.mxu0 %v2059
    %2077 = vmatmul.f32.gmra.mxu0 %v2056
    %v2078 = vpop.f32.mrf.mxu0
    %v2079 = vadd.f32 0.0, %v2078
    %2080 = vdwg.mxu0
    %v2081 = vmul.f32 %v2053, 0.35355338
    %v2082 = vmul.f32 %v2079, 0.35355338
    %v2083 = vadd.f32 %v2081, %v96
    %v2084 = vadd.f32 %v2082, %v97
    %v2085 = vmul.f32 %v2083, 1.442695
    %v2086 = vpow.pop %v2085
    %v2087 = vmul.f32 %v2084, 1.442695
    %v2088 = vpow.pop %v2087
    %v2089 = vsel %vm352, %v2086, 0.0
    %2090 = vadd.xlane.f32.xlu0 %v2089
    %v2091 = vpop.xlane.xlu0 %2090
    %v2092 = vsel %vm352, %v2088, 0.0
    %2093 = vadd.xlane.f32.xlu0 %v2092
    %v2094 = vpop.xlane.xlu0 %2093
    %v2095 = vrcp.pop %v2091
    %v2096 = vrcp.pop %v2094
    %v2097 = vmul.f32 %v2086, %v2095
    %v2098 = vmul.f32 %v2088, %v2096
    %v2100 = vsel %vm352, %v2097, 0
    %2102 = vmatpush.msra.mxu0 0.0
    %2103 = vmatpush.msra.mxu0 0.0
    %2104 = vmatpush.msra.mxu0 0.0
    %2105 = vmatpush.msra.mxu0 0.0
    %2106 = vmatpush.msra.mxu0 0.0
    %2107 = vmatpush.msra.mxu0 0.0
    %2108 = vmatpush.msra.mxu0 0.0
    %2109 = vmatpush.msra.mxu0 0.0
    %2110 = vmatpush.msra.mxu0 0.0
    %2111 = vmatpush.msra.mxu0 0.0
    %2112 = vmatpush.msra.mxu0 0.0
    %2113 = vmatpush.msra.mxu0 0.0
    %2114 = vmatpush.msra.mxu0 0.0
    %2115 = vmatpush.msra.mxu0 0.0
    %2116 = vmatpush.msra.mxu0 0.0
    %2117 = vmatpush.msra.mxu0 %v2022
    %2118 = vmatmul.f32.gmra.mxu0 %v2100
    %v2119 = vpop.f32.mrf.mxu0
    %v2120 = vadd.f32 0.0, %v2119
    %2121 = vdwg.mxu0
    %v2123 = vsel %vm352, %v2098, 0
    %2125 = vmatpush.msra.mxu0 0.0
    %2126 = vmatpush.msra.mxu0 0.0
    %2127 = vmatpush.msra.mxu0 0.0
    %2128 = vmatpush.msra.mxu0 0.0
    %2129 = vmatpush.msra.mxu0 0.0
    %2130 = vmatpush.msra.mxu0 0.0
    %2131 = vmatpush.msra.mxu0 0.0
    %2132 = vmatpush.msra.mxu0 0.0
    %2133 = vmatpush.msra.mxu0 0.0
    %2134 = vmatpush.msra.mxu0 0.0
    %2135 = vmatpush.msra.mxu0 0.0
    %2136 = vmatpush.msra.mxu0 0.0
    %2137 = vmatpush.msra.mxu0 0.0
    %2138 = vmatpush.msra.mxu0 0.0
    %2139 = vmatpush.msra.mxu0 0.0
    %2140 = vmatpush.msra.mxu0 %v2025
    %2141 = vmatmul.f32.gmra.mxu0 %v2123
    %v2142 = vpop.f32.mrf.mxu0
    %v2143 = vadd.f32 0.0, %v2142
    %2144 = vdwg.mxu0
    %v2145 = vmul.f32 %v2120, %v102
    %v2146 = vmul.f32 %v2143, %v102
    %v2147 = vmul.f32 %v1989, %v107
    %v2148 = vmul.f32 %v1992, %v107
    %v2150 = vsel %vm123, %v2147, 0
    %2152 = vmatpush.xpose.msra.mxu0 0.0
    %2153 = vmatpush.xpose.msra.mxu0 0.0
    %2154 = vmatpush.xpose.msra.mxu0 0.0
    %2155 = vmatpush.xpose.msra.mxu0 0.0
    %2156 = vmatpush.xpose.msra.mxu0 0.0
    %2157 = vmatpush.xpose.msra.mxu0 0.0
    %2158 = vmatpush.xpose.msra.mxu0 0.0
    %2159 = vmatpush.xpose.msra.mxu0 0.0
    %2160 = vmatpush.xpose.msra.mxu0 0.0
    %2161 = vmatpush.xpose.msra.mxu0 0.0
    %2162 = vmatpush.xpose.msra.mxu0 0.0
    %2163 = vmatpush.xpose.msra.mxu0 0.0
    %2164 = vmatpush.xpose.msra.mxu0 0.0
    %2165 = vmatpush.xpose.msra.mxu0 0.0
    %2166 = vmatpush.xpose.msra.mxu0 0.0
    %2167 = vmatpush.xpose.msra.mxu0 %v2150
    %2168 = vmatmul.f32.gmra.mxu0 %v2030
    %v2169 = vpop.f32.mrf.mxu0
    %v2170 = vadd.f32 0.0, %v2169
    %2171 = vdwg.mxu0
    %v2173 = vsel %vm123, %v2148, 0
    %2175 = vmatpush.xpose.msra.mxu0 0.0
    %2176 = vmatpush.xpose.msra.mxu0 0.0
    %2177 = vmatpush.xpose.msra.mxu0 0.0
    %2178 = vmatpush.xpose.msra.mxu0 0.0
    %2179 = vmatpush.xpose.msra.mxu0 0.0
    %2180 = vmatpush.xpose.msra.mxu0 0.0
    %2181 = vmatpush.xpose.msra.mxu0 0.0
    %2182 = vmatpush.xpose.msra.mxu0 0.0
    %2183 = vmatpush.xpose.msra.mxu0 0.0
    %2184 = vmatpush.xpose.msra.mxu0 0.0
    %2185 = vmatpush.xpose.msra.mxu0 0.0
    %2186 = vmatpush.xpose.msra.mxu0 0.0
    %2187 = vmatpush.xpose.msra.mxu0 0.0
    %2188 = vmatpush.xpose.msra.mxu0 0.0
    %2189 = vmatpush.xpose.msra.mxu0 0.0
    %2190 = vmatpush.xpose.msra.mxu0 %v2173
    %2191 = vmatmul.f32.gmra.mxu0 %v2056
    %v2192 = vpop.f32.mrf.mxu0
    %v2193 = vadd.f32 0.0, %v2192
    %2194 = vdwg.mxu0
    %v2195 = vmul.f32 %v2170, 0.35355338
    %v2196 = vmul.f32 %v2193, 0.35355338
    %v2197 = vadd.f32 %v2195, %v96
    %v2198 = vadd.f32 %v2196, %v97
    %v2199 = vmul.f32 %v2197, 1.442695
    %v2200 = vpow.pop %v2199
    %v2201 = vmul.f32 %v2198, 1.442695
    %v2202 = vpow.pop %v2201
    %v2203 = vsel %vm352, %v2200, 0.0
    %2204 = vadd.xlane.f32.xlu0 %v2203
    %v2205 = vpop.xlane.xlu0 %2204
    %v2206 = vsel %vm352, %v2202, 0.0
    %2207 = vadd.xlane.f32.xlu0 %v2206
    %v2208 = vpop.xlane.xlu0 %2207
    %v2209 = vrcp.pop %v2205
    %v2210 = vrcp.pop %v2208
    %v2211 = vmul.f32 %v2200, %v2209
    %v2212 = vmul.f32 %v2202, %v2210
    %v2214 = vsel %vm352, %v2211, 0
    %2216 = vmatpush.msra.mxu0 0.0
    %2217 = vmatpush.msra.mxu0 0.0
    %2218 = vmatpush.msra.mxu0 0.0
    %2219 = vmatpush.msra.mxu0 0.0
    %2220 = vmatpush.msra.mxu0 0.0
    %2221 = vmatpush.msra.mxu0 0.0
    %2222 = vmatpush.msra.mxu0 0.0
    %2223 = vmatpush.msra.mxu0 0.0
    %2224 = vmatpush.msra.mxu0 0.0
    %2225 = vmatpush.msra.mxu0 0.0
    %2226 = vmatpush.msra.mxu0 0.0
    %2227 = vmatpush.msra.mxu0 0.0
    %2228 = vmatpush.msra.mxu0 0.0
    %2229 = vmatpush.msra.mxu0 0.0
    %2230 = vmatpush.msra.mxu0 0.0
    %2231 = vmatpush.msra.mxu0 %v2022
    %2232 = vmatmul.f32.gmra.mxu0 %v2214
    %v2233 = vpop.f32.mrf.mxu0
    %v2234 = vadd.f32 0.0, %v2233
    %2235 = vdwg.mxu0
    %v2237 = vsel %vm352, %v2212, 0
    %2239 = vmatpush.msra.mxu0 0.0
    %2240 = vmatpush.msra.mxu0 0.0
    %2241 = vmatpush.msra.mxu0 0.0
    %2242 = vmatpush.msra.mxu0 0.0
    %2243 = vmatpush.msra.mxu0 0.0
    %2244 = vmatpush.msra.mxu0 0.0
    %2245 = vmatpush.msra.mxu0 0.0
    %2246 = vmatpush.msra.mxu0 0.0
    %2247 = vmatpush.msra.mxu0 0.0
    %2248 = vmatpush.msra.mxu0 0.0
    %2249 = vmatpush.msra.mxu0 0.0
    %2250 = vmatpush.msra.mxu0 0.0
    %2251 = vmatpush.msra.mxu0 0.0
    %2252 = vmatpush.msra.mxu0 0.0
    %2253 = vmatpush.msra.mxu0 0.0
    %2254 = vmatpush.msra.mxu0 %v2025
    %2255 = vmatmul.f32.gmra.mxu0 %v2237
    %v2256 = vpop.f32.mrf.mxu0
    %v2257 = vadd.f32 0.0, %v2256
    %2258 = vdwg.mxu0
    %v2259 = vmul.f32 %v2234, %v107
    %v2260 = vmul.f32 %v2257, %v107
    %v2261 = vadd.f32 %v2145, %v2259
    %v2262 = vadd.f32 %v2146, %v2260
    %v2263 = vmul.f32 %v1989, %v112
    %v2264 = vmul.f32 %v1992, %v112
    %v2266 = vsel %vm123, %v2263, 0
    %2268 = vmatpush.xpose.msra.mxu0 0.0
    %2269 = vmatpush.xpose.msra.mxu0 0.0
    %2270 = vmatpush.xpose.msra.mxu0 0.0
    %2271 = vmatpush.xpose.msra.mxu0 0.0
    %2272 = vmatpush.xpose.msra.mxu0 0.0
    %2273 = vmatpush.xpose.msra.mxu0 0.0
    %2274 = vmatpush.xpose.msra.mxu0 0.0
    %2275 = vmatpush.xpose.msra.mxu0 0.0
    %2276 = vmatpush.xpose.msra.mxu0 0.0
    %2277 = vmatpush.xpose.msra.mxu0 0.0
    %2278 = vmatpush.xpose.msra.mxu0 0.0
    %2279 = vmatpush.xpose.msra.mxu0 0.0
    %2280 = vmatpush.xpose.msra.mxu0 0.0
    %2281 = vmatpush.xpose.msra.mxu0 0.0
    %2282 = vmatpush.xpose.msra.mxu0 0.0
    %2283 = vmatpush.xpose.msra.mxu0 %v2266
    %2284 = vmatmul.f32.gmra.mxu0 %v2030
    %v2285 = vpop.f32.mrf.mxu0
    %v2286 = vadd.f32 0.0, %v2285
    %2287 = vdwg.mxu0
    %v2289 = vsel %vm123, %v2264, 0
    %2291 = vmatpush.xpose.msra.mxu0 0.0
    %2292 = vmatpush.xpose.msra.mxu0 0.0
    %2293 = vmatpush.xpose.msra.mxu0 0.0
    %2294 = vmatpush.xpose.msra.mxu0 0.0
    %2295 = vmatpush.xpose.msra.mxu0 0.0
    %2296 = vmatpush.xpose.msra.mxu0 0.0
    %2297 = vmatpush.xpose.msra.mxu0 0.0
    %2298 = vmatpush.xpose.msra.mxu0 0.0
    %2299 = vmatpush.xpose.msra.mxu0 0.0
    %2300 = vmatpush.xpose.msra.mxu0 0.0
    %2301 = vmatpush.xpose.msra.mxu0 0.0
    %2302 = vmatpush.xpose.msra.mxu0 0.0
    %2303 = vmatpush.xpose.msra.mxu0 0.0
    %2304 = vmatpush.xpose.msra.mxu0 0.0
    %2305 = vmatpush.xpose.msra.mxu0 0.0
    %2306 = vmatpush.xpose.msra.mxu0 %v2289
    %2307 = vmatmul.f32.gmra.mxu0 %v2056
    %v2308 = vpop.f32.mrf.mxu0
    %v2309 = vadd.f32 0.0, %v2308
    %2310 = vdwg.mxu0
    %v2311 = vmul.f32 %v2286, 0.35355338
    %v2312 = vmul.f32 %v2309, 0.35355338
    %v2313 = vadd.f32 %v2311, %v96
    %v2314 = vadd.f32 %v2312, %v97
    %v2315 = vmul.f32 %v2313, 1.442695
    %v2316 = vpow.pop %v2315
    %v2317 = vmul.f32 %v2314, 1.442695
    %v2318 = vpow.pop %v2317
    %v2319 = vsel %vm352, %v2316, 0.0
    %2320 = vadd.xlane.f32.xlu0 %v2319
    %v2321 = vpop.xlane.xlu0 %2320
    %v2322 = vsel %vm352, %v2318, 0.0
    %2323 = vadd.xlane.f32.xlu0 %v2322
    %v2324 = vpop.xlane.xlu0 %2323
    %v2325 = vrcp.pop %v2321
    %v2326 = vrcp.pop %v2324
    %v2327 = vmul.f32 %v2316, %v2325
    %v2328 = vmul.f32 %v2318, %v2326
    %v2330 = vsel %vm352, %v2327, 0
    %2332 = vmatpush.msra.mxu0 0.0
    %2333 = vmatpush.msra.mxu0 0.0
    %2334 = vmatpush.msra.mxu0 0.0
    %2335 = vmatpush.msra.mxu0 0.0
    %2336 = vmatpush.msra.mxu0 0.0
    %2337 = vmatpush.msra.mxu0 0.0
    %2338 = vmatpush.msra.mxu0 0.0
    %2339 = vmatpush.msra.mxu0 0.0
    %2340 = vmatpush.msra.mxu0 0.0
    %2341 = vmatpush.msra.mxu0 0.0
    %2342 = vmatpush.msra.mxu0 0.0
    %2343 = vmatpush.msra.mxu0 0.0
    %2344 = vmatpush.msra.mxu0 0.0
    %2345 = vmatpush.msra.mxu0 0.0
    %2346 = vmatpush.msra.mxu0 0.0
    %2347 = vmatpush.msra.mxu0 %v2022
    %2348 = vmatmul.f32.gmra.mxu0 %v2330
    %v2349 = vpop.f32.mrf.mxu0
    %v2350 = vadd.f32 0.0, %v2349
    %2351 = vdwg.mxu0
    %v2353 = vsel %vm352, %v2328, 0
    %2355 = vmatpush.msra.mxu0 0.0
    %2356 = vmatpush.msra.mxu0 0.0
    %2357 = vmatpush.msra.mxu0 0.0
    %2358 = vmatpush.msra.mxu0 0.0
    %2359 = vmatpush.msra.mxu0 0.0
    %2360 = vmatpush.msra.mxu0 0.0
    %2361 = vmatpush.msra.mxu0 0.0
    %2362 = vmatpush.msra.mxu0 0.0
    %2363 = vmatpush.msra.mxu0 0.0
    %2364 = vmatpush.msra.mxu0 0.0
    %2365 = vmatpush.msra.mxu0 0.0
    %2366 = vmatpush.msra.mxu0 0.0
    %2367 = vmatpush.msra.mxu0 0.0
    %2368 = vmatpush.msra.mxu0 0.0
    %2369 = vmatpush.msra.mxu0 0.0
    %2370 = vmatpush.msra.mxu0 %v2025
    %2371 = vmatmul.f32.gmra.mxu0 %v2353
    %v2372 = vpop.f32.mrf.mxu0
    %v2373 = vadd.f32 0.0, %v2372
    %2374 = vdwg.mxu0
    %v2375 = vmul.f32 %v2350, %v112
    %v2376 = vmul.f32 %v2373, %v112
    %v2377 = vadd.f32 %v2261, %v2375
    %v2378 = vadd.f32 %v2262, %v2376
    %v2379 = vmul.f32 %v1989, %v117
    %v2380 = vmul.f32 %v1992, %v117
    %v2382 = vsel %vm123, %v2379, 0
    %2384 = vmatpush.xpose.msra.mxu0 0.0
    %2385 = vmatpush.xpose.msra.mxu0 0.0
    %2386 = vmatpush.xpose.msra.mxu0 0.0
    %2387 = vmatpush.xpose.msra.mxu0 0.0
    %2388 = vmatpush.xpose.msra.mxu0 0.0
    %2389 = vmatpush.xpose.msra.mxu0 0.0
    %2390 = vmatpush.xpose.msra.mxu0 0.0
    %2391 = vmatpush.xpose.msra.mxu0 0.0
    %2392 = vmatpush.xpose.msra.mxu0 0.0
    %2393 = vmatpush.xpose.msra.mxu0 0.0
    %2394 = vmatpush.xpose.msra.mxu0 0.0
    %2395 = vmatpush.xpose.msra.mxu0 0.0
    %2396 = vmatpush.xpose.msra.mxu0 0.0
    %2397 = vmatpush.xpose.msra.mxu0 0.0
    %2398 = vmatpush.xpose.msra.mxu0 0.0
    %2399 = vmatpush.xpose.msra.mxu0 %v2382
    %2400 = vmatmul.f32.gmra.mxu0 %v2030
    %v2401 = vpop.f32.mrf.mxu0
    %v2402 = vadd.f32 0.0, %v2401
    %2403 = vdwg.mxu0
    %v2405 = vsel %vm123, %v2380, 0
    %2407 = vmatpush.xpose.msra.mxu0 0.0
    %2408 = vmatpush.xpose.msra.mxu0 0.0
    %2409 = vmatpush.xpose.msra.mxu0 0.0
    %2410 = vmatpush.xpose.msra.mxu0 0.0
    %2411 = vmatpush.xpose.msra.mxu0 0.0
    %2412 = vmatpush.xpose.msra.mxu0 0.0
    %2413 = vmatpush.xpose.msra.mxu0 0.0
    %2414 = vmatpush.xpose.msra.mxu0 0.0
    %2415 = vmatpush.xpose.msra.mxu0 0.0
    %2416 = vmatpush.xpose.msra.mxu0 0.0
    %2417 = vmatpush.xpose.msra.mxu0 0.0
    %2418 = vmatpush.xpose.msra.mxu0 0.0
    %2419 = vmatpush.xpose.msra.mxu0 0.0
    %2420 = vmatpush.xpose.msra.mxu0 0.0
    %2421 = vmatpush.xpose.msra.mxu0 0.0
    %2422 = vmatpush.xpose.msra.mxu0 %v2405
    %2423 = vmatmul.f32.gmra.mxu0 %v2056
    %v2424 = vpop.f32.mrf.mxu0
    %v2425 = vadd.f32 0.0, %v2424
    %2426 = vdwg.mxu0
    %v2427 = vmul.f32 %v2402, 0.35355338
    %v2428 = vmul.f32 %v2425, 0.35355338
    %v2429 = vadd.f32 %v2427, %v96
    %v2430 = vadd.f32 %v2428, %v97
    %v2431 = vmul.f32 %v2429, 1.442695
    %v2432 = vpow.pop %v2431
    %v2433 = vmul.f32 %v2430, 1.442695
    %v2434 = vpow.pop %v2433
    %v2435 = vsel %vm352, %v2432, 0.0
    %2436 = vadd.xlane.f32.xlu0 %v2435
    %v2437 = vpop.xlane.xlu0 %2436
    %v2438 = vsel %vm352, %v2434, 0.0
    %2439 = vadd.xlane.f32.xlu0 %v2438
    %v2440 = vpop.xlane.xlu0 %2439
    %v2441 = vrcp.pop %v2437
    %v2442 = vrcp.pop %v2440
    %v2443 = vmul.f32 %v2432, %v2441
    %v2444 = vmul.f32 %v2434, %v2442
    %v2446 = vsel %vm352, %v2443, 0
    %2448 = vmatpush.msra.mxu0 0.0
    %2449 = vmatpush.msra.mxu0 0.0
    %2450 = vmatpush.msra.mxu0 0.0
    %2451 = vmatpush.msra.mxu0 0.0
    %2452 = vmatpush.msra.mxu0 0.0
    %2453 = vmatpush.msra.mxu0 0.0
    %2454 = vmatpush.msra.mxu0 0.0
    %2455 = vmatpush.msra.mxu0 0.0
    %2456 = vmatpush.msra.mxu0 0.0
    %2457 = vmatpush.msra.mxu0 0.0
    %2458 = vmatpush.msra.mxu0 0.0
    %2459 = vmatpush.msra.mxu0 0.0
    %2460 = vmatpush.msra.mxu0 0.0
    %2461 = vmatpush.msra.mxu0 0.0
    %2462 = vmatpush.msra.mxu0 0.0
    %2463 = vmatpush.msra.mxu0 %v2022
    %2464 = vmatmul.f32.gmra.mxu0 %v2446
    %v2465 = vpop.f32.mrf.mxu0
    %v2466 = vadd.f32 0.0, %v2465
    %2467 = vdwg.mxu0
    %v2469 = vsel %vm352, %v2444, 0
    %2471 = vmatpush.msra.mxu0 0.0
    %2472 = vmatpush.msra.mxu0 0.0
    %2473 = vmatpush.msra.mxu0 0.0
    %2474 = vmatpush.msra.mxu0 0.0
    %2475 = vmatpush.msra.mxu0 0.0
    %2476 = vmatpush.msra.mxu0 0.0
    %2477 = vmatpush.msra.mxu0 0.0
    %2478 = vmatpush.msra.mxu0 0.0
    %2479 = vmatpush.msra.mxu0 0.0
    %2480 = vmatpush.msra.mxu0 0.0
    %2481 = vmatpush.msra.mxu0 0.0
    %2482 = vmatpush.msra.mxu0 0.0
    %2483 = vmatpush.msra.mxu0 0.0
    %2484 = vmatpush.msra.mxu0 0.0
    %2485 = vmatpush.msra.mxu0 0.0
    %2486 = vmatpush.msra.mxu0 %v2025
    %2487 = vmatmul.f32.gmra.mxu0 %v2469
    %v2488 = vpop.f32.mrf.mxu0
    %v2489 = vadd.f32 0.0, %v2488
    %2490 = vdwg.mxu0
    %v2491 = vmul.f32 %v2466, %v117
    %v2492 = vmul.f32 %v2489, %v117
    %v2493 = vadd.f32 %v2377, %v2491
    %v2494 = vadd.f32 %v2378, %v2492
    %s2495 = scalar_lea.vmem %s11, 64
    %v2496 = vld [vmem:[%s2495] sm:$0xff]
    %v2497 = vld [vmem:[%s2495 + $0x8] sm:$0xff]
    %v2498 = vld [vmem:[%s2495 + $0x10] sm:$0xff]
    %v2499 = vld [vmem:[%s2495 + $0x18] sm:$0xff]
    %s2500 = scalar_lea.vmem %s12, 2
    %v2501 = vld [vmem:[%s2500] sm:$0x1]
    %v2503 = vperm.slane %v2501, 0
    %v2506 = vsel %vm123, %v2493, 0
    %v2509 = vsel %vm123, %v2494, 0
    %2511 = vmatpush.msra.mxu0 0.0
    %2512 = vmatpush.msra.mxu0 0.0
    %2513 = vmatpush.msra.mxu0 0.0
    %2514 = vmatpush.msra.mxu0 0.0
    %2515 = vmatpush.msra.mxu0 0.0
    %2516 = vmatpush.msra.mxu0 0.0
    %2517 = vmatpush.msra.mxu0 0.0
    %2518 = vmatpush.msra.mxu0 0.0
    %2519 = vmatpush.msra.mxu0 0.0
    %2520 = vmatpush.msra.mxu0 0.0
    %2521 = vmatpush.msra.mxu0 0.0
    %2522 = vmatpush.msra.mxu0 0.0
    %2523 = vmatpush.msra.mxu0 %v2499
    %2524 = vmatpush.msra.mxu0 %v2498
    %2525 = vmatpush.msra.mxu0 %v2497
    %2526 = vmatpush.msra.mxu0 %v2496
    %2527 = vmatmul.f32.gmra.mxu0 %v2506
    %v2528 = vpop.f32.mrf.mxu0
    %v2529 = vadd.f32 %v2503, %v2528
    %2530 = vmatmul.f32.gmra.mxu0 %v2509
    %v2531 = vpop.f32.mrf.mxu0
    %v2532 = vadd.f32 %v2503, %v2531
    %2533 = vdwg.mxu0
    %v2534 = vadd.f32 %v2529, %v1863
    %v2535 = vadd.f32 %v2532, %v1864
    %s2536 = scalar_lea.vmem %s13, 2
    %v2537 = vld [vmem:[%s2536] sm:$0x1]
    %s2538 = scalar_lea.vmem %s14, 2
    %v2539 = vld [vmem:[%s2538] sm:$0x1]
    %v2540 = vsel %vm123, %v2534, 0.0
    %2541 = vadd.xlane.f32.xlu0 %v2540
    %v2542 = vpop.xlane.xlu0 %2541
    %v2543 = vsel %vm123, %v2535, 0.0
    %2544 = vadd.xlane.f32.xlu0 %v2543
    %v2545 = vpop.xlane.xlu0 %2544
    %v2546 = vmul.f32 %v2542, %v136
    %v2547 = vmul.f32 %v2545, %v136
    %v2548 = vmul.f32 %v2534, %v2534
    %v2549 = vmul.f32 %v2535, %v2535
    %v2550 = vsel %vm123, %v2548, 0.0
    %2551 = vadd.xlane.f32.xlu0 %v2550
    %v2552 = vpop.xlane.xlu0 %2551
    %v2553 = vsel %vm123, %v2549, 0.0
    %2554 = vadd.xlane.f32.xlu0 %v2553
    %v2555 = vpop.xlane.xlu0 %2554
    %v2556 = vmul.f32 %v2552, %v136
    %v2557 = vmul.f32 %v2555, %v136
    %v2558 = vmul.f32 %v2546, %v2546
    %v2559 = vmul.f32 %v2547, %v2547
    %v2560 = vsub.f32 %v2556, %v2558
    %v2561 = vsub.f32 %v2557, %v2559
    %v2562 = vsub.f32 %v2534, %v2546
    %v2563 = vsub.f32 %v2535, %v2547
    %v2564 = vadd.f32 %v2560, 1e-12
    %v2565 = vadd.f32 %v2561, 1e-12
    %v2566 = vrsqrt.pop %v2564
    %v2567 = vmul.f32 %v2566, %v2564
    %v2568 = vmul.f32 %v2567, %v2566
    %v2569 = vmul.f32 0.5, %v2568
    %v2570 = vsub.f32 1.5, %v2569
    %v2571 = vmul.f32 %v2566, %v2570
    %vm2572 = vweird.f32 %v2564
    %vm2573 = vweird.f32 %v2566
    %vm2574 = vmor %vm2572, %vm2573
    %v2575 = vsel %vm2574, %v2566, %v2571
    %v2576 = vrsqrt.pop %v2565
    %v2577 = vmul.f32 %v2576, %v2565
    %v2578 = vmul.f32 %v2577, %v2576
    %v2579 = vmul.f32 0.5, %v2578
    %v2580 = vsub.f32 1.5, %v2579
    %v2581 = vmul.f32 %v2576, %v2580
    %vm2582 = vweird.f32 %v2565
    %vm2583 = vweird.f32 %v2576
    %vm2584 = vmor %vm2582, %vm2583
    %v2585 = vsel %vm2584, %v2576, %v2581
    %v2586 = vmul.f32 %v2562, %v2575
    %v2587 = vmul.f32 %v2563, %v2585
    %v2589 = vperm.slane %v2537, 0
    %v2591 = vmul.f32 %v2586, %v2589
    %v2592 = vmul.f32 %v2587, %v2589
    %v2594 = vperm.slane %v2539, 0
    %v2596 = vadd.f32 %v2591, %v2594
    %v2597 = vadd.f32 %v2592, %v2594
    %s2598 = scalar_lea.vmem [#allocation2], 64
    %v2599 = vld [vmem:[%s2598] sm:$0xff]
    %v2600 = vld [vmem:[%s2598 + $0x8] sm:$0xff]
    %v2601 = vld [vmem:[%s2598 + $0x10] sm:$0xff]
    %v2602 = vld [vmem:[%s2598 + $0x18] sm:$0xff]
    %s2603 = scalar_lea.vmem %s16, 2
    %v2604 = vld [vmem:[%s2603] sm:$0x1]
    %v2606 = vperm.slane %v2604, 0
    %v2609 = vsel %vm123, %v2596, 0
    %v2612 = vsel %vm123, %v2597, 0
    %2614 = vmatpush.msra.mxu0 0.0
    %2615 = vmatpush.msra.mxu0 0.0
    %2616 = vmatpush.msra.mxu0 0.0
    %2617 = vmatpush.msra.mxu0 0.0
    %2618 = vmatpush.msra.mxu0 0.0
    %2619 = vmatpush.msra.mxu0 0.0
    %2620 = vmatpush.msra.mxu0 0.0
    %2621 = vmatpush.msra.mxu0 0.0
    %2622 = vmatpush.msra.mxu0 0.0
    %2623 = vmatpush.msra.mxu0 0.0
    %2624 = vmatpush.msra.mxu0 0.0
    %2625 = vmatpush.msra.mxu0 0.0
    %2626 = vmatpush.msra.mxu0 %v2602
    %2627 = vmatpush.msra.mxu0 %v2601
    %2628 = vmatpush.msra.mxu0 %v2600
    %2629 = vmatpush.msra.mxu0 %v2599
    %2630 = vmatmul.f32.gmra.mxu0 %v2609
    %v2631 = vpop.f32.mrf.mxu0
    %v2632 = vadd.f32 %v2606, %v2631
    %2633 = vmatmul.f32.gmra.mxu0 %v2612
    %v2634 = vpop.f32.mrf.mxu0
    %v2635 = vadd.f32 %v2606, %v2634
    %2636 = vdwg.mxu0
    %v2637 = vmul.f32 %v2632, %v2632
    %v2638 = vmul.f32 %v2635, %v2635
    %v2639 = vmul.f32 %v2632, %v2637
    %v2640 = vmul.f32 %v2635, %v2638
    %v2641 = vmul.f32 %v2639, 0.044715
    %v2642 = vmul.f32 %v2640, 0.044715
    %v2643 = vadd.f32 %v2632, %v2641
    %v2644 = vadd.f32 %v2635, %v2642
    %v2645 = vmul.f32 %v2643, 0.7978846
    %v2646 = vmul.f32 %v2644, 0.7978846
    %v2647 = vtanh.pop %v2645
    %v2648 = vtanh.pop %v2646
    %v2649 = vadd.f32 %v2647, 1.0
    %v2650 = vadd.f32 %v2648, 1.0
    %v2651 = vmul.f32 %v2649, 0.5
    %v2652 = vmul.f32 %v2650, 0.5
    %v2653 = vmul.f32 %v2632, %v2651
    %v2654 = vmul.f32 %v2635, %v2652
    %s2655 = scalar_lea.vmem %s17, 128
    %v2656 = vld [vmem:[%s2655] sm:$0xff]
    %v2657 = vld [vmem:[%s2655 + $0x8] sm:$0xff]
    %v2658 = vld [vmem:[%s2655 + $0x10] sm:$0xff]
    %v2659 = vld [vmem:[%s2655 + $0x18] sm:$0xff]
    %v2660 = vld [vmem:[%s2655 + $0x20] sm:$0xff]
    %v2661 = vld [vmem:[%s2655 + $0x28] sm:$0xff]
    %v2662 = vld [vmem:[%s2655 + $0x30] sm:$0xff]
    %v2663 = vld [vmem:[%s2655 + $0x38] sm:$0xff]
    %s2664 = scalar_lea.vmem %s18, 2
    %v2665 = vld [vmem:[%s2664] sm:$0x1]
    %v2667 = vperm.slane %v2665, 0
    %v2670 = vsel %vm925, %v2653, 0
    %v2673 = vsel %vm925, %v2654, 0
    %2675 = vmatpush.msra.mxu0 0.0
    %2676 = vmatpush.msra.mxu0 0.0
    %2677 = vmatpush.msra.mxu0 0.0
    %2678 = vmatpush.msra.mxu0 0.0
    %2679 = vmatpush.msra.mxu0 0.0
    %2680 = vmatpush.msra.mxu0 0.0
    %2681 = vmatpush.msra.mxu0 0.0
    %2682 = vmatpush.msra.mxu0 0.0
    %2683 = vmatpush.msra.mxu0 %v2663
    %2684 = vmatpush.msra.mxu0 %v2662
    %2685 = vmatpush.msra.mxu0 %v2661
    %2686 = vmatpush.msra.mxu0 %v2660
    %2687 = vmatpush.msra.mxu0 %v2659
    %2688 = vmatpush.msra.mxu0 %v2658
    %2689 = vmatpush.msra.mxu0 %v2657
    %2690 = vmatpush.msra.mxu0 %v2656
    %2691 = vmatmul.f32.gmra.mxu0 %v2670
    %v2692 = vpop.f32.mrf.mxu0
    %v2693 = vadd.f32 %v2667, %v2692
    %2694 = vmatmul.f32.gmra.mxu0 %v2673
    %v2695 = vpop.f32.mrf.mxu0
    %v2696 = vadd.f32 %v2667, %v2695
    %2697 = vdwg.mxu0
    %v2698 = vadd.f32 %v2693, %v2596
    %v2699 = vadd.f32 %v2696, %v2597
    %s2700 = scalar_lea.vmem %s19, 2
    %v2701 = vld [vmem:[%s2700] sm:$0x1]
    %s2702 = scalar_lea.vmem %s20, 2
    %v2703 = vld [vmem:[%s2702] sm:$0x1]
    %v2704 = vsel %vm123, %v2698, 0.0
    %2705 = vadd.xlane.f32.xlu0 %v2704
    %v2706 = vpop.xlane.xlu0 %2705
    %v2707 = vsel %vm123, %v2699, 0.0
    %2708 = vadd.xlane.f32.xlu0 %v2707
    %v2709 = vpop.xlane.xlu0 %2708
    %v2710 = vmul.f32 %v2706, %v136
    %v2711 = vmul.f32 %v2709, %v136
    %v2712 = vmul.f32 %v2698, %v2698
    %v2713 = vmul.f32 %v2699, %v2699
    %v2714 = vsel %vm123, %v2712, 0.0
    %2715 = vadd.xlane.f32.xlu0 %v2714
    %v2716 = vpop.xlane.xlu0 %2715
    %v2717 = vsel %vm123, %v2713, 0.0
    %2718 = vadd.xlane.f32.xlu0 %v2717
    %v2719 = vpop.xlane.xlu0 %2718
    %v2720 = vmul.f32 %v2716, %v136
    %v2721 = vmul.f32 %v2719, %v136
    %v2722 = vmul.f32 %v2710, %v2710
    %v2723 = vmul.f32 %v2711, %v2711
    %v2724 = vsub.f32 %v2720, %v2722
    %v2725 = vsub.f32 %v2721, %v2723
    %v2726 = vsub.f32 %v2698, %v2710
    %v2727 = vsub.f32 %v2699, %v2711
    %v2728 = vadd.f32 %v2724, 1e-12
    %v2729 = vadd.f32 %v2725, 1e-12
    %v2730 = vrsqrt.pop %v2728
    %v2731 = vmul.f32 %v2730, %v2728
    %v2732 = vmul.f32 %v2731, %v2730
    %v2733 = vmul.f32 0.5, %v2732
    %v2734 = vsub.f32 1.5, %v2733
    %v2735 = vmul.f32 %v2730, %v2734
    %vm2736 = vweird.f32 %v2728
    %vm2737 = vweird.f32 %v2730
    %vm2738 = vmor %vm2736, %vm2737
    %v2739 = vsel %vm2738, %v2730, %v2735
    %v2740 = vrsqrt.pop %v2729
    %v2741 = vmul.f32 %v2740, %v2729
    %v2742 = vmul.f32 %v2741, %v2740
    %v2743 = vmul.f32 0.5, %v2742
    %v2744 = vsub.f32 1.5, %v2743
    %v2745 = vmul.f32 %v2740, %v2744
    %vm2746 = vweird.f32 %v2729
    %vm2747 = vweird.f32 %v2740
    %vm2748 = vmor %vm2746, %vm2747
    %v2749 = vsel %vm2748, %v2740, %v2745
    %v2750 = vmul.f32 %v2726, %v2739
    %v2751 = vmul.f32 %v2727, %v2749
    %v2753 = vperm.slane %v2701, 0
    %v2755 = vmul.f32 %v2750, %v2753
    %v2756 = vmul.f32 %v2751, %v2753
    %v2758 = vperm.slane %v2703, 0
    %v2760 = vadd.f32 %v2755, %v2758
    %v2761 = vadd.f32 %v2756, %v2758
    %s2762 = scalar_lea.vmem %s24, 48
    %2763 = vst.msk [vmem:[%s2762] sm:$0xff] %vm123, %v2760
    %2764 = vst.msk [vmem:[%s2762 + $0x8] sm:$0xff] %vm123, %v2761
    %s2765 = scalar_lea.vmem %s21, 96
    %v2766 = vld [vmem:[%s2765] sm:$0xff]
    %v2767 = vld [vmem:[%s2765 + $0x8] sm:$0xff]
    %v2768 = vld [vmem:[%s2765 + $0x10] sm:$0xff]
    %v2769 = vld [vmem:[%s2765 + $0x18] sm:$0xff]
    %v2772 = vrot.slane %v2761, 7
    %v2773 = vsel %vm1876, %v2772, %v2760
    %v2774 = vsel %vm123, %v2773, 0
    %2776 = vmatpush.msra.mxu0 0.0
    %2777 = vmatpush.msra.mxu0 0.0
    %2778 = vmatpush.msra.mxu0 0.0
    %2779 = vmatpush.msra.mxu0 0.0
    %2780 = vmatpush.msra.mxu0 0.0
    %2781 = vmatpush.msra.mxu0 0.0
    %2782 = vmatpush.msra.mxu0 0.0
    %2783 = vmatpush.msra.mxu0 0.0
    %2784 = vmatpush.msra.mxu0 0.0
    %2785 = vmatpush.msra.mxu0 0.0
    %2786 = vmatpush.msra.mxu0 0.0
    %2787 = vmatpush.msra.mxu0 0.0
    %2788 = vmatpush.msra.mxu0 %v2769
    %2789 = vmatpush.msra.mxu0 %v2768
    %2790 = vmatpush.msra.mxu0 %v2767
    %2791 = vmatpush.msra.mxu0 %v2766
    %2792 = vmatmul.f32.gmra.mxu0 %v2774
    %v2793 = vpop.f32.mrf.mxu0
    %v2794 = vadd.f32 0.0, %v2793
    %2795 = vdwg.mxu0
    %v2796 = vadd.f32 %v1922, %v2794
    %s2797 = scalar_lea.vmem %s5, 96
    %v2798 = vld [vmem:[%s2797] sm:$0xff]
    %v2799 = vld [vmem:[%s2797 + $0x8] sm:$0xff]
    %v2800 = vld [vmem:[%s2797 + $0x10] sm:$0xff]
    %v2801 = vld [vmem:[%s2797 + $0x18] sm:$0xff]
    %s2802 = scalar_lea.vmem %s6, 3
    %v2803 = vld [vmem:[%s2802] sm:$0x1]
    %v2805 = vperm.slane %v2803, 0
    %v2807 = vsel %vm123, %v2760, 0
    %v2809 = vsel %vm123, %v2761, 0
    %2811 = vmatpush.msra.mxu0 0.0
    %2812 = vmatpush.msra.mxu0 0.0
    %2813 = vmatpush.msra.mxu0 0.0
    %2814 = vmatpush.msra.mxu0 0.0
    %2815 = vmatpush.msra.mxu0 0.0
    %2816 = vmatpush.msra.mxu0 0.0
    %2817 = vmatpush.msra.mxu0 0.0
    %2818 = vmatpush.msra.mxu0 0.0
    %2819 = vmatpush.msra.mxu0 0.0
    %2820 = vmatpush.msra.mxu0 0.0
    %2821 = vmatpush.msra.mxu0 0.0
    %2822 = vmatpush.msra.mxu0 0.0
    %2823 = vmatpush.msra.mxu0 %v2801
    %2824 = vmatpush.msra.mxu0 %v2800
    %2825 = vmatpush.msra.mxu0 %v2799
    %2826 = vmatpush.msra.mxu0 %v2798
    %2827 = vmatmul.f32.gmra.mxu0 %v2807
    %v2828 = vpop.f32.mrf.mxu0
    %v2829 = vadd.f32 %v2805, %v2828
    %2830 = vmatmul.f32.gmra.mxu0 %v2809
    %v2831 = vpop.f32.mrf.mxu0
    %v2832 = vadd.f32 %v2805, %v2831
    %2833 = vdwg.mxu0
    %s2834 = scalar_lea.vmem %s7, 96
    %v2835 = vld [vmem:[%s2834] sm:$0xff]
    %v2836 = vld [vmem:[%s2834 + $0x8] sm:$0xff]
    %v2837 = vld [vmem:[%s2834 + $0x10] sm:$0xff]
    %v2838 = vld [vmem:[%s2834 + $0x18] sm:$0xff]
    %s2839 = scalar_lea.vmem %s8, 3
    %v2840 = vld [vmem:[%s2839] sm:$0x1]
    %v2842 = vperm.slane %v2840, 0
    %2844 = vmatpush.msra.mxu0 0.0
    %2845 = vmatpush.msra.mxu0 0.0
    %2846 = vmatpush.msra.mxu0 0.0
    %2847 = vmatpush.msra.mxu0 0.0
    %2848 = vmatpush.msra.mxu0 0.0
    %2849 = vmatpush.msra.mxu0 0.0
    %2850 = vmatpush.msra.mxu0 0.0
    %2851 = vmatpush.msra.mxu0 0.0
    %2852 = vmatpush.msra.mxu0 0.0
    %2853 = vmatpush.msra.mxu0 0.0
    %2854 = vmatpush.msra.mxu0 0.0
    %2855 = vmatpush.msra.mxu0 0.0
    %2856 = vmatpush.msra.mxu0 %v2838
    %2857 = vmatpush.msra.mxu0 %v2837
    %2858 = vmatpush.msra.mxu0 %v2836
    %2859 = vmatpush.msra.mxu0 %v2835
    %2860 = vmatmul.f32.gmra.mxu0 %v2807
    %v2861 = vpop.f32.mrf.mxu0
    %v2862 = vadd.f32 %v2842, %v2861
    %2863 = vmatmul.f32.gmra.mxu0 %v2809
    %v2864 = vpop.f32.mrf.mxu0
    %v2865 = vadd.f32 %v2842, %v2864
    %2866 = vdwg.mxu0
    %s2867 = scalar_lea.vmem %s9, 96
    %v2868 = vld [vmem:[%s2867] sm:$0xff]
    %v2869 = vld [vmem:[%s2867 + $0x8] sm:$0xff]
    %v2870 = vld [vmem:[%s2867 + $0x10] sm:$0xff]
    %v2871 = vld [vmem:[%s2867 + $0x18] sm:$0xff]
    %s2872 = scalar_lea.vmem %s10, 3
    %v2873 = vld [vmem:[%s2872] sm:$0x1]
    %v2875 = vperm.slane %v2873, 0
    %2877 = vmatpush.msra.mxu0 0.0
    %2878 = vmatpush.msra.mxu0 0.0
    %2879 = vmatpush.msra.mxu0 0.0
    %2880 = vmatpush.msra.mxu0 0.0
    %2881 = vmatpush.msra.mxu0 0.0
    %2882 = vmatpush.msra.mxu0 0.0
    %2883 = vmatpush.msra.mxu0 0.0
    %2884 = vmatpush.msra.mxu0 0.0
    %2885 = vmatpush.msra.mxu0 0.0
    %2886 = vmatpush.msra.mxu0 0.0
    %2887 = vmatpush.msra.mxu0 0.0
    %2888 = vmatpush.msra.mxu0 0.0
    %2889 = vmatpush.msra.mxu0 %v2871
    %2890 = vmatpush.msra.mxu0 %v2870
    %2891 = vmatpush.msra.mxu0 %v2869
    %2892 = vmatpush.msra.mxu0 %v2868
    %2893 = vmatmul.f32.gmra.mxu0 %v2807
    %v2894 = vpop.f32.mrf.mxu0
    %v2895 = vadd.f32 %v2875, %v2894
    %2896 = vmatmul.f32.gmra.mxu0 %v2809
    %v2897 = vpop.f32.mrf.mxu0
    %v2898 = vadd.f32 %v2875, %v2897
    %2899 = vdwg.mxu0
    %v2900 = vmul.f32 %v2862, %v102
    %v2901 = vmul.f32 %v2865, %v102
    %v2903 = vsel %vm123, %v2829, 0
    %v2906 = vsel %vm123, %v2900, 0
    %2908 = vmatpush.xpose.msra.mxu0 0.0
    %2909 = vmatpush.xpose.msra.mxu0 0.0
    %2910 = vmatpush.xpose.msra.mxu0 0.0
    %2911 = vmatpush.xpose.msra.mxu0 0.0
    %2912 = vmatpush.xpose.msra.mxu0 0.0
    %2913 = vmatpush.xpose.msra.mxu0 0.0
    %2914 = vmatpush.xpose.msra.mxu0 0.0
    %2915 = vmatpush.xpose.msra.mxu0 0.0
    %2916 = vmatpush.xpose.msra.mxu0 0.0
    %2917 = vmatpush.xpose.msra.mxu0 0.0
    %2918 = vmatpush.xpose.msra.mxu0 0.0
    %2919 = vmatpush.xpose.msra.mxu0 0.0
    %2920 = vmatpush.xpose.msra.mxu0 0.0
    %2921 = vmatpush.xpose.msra.mxu0 0.0
    %2922 = vmatpush.xpose.msra.mxu0 0.0
    %2923 = vmatpush.xpose.msra.mxu0 %v2906
    %2924 = vmatmul.f32.gmra.mxu0 %v2903
    %v2925 = vpop.f32.mrf.mxu0
    %v2926 = vadd.f32 0.0, %v2925
    %2927 = vdwg.mxu0
    %v2929 = vsel %vm123, %v2832, 0
    %v2932 = vsel %vm123, %v2901, 0
    %2934 = vmatpush.xpose.msra.mxu0 0.0
    %2935 = vmatpush.xpose.msra.mxu0 0.0
    %2936 = vmatpush.xpose.msra.mxu0 0.0
    %2937 = vmatpush.xpose.msra.mxu0 0.0
    %2938 = vmatpush.xpose.msra.mxu0 0.0
    %2939 = vmatpush.xpose.msra.mxu0 0.0
    %2940 = vmatpush.xpose.msra.mxu0 0.0
    %2941 = vmatpush.xpose.msra.mxu0 0.0
    %2942 = vmatpush.xpose.msra.mxu0 0.0
    %2943 = vmatpush.xpose.msra.mxu0 0.0
    %2944 = vmatpush.xpose.msra.mxu0 0.0
    %2945 = vmatpush.xpose.msra.mxu0 0.0
    %2946 = vmatpush.xpose.msra.mxu0 0.0
    %2947 = vmatpush.xpose.msra.mxu0 0.0
    %2948 = vmatpush.xpose.msra.mxu0 0.0
    %2949 = vmatpush.xpose.msra.mxu0 %v2932
    %2950 = vmatmul.f32.gmra.mxu0 %v2929
    %v2951 = vpop.f32.mrf.mxu0
    %v2952 = vadd.f32 0.0, %v2951
    %2953 = vdwg.mxu0
    %v2954 = vmul.f32 %v2926, 0.35355338
    %v2955 = vmul.f32 %v2952, 0.35355338
    %v2956 = vadd.f32 %v2954, %v96
    %v2957 = vadd.f32 %v2955, %v97
    %v2958 = vmul.f32 %v2956, 1.442695
    %v2959 = vpow.pop %v2958
    %v2960 = vmul.f32 %v2957, 1.442695
    %v2961 = vpow.pop %v2960
    %v2962 = vsel %vm352, %v2959, 0.0
    %2963 = vadd.xlane.f32.xlu0 %v2962
    %v2964 = vpop.xlane.xlu0 %2963
    %v2965 = vsel %vm352, %v2961, 0.0
    %2966 = vadd.xlane.f32.xlu0 %v2965
    %v2967 = vpop.xlane.xlu0 %2966
    %v2968 = vrcp.pop %v2964
    %v2969 = vrcp.pop %v2967
    %v2970 = vmul.f32 %v2959, %v2968
    %v2971 = vmul.f32 %v2961, %v2969
    %v2973 = vsel %vm352, %v2970, 0
    %2975 = vmatpush.msra.mxu0 0.0
    %2976 = vmatpush.msra.mxu0 0.0
    %2977 = vmatpush.msra.mxu0 0.0
    %2978 = vmatpush.msra.mxu0 0.0
    %2979 = vmatpush.msra.mxu0 0.0
    %2980 = vmatpush.msra.mxu0 0.0
    %2981 = vmatpush.msra.mxu0 0.0
    %2982 = vmatpush.msra.mxu0 0.0
    %2983 = vmatpush.msra.mxu0 0.0
    %2984 = vmatpush.msra.mxu0 0.0
    %2985 = vmatpush.msra.mxu0 0.0
    %2986 = vmatpush.msra.mxu0 0.0
    %2987 = vmatpush.msra.mxu0 0.0
    %2988 = vmatpush.msra.mxu0 0.0
    %2989 = vmatpush.msra.mxu0 0.0
    %2990 = vmatpush.msra.mxu0 %v2895
    %2991 = vmatmul.f32.gmra.mxu0 %v2973
    %v2992 = vpop.f32.mrf.mxu0
    %v2993 = vadd.f32 0.0, %v2992
    %2994 = vdwg.mxu0
    %v2996 = vsel %vm352, %v2971, 0
    %2998 = vmatpush.msra.mxu0 0.0
    %2999 = vmatpush.msra.mxu0 0.0
    %3000 = vmatpush.msra.mxu0 0.0
    %3001 = vmatpush.msra.mxu0 0.0
    %3002 = vmatpush.msra.mxu0 0.0
    %3003 = vmatpush.msra.mxu0 0.0
    %3004 = vmatpush.msra.mxu0 0.0
    %3005 = vmatpush.msra.mxu0 0.0
    %3006 = vmatpush.msra.mxu0 0.0
    %3007 = vmatpush.msra.mxu0 0.0
    %3008 = vmatpush.msra.mxu0 0.0
    %3009 = vmatpush.msra.mxu0 0.0
    %3010 = vmatpush.msra.mxu0 0.0
    %3011 = vmatpush.msra.mxu0 0.0
    %3012 = vmatpush.msra.mxu0 0.0
    %3013 = vmatpush.msra.mxu0 %v2898
    %3014 = vmatmul.f32.gmra.mxu0 %v2996
    %v3015 = vpop.f32.mrf.mxu0
    %v3016 = vadd.f32 0.0, %v3015
    %3017 = vdwg.mxu0
    %v3018 = vmul.f32 %v2993, %v102
    %v3019 = vmul.f32 %v3016, %v102
    %v3020 = vmul.f32 %v2862, %v107
    %v3021 = vmul.f32 %v2865, %v107
    %v3023 = vsel %vm123, %v3020, 0
    %3025 = vmatpush.xpose.msra.mxu0 0.0
    %3026 = vmatpush.xpose.msra.mxu0 0.0
    %3027 = vmatpush.xpose.msra.mxu0 0.0
    %3028 = vmatpush.xpose.msra.mxu0 0.0
    %3029 = vmatpush.xpose.msra.mxu0 0.0
    %3030 = vmatpush.xpose.msra.mxu0 0.0
    %3031 = vmatpush.xpose.msra.mxu0 0.0
    %3032 = vmatpush.xpose.msra.mxu0 0.0
    %3033 = vmatpush.xpose.msra.mxu0 0.0
    %3034 = vmatpush.xpose.msra.mxu0 0.0
    %3035 = vmatpush.xpose.msra.mxu0 0.0
    %3036 = vmatpush.xpose.msra.mxu0 0.0
    %3037 = vmatpush.xpose.msra.mxu0 0.0
    %3038 = vmatpush.xpose.msra.mxu0 0.0
    %3039 = vmatpush.xpose.msra.mxu0 0.0
    %3040 = vmatpush.xpose.msra.mxu0 %v3023
    %3041 = vmatmul.f32.gmra.mxu0 %v2903
    %v3042 = vpop.f32.mrf.mxu0
    %v3043 = vadd.f32 0.0, %v3042
    %3044 = vdwg.mxu0
    %v3046 = vsel %vm123, %v3021, 0
    %3048 = vmatpush.xpose.msra.mxu0 0.0
    %3049 = vmatpush.xpose.msra.mxu0 0.0
    %3050 = vmatpush.xpose.msra.mxu0 0.0
    %3051 = vmatpush.xpose.msra.mxu0 0.0
    %3052 = vmatpush.xpose.msra.mxu0 0.0
    %3053 = vmatpush.xpose.msra.mxu0 0.0
    %3054 = vmatpush.xpose.msra.mxu0 0.0
    %3055 = vmatpush.xpose.msra.mxu0 0.0
    %3056 = vmatpush.xpose.msra.mxu0 0.0
    %3057 = vmatpush.xpose.msra.mxu0 0.0
    %3058 = vmatpush.xpose.msra.mxu0 0.0
    %3059 = vmatpush.xpose.msra.mxu0 0.0
    %3060 = vmatpush.xpose.msra.mxu0 0.0
    %3061 = vmatpush.xpose.msra.mxu0 0.0
    %3062 = vmatpush.xpose.msra.mxu0 0.0
    %3063 = vmatpush.xpose.msra.mxu0 %v3046
    %3064 = vmatmul.f32.gmra.mxu0 %v2929
    %v3065 = vpop.f32.mrf.mxu0
    %v3066 = vadd.f32 0.0, %v3065
    %3067 = vdwg.mxu0
    %v3068 = vmul.f32 %v3043, 0.35355338
    %v3069 = vmul.f32 %v3066, 0.35355338
    %v3070 = vadd.f32 %v3068, %v96
    %v3071 = vadd.f32 %v3069, %v97
    %v3072 = vmul.f32 %v3070, 1.442695
    %v3073 = vpow.pop %v3072
    %v3074 = vmul.f32 %v3071, 1.442695
    %v3075 = vpow.pop %v3074
    %v3076 = vsel %vm352, %v3073, 0.0
    %3077 = vadd.xlane.f32.xlu0 %v3076
    %v3078 = vpop.xlane.xlu0 %3077
    %v3079 = vsel %vm352, %v3075, 0.0
    %3080 = vadd.xlane.f32.xlu0 %v3079
    %v3081 = vpop.xlane.xlu0 %3080
    %v3082 = vrcp.pop %v3078
    %v3083 = vrcp.pop %v3081
    %v3084 = vmul.f32 %v3073, %v3082
    %v3085 = vmul.f32 %v3075, %v3083
    %v3087 = vsel %vm352, %v3084, 0
    %3089 = vmatpush.msra.mxu0 0.0
    %3090 = vmatpush.msra.mxu0 0.0
    %3091 = vmatpush.msra.mxu0 0.0
    %3092 = vmatpush.msra.mxu0 0.0
    %3093 = vmatpush.msra.mxu0 0.0
    %3094 = vmatpush.msra.mxu0 0.0
    %3095 = vmatpush.msra.mxu0 0.0
    %3096 = vmatpush.msra.mxu0 0.0
    %3097 = vmatpush.msra.mxu0 0.0
    %3098 = vmatpush.msra.mxu0 0.0
    %3099 = vmatpush.msra.mxu0 0.0
    %3100 = vmatpush.msra.mxu0 0.0
    %3101 = vmatpush.msra.mxu0 0.0
    %3102 = vmatpush.msra.mxu0 0.0
    %3103 = vmatpush.msra.mxu0 0.0
    %3104 = vmatpush.msra.mxu0 %v2895
    %3105 = vmatmul.f32.gmra.mxu0 %v3087
    %v3106 = vpop.f32.mrf.mxu0
    %v3107 = vadd.f32 0.0, %v3106
    %3108 = vdwg.mxu0
    %v3110 = vsel %vm352, %v3085, 0
    %3112 = vmatpush.msra.mxu0 0.0
    %3113 = vmatpush.msra.mxu0 0.0
    %3114 = vmatpush.msra.mxu0 0.0
    %3115 = vmatpush.msra.mxu0 0.0
    %3116 = vmatpush.msra.mxu0 0.0
    %3117 = vmatpush.msra.mxu0 0.0
    %3118 = vmatpush.msra.mxu0 0.0
    %3119 = vmatpush.msra.mxu0 0.0
    %3120 = vmatpush.msra.mxu0 0.0
    %3121 = vmatpush.msra.mxu0 0.0
    %3122 = vmatpush.msra.mxu0 0.0
    %3123 = vmatpush.msra.mxu0 0.0
    %3124 = vmatpush.msra.mxu0 0.0
    %3125 = vmatpush.msra.mxu0 0.0
    %3126 = vmatpush.msra.mxu0 0.0
    %3127 = vmatpush.msra.mxu0 %v2898
    %3128 = vmatmul.f32.gmra.mxu0 %v3110
    %v3129 = vpop.f32.mrf.mxu0
    %v3130 = vadd.f32 0.0, %v3129
    %3131 = vdwg.mxu0
    %v3132 = vmul.f32 %v3107, %v107
    %v3133 = vmul.f32 %v3130, %v107
    %v3134 = vadd.f32 %v3018, %v3132
    %v3135 = vadd.f32 %v3019, %v3133
    %v3136 = vmul.f32 %v2862, %v112
    %v3137 = vmul.f32 %v2865, %v112
    %v3139 = vsel %vm123, %v3136, 0
    %3141 = vmatpush.xpose.msra.mxu0 0.0
    %3142 = vmatpush.xpose.msra.mxu0 0.0
    %3143 = vmatpush.xpose.msra.mxu0 0.0
    %3144 = vmatpush.xpose.msra.mxu0 0.0
    %3145 = vmatpush.xpose.msra.mxu0 0.0
    %3146 = vmatpush.xpose.msra.mxu0 0.0
    %3147 = vmatpush.xpose.msra.mxu0 0.0
    %3148 = vmatpush.xpose.msra.mxu0 0.0
    %3149 = vmatpush.xpose.msra.mxu0 0.0
    %3150 = vmatpush.xpose.msra.mxu0 0.0
    %3151 = vmatpush.xpose.msra.mxu0 0.0
    %3152 = vmatpush.xpose.msra.mxu0 0.0
    %3153 = vmatpush.xpose.msra.mxu0 0.0
    %3154 = vmatpush.xpose.msra.mxu0 0.0
    %3155 = vmatpush.xpose.msra.mxu0 0.0
    %3156 = vmatpush.xpose.msra.mxu0 %v3139
    %3157 = vmatmul.f32.gmra.mxu0 %v2903
    %v3158 = vpop.f32.mrf.mxu0
    %v3159 = vadd.f32 0.0, %v3158
    %3160 = vdwg.mxu0
    %v3162 = vsel %vm123, %v3137, 0
    %3164 = vmatpush.xpose.msra.mxu0 0.0
    %3165 = vmatpush.xpose.msra.mxu0 0.0
    %3166 = vmatpush.xpose.msra.mxu0 0.0
    %3167 = vmatpush.xpose.msra.mxu0 0.0
    %3168 = vmatpush.xpose.msra.mxu0 0.0
    %3169 = vmatpush.xpose.msra.mxu0 0.0
    %3170 = vmatpush.xpose.msra.mxu0 0.0
    %3171 = vmatpush.xpose.msra.mxu0 0.0
    %3172 = vmatpush.xpose.msra.mxu0 0.0
    %3173 = vmatpush.xpose.msra.mxu0 0.0
    %3174 = vmatpush.xpose.msra.mxu0 0.0
    %3175 = vmatpush.xpose.msra.mxu0 0.0
    %3176 = vmatpush.xpose.msra.mxu0 0.0
    %3177 = vmatpush.xpose.msra.mxu0 0.0
    %3178 = vmatpush.xpose.msra.mxu0 0.0
    %3179 = vmatpush.xpose.msra.mxu0 %v3162
    %3180 = vmatmul.f32.gmra.mxu0 %v2929
    %v3181 = vpop.f32.mrf.mxu0
    %v3182 = vadd.f32 0.0, %v3181
    %3183 = vdwg.mxu0
    %v3184 = vmul.f32 %v3159, 0.35355338
    %v3185 = vmul.f32 %v3182, 0.35355338
    %v3186 = vadd.f32 %v3184, %v96
    %v3187 = vadd.f32 %v3185, %v97
    %v3188 = vmul.f32 %v3186, 1.442695
    %v3189 = vpow.pop %v3188
    %v3190 = vmul.f32 %v3187, 1.442695
    %v3191 = vpow.pop %v3190
    %v3192 = vsel %vm352, %v3189, 0.0
    %3193 = vadd.xlane.f32.xlu0 %v3192
    %v3194 = vpop.xlane.xlu0 %3193
    %v3195 = vsel %vm352, %v3191, 0.0
    %3196 = vadd.xlane.f32.xlu0 %v3195
    %v3197 = vpop.xlane.xlu0 %3196
    %v3198 = vrcp.pop %v3194
    %v3199 = vrcp.pop %v3197
    %v3200 = vmul.f32 %v3189, %v3198
    %v3201 = vmul.f32 %v3191, %v3199
    %v3203 = vsel %vm352, %v3200, 0
    %3205 = vmatpush.msra.mxu0 0.0
    %3206 = vmatpush.msra.mxu0 0.0
    %3207 = vmatpush.msra.mxu0 0.0
    %3208 = vmatpush.msra.mxu0 0.0
    %3209 = vmatpush.msra.mxu0 0.0
    %3210 = vmatpush.msra.mxu0 0.0
    %3211 = vmatpush.msra.mxu0 0.0
    %3212 = vmatpush.msra.mxu0 0.0
    %3213 = vmatpush.msra.mxu0 0.0
    %3214 = vmatpush.msra.mxu0 0.0
    %3215 = vmatpush.msra.mxu0 0.0
    %3216 = vmatpush.msra.mxu0 0.0
    %3217 = vmatpush.msra.mxu0 0.0
    %3218 = vmatpush.msra.mxu0 0.0
    %3219 = vmatpush.msra.mxu0 0.0
    %3220 = vmatpush.msra.mxu0 %v2895
    %3221 = vmatmul.f32.gmra.mxu0 %v3203
    %v3222 = vpop.f32.mrf.mxu0
    %v3223 = vadd.f32 0.0, %v3222
    %3224 = vdwg.mxu0
    %v3226 = vsel %vm352, %v3201, 0
    %3228 = vmatpush.msra.mxu0 0.0
    %3229 = vmatpush.msra.mxu0 0.0
    %3230 = vmatpush.msra.mxu0 0.0
    %3231 = vmatpush.msra.mxu0 0.0
    %3232 = vmatpush.msra.mxu0 0.0
    %3233 = vmatpush.msra.mxu0 0.0
    %3234 = vmatpush.msra.mxu0 0.0
    %3235 = vmatpush.msra.mxu0 0.0
    %3236 = vmatpush.msra.mxu0 0.0
    %3237 = vmatpush.msra.mxu0 0.0
    %3238 = vmatpush.msra.mxu0 0.0
    %3239 = vmatpush.msra.mxu0 0.0
    %3240 = vmatpush.msra.mxu0 0.0
    %3241 = vmatpush.msra.mxu0 0.0
    %3242 = vmatpush.msra.mxu0 0.0
    %3243 = vmatpush.msra.mxu0 %v2898
    %3244 = vmatmul.f32.gmra.mxu0 %v3226
    %v3245 = vpop.f32.mrf.mxu0
    %v3246 = vadd.f32 0.0, %v3245
    %3247 = vdwg.mxu0
    %v3248 = vmul.f32 %v3223, %v112
    %v3249 = vmul.f32 %v3246, %v112
    %v3250 = vadd.f32 %v3134, %v3248
    %v3251 = vadd.f32 %v3135, %v3249
    %v3252 = vmul.f32 %v2862, %v117
    %v3253 = vmul.f32 %v2865, %v117
    %v3255 = vsel %vm123, %v3252, 0
    %3257 = vmatpush.xpose.msra.mxu0 0.0
    %3258 = vmatpush.xpose.msra.mxu0 0.0
    %3259 = vmatpush.xpose.msra.mxu0 0.0
    %3260 = vmatpush.xpose.msra.mxu0 0.0
    %3261 = vmatpush.xpose.msra.mxu0 0.0
    %3262 = vmatpush.xpose.msra.mxu0 0.0
    %3263 = vmatpush.xpose.msra.mxu0 0.0
    %3264 = vmatpush.xpose.msra.mxu0 0.0
    %3265 = vmatpush.xpose.msra.mxu0 0.0
    %3266 = vmatpush.xpose.msra.mxu0 0.0
    %3267 = vmatpush.xpose.msra.mxu0 0.0
    %3268 = vmatpush.xpose.msra.mxu0 0.0
    %3269 = vmatpush.xpose.msra.mxu0 0.0
    %3270 = vmatpush.xpose.msra.mxu0 0.0
    %3271 = vmatpush.xpose.msra.mxu0 0.0
    %3272 = vmatpush.xpose.msra.mxu0 %v3255
    %3273 = vmatmul.f32.gmra.mxu0 %v2903
    %v3274 = vpop.f32.mrf.mxu0
    %v3275 = vadd.f32 0.0, %v3274
    %3276 = vdwg.mxu0
    %v3278 = vsel %vm123, %v3253, 0
    %3280 = vmatpush.xpose.msra.mxu0 0.0
    %3281 = vmatpush.xpose.msra.mxu0 0.0
    %3282 = vmatpush.xpose.msra.mxu0 0.0
    %3283 = vmatpush.xpose.msra.mxu0 0.0
    %3284 = vmatpush.xpose.msra.mxu0 0.0
    %3285 = vmatpush.xpose.msra.mxu0 0.0
    %3286 = vmatpush.xpose.msra.mxu0 0.0
    %3287 = vmatpush.xpose.msra.mxu0 0.0
    %3288 = vmatpush.xpose.msra.mxu0 0.0
    %3289 = vmatpush.xpose.msra.mxu0 0.0
    %3290 = vmatpush.xpose.msra.mxu0 0.0
    %3291 = vmatpush.xpose.msra.mxu0 0.0
    %3292 = vmatpush.xpose.msra.mxu0 0.0
    %3293 = vmatpush.xpose.msra.mxu0 0.0
    %3294 = vmatpush.xpose.msra.mxu0 0.0
    %3295 = vmatpush.xpose.msra.mxu0 %v3278
    %3296 = vmatmul.f32.gmra.mxu0 %v2929
    %v3297 = vpop.f32.mrf.mxu0
    %v3298 = vadd.f32 0.0, %v3297
    %3299 = vdwg.mxu0
    %v3300 = vmul.f32 %v3275, 0.35355338
    %v3301 = vmul.f32 %v3298, 0.35355338
    %v3302 = vadd.f32 %v3300, %v96
    %v3303 = vadd.f32 %v3301, %v97
    %v3304 = vmul.f32 %v3302, 1.442695
    %v3305 = vpow.pop %v3304
    %v3306 = vmul.f32 %v3303, 1.442695
    %v3307 = vpow.pop %v3306
    %v3308 = vsel %vm352, %v3305, 0.0
    %3309 = vadd.xlane.f32.xlu0 %v3308
    %v3310 = vpop.xlane.xlu0 %3309
    %v3311 = vsel %vm352, %v3307, 0.0
    %3312 = vadd.xlane.f32.xlu0 %v3311
    %v3313 = vpop.xlane.xlu0 %3312
    %v3314 = vrcp.pop %v3310
    %v3315 = vrcp.pop %v3313
    %v3316 = vmul.f32 %v3305, %v3314
    %v3317 = vmul.f32 %v3307, %v3315
    %v3319 = vsel %vm352, %v3316, 0
    %3321 = vmatpush.msra.mxu0 0.0
    %3322 = vmatpush.msra.mxu0 0.0
    %3323 = vmatpush.msra.mxu0 0.0
    %3324 = vmatpush.msra.mxu0 0.0
    %3325 = vmatpush.msra.mxu0 0.0
    %3326 = vmatpush.msra.mxu0 0.0
    %3327 = vmatpush.msra.mxu0 0.0
    %3328 = vmatpush.msra.mxu0 0.0
    %3329 = vmatpush.msra.mxu0 0.0
    %3330 = vmatpush.msra.mxu0 0.0
    %3331 = vmatpush.msra.mxu0 0.0
    %3332 = vmatpush.msra.mxu0 0.0
    %3333 = vmatpush.msra.mxu0 0.0
    %3334 = vmatpush.msra.mxu0 0.0
    %3335 = vmatpush.msra.mxu0 0.0
    %3336 = vmatpush.msra.mxu0 %v2895
    %3337 = vmatmul.f32.gmra.mxu0 %v3319
    %v3338 = vpop.f32.mrf.mxu0
    %v3339 = vadd.f32 0.0, %v3338
    %3340 = vdwg.mxu0
    %v3342 = vsel %vm352, %v3317, 0
    %3344 = vmatpush.msra.mxu0 0.0
    %3345 = vmatpush.msra.mxu0 0.0
    %3346 = vmatpush.msra.mxu0 0.0
    %3347 = vmatpush.msra.mxu0 0.0
    %3348 = vmatpush.msra.mxu0 0.0
    %3349 = vmatpush.msra.mxu0 0.0
    %3350 = vmatpush.msra.mxu0 0.0
    %3351 = vmatpush.msra.mxu0 0.0
    %3352 = vmatpush.msra.mxu0 0.0
    %3353 = vmatpush.msra.mxu0 0.0
    %3354 = vmatpush.msra.mxu0 0.0
    %3355 = vmatpush.msra.mxu0 0.0
    %3356 = vmatpush.msra.mxu0 0.0
    %3357 = vmatpush.msra.mxu0 0.0
    %3358 = vmatpush.msra.mxu0 0.0
    %3359 = vmatpush.msra.mxu0 %v2898
    %3360 = vmatmul.f32.gmra.mxu0 %v3342
    %v3361 = vpop.f32.mrf.mxu0
    %v3362 = vadd.f32 0.0, %v3361
    %3363 = vdwg.mxu0
    %v3364 = vmul.f32 %v3339, %v117
    %v3365 = vmul.f32 %v3362, %v117
    %v3366 = vadd.f32 %v3250, %v3364
    %v3367 = vadd.f32 %v3251, %v3365
    %s3368 = scalar_lea.vmem %s11, 96
    %v3369 = vld [vmem:[%s3368] sm:$0xff]
    %v3370 = vld [vmem:[%s3368 + $0x8] sm:$0xff]
    %v3371 = vld [vmem:[%s3368 + $0x10] sm:$0xff]
    %v3372 = vld [vmem:[%s3368 + $0x18] sm:$0xff]
    %s3373 = scalar_lea.vmem %s12, 3
    %v3374 = vld [vmem:[%s3373] sm:$0x1]
    %v3376 = vperm.slane %v3374, 0
    %v3379 = vsel %vm123, %v3366, 0
    %v3382 = vsel %vm123, %v3367, 0
    %3384 = vmatpush.msra.mxu0 0.0
    %3385 = vmatpush.msra.mxu0 0.0
    %3386 = vmatpush.msra.mxu0 0.0
    %3387 = vmatpush.msra.mxu0 0.0
    %3388 = vmatpush.msra.mxu0 0.0
    %3389 = vmatpush.msra.mxu0 0.0
    %3390 = vmatpush.msra.mxu0 0.0
    %3391 = vmatpush.msra.mxu0 0.0
    %3392 = vmatpush.msra.mxu0 0.0
    %3393 = vmatpush.msra.mxu0 0.0
    %3394 = vmatpush.msra.mxu0 0.0
    %3395 = vmatpush.msra.mxu0 0.0
    %3396 = vmatpush.msra.mxu0 %v3372
    %3397 = vmatpush.msra.mxu0 %v3371
    %3398 = vmatpush.msra.mxu0 %v3370
    %3399 = vmatpush.msra.mxu0 %v3369
    %3400 = vmatmul.f32.gmra.mxu0 %v3379
    %v3401 = vpop.f32.mrf.mxu0
    %v3402 = vadd.f32 %v3376, %v3401
    %3403 = vmatmul.f32.gmra.mxu0 %v3382
    %v3404 = vpop.f32.mrf.mxu0
    %v3405 = vadd.f32 %v3376, %v3404
    %3406 = vdwg.mxu0
    %v3407 = vadd.f32 %v3402, %v2760
    %v3408 = vadd.f32 %v3405, %v2761
    %s3409 = scalar_lea.vmem %s13, 3
    %v3410 = vld [vmem:[%s3409] sm:$0x1]
    %s3411 = scalar_lea.vmem %s14, 3
    %v3412 = vld [vmem:[%s3411] sm:$0x1]
    %v3413 = vsel %vm123, %v3407, 0.0
    %3414 = vadd.xlane.f32.xlu0 %v3413
    %v3415 = vpop.xlane.xlu0 %3414
    %v3416 = vsel %vm123, %v3408, 0.0
    %3417 = vadd.xlane.f32.xlu0 %v3416
    %v3418 = vpop.xlane.xlu0 %3417
    %v3419 = vmul.f32 %v3415, %v136
    %v3420 = vmul.f32 %v3418, %v136
    %v3421 = vmul.f32 %v3407, %v3407
    %v3422 = vmul.f32 %v3408, %v3408
    %v3423 = vsel %vm123, %v3421, 0.0
    %3424 = vadd.xlane.f32.xlu0 %v3423
    %v3425 = vpop.xlane.xlu0 %3424
    %v3426 = vsel %vm123, %v3422, 0.0
    %3427 = vadd.xlane.f32.xlu0 %v3426
    %v3428 = vpop.xlane.xlu0 %3427
    %v3429 = vmul.f32 %v3425, %v136
    %v3430 = vmul.f32 %v3428, %v136
    %v3431 = vmul.f32 %v3419, %v3419
    %v3432 = vmul.f32 %v3420, %v3420
    %v3433 = vsub.f32 %v3429, %v3431
    %v3434 = vsub.f32 %v3430, %v3432
    %v3435 = vsub.f32 %v3407, %v3419
    %v3436 = vsub.f32 %v3408, %v3420
    %v3437 = vadd.f32 %v3433, 1e-12
    %v3438 = vadd.f32 %v3434, 1e-12
    %v3439 = vrsqrt.pop %v3437
    %v3440 = vmul.f32 %v3439, %v3437
    %v3441 = vmul.f32 %v3440, %v3439
    %v3442 = vmul.f32 0.5, %v3441
    %v3443 = vsub.f32 1.5, %v3442
    %v3444 = vmul.f32 %v3439, %v3443
    %vm3445 = vweird.f32 %v3437
    %vm3446 = vweird.f32 %v3439
    %vm3447 = vmor %vm3445, %vm3446
    %v3448 = vsel %vm3447, %v3439, %v3444
    %v3449 = vrsqrt.pop %v3438
    %v3450 = vmul.f32 %v3449, %v3438
    %v3451 = vmul.f32 %v3450, %v3449
    %v3452 = vmul.f32 0.5, %v3451
    %v3453 = vsub.f32 1.5, %v3452
    %v3454 = vmul.f32 %v3449, %v3453
    %vm3455 = vweird.f32 %v3438
    %vm3456 = vweird.f32 %v3449
    %vm3457 = vmor %vm3455, %vm3456
    %v3458 = vsel %vm3457, %v3449, %v3454
    %v3459 = vmul.f32 %v3435, %v3448
    %v3460 = vmul.f32 %v3436, %v3458
    %v3462 = vperm.slane %v3410, 0
    %v3464 = vmul.f32 %v3459, %v3462
    %v3465 = vmul.f32 %v3460, %v3462
    %v3467 = vperm.slane %v3412, 0
    %v3469 = vadd.f32 %v3464, %v3467
    %v3470 = vadd.f32 %v3465, %v3467
    %s3471 = scalar_lea.vmem [#allocation2], 96
    %v3472 = vld [vmem:[%s3471] sm:$0xff]
    %v3473 = vld [vmem:[%s3471 + $0x8] sm:$0xff]
    %v3474 = vld [vmem:[%s3471 + $0x10] sm:$0xff]
    %v3475 = vld [vmem:[%s3471 + $0x18] sm:$0xff]
    %s3476 = scalar_lea.vmem %s16, 3
    %v3477 = vld [vmem:[%s3476] sm:$0x1]
    %v3479 = vperm.slane %v3477, 0
    %v3482 = vsel %vm123, %v3469, 0
    %v3485 = vsel %vm123, %v3470, 0
    %3487 = vmatpush.msra.mxu0 0.0
    %3488 = vmatpush.msra.mxu0 0.0
    %3489 = vmatpush.msra.mxu0 0.0
    %3490 = vmatpush.msra.mxu0 0.0
    %3491 = vmatpush.msra.mxu0 0.0
    %3492 = vmatpush.msra.mxu0 0.0
    %3493 = vmatpush.msra.mxu0 0.0
    %3494 = vmatpush.msra.mxu0 0.0
    %3495 = vmatpush.msra.mxu0 0.0
    %3496 = vmatpush.msra.mxu0 0.0
    %3497 = vmatpush.msra.mxu0 0.0
    %3498 = vmatpush.msra.mxu0 0.0
    %3499 = vmatpush.msra.mxu0 %v3475
    %3500 = vmatpush.msra.mxu0 %v3474
    %3501 = vmatpush.msra.mxu0 %v3473
    %3502 = vmatpush.msra.mxu0 %v3472
    %3503 = vmatmul.f32.gmra.mxu0 %v3482
    %v3504 = vpop.f32.mrf.mxu0
    %v3505 = vadd.f32 %v3479, %v3504
    %3506 = vmatmul.f32.gmra.mxu0 %v3485
    %v3507 = vpop.f32.mrf.mxu0
    %v3508 = vadd.f32 %v3479, %v3507
    %3509 = vdwg.mxu0
    %v3510 = vmul.f32 %v3505, %v3505
    %v3511 = vmul.f32 %v3508, %v3508
    %v3512 = vmul.f32 %v3505, %v3510
    %v3513 = vmul.f32 %v3508, %v3511
    %v3514 = vmul.f32 %v3512, 0.044715
    %v3515 = vmul.f32 %v3513, 0.044715
    %v3516 = vadd.f32 %v3505, %v3514
    %v3517 = vadd.f32 %v3508, %v3515
    %v3518 = vmul.f32 %v3516, 0.7978846
    %v3519 = vmul.f32 %v3517, 0.7978846
    %v3520 = vtanh.pop %v3518
    %v3521 = vtanh.pop %v3519
    %v3522 = vadd.f32 %v3520, 1.0
    %v3523 = vadd.f32 %v3521, 1.0
    %v3524 = vmul.f32 %v3522, 0.5
    %v3525 = vmul.f32 %v3523, 0.5
    %v3526 = vmul.f32 %v3505, %v3524
    %v3527 = vmul.f32 %v3508, %v3525
    %s3528 = scalar_lea.vmem %s17, 192
    %v3529 = vld [vmem:[%s3528] sm:$0xff]
    %v3530 = vld [vmem:[%s3528 + $0x8] sm:$0xff]
    %v3531 = vld [vmem:[%s3528 + $0x10] sm:$0xff]
    %v3532 = vld [vmem:[%s3528 + $0x18] sm:$0xff]
    %v3533 = vld [vmem:[%s3528 + $0x20] sm:$0xff]
    %v3534 = vld [vmem:[%s3528 + $0x28] sm:$0xff]
    %v3535 = vld [vmem:[%s3528 + $0x30] sm:$0xff]
    %v3536 = vld [vmem:[%s3528 + $0x38] sm:$0xff]
    %s3537 = scalar_lea.vmem %s18, 3
    %v3538 = vld [vmem:[%s3537] sm:$0x1]
    %v3540 = vperm.slane %v3538, 0
    %v3543 = vsel %vm925, %v3526, 0
    %v3546 = vsel %vm925, %v3527, 0
    %3548 = vmatpush.msra.mxu0 0.0
    %3549 = vmatpush.msra.mxu0 0.0
    %3550 = vmatpush.msra.mxu0 0.0
    %3551 = vmatpush.msra.mxu0 0.0
    %3552 = vmatpush.msra.mxu0 0.0
    %3553 = vmatpush.msra.mxu0 0.0
    %3554 = vmatpush.msra.mxu0 0.0
    %3555 = vmatpush.msra.mxu0 0.0
    %3556 = vmatpush.msra.mxu0 %v3536
    %3557 = vmatpush.msra.mxu0 %v3535
    %3558 = vmatpush.msra.mxu0 %v3534
    %3559 = vmatpush.msra.mxu0 %v3533
    %3560 = vmatpush.msra.mxu0 %v3532
    %3561 = vmatpush.msra.mxu0 %v3531
    %3562 = vmatpush.msra.mxu0 %v3530
    %3563 = vmatpush.msra.mxu0 %v3529
    %3564 = vmatmul.f32.gmra.mxu0 %v3543
    %v3565 = vpop.f32.mrf.mxu0
    %v3566 = vadd.f32 %v3540, %v3565
    %3567 = vmatmul.f32.gmra.mxu0 %v3546
    %v3568 = vpop.f32.mrf.mxu0
    %v3569 = vadd.f32 %v3540, %v3568
    %3570 = vdwg.mxu0
    %v3571 = vadd.f32 %v3566, %v3469
    %v3572 = vadd.f32 %v3569, %v3470
    %s3573 = scalar_lea.vmem %s19, 3
    %v3574 = vld [vmem:[%s3573] sm:$0x1]
    %s3575 = scalar_lea.vmem %s20, 3
    %v3576 = vld [vmem:[%s3575] sm:$0x1]
    %v3577 = vsel %vm123, %v3571, 0.0
    %3578 = vadd.xlane.f32.xlu0 %v3577
    %v3579 = vpop.xlane.xlu0 %3578
    %v3580 = vsel %vm123, %v3572, 0.0
    %3581 = vadd.xlane.f32.xlu0 %v3580
    %v3582 = vpop.xlane.xlu0 %3581
    %v3583 = vmul.f32 %v3579, %v136
    %v3584 = vmul.f32 %v3582, %v136
    %v3585 = vmul.f32 %v3571, %v3571
    %v3586 = vmul.f32 %v3572, %v3572
    %v3587 = vsel %vm123, %v3585, 0.0
    %3588 = vadd.xlane.f32.xlu0 %v3587
    %v3589 = vpop.xlane.xlu0 %3588
    %v3590 = vsel %vm123, %v3586, 0.0
    %3591 = vadd.xlane.f32.xlu0 %v3590
    %v3592 = vpop.xlane.xlu0 %3591
    %v3593 = vmul.f32 %v3589, %v136
    %v3594 = vmul.f32 %v3592, %v136
    %v3595 = vmul.f32 %v3583, %v3583
    %v3596 = vmul.f32 %v3584, %v3584
    %v3597 = vsub.f32 %v3593, %v3595
    %v3598 = vsub.f32 %v3594, %v3596
    %v3599 = vsub.f32 %v3571, %v3583
    %v3600 = vsub.f32 %v3572, %v3584
    %v3601 = vadd.f32 %v3597, 1e-12
    %v3602 = vadd.f32 %v3598, 1e-12
    %v3603 = vrsqrt.pop %v3601
    %v3604 = vmul.f32 %v3603, %v3601
    %v3605 = vmul.f32 %v3604, %v3603
    %v3606 = vmul.f32 0.5, %v3605
    %v3607 = vsub.f32 1.5, %v3606
    %v3608 = vmul.f32 %v3603, %v3607
    %vm3609 = vweird.f32 %v3601
    %vm3610 = vweird.f32 %v3603
    %vm3611 = vmor %vm3609, %vm3610
    %v3612 = vsel %vm3611, %v3603, %v3608
    %v3613 = vrsqrt.pop %v3602
    %v3614 = vmul.f32 %v3613, %v3602
    %v3615 = vmul.f32 %v3614, %v3613
    %v3616 = vmul.f32 0.5, %v3615
    %v3617 = vsub.f32 1.5, %v3616
    %v3618 = vmul.f32 %v3613, %v3617
    %vm3619 = vweird.f32 %v3602
    %vm3620 = vweird.f32 %v3613
    %vm3621 = vmor %vm3619, %vm3620
    %v3622 = vsel %vm3621, %v3613, %v3618
    %v3623 = vmul.f32 %v3599, %v3612
    %v3624 = vmul.f32 %v3600, %v3622
    %v3626 = vperm.slane %v3574, 0
    %v3628 = vmul.f32 %v3623, %v3626
    %v3629 = vmul.f32 %v3624, %v3626
    %v3631 = vperm.slane %v3576, 0
    %v3633 = vadd.f32 %v3628, %v3631
    %v3634 = vadd.f32 %v3629, %v3631
    %s3635 = scalar_lea.vmem %s24, 64
    %3636 = vst.msk [vmem:[%s3635] sm:$0xff] %vm123, %v3633
    %3637 = vst.msk [vmem:[%s3635 + $0x8] sm:$0xff] %vm123, %v3634
    %s3638 = scalar_lea.vmem %s21, 64
    %v3639 = vld [vmem:[%s3638] sm:$0xff]
    %v3640 = vld [vmem:[%s3638 + $0x8] sm:$0xff]
    %v3641 = vld [vmem:[%s3638 + $0x10] sm:$0xff]
    %v3642 = vld [vmem:[%s3638 + $0x18] sm:$0xff]
    %v3645 = vrot.slane %v3634, 7
    %v3646 = vsel %vm1876, %v3645, %v3633
    %v3647 = vsel %vm123, %v3646, 0
    %3649 = vmatpush.msra.mxu0 0.0
    %3650 = vmatpush.msra.mxu0 0.0
    %3651 = vmatpush.msra.mxu0 0.0
    %3652 = vmatpush.msra.mxu0 0.0
    %3653 = vmatpush.msra.mxu0 0.0
    %3654 = vmatpush.msra.mxu0 0.0
    %3655 = vmatpush.msra.mxu0 0.0
    %3656 = vmatpush.msra.mxu0 0.0
    %3657 = vmatpush.msra.mxu0 0.0
    %3658 = vmatpush.msra.mxu0 0.0
    %3659 = vmatpush.msra.mxu0 0.0
    %3660 = vmatpush.msra.mxu0 0.0
    %3661 = vmatpush.msra.mxu0 %v3642
    %3662 = vmatpush.msra.mxu0 %v3641
    %3663 = vmatpush.msra.mxu0 %v3640
    %3664 = vmatpush.msra.mxu0 %v3639
    %3665 = vmatmul.f32.gmra.mxu0 %v3647
    %v3666 = vpop.f32.mrf.mxu0
    %v3667 = vadd.f32 0.0, %v3666
    %3668 = vdwg.mxu0
    %v3669 = vadd.f32 %v2796, %v3667
    %s3670 = scalar_lea.vmem %s5, 128
    %v3671 = vld [vmem:[%s3670] sm:$0xff]
    %v3672 = vld [vmem:[%s3670 + $0x8] sm:$0xff]
    %v3673 = vld [vmem:[%s3670 + $0x10] sm:$0xff]
    %v3674 = vld [vmem:[%s3670 + $0x18] sm:$0xff]
    %s3675 = scalar_lea.vmem %s6, 4
    %v3676 = vld [vmem:[%s3675] sm:$0x1]
    %v3678 = vperm.slane %v3676, 0
    %v3680 = vsel %vm123, %v3633, 0
    %v3682 = vsel %vm123, %v3634, 0
    %3684 = vmatpush.msra.mxu0 0.0
    %3685 = vmatpush.msra.mxu0 0.0
    %3686 = vmatpush.msra.mxu0 0.0
    %3687 = vmatpush.msra.mxu0 0.0
    %3688 = vmatpush.msra.mxu0 0.0
    %3689 = vmatpush.msra.mxu0 0.0
    %3690 = vmatpush.msra.mxu0 0.0
    %3691 = vmatpush.msra.mxu0 0.0
    %3692 = vmatpush.msra.mxu0 0.0
    %3693 = vmatpush.msra.mxu0 0.0
    %3694 = vmatpush.msra.mxu0 0.0
    %3695 = vmatpush.msra.mxu0 0.0
    %3696 = vmatpush.msra.mxu0 %v3674
    %3697 = vmatpush.msra.mxu0 %v3673
    %3698 = vmatpush.msra.mxu0 %v3672
    %3699 = vmatpush.msra.mxu0 %v3671
    %3700 = vmatmul.f32.gmra.mxu0 %v3680
    %v3701 = vpop.f32.mrf.mxu0
    %v3702 = vadd.f32 %v3678, %v3701
    %3703 = vmatmul.f32.gmra.mxu0 %v3682
    %v3704 = vpop.f32.mrf.mxu0
    %v3705 = vadd.f32 %v3678, %v3704
    %3706 = vdwg.mxu0
    %s3707 = scalar_lea.vmem %s7, 128
    %v3708 = vld [vmem:[%s3707] sm:$0xff]
    %v3709 = vld [vmem:[%s3707 + $0x8] sm:$0xff]
    %v3710 = vld [vmem:[%s3707 + $0x10] sm:$0xff]
    %v3711 = vld [vmem:[%s3707 + $0x18] sm:$0xff]
    %s3712 = scalar_lea.vmem %s8, 4
    %v3713 = vld [vmem:[%s3712] sm:$0x1]
    %v3715 = vperm.slane %v3713, 0
    %3717 = vmatpush.msra.mxu0 0.0
    %3718 = vmatpush.msra.mxu0 0.0
    %3719 = vmatpush.msra.mxu0 0.0
    %3720 = vmatpush.msra.mxu0 0.0
    %3721 = vmatpush.msra.mxu0 0.0
    %3722 = vmatpush.msra.mxu0 0.0
    %3723 = vmatpush.msra.mxu0 0.0
    %3724 = vmatpush.msra.mxu0 0.0
    %3725 = vmatpush.msra.mxu0 0.0
    %3726 = vmatpush.msra.mxu0 0.0
    %3727 = vmatpush.msra.mxu0 0.0
    %3728 = vmatpush.msra.mxu0 0.0
    %3729 = vmatpush.msra.mxu0 %v3711
    %3730 = vmatpush.msra.mxu0 %v3710
    %3731 = vmatpush.msra.mxu0 %v3709
    %3732 = vmatpush.msra.mxu0 %v3708
    %3733 = vmatmul.f32.gmra.mxu0 %v3680
    %v3734 = vpop.f32.mrf.mxu0
    %v3735 = vadd.f32 %v3715, %v3734
    %3736 = vmatmul.f32.gmra.mxu0 %v3682
    %v3737 = vpop.f32.mrf.mxu0
    %v3738 = vadd.f32 %v3715, %v3737
    %3739 = vdwg.mxu0
    %s3740 = scalar_lea.vmem %s9, 128
    %v3741 = vld [vmem:[%s3740] sm:$0xff]
    %v3742 = vld [vmem:[%s3740 + $0x8] sm:$0xff]
    %v3743 = vld [vmem:[%s3740 + $0x10] sm:$0xff]
    %v3744 = vld [vmem:[%s3740 + $0x18] sm:$0xff]
    %s3745 = scalar_lea.vmem %s10, 4
    %v3746 = vld [vmem:[%s3745] sm:$0x1]
    %v3748 = vperm.slane %v3746, 0
    %3750 = vmatpush.msra.mxu0 0.0
    %3751 = vmatpush.msra.mxu0 0.0
    %3752 = vmatpush.msra.mxu0 0.0
    %3753 = vmatpush.msra.mxu0 0.0
    %3754 = vmatpush.msra.mxu0 0.0
    %3755 = vmatpush.msra.mxu0 0.0
    %3756 = vmatpush.msra.mxu0 0.0
    %3757 = vmatpush.msra.mxu0 0.0
    %3758 = vmatpush.msra.mxu0 0.0
    %3759 = vmatpush.msra.mxu0 0.0
    %3760 = vmatpush.msra.mxu0 0.0
    %3761 = vmatpush.msra.mxu0 0.0
    %3762 = vmatpush.msra.mxu0 %v3744
    %3763 = vmatpush.msra.mxu0 %v3743
    %3764 = vmatpush.msra.mxu0 %v3742
    %3765 = vmatpush.msra.mxu0 %v3741
    %3766 = vmatmul.f32.gmra.mxu0 %v3680
    %v3767 = vpop.f32.mrf.mxu0
    %v3768 = vadd.f32 %v3748, %v3767
    %3769 = vmatmul.f32.gmra.mxu0 %v3682
    %v3770 = vpop.f32.mrf.mxu0
    %v3771 = vadd.f32 %v3748, %v3770
    %3772 = vdwg.mxu0
    %v3773 = vmul.f32 %v3735, %v102
    %v3774 = vmul.f32 %v3738, %v102
    %v3776 = vsel %vm123, %v3702, 0
    %v3779 = vsel %vm123, %v3773, 0
    %3781 = vmatpush.xpose.msra.mxu0 0.0
    %3782 = vmatpush.xpose.msra.mxu0 0.0
    %3783 = vmatpush.xpose.msra.mxu0 0.0
    %3784 = vmatpush.xpose.msra.mxu0 0.0
    %3785 = vmatpush.xpose.msra.mxu0 0.0
    %3786 = vmatpush.xpose.msra.mxu0 0.0
    %3787 = vmatpush.xpose.msra.mxu0 0.0
    %3788 = vmatpush.xpose.msra.mxu0 0.0
    %3789 = vmatpush.xpose.msra.mxu0 0.0
    %3790 = vmatpush.xpose.msra.mxu0 0.0
    %3791 = vmatpush.xpose.msra.mxu0 0.0
    %3792 = vmatpush.xpose.msra.mxu0 0.0
    %3793 = vmatpush.xpose.msra.mxu0 0.0
    %3794 = vmatpush.xpose.msra.mxu0 0.0
    %3795 = vmatpush.xpose.msra.mxu0 0.0
    %3796 = vmatpush.xpose.msra.mxu0 %v3779
    %3797 = vmatmul.f32.gmra.mxu0 %v3776
    %v3798 = vpop.f32.mrf.mxu0
    %v3799 = vadd.f32 0.0, %v3798
    %3800 = vdwg.mxu0
    %v3802 = vsel %vm123, %v3705, 0
    %v3805 = vsel %vm123, %v3774, 0
    %3807 = vmatpush.xpose.msra.mxu0 0.0
    %3808 = vmatpush.xpose.msra.mxu0 0.0
    %3809 = vmatpush.xpose.msra.mxu0 0.0
    %3810 = vmatpush.xpose.msra.mxu0 0.0
    %3811 = vmatpush.xpose.msra.mxu0 0.0
    %3812 = vmatpush.xpose.msra.mxu0 0.0
    %3813 = vmatpush.xpose.msra.mxu0 0.0
    %3814 = vmatpush.xpose.msra.mxu0 0.0
    %3815 = vmatpush.xpose.msra.mxu0 0.0
    %3816 = vmatpush.xpose.msra.mxu0 0.0
    %3817 = vmatpush.xpose.msra.mxu0 0.0
    %3818 = vmatpush.xpose.msra.mxu0 0.0
    %3819 = vmatpush.xpose.msra.mxu0 0.0
    %3820 = vmatpush.xpose.msra.mxu0 0.0
    %3821 = vmatpush.xpose.msra.mxu0 0.0
    %3822 = vmatpush.xpose.msra.mxu0 %v3805
    %3823 = vmatmul.f32.gmra.mxu0 %v3802
    %v3824 = vpop.f32.mrf.mxu0
    %v3825 = vadd.f32 0.0, %v3824
    %3826 = vdwg.mxu0
    %v3827 = vmul.f32 %v3799, 0.35355338
    %v3828 = vmul.f32 %v3825, 0.35355338
    %v3829 = vadd.f32 %v3827, %v96
    %v3830 = vadd.f32 %v3828, %v97
    %v3831 = vmul.f32 %v3829, 1.442695
    %v3832 = vpow.pop %v3831
    %v3833 = vmul.f32 %v3830, 1.442695
    %v3834 = vpow.pop %v3833
    %v3835 = vsel %vm352, %v3832, 0.0
    %3836 = vadd.xlane.f32.xlu0 %v3835
    %v3837 = vpop.xlane.xlu0 %3836
    %v3838 = vsel %vm352, %v3834, 0.0
    %3839 = vadd.xlane.f32.xlu0 %v3838
    %v3840 = vpop.xlane.xlu0 %3839
    %v3841 = vrcp.pop %v3837
    %v3842 = vrcp.pop %v3840
    %v3843 = vmul.f32 %v3832, %v3841
    %v3844 = vmul.f32 %v3834, %v3842
    %v3846 = vsel %vm352, %v3843, 0
    %3848 = vmatpush.msra.mxu0 0.0
    %3849 = vmatpush.msra.mxu0 0.0
    %3850 = vmatpush.msra.mxu0 0.0
    %3851 = vmatpush.msra.mxu0 0.0
    %3852 = vmatpush.msra.mxu0 0.0
    %3853 = vmatpush.msra.mxu0 0.0
    %3854 = vmatpush.msra.mxu0 0.0
    %3855 = vmatpush.msra.mxu0 0.0
    %3856 = vmatpush.msra.mxu0 0.0
    %3857 = vmatpush.msra.mxu0 0.0
    %3858 = vmatpush.msra.mxu0 0.0
    %3859 = vmatpush.msra.mxu0 0.0
    %3860 = vmatpush.msra.mxu0 0.0
    %3861 = vmatpush.msra.mxu0 0.0
    %3862 = vmatpush.msra.mxu0 0.0
    %3863 = vmatpush.msra.mxu0 %v3768
    %3864 = vmatmul.f32.gmra.mxu0 %v3846
    %v3865 = vpop.f32.mrf.mxu0
    %v3866 = vadd.f32 0.0, %v3865
    %3867 = vdwg.mxu0
    %v3869 = vsel %vm352, %v3844, 0
    %3871 = vmatpush.msra.mxu0 0.0
    %3872 = vmatpush.msra.mxu0 0.0
    %3873 = vmatpush.msra.mxu0 0.0
    %3874 = vmatpush.msra.mxu0 0.0
    %3875 = vmatpush.msra.mxu0 0.0
    %3876 = vmatpush.msra.mxu0 0.0
    %3877 = vmatpush.msra.mxu0 0.0
    %3878 = vmatpush.msra.mxu0 0.0
    %3879 = vmatpush.msra.mxu0 0.0
    %3880 = vmatpush.msra.mxu0 0.0
    %3881 = vmatpush.msra.mxu0 0.0
    %3882 = vmatpush.msra.mxu0 0.0
    %3883 = vmatpush.msra.mxu0 0.0
    %3884 = vmatpush.msra.mxu0 0.0
    %3885 = vmatpush.msra.mxu0 0.0
    %3886 = vmatpush.msra.mxu0 %v3771
    %3887 = vmatmul.f32.gmra.mxu0 %v3869
    %v3888 = vpop.f32.mrf.mxu0
    %v3889 = vadd.f32 0.0, %v3888
    %3890 = vdwg.mxu0
    %v3891 = vmul.f32 %v3866, %v102
    %v3892 = vmul.f32 %v3889, %v102
    %v3893 = vmul.f32 %v3735, %v107
    %v3894 = vmul.f32 %v3738, %v107
    %v3896 = vsel %vm123, %v3893, 0
    %3898 = vmatpush.xpose.msra.mxu0 0.0
    %3899 = vmatpush.xpose.msra.mxu0 0.0
    %3900 = vmatpush.xpose.msra.mxu0 0.0
    %3901 = vmatpush.xpose.msra.mxu0 0.0
    %3902 = vmatpush.xpose.msra.mxu0 0.0
    %3903 = vmatpush.xpose.msra.mxu0 0.0
    %3904 = vmatpush.xpose.msra.mxu0 0.0
    %3905 = vmatpush.xpose.msra.mxu0 0.0
    %3906 = vmatpush.xpose.msra.mxu0 0.0
    %3907 = vmatpush.xpose.msra.mxu0 0.0
    %3908 = vmatpush.xpose.msra.mxu0 0.0
    %3909 = vmatpush.xpose.msra.mxu0 0.0
    %3910 = vmatpush.xpose.msra.mxu0 0.0
    %3911 = vmatpush.xpose.msra.mxu0 0.0
    %3912 = vmatpush.xpose.msra.mxu0 0.0
    %3913 = vmatpush.xpose.msra.mxu0 %v3896
    %3914 = vmatmul.f32.gmra.mxu0 %v3776
    %v3915 = vpop.f32.mrf.mxu0
    %v3916 = vadd.f32 0.0, %v3915
    %3917 = vdwg.mxu0
    %v3919 = vsel %vm123, %v3894, 0
    %3921 = vmatpush.xpose.msra.mxu0 0.0
    %3922 = vmatpush.xpose.msra.mxu0 0.0
    %3923 = vmatpush.xpose.msra.mxu0 0.0
    %3924 = vmatpush.xpose.msra.mxu0 0.0
    %3925 = vmatpush.xpose.msra.mxu0 0.0
    %3926 = vmatpush.xpose.msra.mxu0 0.0
    %3927 = vmatpush.xpose.msra.mxu0 0.0
    %3928 = vmatpush.xpose.msra.mxu0 0.0
    %3929 = vmatpush.xpose.msra.mxu0 0.0
    %3930 = vmatpush.xpose.msra.mxu0 0.0
    %3931 = vmatpush.xpose.msra.mxu0 0.0
    %3932 = vmatpush.xpose.msra.mxu0 0.0
    %3933 = vmatpush.xpose.msra.mxu0 0.0
    %3934 = vmatpush.xpose.msra.mxu0 0.0
    %3935 = vmatpush.xpose.msra.mxu0 0.0
    %3936 = vmatpush.xpose.msra.mxu0 %v3919
    %3937 = vmatmul.f32.gmra.mxu0 %v3802
    %v3938 = vpop.f32.mrf.mxu0
    %v3939 = vadd.f32 0.0, %v3938
    %3940 = vdwg.mxu0
    %v3941 = vmul.f32 %v3916, 0.35355338
    %v3942 = vmul.f32 %v3939, 0.35355338
    %v3943 = vadd.f32 %v3941, %v96
    %v3944 = vadd.f32 %v3942, %v97
    %v3945 = vmul.f32 %v3943, 1.442695
    %v3946 = vpow.pop %v3945
    %v3947 = vmul.f32 %v3944, 1.442695
    %v3948 = vpow.pop %v3947
    %v3949 = vsel %vm352, %v3946, 0.0
    %3950 = vadd.xlane.f32.xlu0 %v3949
    %v3951 = vpop.xlane.xlu0 %3950
    %v3952 = vsel %vm352, %v3948, 0.0
    %3953 = vadd.xlane.f32.xlu0 %v3952
    %v3954 = vpop.xlane.xlu0 %3953
    %v3955 = vrcp.pop %v3951
    %v3956 = vrcp.pop %v3954
    %v3957 = vmul.f32 %v3946, %v3955
    %v3958 = vmul.f32 %v3948, %v3956
    %v3960 = vsel %vm352, %v3957, 0
    %3962 = vmatpush.msra.mxu0 0.0
    %3963 = vmatpush.msra.mxu0 0.0
    %3964 = vmatpush.msra.mxu0 0.0
    %3965 = vmatpush.msra.mxu0 0.0
    %3966 = vmatpush.msra.mxu0 0.0
    %3967 = vmatpush.msra.mxu0 0.0
    %3968 = vmatpush.msra.mxu0 0.0
    %3969 = vmatpush.msra.mxu0 0.0
    %3970 = vmatpush.msra.mxu0 0.0
    %3971 = vmatpush.msra.mxu0 0.0
    %3972 = vmatpush.msra.mxu0 0.0
    %3973 = vmatpush.msra.mxu0 0.0
    %3974 = vmatpush.msra.mxu0 0.0
    %3975 = vmatpush.msra.mxu0 0.0
    %3976 = vmatpush.msra.mxu0 0.0
    %3977 = vmatpush.msra.mxu0 %v3768
    %3978 = vmatmul.f32.gmra.mxu0 %v3960
    %v3979 = vpop.f32.mrf.mxu0
    %v3980 = vadd.f32 0.0, %v3979
    %3981 = vdwg.mxu0
    %v3983 = vsel %vm352, %v3958, 0
    %3985 = vmatpush.msra.mxu0 0.0
    %3986 = vmatpush.msra.mxu0 0.0
    %3987 = vmatpush.msra.mxu0 0.0
    %3988 = vmatpush.msra.mxu0 0.0
    %3989 = vmatpush.msra.mxu0 0.0
    %3990 = vmatpush.msra.mxu0 0.0
    %3991 = vmatpush.msra.mxu0 0.0
    %3992 = vmatpush.msra.mxu0 0.0
    %3993 = vmatpush.msra.mxu0 0.0
    %3994 = vmatpush.msra.mxu0 0.0
    %3995 = vmatpush.msra.mxu0 0.0
    %3996 = vmatpush.msra.mxu0 0.0
    %3997 = vmatpush.msra.mxu0 0.0
    %3998 = vmatpush.msra.mxu0 0.0
    %3999 = vmatpush.msra.mxu0 0.0
    %4000 = vmatpush.msra.mxu0 %v3771
    %4001 = vmatmul.f32.gmra.mxu0 %v3983
    %v4002 = vpop.f32.mrf.mxu0
    %v4003 = vadd.f32 0.0, %v4002
    %4004 = vdwg.mxu0
    %v4005 = vmul.f32 %v3980, %v107
    %v4006 = vmul.f32 %v4003, %v107
    %v4007 = vadd.f32 %v3891, %v4005
    %v4008 = vadd.f32 %v3892, %v4006
    %v4009 = vmul.f32 %v3735, %v112
    %v4010 = vmul.f32 %v3738, %v112
    %v4012 = vsel %vm123, %v4009, 0
    %4014 = vmatpush.xpose.msra.mxu0 0.0
    %4015 = vmatpush.xpose.msra.mxu0 0.0
    %4016 = vmatpush.xpose.msra.mxu0 0.0
    %4017 = vmatpush.xpose.msra.mxu0 0.0
    %4018 = vmatpush.xpose.msra.mxu0 0.0
    %4019 = vmatpush.xpose.msra.mxu0 0.0
    %4020 = vmatpush.xpose.msra.mxu0 0.0
    %4021 = vmatpush.xpose.msra.mxu0 0.0
    %4022 = vmatpush.xpose.msra.mxu0 0.0
    %4023 = vmatpush.xpose.msra.mxu0 0.0
    %4024 = vmatpush.xpose.msra.mxu0 0.0
    %4025 = vmatpush.xpose.msra.mxu0 0.0
    %4026 = vmatpush.xpose.msra.mxu0 0.0
    %4027 = vmatpush.xpose.msra.mxu0 0.0
    %4028 = vmatpush.xpose.msra.mxu0 0.0
    %4029 = vmatpush.xpose.msra.mxu0 %v4012
    %4030 = vmatmul.f32.gmra.mxu0 %v3776
    %v4031 = vpop.f32.mrf.mxu0
    %v4032 = vadd.f32 0.0, %v4031
    %4033 = vdwg.mxu0
    %v4035 = vsel %vm123, %v4010, 0
    %4037 = vmatpush.xpose.msra.mxu0 0.0
    %4038 = vmatpush.xpose.msra.mxu0 0.0
    %4039 = vmatpush.xpose.msra.mxu0 0.0
    %4040 = vmatpush.xpose.msra.mxu0 0.0
    %4041 = vmatpush.xpose.msra.mxu0 0.0
    %4042 = vmatpush.xpose.msra.mxu0 0.0
    %4043 = vmatpush.xpose.msra.mxu0 0.0
    %4044 = vmatpush.xpose.msra.mxu0 0.0
    %4045 = vmatpush.xpose.msra.mxu0 0.0
    %4046 = vmatpush.xpose.msra.mxu0 0.0
    %4047 = vmatpush.xpose.msra.mxu0 0.0
    %4048 = vmatpush.xpose.msra.mxu0 0.0
    %4049 = vmatpush.xpose.msra.mxu0 0.0
    %4050 = vmatpush.xpose.msra.mxu0 0.0
    %4051 = vmatpush.xpose.msra.mxu0 0.0
    %4052 = vmatpush.xpose.msra.mxu0 %v4035
    %4053 = vmatmul.f32.gmra.mxu0 %v3802
    %v4054 = vpop.f32.mrf.mxu0
    %v4055 = vadd.f32 0.0, %v4054
    %4056 = vdwg.mxu0
    %v4057 = vmul.f32 %v4032, 0.35355338
    %v4058 = vmul.f32 %v4055, 0.35355338
    %v4059 = vadd.f32 %v4057, %v96
    %v4060 = vadd.f32 %v4058, %v97
    %v4061 = vmul.f32 %v4059, 1.442695
    %v4062 = vpow.pop %v4061
    %v4063 = vmul.f32 %v4060, 1.442695
    %v4064 = vpow.pop %v4063
    %v4065 = vsel %vm352, %v4062, 0.0
    %4066 = vadd.xlane.f32.xlu0 %v4065
    %v4067 = vpop.xlane.xlu0 %4066
    %v4068 = vsel %vm352, %v4064, 0.0
    %4069 = vadd.xlane.f32.xlu0 %v4068
    %v4070 = vpop.xlane.xlu0 %4069
    %v4071 = vrcp.pop %v4067
    %v4072 = vrcp.pop %v4070
    %v4073 = vmul.f32 %v4062, %v4071
    %v4074 = vmul.f32 %v4064, %v4072
    %v4076 = vsel %vm352, %v4073, 0
    %4078 = vmatpush.msra.mxu0 0.0
    %4079 = vmatpush.msra.mxu0 0.0
    %4080 = vmatpush.msra.mxu0 0.0
    %4081 = vmatpush.msra.mxu0 0.0
    %4082 = vmatpush.msra.mxu0 0.0
    %4083 = vmatpush.msra.mxu0 0.0
    %4084 = vmatpush.msra.mxu0 0.0
    %4085 = vmatpush.msra.mxu0 0.0
    %4086 = vmatpush.msra.mxu0 0.0
    %4087 = vmatpush.msra.mxu0 0.0
    %4088 = vmatpush.msra.mxu0 0.0
    %4089 = vmatpush.msra.mxu0 0.0
    %4090 = vmatpush.msra.mxu0 0.0
    %4091 = vmatpush.msra.mxu0 0.0
    %4092 = vmatpush.msra.mxu0 0.0
    %4093 = vmatpush.msra.mxu0 %v3768
    %4094 = vmatmul.f32.gmra.mxu0 %v4076
    %v4095 = vpop.f32.mrf.mxu0
    %v4096 = vadd.f32 0.0, %v4095
    %4097 = vdwg.mxu0
    %v4099 = vsel %vm352, %v4074, 0
    %4101 = vmatpush.msra.mxu0 0.0
    %4102 = vmatpush.msra.mxu0 0.0
    %4103 = vmatpush.msra.mxu0 0.0
    %4104 = vmatpush.msra.mxu0 0.0
    %4105 = vmatpush.msra.mxu0 0.0
    %4106 = vmatpush.msra.mxu0 0.0
    %4107 = vmatpush.msra.mxu0 0.0
    %4108 = vmatpush.msra.mxu0 0.0
    %4109 = vmatpush.msra.mxu0 0.0
    %4110 = vmatpush.msra.mxu0 0.0
    %4111 = vmatpush.msra.mxu0 0.0
    %4112 = vmatpush.msra.mxu0 0.0
    %4113 = vmatpush.msra.mxu0 0.0
    %4114 = vmatpush.msra.mxu0 0.0
    %4115 = vmatpush.msra.mxu0 0.0
    %4116 = vmatpush.msra.mxu0 %v3771
    %4117 = vmatmul.f32.gmra.mxu0 %v4099
    %v4118 = vpop.f32.mrf.mxu0
    %v4119 = vadd.f32 0.0, %v4118
    %4120 = vdwg.mxu0
    %v4121 = vmul.f32 %v4096, %v112
    %v4122 = vmul.f32 %v4119, %v112
    %v4123 = vadd.f32 %v4007, %v4121
    %v4124 = vadd.f32 %v4008, %v4122
    %v4125 = vmul.f32 %v3735, %v117
    %v4126 = vmul.f32 %v3738, %v117
    %v4128 = vsel %vm123, %v4125, 0
    %4130 = vmatpush.xpose.msra.mxu0 0.0
    %4131 = vmatpush.xpose.msra.mxu0 0.0
    %4132 = vmatpush.xpose.msra.mxu0 0.0
    %4133 = vmatpush.xpose.msra.mxu0 0.0
    %4134 = vmatpush.xpose.msra.mxu0 0.0
    %4135 = vmatpush.xpose.msra.mxu0 0.0
    %4136 = vmatpush.xpose.msra.mxu0 0.0
    %4137 = vmatpush.xpose.msra.mxu0 0.0
    %4138 = vmatpush.xpose.msra.mxu0 0.0
    %4139 = vmatpush.xpose.msra.mxu0 0.0
    %4140 = vmatpush.xpose.msra.mxu0 0.0
    %4141 = vmatpush.xpose.msra.mxu0 0.0
    %4142 = vmatpush.xpose.msra.mxu0 0.0
    %4143 = vmatpush.xpose.msra.mxu0 0.0
    %4144 = vmatpush.xpose.msra.mxu0 0.0
    %4145 = vmatpush.xpose.msra.mxu0 %v4128
    %4146 = vmatmul.f32.gmra.mxu0 %v3776
    %v4147 = vpop.f32.mrf.mxu0
    %v4148 = vadd.f32 0.0, %v4147
    %4149 = vdwg.mxu0
    %v4151 = vsel %vm123, %v4126, 0
    %4153 = vmatpush.xpose.msra.mxu0 0.0
    %4154 = vmatpush.xpose.msra.mxu0 0.0
    %4155 = vmatpush.xpose.msra.mxu0 0.0
    %4156 = vmatpush.xpose.msra.mxu0 0.0
    %4157 = vmatpush.xpose.msra.mxu0 0.0
    %4158 = vmatpush.xpose.msra.mxu0 0.0
    %4159 = vmatpush.xpose.msra.mxu0 0.0
    %4160 = vmatpush.xpose.msra.mxu0 0.0
    %4161 = vmatpush.xpose.msra.mxu0 0.0
    %4162 = vmatpush.xpose.msra.mxu0 0.0
    %4163 = vmatpush.xpose.msra.mxu0 0.0
    %4164 = vmatpush.xpose.msra.mxu0 0.0
    %4165 = vmatpush.xpose.msra.mxu0 0.0
    %4166 = vmatpush.xpose.msra.mxu0 0.0
    %4167 = vmatpush.xpose.msra.mxu0 0.0
    %4168 = vmatpush.xpose.msra.mxu0 %v4151
    %4169 = vmatmul.f32.gmra.mxu0 %v3802
    %v4170 = vpop.f32.mrf.mxu0
    %v4171 = vadd.f32 0.0, %v4170
    %4172 = vdwg.mxu0
    %v4173 = vmul.f32 %v4148, 0.35355338
    %v4174 = vmul.f32 %v4171, 0.35355338
    %v4175 = vadd.f32 %v4173, %v96
    %v4176 = vadd.f32 %v4174, %v97
    %v4177 = vmul.f32 %v4175, 1.442695
    %v4178 = vpow.pop %v4177
    %v4179 = vmul.f32 %v4176, 1.442695
    %v4180 = vpow.pop %v4179
    %v4181 = vsel %vm352, %v4178, 0.0
    %4182 = vadd.xlane.f32.xlu0 %v4181
    %v4183 = vpop.xlane.xlu0 %4182
    %v4184 = vsel %vm352, %v4180, 0.0
    %4185 = vadd.xlane.f32.xlu0 %v4184
    %v4186 = vpop.xlane.xlu0 %4185
    %v4187 = vrcp.pop %v4183
    %v4188 = vrcp.pop %v4186
    %v4189 = vmul.f32 %v4178, %v4187
    %v4190 = vmul.f32 %v4180, %v4188
    %v4192 = vsel %vm352, %v4189, 0
    %4194 = vmatpush.msra.mxu0 0.0
    %4195 = vmatpush.msra.mxu0 0.0
    %4196 = vmatpush.msra.mxu0 0.0
    %4197 = vmatpush.msra.mxu0 0.0
    %4198 = vmatpush.msra.mxu0 0.0
    %4199 = vmatpush.msra.mxu0 0.0
    %4200 = vmatpush.msra.mxu0 0.0
    %4201 = vmatpush.msra.mxu0 0.0
    %4202 = vmatpush.msra.mxu0 0.0
    %4203 = vmatpush.msra.mxu0 0.0
    %4204 = vmatpush.msra.mxu0 0.0
    %4205 = vmatpush.msra.mxu0 0.0
    %4206 = vmatpush.msra.mxu0 0.0
    %4207 = vmatpush.msra.mxu0 0.0
    %4208 = vmatpush.msra.mxu0 0.0
    %4209 = vmatpush.msra.mxu0 %v3768
    %4210 = vmatmul.f32.gmra.mxu0 %v4192
    %v4211 = vpop.f32.mrf.mxu0
    %v4212 = vadd.f32 0.0, %v4211
    %4213 = vdwg.mxu0
    %v4215 = vsel %vm352, %v4190, 0
    %4217 = vmatpush.msra.mxu0 0.0
    %4218 = vmatpush.msra.mxu0 0.0
    %4219 = vmatpush.msra.mxu0 0.0
    %4220 = vmatpush.msra.mxu0 0.0
    %4221 = vmatpush.msra.mxu0 0.0
    %4222 = vmatpush.msra.mxu0 0.0
    %4223 = vmatpush.msra.mxu0 0.0
    %4224 = vmatpush.msra.mxu0 0.0
    %4225 = vmatpush.msra.mxu0 0.0
    %4226 = vmatpush.msra.mxu0 0.0
    %4227 = vmatpush.msra.mxu0 0.0
    %4228 = vmatpush.msra.mxu0 0.0
    %4229 = vmatpush.msra.mxu0 0.0
    %4230 = vmatpush.msra.mxu0 0.0
    %4231 = vmatpush.msra.mxu0 0.0
    %4232 = vmatpush.msra.mxu0 %v3771
    %4233 = vmatmul.f32.gmra.mxu0 %v4215
    %v4234 = vpop.f32.mrf.mxu0
    %v4235 = vadd.f32 0.0, %v4234
    %4236 = vdwg.mxu0
    %v4237 = vmul.f32 %v4212, %v117
    %v4238 = vmul.f32 %v4235, %v117
    %v4239 = vadd.f32 %v4123, %v4237
    %v4240 = vadd.f32 %v4124, %v4238
    %s4241 = scalar_lea.vmem %s11, 128
    %v4242 = vld [vmem:[%s4241] sm:$0xff]
    %v4243 = vld [vmem:[%s4241 + $0x8] sm:$0xff]
    %v4244 = vld [vmem:[%s4241 + $0x10] sm:$0xff]
    %v4245 = vld [vmem:[%s4241 + $0x18] sm:$0xff]
    %s4246 = scalar_lea.vmem %s12, 4
    %v4247 = vld [vmem:[%s4246] sm:$0x1]
    %v4249 = vperm.slane %v4247, 0
    %v4252 = vsel %vm123, %v4239, 0
    %v4255 = vsel %vm123, %v4240, 0
    %4257 = vmatpush.msra.mxu0 0.0
    %4258 = vmatpush.msra.mxu0 0.0
    %4259 = vmatpush.msra.mxu0 0.0
    %4260 = vmatpush.msra.mxu0 0.0
    %4261 = vmatpush.msra.mxu0 0.0
    %4262 = vmatpush.msra.mxu0 0.0
    %4263 = vmatpush.msra.mxu0 0.0
    %4264 = vmatpush.msra.mxu0 0.0
    %4265 = vmatpush.msra.mxu0 0.0
    %4266 = vmatpush.msra.mxu0 0.0
    %4267 = vmatpush.msra.mxu0 0.0
    %4268 = vmatpush.msra.mxu0 0.0
    %4269 = vmatpush.msra.mxu0 %v4245
    %4270 = vmatpush.msra.mxu0 %v4244
    %4271 = vmatpush.msra.mxu0 %v4243
    %4272 = vmatpush.msra.mxu0 %v4242
    %4273 = vmatmul.f32.gmra.mxu0 %v4252
    %v4274 = vpop.f32.mrf.mxu0
    %v4275 = vadd.f32 %v4249, %v4274
    %4276 = vmatmul.f32.gmra.mxu0 %v4255
    %v4277 = vpop.f32.mrf.mxu0
    %v4278 = vadd.f32 %v4249, %v4277
    %4279 = vdwg.mxu0
    %v4280 = vadd.f32 %v4275, %v3633
    %v4281 = vadd.f32 %v4278, %v3634
    %s4282 = scalar_lea.vmem %s13, 4
    %v4283 = vld [vmem:[%s4282] sm:$0x1]
    %s4284 = scalar_lea.vmem %s14, 4
    %v4285 = vld [vmem:[%s4284] sm:$0x1]
    %v4286 = vsel %vm123, %v4280, 0.0
    %4287 = vadd.xlane.f32.xlu0 %v4286
    %v4288 = vpop.xlane.xlu0 %4287
    %v4289 = vsel %vm123, %v4281, 0.0
    %4290 = vadd.xlane.f32.xlu0 %v4289
    %v4291 = vpop.xlane.xlu0 %4290
    %v4292 = vmul.f32 %v4288, %v136
    %v4293 = vmul.f32 %v4291, %v136
    %v4294 = vmul.f32 %v4280, %v4280
    %v4295 = vmul.f32 %v4281, %v4281
    %v4296 = vsel %vm123, %v4294, 0.0
    %4297 = vadd.xlane.f32.xlu0 %v4296
    %v4298 = vpop.xlane.xlu0 %4297
    %v4299 = vsel %vm123, %v4295, 0.0
    %4300 = vadd.xlane.f32.xlu0 %v4299
    %v4301 = vpop.xlane.xlu0 %4300
    %v4302 = vmul.f32 %v4298, %v136
    %v4303 = vmul.f32 %v4301, %v136
    %v4304 = vmul.f32 %v4292, %v4292
    %v4305 = vmul.f32 %v4293, %v4293
    %v4306 = vsub.f32 %v4302, %v4304
    %v4307 = vsub.f32 %v4303, %v4305
    %v4308 = vsub.f32 %v4280, %v4292
    %v4309 = vsub.f32 %v4281, %v4293
    %v4310 = vadd.f32 %v4306, 1e-12
    %v4311 = vadd.f32 %v4307, 1e-12
    %v4312 = vrsqrt.pop %v4310
    %v4313 = vmul.f32 %v4312, %v4310
    %v4314 = vmul.f32 %v4313, %v4312
    %v4315 = vmul.f32 0.5, %v4314
    %v4316 = vsub.f32 1.5, %v4315
    %v4317 = vmul.f32 %v4312, %v4316
    %vm4318 = vweird.f32 %v4310
    %vm4319 = vweird.f32 %v4312
    %vm4320 = vmor %vm4318, %vm4319
    %v4321 = vsel %vm4320, %v4312, %v4317
    %v4322 = vrsqrt.pop %v4311
    %v4323 = vmul.f32 %v4322, %v4311
    %v4324 = vmul.f32 %v4323, %v4322
    %v4325 = vmul.f32 0.5, %v4324
    %v4326 = vsub.f32 1.5, %v4325
    %v4327 = vmul.f32 %v4322, %v4326
    %vm4328 = vweird.f32 %v4311
    %vm4329 = vweird.f32 %v4322
    %vm4330 = vmor %vm4328, %vm4329
    %v4331 = vsel %vm4330, %v4322, %v4327
    %v4332 = vmul.f32 %v4308, %v4321
    %v4333 = vmul.f32 %v4309, %v4331
    %v4335 = vperm.slane %v4283, 0
    %v4337 = vmul.f32 %v4332, %v4335
    %v4338 = vmul.f32 %v4333, %v4335
    %v4340 = vperm.slane %v4285, 0
    %v4342 = vadd.f32 %v4337, %v4340
    %v4343 = vadd.f32 %v4338, %v4340
    %s4344 = scalar_lea.vmem [#allocation2], 128
    %v4345 = vld [vmem:[%s4344] sm:$0xff]
    %v4346 = vld [vmem:[%s4344 + $0x8] sm:$0xff]
    %v4347 = vld [vmem:[%s4344 + $0x10] sm:$0xff]
    %v4348 = vld [vmem:[%s4344 + $0x18] sm:$0xff]
    %s4349 = scalar_lea.vmem %s16, 4
    %v4350 = vld [vmem:[%s4349] sm:$0x1]
    %v4352 = vperm.slane %v4350, 0
    %v4355 = vsel %vm123, %v4342, 0
    %v4358 = vsel %vm123, %v4343, 0
    %4360 = vmatpush.msra.mxu0 0.0
    %4361 = vmatpush.msra.mxu0 0.0
    %4362 = vmatpush.msra.mxu0 0.0
    %4363 = vmatpush.msra.mxu0 0.0
    %4364 = vmatpush.msra.mxu0 0.0
    %4365 = vmatpush.msra.mxu0 0.0
    %4366 = vmatpush.msra.mxu0 0.0
    %4367 = vmatpush.msra.mxu0 0.0
    %4368 = vmatpush.msra.mxu0 0.0
    %4369 = vmatpush.msra.mxu0 0.0
    %4370 = vmatpush.msra.mxu0 0.0
    %4371 = vmatpush.msra.mxu0 0.0
    %4372 = vmatpush.msra.mxu0 %v4348
    %4373 = vmatpush.msra.mxu0 %v4347
    %4374 = vmatpush.msra.mxu0 %v4346
    %4375 = vmatpush.msra.mxu0 %v4345
    %4376 = vmatmul.f32.gmra.mxu0 %v4355
    %v4377 = vpop.f32.mrf.mxu0
    %v4378 = vadd.f32 %v4352, %v4377
    %4379 = vmatmul.f32.gmra.mxu0 %v4358
    %v4380 = vpop.f32.mrf.mxu0
    %v4381 = vadd.f32 %v4352, %v4380
    %4382 = vdwg.mxu0
    %v4383 = vmul.f32 %v4378, %v4378
    %v4384 = vmul.f32 %v4381, %v4381
    %v4385 = vmul.f32 %v4378, %v4383
    %v4386 = vmul.f32 %v4381, %v4384
    %v4387 = vmul.f32 %v4385, 0.044715
    %v4388 = vmul.f32 %v4386, 0.044715
    %v4389 = vadd.f32 %v4378, %v4387
    %v4390 = vadd.f32 %v4381, %v4388
    %v4391 = vmul.f32 %v4389, 0.7978846
    %v4392 = vmul.f32 %v4390, 0.7978846
    %v4393 = vtanh.pop %v4391
    %v4394 = vtanh.pop %v4392
    %v4395 = vadd.f32 %v4393, 1.0
    %v4396 = vadd.f32 %v4394, 1.0
    %v4397 = vmul.f32 %v4395, 0.5
    %v4398 = vmul.f32 %v4396, 0.5
    %v4399 = vmul.f32 %v4378, %v4397
    %v4400 = vmul.f32 %v4381, %v4398
    %s4401 = scalar_lea.vmem %s17, 256
    %v4402 = vld [vmem:[%s4401] sm:$0xff]
    %v4403 = vld [vmem:[%s4401 + $0x8] sm:$0xff]
    %v4404 = vld [vmem:[%s4401 + $0x10] sm:$0xff]
    %v4405 = vld [vmem:[%s4401 + $0x18] sm:$0xff]
    %v4406 = vld [vmem:[%s4401 + $0x20] sm:$0xff]
    %v4407 = vld [vmem:[%s4401 + $0x28] sm:$0xff]
    %v4408 = vld [vmem:[%s4401 + $0x30] sm:$0xff]
    %v4409 = vld [vmem:[%s4401 + $0x38] sm:$0xff]
    %s4410 = scalar_lea.vmem %s18, 4
    %v4411 = vld [vmem:[%s4410] sm:$0x1]
    %v4413 = vperm.slane %v4411, 0
    %v4416 = vsel %vm925, %v4399, 0
    %v4419 = vsel %vm925, %v4400, 0
    %4421 = vmatpush.msra.mxu0 0.0
    %4422 = vmatpush.msra.mxu0 0.0
    %4423 = vmatpush.msra.mxu0 0.0
    %4424 = vmatpush.msra.mxu0 0.0
    %4425 = vmatpush.msra.mxu0 0.0
    %4426 = vmatpush.msra.mxu0 0.0
    %4427 = vmatpush.msra.mxu0 0.0
    %4428 = vmatpush.msra.mxu0 0.0
    %4429 = vmatpush.msra.mxu0 %v4409
    %4430 = vmatpush.msra.mxu0 %v4408
    %4431 = vmatpush.msra.mxu0 %v4407
    %4432 = vmatpush.msra.mxu0 %v4406
    %4433 = vmatpush.msra.mxu0 %v4405
    %4434 = vmatpush.msra.mxu0 %v4404
    %4435 = vmatpush.msra.mxu0 %v4403
    %4436 = vmatpush.msra.mxu0 %v4402
    %4437 = vmatmul.f32.gmra.mxu0 %v4416
    %v4438 = vpop.f32.mrf.mxu0
    %v4439 = vadd.f32 %v4413, %v4438
    %4440 = vmatmul.f32.gmra.mxu0 %v4419
    %v4441 = vpop.f32.mrf.mxu0
    %v4442 = vadd.f32 %v4413, %v4441
    %4443 = vdwg.mxu0
    %v4444 = vadd.f32 %v4439, %v4342
    %v4445 = vadd.f32 %v4442, %v4343
    %s4446 = scalar_lea.vmem %s19, 4
    %v4447 = vld [vmem:[%s4446] sm:$0x1]
    %s4448 = scalar_lea.vmem %s20, 4
    %v4449 = vld [vmem:[%s4448] sm:$0x1]
    %v4450 = vsel %vm123, %v4444, 0.0
    %4451 = vadd.xlane.f32.xlu0 %v4450
    %v4452 = vpop.xlane.xlu0 %4451
    %v4453 = vsel %vm123, %v4445, 0.0
    %4454 = vadd.xlane.f32.xlu0 %v4453
    %v4455 = vpop.xlane.xlu0 %4454
    %v4456 = vmul.f32 %v4452, %v136
    %v4457 = vmul.f32 %v4455, %v136
    %v4458 = vmul.f32 %v4444, %v4444
    %v4459 = vmul.f32 %v4445, %v4445
    %v4460 = vsel %vm123, %v4458, 0.0
    %4461 = vadd.xlane.f32.xlu0 %v4460
    %v4462 = vpop.xlane.xlu0 %4461
    %v4463 = vsel %vm123, %v4459, 0.0
    %4464 = vadd.xlane.f32.xlu0 %v4463
    %v4465 = vpop.xlane.xlu0 %4464
    %v4466 = vmul.f32 %v4462, %v136
    %v4467 = vmul.f32 %v4465, %v136
    %v4468 = vmul.f32 %v4456, %v4456
    %v4469 = vmul.f32 %v4457, %v4457
    %v4470 = vsub.f32 %v4466, %v4468
    %v4471 = vsub.f32 %v4467, %v4469
    %v4472 = vsub.f32 %v4444, %v4456
    %v4473 = vsub.f32 %v4445, %v4457
    %v4474 = vadd.f32 %v4470, 1e-12
    %v4475 = vadd.f32 %v4471, 1e-12
    %v4476 = vrsqrt.pop %v4474
    %v4477 = vmul.f32 %v4476, %v4474
    %v4478 = vmul.f32 %v4477, %v4476
    %v4479 = vmul.f32 0.5, %v4478
    %v4480 = vsub.f32 1.5, %v4479
    %v4481 = vmul.f32 %v4476, %v4480
    %vm4482 = vweird.f32 %v4474
    %vm4483 = vweird.f32 %v4476
    %vm4484 = vmor %vm4482, %vm4483
    %v4485 = vsel %vm4484, %v4476, %v4481
    %v4486 = vrsqrt.pop %v4475
    %v4487 = vmul.f32 %v4486, %v4475
    %v4488 = vmul.f32 %v4487, %v4486
    %v4489 = vmul.f32 0.5, %v4488
    %v4490 = vsub.f32 1.5, %v4489
    %v4491 = vmul.f32 %v4486, %v4490
    %vm4492 = vweird.f32 %v4475
    %vm4493 = vweird.f32 %v4486
    %vm4494 = vmor %vm4492, %vm4493
    %v4495 = vsel %vm4494, %v4486, %v4491
    %v4496 = vmul.f32 %v4472, %v4485
    %v4497 = vmul.f32 %v4473, %v4495
    %v4499 = vperm.slane %v4447, 0
    %v4501 = vmul.f32 %v4496, %v4499
    %v4502 = vmul.f32 %v4497, %v4499
    %v4504 = vperm.slane %v4449, 0
    %v4506 = vadd.f32 %v4501, %v4504
    %v4507 = vadd.f32 %v4502, %v4504
    %s4508 = scalar_lea.vmem %s24, 80
    %4509 = vst.msk [vmem:[%s4508] sm:$0xff] %vm123, %v4506
    %4510 = vst.msk [vmem:[%s4508 + $0x8] sm:$0xff] %vm123, %v4507
    %s4511 = scalar_lea.vmem %s21, 32
    %v4512 = vld [vmem:[%s4511] sm:$0xff]
    %v4513 = vld [vmem:[%s4511 + $0x8] sm:$0xff]
    %v4514 = vld [vmem:[%s4511 + $0x10] sm:$0xff]
    %v4515 = vld [vmem:[%s4511 + $0x18] sm:$0xff]
    %v4518 = vrot.slane %v4507, 7
    %v4519 = vsel %vm1876, %v4518, %v4506
    %v4520 = vsel %vm123, %v4519, 0
    %4522 = vmatpush.msra.mxu0 0.0
    %4523 = vmatpush.msra.mxu0 0.0
    %4524 = vmatpush.msra.mxu0 0.0
    %4525 = vmatpush.msra.mxu0 0.0
    %4526 = vmatpush.msra.mxu0 0.0
    %4527 = vmatpush.msra.mxu0 0.0
    %4528 = vmatpush.msra.mxu0 0.0
    %4529 = vmatpush.msra.mxu0 0.0
    %4530 = vmatpush.msra.mxu0 0.0
    %4531 = vmatpush.msra.mxu0 0.0
    %4532 = vmatpush.msra.mxu0 0.0
    %4533 = vmatpush.msra.mxu0 0.0
    %4534 = vmatpush.msra.mxu0 %v4515
    %4535 = vmatpush.msra.mxu0 %v4514
    %4536 = vmatpush.msra.mxu0 %v4513
    %4537 = vmatpush.msra.mxu0 %v4512
    %4538 = vmatmul.f32.gmra.mxu0 %v4520
    %v4539 = vpop.f32.mrf.mxu0
    %v4540 = vadd.f32 0.0, %v4539
    %4541 = vdwg.mxu0
    %v4542 = vadd.f32 %v3669, %v4540
    %s4543 = scalar_lea.vmem %s5, 160
    %v4544 = vld [vmem:[%s4543] sm:$0xff]
    %v4545 = vld [vmem:[%s4543 + $0x8] sm:$0xff]
    %v4546 = vld [vmem:[%s4543 + $0x10] sm:$0xff]
    %v4547 = vld [vmem:[%s4543 + $0x18] sm:$0xff]
    %s4548 = scalar_lea.vmem %s6, 5
    %v4549 = vld [vmem:[%s4548] sm:$0x1]
    %v4551 = vperm.slane %v4549, 0
    %v4553 = vsel %vm123, %v4506, 0
    %v4555 = vsel %vm123, %v4507, 0
    %4557 = vmatpush.msra.mxu0 0.0
    %4558 = vmatpush.msra.mxu0 0.0
    %4559 = vmatpush.msra.mxu0 0.0
    %4560 = vmatpush.msra.mxu0 0.0
    %4561 = vmatpush.msra.mxu0 0.0
    %4562 = vmatpush.msra.mxu0 0.0
    %4563 = vmatpush.msra.mxu0 0.0
    %4564 = vmatpush.msra.mxu0 0.0
    %4565 = vmatpush.msra.mxu0 0.0
    %4566 = vmatpush.msra.mxu0 0.0
    %4567 = vmatpush.msra.mxu0 0.0
    %4568 = vmatpush.msra.mxu0 0.0
    %4569 = vmatpush.msra.mxu0 %v4547
    %4570 = vmatpush.msra.mxu0 %v4546
    %4571 = vmatpush.msra.mxu0 %v4545
    %4572 = vmatpush.msra.mxu0 %v4544
    %4573 = vmatmul.f32.gmra.mxu0 %v4553
    %v4574 = vpop.f32.mrf.mxu0
    %v4575 = vadd.f32 %v4551, %v4574
    %4576 = vmatmul.f32.gmra.mxu0 %v4555
    %v4577 = vpop.f32.mrf.mxu0
    %v4578 = vadd.f32 %v4551, %v4577
    %4579 = vdwg.mxu0
    %s4580 = scalar_lea.vmem %s7, 160
    %v4581 = vld [vmem:[%s4580] sm:$0xff]
    %v4582 = vld [vmem:[%s4580 + $0x8] sm:$0xff]
    %v4583 = vld [vmem:[%s4580 + $0x10] sm:$0xff]
    %v4584 = vld [vmem:[%s4580 + $0x18] sm:$0xff]
    %s4585 = scalar_lea.vmem %s8, 5
    %v4586 = vld [vmem:[%s4585] sm:$0x1]
    %v4588 = vperm.slane %v4586, 0
    %4590 = vmatpush.msra.mxu0 0.0
    %4591 = vmatpush.msra.mxu0 0.0
    %4592 = vmatpush.msra.mxu0 0.0
    %4593 = vmatpush.msra.mxu0 0.0
    %4594 = vmatpush.msra.mxu0 0.0
    %4595 = vmatpush.msra.mxu0 0.0
    %4596 = vmatpush.msra.mxu0 0.0
    %4597 = vmatpush.msra.mxu0 0.0
    %4598 = vmatpush.msra.mxu0 0.0
    %4599 = vmatpush.msra.mxu0 0.0
    %4600 = vmatpush.msra.mxu0 0.0
    %4601 = vmatpush.msra.mxu0 0.0
    %4602 = vmatpush.msra.mxu0 %v4584
    %4603 = vmatpush.msra.mxu0 %v4583
    %4604 = vmatpush.msra.mxu0 %v4582
    %4605 = vmatpush.msra.mxu0 %v4581
    %4606 = vmatmul.f32.gmra.mxu0 %v4553
    %v4607 = vpop.f32.mrf.mxu0
    %v4608 = vadd.f32 %v4588, %v4607
    %4609 = vmatmul.f32.gmra.mxu0 %v4555
    %v4610 = vpop.f32.mrf.mxu0
    %v4611 = vadd.f32 %v4588, %v4610
    %4612 = vdwg.mxu0
    %s4613 = scalar_lea.vmem %s9, 160
    %v4614 = vld [vmem:[%s4613] sm:$0xff]
    %v4615 = vld [vmem:[%s4613 + $0x8] sm:$0xff]
    %v4616 = vld [vmem:[%s4613 + $0x10] sm:$0xff]
    %v4617 = vld [vmem:[%s4613 + $0x18] sm:$0xff]
    %s4618 = scalar_lea.vmem %s10, 5
    %v4619 = vld [vmem:[%s4618] sm:$0x1]
    %v4621 = vperm.slane %v4619, 0
    %4623 = vmatpush.msra.mxu0 0.0
    %4624 = vmatpush.msra.mxu0 0.0
    %4625 = vmatpush.msra.mxu0 0.0
    %4626 = vmatpush.msra.mxu0 0.0
    %4627 = vmatpush.msra.mxu0 0.0
    %4628 = vmatpush.msra.mxu0 0.0
    %4629 = vmatpush.msra.mxu0 0.0
    %4630 = vmatpush.msra.mxu0 0.0
    %4631 = vmatpush.msra.mxu0 0.0
    %4632 = vmatpush.msra.mxu0 0.0
    %4633 = vmatpush.msra.mxu0 0.0
    %4634 = vmatpush.msra.mxu0 0.0
    %4635 = vmatpush.msra.mxu0 %v4617
    %4636 = vmatpush.msra.mxu0 %v4616
    %4637 = vmatpush.msra.mxu0 %v4615
    %4638 = vmatpush.msra.mxu0 %v4614
    %4639 = vmatmul.f32.gmra.mxu0 %v4553
    %v4640 = vpop.f32.mrf.mxu0
    %v4641 = vadd.f32 %v4621, %v4640
    %4642 = vmatmul.f32.gmra.mxu0 %v4555
    %v4643 = vpop.f32.mrf.mxu0
    %v4644 = vadd.f32 %v4621, %v4643
    %4645 = vdwg.mxu0
    %v4646 = vmul.f32 %v4608, %v102
    %v4647 = vmul.f32 %v4611, %v102
    %v4649 = vsel %vm123, %v4575, 0
    %v4652 = vsel %vm123, %v4646, 0
    %4654 = vmatpush.xpose.msra.mxu0 0.0
    %4655 = vmatpush.xpose.msra.mxu0 0.0
    %4656 = vmatpush.xpose.msra.mxu0 0.0
    %4657 = vmatpush.xpose.msra.mxu0 0.0
    %4658 = vmatpush.xpose.msra.mxu0 0.0
    %4659 = vmatpush.xpose.msra.mxu0 0.0
    %4660 = vmatpush.xpose.msra.mxu0 0.0
    %4661 = vmatpush.xpose.msra.mxu0 0.0
    %4662 = vmatpush.xpose.msra.mxu0 0.0
    %4663 = vmatpush.xpose.msra.mxu0 0.0
    %4664 = vmatpush.xpose.msra.mxu0 0.0
    %4665 = vmatpush.xpose.msra.mxu0 0.0
    %4666 = vmatpush.xpose.msra.mxu0 0.0
    %4667 = vmatpush.xpose.msra.mxu0 0.0
    %4668 = vmatpush.xpose.msra.mxu0 0.0
    %4669 = vmatpush.xpose.msra.mxu0 %v4652
    %4670 = vmatmul.f32.gmra.mxu0 %v4649
    %v4671 = vpop.f32.mrf.mxu0
    %v4672 = vadd.f32 0.0, %v4671
    %4673 = vdwg.mxu0
    %v4675 = vsel %vm123, %v4578, 0
    %v4678 = vsel %vm123, %v4647, 0
    %4680 = vmatpush.xpose.msra.mxu0 0.0
    %4681 = vmatpush.xpose.msra.mxu0 0.0
    %4682 = vmatpush.xpose.msra.mxu0 0.0
    %4683 = vmatpush.xpose.msra.mxu0 0.0
    %4684 = vmatpush.xpose.msra.mxu0 0.0
    %4685 = vmatpush.xpose.msra.mxu0 0.0
    %4686 = vmatpush.xpose.msra.mxu0 0.0
    %4687 = vmatpush.xpose.msra.mxu0 0.0
    %4688 = vmatpush.xpose.msra.mxu0 0.0
    %4689 = vmatpush.xpose.msra.mxu0 0.0
    %4690 = vmatpush.xpose.msra.mxu0 0.0
    %4691 = vmatpush.xpose.msra.mxu0 0.0
    %4692 = vmatpush.xpose.msra.mxu0 0.0
    %4693 = vmatpush.xpose.msra.mxu0 0.0
    %4694 = vmatpush.xpose.msra.mxu0 0.0
    %4695 = vmatpush.xpose.msra.mxu0 %v4678
    %4696 = vmatmul.f32.gmra.mxu0 %v4675
    %v4697 = vpop.f32.mrf.mxu0
    %v4698 = vadd.f32 0.0, %v4697
    %4699 = vdwg.mxu0
    %v4700 = vmul.f32 %v4672, 0.35355338
    %v4701 = vmul.f32 %v4698, 0.35355338
    %v4702 = vadd.f32 %v4700, %v96
    %v4703 = vadd.f32 %v4701, %v97
    %v4704 = vmul.f32 %v4702, 1.442695
    %v4705 = vpow.pop %v4704
    %v4706 = vmul.f32 %v4703, 1.442695
    %v4707 = vpow.pop %v4706
    %v4708 = vsel %vm352, %v4705, 0.0
    %4709 = vadd.xlane.f32.xlu0 %v4708
    %v4710 = vpop.xlane.xlu0 %4709
    %v4711 = vsel %vm352, %v4707, 0.0
    %4712 = vadd.xlane.f32.xlu0 %v4711
    %v4713 = vpop.xlane.xlu0 %4712
    %v4714 = vrcp.pop %v4710
    %v4715 = vrcp.pop %v4713
    %v4716 = vmul.f32 %v4705, %v4714
    %v4717 = vmul.f32 %v4707, %v4715
    %v4719 = vsel %vm352, %v4716, 0
    %4721 = vmatpush.msra.mxu0 0.0
    %4722 = vmatpush.msra.mxu0 0.0
    %4723 = vmatpush.msra.mxu0 0.0
    %4724 = vmatpush.msra.mxu0 0.0
    %4725 = vmatpush.msra.mxu0 0.0
    %4726 = vmatpush.msra.mxu0 0.0
    %4727 = vmatpush.msra.mxu0 0.0
    %4728 = vmatpush.msra.mxu0 0.0
    %4729 = vmatpush.msra.mxu0 0.0
    %4730 = vmatpush.msra.mxu0 0.0
    %4731 = vmatpush.msra.mxu0 0.0
    %4732 = vmatpush.msra.mxu0 0.0
    %4733 = vmatpush.msra.mxu0 0.0
    %4734 = vmatpush.msra.mxu0 0.0
    %4735 = vmatpush.msra.mxu0 0.0
    %4736 = vmatpush.msra.mxu0 %v4641
    %4737 = vmatmul.f32.gmra.mxu0 %v4719
    %v4738 = vpop.f32.mrf.mxu0
    %v4739 = vadd.f32 0.0, %v4738
    %4740 = vdwg.mxu0
    %v4742 = vsel %vm352, %v4717, 0
    %4744 = vmatpush.msra.mxu0 0.0
    %4745 = vmatpush.msra.mxu0 0.0
    %4746 = vmatpush.msra.mxu0 0.0
    %4747 = vmatpush.msra.mxu0 0.0
    %4748 = vmatpush.msra.mxu0 0.0
    %4749 = vmatpush.msra.mxu0 0.0
    %4750 = vmatpush.msra.mxu0 0.0
    %4751 = vmatpush.msra.mxu0 0.0
    %4752 = vmatpush.msra.mxu0 0.0
    %4753 = vmatpush.msra.mxu0 0.0
    %4754 = vmatpush.msra.mxu0 0.0
    %4755 = vmatpush.msra.mxu0 0.0
    %4756 = vmatpush.msra.mxu0 0.0
    %4757 = vmatpush.msra.mxu0 0.0
    %4758 = vmatpush.msra.mxu0 0.0
    %4759 = vmatpush.msra.mxu0 %v4644
    %4760 = vmatmul.f32.gmra.mxu0 %v4742
    %v4761 = vpop.f32.mrf.mxu0
    %v4762 = vadd.f32 0.0, %v4761
    %4763 = vdwg.mxu0
    %v4764 = vmul.f32 %v4739, %v102
    %v4765 = vmul.f32 %v4762, %v102
    %v4766 = vmul.f32 %v4608, %v107
    %v4767 = vmul.f32 %v4611, %v107
    %v4769 = vsel %vm123, %v4766, 0
    %4771 = vmatpush.xpose.msra.mxu0 0.0
    %4772 = vmatpush.xpose.msra.mxu0 0.0
    %4773 = vmatpush.xpose.msra.mxu0 0.0
    %4774 = vmatpush.xpose.msra.mxu0 0.0
    %4775 = vmatpush.xpose.msra.mxu0 0.0
    %4776 = vmatpush.xpose.msra.mxu0 0.0
    %4777 = vmatpush.xpose.msra.mxu0 0.0
    %4778 = vmatpush.xpose.msra.mxu0 0.0
    %4779 = vmatpush.xpose.msra.mxu0 0.0
    %4780 = vmatpush.xpose.msra.mxu0 0.0
    %4781 = vmatpush.xpose.msra.mxu0 0.0
    %4782 = vmatpush.xpose.msra.mxu0 0.0
    %4783 = vmatpush.xpose.msra.mxu0 0.0
    %4784 = vmatpush.xpose.msra.mxu0 0.0
    %4785 = vmatpush.xpose.msra.mxu0 0.0
    %4786 = vmatpush.xpose.msra.mxu0 %v4769
    %4787 = vmatmul.f32.gmra.mxu0 %v4649
    %v4788 = vpop.f32.mrf.mxu0
    %v4789 = vadd.f32 0.0, %v4788
    %4790 = vdwg.mxu0
    %v4792 = vsel %vm123, %v4767, 0
    %4794 = vmatpush.xpose.msra.mxu0 0.0
    %4795 = vmatpush.xpose.msra.mxu0 0.0
    %4796 = vmatpush.xpose.msra.mxu0 0.0
    %4797 = vmatpush.xpose.msra.mxu0 0.0
    %4798 = vmatpush.xpose.msra.mxu0 0.0
    %4799 = vmatpush.xpose.msra.mxu0 0.0
    %4800 = vmatpush.xpose.msra.mxu0 0.0
    %4801 = vmatpush.xpose.msra.mxu0 0.0
    %4802 = vmatpush.xpose.msra.mxu0 0.0
    %4803 = vmatpush.xpose.msra.mxu0 0.0
    %4804 = vmatpush.xpose.msra.mxu0 0.0
    %4805 = vmatpush.xpose.msra.mxu0 0.0
    %4806 = vmatpush.xpose.msra.mxu0 0.0
    %4807 = vmatpush.xpose.msra.mxu0 0.0
    %4808 = vmatpush.xpose.msra.mxu0 0.0
    %4809 = vmatpush.xpose.msra.mxu0 %v4792
    %4810 = vmatmul.f32.gmra.mxu0 %v4675
    %v4811 = vpop.f32.mrf.mxu0
    %v4812 = vadd.f32 0.0, %v4811
    %4813 = vdwg.mxu0
    %v4814 = vmul.f32 %v4789, 0.35355338
    %v4815 = vmul.f32 %v4812, 0.35355338
    %v4816 = vadd.f32 %v4814, %v96
    %v4817 = vadd.f32 %v4815, %v97
    %v4818 = vmul.f32 %v4816, 1.442695
    %v4819 = vpow.pop %v4818
    %v4820 = vmul.f32 %v4817, 1.442695
    %v4821 = vpow.pop %v4820
    %v4822 = vsel %vm352, %v4819, 0.0
    %4823 = vadd.xlane.f32.xlu0 %v4822
    %v4824 = vpop.xlane.xlu0 %4823
    %v4825 = vsel %vm352, %v4821, 0.0
    %4826 = vadd.xlane.f32.xlu0 %v4825
    %v4827 = vpop.xlane.xlu0 %4826
    %v4828 = vrcp.pop %v4824
    %v4829 = vrcp.pop %v4827
    %v4830 = vmul.f32 %v4819, %v4828
    %v4831 = vmul.f32 %v4821, %v4829
    %v4833 = vsel %vm352, %v4830, 0
    %4835 = vmatpush.msra.mxu0 0.0
    %4836 = vmatpush.msra.mxu0 0.0
    %4837 = vmatpush.msra.mxu0 0.0
    %4838 = vmatpush.msra.mxu0 0.0
    %4839 = vmatpush.msra.mxu0 0.0
    %4840 = vmatpush.msra.mxu0 0.0
    %4841 = vmatpush.msra.mxu0 0.0
    %4842 = vmatpush.msra.mxu0 0.0
    %4843 = vmatpush.msra.mxu0 0.0
    %4844 = vmatpush.msra.mxu0 0.0
    %4845 = vmatpush.msra.mxu0 0.0
    %4846 = vmatpush.msra.mxu0 0.0
    %4847 = vmatpush.msra.mxu0 0.0
    %4848 = vmatpush.msra.mxu0 0.0
    %4849 = vmatpush.msra.mxu0 0.0
    %4850 = vmatpush.msra.mxu0 %v4641
    %4851 = vmatmul.f32.gmra.mxu0 %v4833
    %v4852 = vpop.f32.mrf.mxu0
    %v4853 = vadd.f32 0.0, %v4852
    %4854 = vdwg.mxu0
    %v4856 = vsel %vm352, %v4831, 0
    %4858 = vmatpush.msra.mxu0 0.0
    %4859 = vmatpush.msra.mxu0 0.0
    %4860 = vmatpush.msra.mxu0 0.0
    %4861 = vmatpush.msra.mxu0 0.0
    %4862 = vmatpush.msra.mxu0 0.0
    %4863 = vmatpush.msra.mxu0 0.0
    %4864 = vmatpush.msra.mxu0 0.0
    %4865 = vmatpush.msra.mxu0 0.0
    %4866 = vmatpush.msra.mxu0 0.0
    %4867 = vmatpush.msra.mxu0 0.0
    %4868 = vmatpush.msra.mxu0 0.0
    %4869 = vmatpush.msra.mxu0 0.0
    %4870 = vmatpush.msra.mxu0 0.0
    %4871 = vmatpush.msra.mxu0 0.0
    %4872 = vmatpush.msra.mxu0 0.0
    %4873 = vmatpush.msra.mxu0 %v4644
    %4874 = vmatmul.f32.gmra.mxu0 %v4856
    %v4875 = vpop.f32.mrf.mxu0
    %v4876 = vadd.f32 0.0, %v4875
    %4877 = vdwg.mxu0
    %v4878 = vmul.f32 %v4853, %v107
    %v4879 = vmul.f32 %v4876, %v107
    %v4880 = vadd.f32 %v4764, %v4878
    %v4881 = vadd.f32 %v4765, %v4879
    %v4882 = vmul.f32 %v4608, %v112
    %v4883 = vmul.f32 %v4611, %v112
    %v4885 = vsel %vm123, %v4882, 0
    %4887 = vmatpush.xpose.msra.mxu0 0.0
    %4888 = vmatpush.xpose.msra.mxu0 0.0
    %4889 = vmatpush.xpose.msra.mxu0 0.0
    %4890 = vmatpush.xpose.msra.mxu0 0.0
    %4891 = vmatpush.xpose.msra.mxu0 0.0
    %4892 = vmatpush.xpose.msra.mxu0 0.0
    %4893 = vmatpush.xpose.msra.mxu0 0.0
    %4894 = vmatpush.xpose.msra.mxu0 0.0
    %4895 = vmatpush.xpose.msra.mxu0 0.0
    %4896 = vmatpush.xpose.msra.mxu0 0.0
    %4897 = vmatpush.xpose.msra.mxu0 0.0
    %4898 = vmatpush.xpose.msra.mxu0 0.0
    %4899 = vmatpush.xpose.msra.mxu0 0.0
    %4900 = vmatpush.xpose.msra.mxu0 0.0
    %4901 = vmatpush.xpose.msra.mxu0 0.0
    %4902 = vmatpush.xpose.msra.mxu0 %v4885
    %4903 = vmatmul.f32.gmra.mxu0 %v4649
    %v4904 = vpop.f32.mrf.mxu0
    %v4905 = vadd.f32 0.0, %v4904
    %4906 = vdwg.mxu0
    %v4908 = vsel %vm123, %v4883, 0
    %4910 = vmatpush.xpose.msra.mxu0 0.0
    %4911 = vmatpush.xpose.msra.mxu0 0.0
    %4912 = vmatpush.xpose.msra.mxu0 0.0
    %4913 = vmatpush.xpose.msra.mxu0 0.0
    %4914 = vmatpush.xpose.msra.mxu0 0.0
    %4915 = vmatpush.xpose.msra.mxu0 0.0
    %4916 = vmatpush.xpose.msra.mxu0 0.0
    %4917 = vmatpush.xpose.msra.mxu0 0.0
    %4918 = vmatpush.xpose.msra.mxu0 0.0
    %4919 = vmatpush.xpose.msra.mxu0 0.0
    %4920 = vmatpush.xpose.msra.mxu0 0.0
    %4921 = vmatpush.xpose.msra.mxu0 0.0
    %4922 = vmatpush.xpose.msra.mxu0 0.0
    %4923 = vmatpush.xpose.msra.mxu0 0.0
    %4924 = vmatpush.xpose.msra.mxu0 0.0
    %4925 = vmatpush.xpose.msra.mxu0 %v4908
    %4926 = vmatmul.f32.gmra.mxu0 %v4675
    %v4927 = vpop.f32.mrf.mxu0
    %v4928 = vadd.f32 0.0, %v4927
    %4929 = vdwg.mxu0
    %v4930 = vmul.f32 %v4905, 0.35355338
    %v4931 = vmul.f32 %v4928, 0.35355338
    %v4932 = vadd.f32 %v4930, %v96
    %v4933 = vadd.f32 %v4931, %v97
    %v4934 = vmul.f32 %v4932, 1.442695
    %v4935 = vpow.pop %v4934
    %v4936 = vmul.f32 %v4933, 1.442695
    %v4937 = vpow.pop %v4936
    %v4938 = vsel %vm352, %v4935, 0.0
    %4939 = vadd.xlane.f32.xlu0 %v4938
    %v4940 = vpop.xlane.xlu0 %4939
    %v4941 = vsel %vm352, %v4937, 0.0
    %4942 = vadd.xlane.f32.xlu0 %v4941
    %v4943 = vpop.xlane.xlu0 %4942
    %v4944 = vrcp.pop %v4940
    %v4945 = vrcp.pop %v4943
    %v4946 = vmul.f32 %v4935, %v4944
    %v4947 = vmul.f32 %v4937, %v4945
    %v4949 = vsel %vm352, %v4946, 0
    %4951 = vmatpush.msra.mxu0 0.0
    %4952 = vmatpush.msra.mxu0 0.0
    %4953 = vmatpush.msra.mxu0 0.0
    %4954 = vmatpush.msra.mxu0 0.0
    %4955 = vmatpush.msra.mxu0 0.0
    %4956 = vmatpush.msra.mxu0 0.0
    %4957 = vmatpush.msra.mxu0 0.0
    %4958 = vmatpush.msra.mxu0 0.0
    %4959 = vmatpush.msra.mxu0 0.0
    %4960 = vmatpush.msra.mxu0 0.0
    %4961 = vmatpush.msra.mxu0 0.0
    %4962 = vmatpush.msra.mxu0 0.0
    %4963 = vmatpush.msra.mxu0 0.0
    %4964 = vmatpush.msra.mxu0 0.0
    %4965 = vmatpush.msra.mxu0 0.0
    %4966 = vmatpush.msra.mxu0 %v4641
    %4967 = vmatmul.f32.gmra.mxu0 %v4949
    %v4968 = vpop.f32.mrf.mxu0
    %v4969 = vadd.f32 0.0, %v4968
    %4970 = vdwg.mxu0
    %v4972 = vsel %vm352, %v4947, 0
    %4974 = vmatpush.msra.mxu0 0.0
    %4975 = vmatpush.msra.mxu0 0.0
    %4976 = vmatpush.msra.mxu0 0.0
    %4977 = vmatpush.msra.mxu0 0.0
    %4978 = vmatpush.msra.mxu0 0.0
    %4979 = vmatpush.msra.mxu0 0.0
    %4980 = vmatpush.msra.mxu0 0.0
    %4981 = vmatpush.msra.mxu0 0.0
    %4982 = vmatpush.msra.mxu0 0.0
    %4983 = vmatpush.msra.mxu0 0.0
    %4984 = vmatpush.msra.mxu0 0.0
    %4985 = vmatpush.msra.mxu0 0.0
    %4986 = vmatpush.msra.mxu0 0.0
    %4987 = vmatpush.msra.mxu0 0.0
    %4988 = vmatpush.msra.mxu0 0.0
    %4989 = vmatpush.msra.mxu0 %v4644
    %4990 = vmatmul.f32.gmra.mxu0 %v4972
    %v4991 = vpop.f32.mrf.mxu0
    %v4992 = vadd.f32 0.0, %v4991
    %4993 = vdwg.mxu0
    %v4994 = vmul.f32 %v4969, %v112
    %v4995 = vmul.f32 %v4992, %v112
    %v4996 = vadd.f32 %v4880, %v4994
    %v4997 = vadd.f32 %v4881, %v4995
    %v4998 = vmul.f32 %v4608, %v117
    %v4999 = vmul.f32 %v4611, %v117
    %v5001 = vsel %vm123, %v4998, 0
    %5003 = vmatpush.xpose.msra.mxu0 0.0
    %5004 = vmatpush.xpose.msra.mxu0 0.0
    %5005 = vmatpush.xpose.msra.mxu0 0.0
    %5006 = vmatpush.xpose.msra.mxu0 0.0
    %5007 = vmatpush.xpose.msra.mxu0 0.0
    %5008 = vmatpush.xpose.msra.mxu0 0.0
    %5009 = vmatpush.xpose.msra.mxu0 0.0
    %5010 = vmatpush.xpose.msra.mxu0 0.0
    %5011 = vmatpush.xpose.msra.mxu0 0.0
    %5012 = vmatpush.xpose.msra.mxu0 0.0
    %5013 = vmatpush.xpose.msra.mxu0 0.0
    %5014 = vmatpush.xpose.msra.mxu0 0.0
    %5015 = vmatpush.xpose.msra.mxu0 0.0
    %5016 = vmatpush.xpose.msra.mxu0 0.0
    %5017 = vmatpush.xpose.msra.mxu0 0.0
    %5018 = vmatpush.xpose.msra.mxu0 %v5001
    %5019 = vmatmul.f32.gmra.mxu0 %v4649
    %v5020 = vpop.f32.mrf.mxu0
    %v5021 = vadd.f32 0.0, %v5020
    %5022 = vdwg.mxu0
    %v5024 = vsel %vm123, %v4999, 0
    %5026 = vmatpush.xpose.msra.mxu0 0.0
    %5027 = vmatpush.xpose.msra.mxu0 0.0
    %5028 = vmatpush.xpose.msra.mxu0 0.0
    %5029 = vmatpush.xpose.msra.mxu0 0.0
    %5030 = vmatpush.xpose.msra.mxu0 0.0
    %5031 = vmatpush.xpose.msra.mxu0 0.0
    %5032 = vmatpush.xpose.msra.mxu0 0.0
    %5033 = vmatpush.xpose.msra.mxu0 0.0
    %5034 = vmatpush.xpose.msra.mxu0 0.0
    %5035 = vmatpush.xpose.msra.mxu0 0.0
    %5036 = vmatpush.xpose.msra.mxu0 0.0
    %5037 = vmatpush.xpose.msra.mxu0 0.0
    %5038 = vmatpush.xpose.msra.mxu0 0.0
    %5039 = vmatpush.xpose.msra.mxu0 0.0
    %5040 = vmatpush.xpose.msra.mxu0 0.0
    %5041 = vmatpush.xpose.msra.mxu0 %v5024
    %5042 = vmatmul.f32.gmra.mxu0 %v4675
    %v5043 = vpop.f32.mrf.mxu0
    %v5044 = vadd.f32 0.0, %v5043
    %5045 = vdwg.mxu0
    %v5046 = vmul.f32 %v5021, 0.35355338
    %v5047 = vmul.f32 %v5044, 0.35355338
    %v5048 = vadd.f32 %v5046, %v96
    %v5049 = vadd.f32 %v5047, %v97
    %v5050 = vmul.f32 %v5048, 1.442695
    %v5051 = vpow.pop %v5050
    %v5052 = vmul.f32 %v5049, 1.442695
    %v5053 = vpow.pop %v5052
    %v5054 = vsel %vm352, %v5051, 0.0
    %5055 = vadd.xlane.f32.xlu0 %v5054
    %v5056 = vpop.xlane.xlu0 %5055
    %v5057 = vsel %vm352, %v5053, 0.0
    %5058 = vadd.xlane.f32.xlu0 %v5057
    %v5059 = vpop.xlane.xlu0 %5058
    %v5060 = vrcp.pop %v5056
    %v5061 = vrcp.pop %v5059
    %v5062 = vmul.f32 %v5051, %v5060
    %v5063 = vmul.f32 %v5053, %v5061
    %v5065 = vsel %vm352, %v5062, 0
    %5067 = vmatpush.msra.mxu0 0.0
    %5068 = vmatpush.msra.mxu0 0.0
    %5069 = vmatpush.msra.mxu0 0.0
    %5070 = vmatpush.msra.mxu0 0.0
    %5071 = vmatpush.msra.mxu0 0.0
    %5072 = vmatpush.msra.mxu0 0.0
    %5073 = vmatpush.msra.mxu0 0.0
    %5074 = vmatpush.msra.mxu0 0.0
    %5075 = vmatpush.msra.mxu0 0.0
    %5076 = vmatpush.msra.mxu0 0.0
    %5077 = vmatpush.msra.mxu0 0.0
    %5078 = vmatpush.msra.mxu0 0.0
    %5079 = vmatpush.msra.mxu0 0.0
    %5080 = vmatpush.msra.mxu0 0.0
    %5081 = vmatpush.msra.mxu0 0.0
    %5082 = vmatpush.msra.mxu0 %v4641
    %5083 = vmatmul.f32.gmra.mxu0 %v5065
    %v5084 = vpop.f32.mrf.mxu0
    %v5085 = vadd.f32 0.0, %v5084
    %5086 = vdwg.mxu0
    %v5088 = vsel %vm352, %v5063, 0
    %5090 = vmatpush.msra.mxu0 0.0
    %5091 = vmatpush.msra.mxu0 0.0
    %5092 = vmatpush.msra.mxu0 0.0
    %5093 = vmatpush.msra.mxu0 0.0
    %5094 = vmatpush.msra.mxu0 0.0
    %5095 = vmatpush.msra.mxu0 0.0
    %5096 = vmatpush.msra.mxu0 0.0
    %5097 = vmatpush.msra.mxu0 0.0
    %5098 = vmatpush.msra.mxu0 0.0
    %5099 = vmatpush.msra.mxu0 0.0
    %5100 = vmatpush.msra.mxu0 0.0
    %5101 = vmatpush.msra.mxu0 0.0
    %5102 = vmatpush.msra.mxu0 0.0
    %5103 = vmatpush.msra.mxu0 0.0
    %5104 = vmatpush.msra.mxu0 0.0
    %5105 = vmatpush.msra.mxu0 %v4644
    %5106 = vmatmul.f32.gmra.mxu0 %v5088
    %v5107 = vpop.f32.mrf.mxu0
    %v5108 = vadd.f32 0.0, %v5107
    %5109 = vdwg.mxu0
    %v5110 = vmul.f32 %v5085, %v117
    %v5111 = vmul.f32 %v5108, %v117
    %v5112 = vadd.f32 %v4996, %v5110
    %v5113 = vadd.f32 %v4997, %v5111
    %s5114 = scalar_lea.vmem %s11, 160
    %v5115 = vld [vmem:[%s5114] sm:$0xff]
    %v5116 = vld [vmem:[%s5114 + $0x8] sm:$0xff]
    %v5117 = vld [vmem:[%s5114 + $0x10] sm:$0xff]
    %v5118 = vld [vmem:[%s5114 + $0x18] sm:$0xff]
    %s5119 = scalar_lea.vmem %s12, 5
    %v5120 = vld [vmem:[%s5119] sm:$0x1]
    %v5122 = vperm.slane %v5120, 0
    %v5125 = vsel %vm123, %v5112, 0
    %v5128 = vsel %vm123, %v5113, 0
    %5130 = vmatpush.msra.mxu0 0.0
    %5131 = vmatpush.msra.mxu0 0.0
    %5132 = vmatpush.msra.mxu0 0.0
    %5133 = vmatpush.msra.mxu0 0.0
    %5134 = vmatpush.msra.mxu0 0.0
    %5135 = vmatpush.msra.mxu0 0.0
    %5136 = vmatpush.msra.mxu0 0.0
    %5137 = vmatpush.msra.mxu0 0.0
    %5138 = vmatpush.msra.mxu0 0.0
    %5139 = vmatpush.msra.mxu0 0.0
    %5140 = vmatpush.msra.mxu0 0.0
    %5141 = vmatpush.msra.mxu0 0.0
    %5142 = vmatpush.msra.mxu0 %v5118
    %5143 = vmatpush.msra.mxu0 %v5117
    %5144 = vmatpush.msra.mxu0 %v5116
    %5145 = vmatpush.msra.mxu0 %v5115
    %5146 = vmatmul.f32.gmra.mxu0 %v5125
    %v5147 = vpop.f32.mrf.mxu0
    %v5148 = vadd.f32 %v5122, %v5147
    %5149 = vmatmul.f32.gmra.mxu0 %v5128
    %v5150 = vpop.f32.mrf.mxu0
    %v5151 = vadd.f32 %v5122, %v5150
    %5152 = vdwg.mxu0
    %v5153 = vadd.f32 %v5148, %v4506
    %v5154 = vadd.f32 %v5151, %v4507
    %s5155 = scalar_lea.vmem %s13, 5
    %v5156 = vld [vmem:[%s5155] sm:$0x1]
    %s5157 = scalar_lea.vmem %s14, 5
    %v5158 = vld [vmem:[%s5157] sm:$0x1]
    %v5159 = vsel %vm123, %v5153, 0.0
    %5160 = vadd.xlane.f32.xlu0 %v5159
    %v5161 = vpop.xlane.xlu0 %5160
    %v5162 = vsel %vm123, %v5154, 0.0
    %5163 = vadd.xlane.f32.xlu0 %v5162
    %v5164 = vpop.xlane.xlu0 %5163
    %v5165 = vmul.f32 %v5161, %v136
    %v5166 = vmul.f32 %v5164, %v136
    %v5167 = vmul.f32 %v5153, %v5153
    %v5168 = vmul.f32 %v5154, %v5154
    %v5169 = vsel %vm123, %v5167, 0.0
    %5170 = vadd.xlane.f32.xlu0 %v5169
    %v5171 = vpop.xlane.xlu0 %5170
    %v5172 = vsel %vm123, %v5168, 0.0
    %5173 = vadd.xlane.f32.xlu0 %v5172
    %v5174 = vpop.xlane.xlu0 %5173
    %v5175 = vmul.f32 %v5171, %v136
    %v5176 = vmul.f32 %v5174, %v136
    %v5177 = vmul.f32 %v5165, %v5165
    %v5178 = vmul.f32 %v5166, %v5166
    %v5179 = vsub.f32 %v5175, %v5177
    %v5180 = vsub.f32 %v5176, %v5178
    %v5181 = vsub.f32 %v5153, %v5165
    %v5182 = vsub.f32 %v5154, %v5166
    %v5183 = vadd.f32 %v5179, 1e-12
    %v5184 = vadd.f32 %v5180, 1e-12
    %v5185 = vrsqrt.pop %v5183
    %v5186 = vmul.f32 %v5185, %v5183
    %v5187 = vmul.f32 %v5186, %v5185
    %v5188 = vmul.f32 0.5, %v5187
    %v5189 = vsub.f32 1.5, %v5188
    %v5190 = vmul.f32 %v5185, %v5189
    %vm5191 = vweird.f32 %v5183
    %vm5192 = vweird.f32 %v5185
    %vm5193 = vmor %vm5191, %vm5192
    %v5194 = vsel %vm5193, %v5185, %v5190
    %v5195 = vrsqrt.pop %v5184
    %v5196 = vmul.f32 %v5195, %v5184
    %v5197 = vmul.f32 %v5196, %v5195
    %v5198 = vmul.f32 0.5, %v5197
    %v5199 = vsub.f32 1.5, %v5198
    %v5200 = vmul.f32 %v5195, %v5199
    %vm5201 = vweird.f32 %v5184
    %vm5202 = vweird.f32 %v5195
    %vm5203 = vmor %vm5201, %vm5202
    %v5204 = vsel %vm5203, %v5195, %v5200
    %v5205 = vmul.f32 %v5181, %v5194
    %v5206 = vmul.f32 %v5182, %v5204
    %v5208 = vperm.slane %v5156, 0
    %v5210 = vmul.f32 %v5205, %v5208
    %v5211 = vmul.f32 %v5206, %v5208
    %v5213 = vperm.slane %v5158, 0
    %v5215 = vadd.f32 %v5210, %v5213
    %v5216 = vadd.f32 %v5211, %v5213
    %s5217 = scalar_lea.vmem [#allocation2], 160
    %v5218 = vld [vmem:[%s5217] sm:$0xff]
    %v5219 = vld [vmem:[%s5217 + $0x8] sm:$0xff]
    %v5220 = vld [vmem:[%s5217 + $0x10] sm:$0xff]
    %v5221 = vld [vmem:[%s5217 + $0x18] sm:$0xff]
    %s5222 = scalar_lea.vmem %s16, 5
    %v5223 = vld [vmem:[%s5222] sm:$0x1]
    %v5225 = vperm.slane %v5223, 0
    %v5228 = vsel %vm123, %v5215, 0
    %v5231 = vsel %vm123, %v5216, 0
    %5233 = vmatpush.msra.mxu0 0.0
    %5234 = vmatpush.msra.mxu0 0.0
    %5235 = vmatpush.msra.mxu0 0.0
    %5236 = vmatpush.msra.mxu0 0.0
    %5237 = vmatpush.msra.mxu0 0.0
    %5238 = vmatpush.msra.mxu0 0.0
    %5239 = vmatpush.msra.mxu0 0.0
    %5240 = vmatpush.msra.mxu0 0.0
    %5241 = vmatpush.msra.mxu0 0.0
    %5242 = vmatpush.msra.mxu0 0.0
    %5243 = vmatpush.msra.mxu0 0.0
    %5244 = vmatpush.msra.mxu0 0.0
    %5245 = vmatpush.msra.mxu0 %v5221
    %5246 = vmatpush.msra.mxu0 %v5220
    %5247 = vmatpush.msra.mxu0 %v5219
    %5248 = vmatpush.msra.mxu0 %v5218
    %5249 = vmatmul.f32.gmra.mxu0 %v5228
    %v5250 = vpop.f32.mrf.mxu0
    %v5251 = vadd.f32 %v5225, %v5250
    %5252 = vmatmul.f32.gmra.mxu0 %v5231
    %v5253 = vpop.f32.mrf.mxu0
    %v5254 = vadd.f32 %v5225, %v5253
    %5255 = vdwg.mxu0
    %v5256 = vmul.f32 %v5251, %v5251
    %v5257 = vmul.f32 %v5254, %v5254
    %v5258 = vmul.f32 %v5251, %v5256
    %v5259 = vmul.f32 %v5254, %v5257
    %v5260 = vmul.f32 %v5258, 0.044715
    %v5261 = vmul.f32 %v5259, 0.044715
    %v5262 = vadd.f32 %v5251, %v5260
    %v5263 = vadd.f32 %v5254, %v5261
    %v5264 = vmul.f32 %v5262, 0.7978846
    %v5265 = vmul.f32 %v5263, 0.7978846
    %v5266 = vtanh.pop %v5264
    %v5267 = vtanh.pop %v5265
    %v5268 = vadd.f32 %v5266, 1.0
    %v5269 = vadd.f32 %v5267, 1.0
    %v5270 = vmul.f32 %v5268, 0.5
    %v5271 = vmul.f32 %v5269, 0.5
    %v5272 = vmul.f32 %v5251, %v5270
    %v5273 = vmul.f32 %v5254, %v5271
    %s5274 = scalar_lea.vmem %s17, 320
    %v5275 = vld [vmem:[%s5274] sm:$0xff]
    %v5276 = vld [vmem:[%s5274 + $0x8] sm:$0xff]
    %v5277 = vld [vmem:[%s5274 + $0x10] sm:$0xff]
    %v5278 = vld [vmem:[%s5274 + $0x18] sm:$0xff]
    %v5279 = vld [vmem:[%s5274 + $0x20] sm:$0xff]
    %v5280 = vld [vmem:[%s5274 + $0x28] sm:$0xff]
    %v5281 = vld [vmem:[%s5274 + $0x30] sm:$0xff]
    %v5282 = vld [vmem:[%s5274 + $0x38] sm:$0xff]
    %s5283 = scalar_lea.vmem %s18, 5
    %v5284 = vld [vmem:[%s5283] sm:$0x1]
    %v5286 = vperm.slane %v5284, 0
    %v5289 = vsel %vm925, %v5272, 0
    %v5292 = vsel %vm925, %v5273, 0
    %5294 = vmatpush.msra.mxu0 0.0
    %5295 = vmatpush.msra.mxu0 0.0
    %5296 = vmatpush.msra.mxu0 0.0
    %5297 = vmatpush.msra.mxu0 0.0
    %5298 = vmatpush.msra.mxu0 0.0
    %5299 = vmatpush.msra.mxu0 0.0
    %5300 = vmatpush.msra.mxu0 0.0
    %5301 = vmatpush.msra.mxu0 0.0
    %5302 = vmatpush.msra.mxu0 %v5282
    %5303 = vmatpush.msra.mxu0 %v5281
    %5304 = vmatpush.msra.mxu0 %v5280
    %5305 = vmatpush.msra.mxu0 %v5279
    %5306 = vmatpush.msra.mxu0 %v5278
    %5307 = vmatpush.msra.mxu0 %v5277
    %5308 = vmatpush.msra.mxu0 %v5276
    %5309 = vmatpush.msra.mxu0 %v5275
    %5310 = vmatmul.f32.gmra.mxu0 %v5289
    %v5311 = vpop.f32.mrf.mxu0
    %v5312 = vadd.f32 %v5286, %v5311
    %5313 = vmatmul.f32.gmra.mxu0 %v5292
    %v5314 = vpop.f32.mrf.mxu0
    %v5315 = vadd.f32 %v5286, %v5314
    %5316 = vdwg.mxu0
    %v5317 = vadd.f32 %v5312, %v5215
    %v5318 = vadd.f32 %v5315, %v5216
    %s5319 = scalar_lea.vmem %s19, 5
    %v5320 = vld [vmem:[%s5319] sm:$0x1]
    %s5321 = scalar_lea.vmem %s20, 5
    %v5322 = vld [vmem:[%s5321] sm:$0x1]
    %v5323 = vsel %vm123, %v5317, 0.0
    %5324 = vadd.xlane.f32.xlu0 %v5323
    %v5325 = vpop.xlane.xlu0 %5324
    %v5326 = vsel %vm123, %v5318, 0.0
    %5327 = vadd.xlane.f32.xlu0 %v5326
    %v5328 = vpop.xlane.xlu0 %5327
    %v5329 = vmul.f32 %v5325, %v136
    %v5330 = vmul.f32 %v5328, %v136
    %v5331 = vmul.f32 %v5317, %v5317
    %v5332 = vmul.f32 %v5318, %v5318
    %v5333 = vsel %vm123, %v5331, 0.0
    %5334 = vadd.xlane.f32.xlu0 %v5333
    %v5335 = vpop.xlane.xlu0 %5334
    %v5336 = vsel %vm123, %v5332, 0.0
    %5337 = vadd.xlane.f32.xlu0 %v5336
    %v5338 = vpop.xlane.xlu0 %5337
    %v5339 = vmul.f32 %v5335, %v136
    %v5340 = vmul.f32 %v5338, %v136
    %v5341 = vmul.f32 %v5329, %v5329
    %v5342 = vmul.f32 %v5330, %v5330
    %v5343 = vsub.f32 %v5339, %v5341
    %v5344 = vsub.f32 %v5340, %v5342
    %v5345 = vsub.f32 %v5317, %v5329
    %v5346 = vsub.f32 %v5318, %v5330
    %v5347 = vadd.f32 %v5343, 1e-12
    %v5348 = vadd.f32 %v5344, 1e-12
    %v5349 = vrsqrt.pop %v5347
    %v5350 = vmul.f32 %v5349, %v5347
    %v5351 = vmul.f32 %v5350, %v5349
    %v5352 = vmul.f32 0.5, %v5351
    %v5353 = vsub.f32 1.5, %v5352
    %v5354 = vmul.f32 %v5349, %v5353
    %vm5355 = vweird.f32 %v5347
    %vm5356 = vweird.f32 %v5349
    %vm5357 = vmor %vm5355, %vm5356
    %v5358 = vsel %vm5357, %v5349, %v5354
    %v5359 = vrsqrt.pop %v5348
    %v5360 = vmul.f32 %v5359, %v5348
    %v5361 = vmul.f32 %v5360, %v5359
    %v5362 = vmul.f32 0.5, %v5361
    %v5363 = vsub.f32 1.5, %v5362
    %v5364 = vmul.f32 %v5359, %v5363
    %vm5365 = vweird.f32 %v5348
    %vm5366 = vweird.f32 %v5359
    %vm5367 = vmor %vm5365, %vm5366
    %v5368 = vsel %vm5367, %v5359, %v5364
    %v5369 = vmul.f32 %v5345, %v5358
    %v5370 = vmul.f32 %v5346, %v5368
    %v5372 = vperm.slane %v5320, 0
    %v5374 = vmul.f32 %v5369, %v5372
    %v5375 = vmul.f32 %v5370, %v5372
    %v5377 = vperm.slane %v5322, 0
    %v5379 = vadd.f32 %v5374, %v5377
    %v5380 = vadd.f32 %v5375, %v5377
    %s5381 = scalar_lea.vmem %s24, 96
    %5382 = vst.msk [vmem:[%s5381] sm:$0xff] %vm123, %v5379
    %5383 = vst.msk [vmem:[%s5381 + $0x8] sm:$0xff] %vm123, %v5380
    %v5384 = vld [vmem:[%s21] sm:$0xff]
    %v5385 = vld [vmem:[%s21 + $0x8] sm:$0xff]
    %v5386 = vld [vmem:[%s21 + $0x10] sm:$0xff]
    %v5387 = vld [vmem:[%s21 + $0x18] sm:$0xff]
    %v5390 = vrot.slane %v5380, 7
    %v5391 = vsel %vm1876, %v5390, %v5379
    %v5392 = vsel %vm123, %v5391, 0
    %5394 = vmatpush.msra.mxu0 0.0
    %5395 = vmatpush.msra.mxu0 0.0
    %5396 = vmatpush.msra.mxu0 0.0
    %5397 = vmatpush.msra.mxu0 0.0
    %5398 = vmatpush.msra.mxu0 0.0
    %5399 = vmatpush.msra.mxu0 0.0
    %5400 = vmatpush.msra.mxu0 0.0
    %5401 = vmatpush.msra.mxu0 0.0
    %5402 = vmatpush.msra.mxu0 0.0
    %5403 = vmatpush.msra.mxu0 0.0
    %5404 = vmatpush.msra.mxu0 0.0
    %5405 = vmatpush.msra.mxu0 0.0
    %5406 = vmatpush.msra.mxu0 %v5387
    %5407 = vmatpush.msra.mxu0 %v5386
    %5408 = vmatpush.msra.mxu0 %v5385
    %5409 = vmatpush.msra.mxu0 %v5384
    %5410 = vmatmul.f32.gmra.mxu0 %v5392
    %v5411 = vpop.f32.mrf.mxu0
    %v5412 = vadd.f32 0.0, %v5411
    %5413 = vdwg.mxu0
    %v5414 = vadd.f32 %v4542, %v5412
    %v5415 = vld [vmem:[%s22] sm:$0x1]
    %v5417 = vperm.slane %v5415, 0
    %v5419 = vadd.f32 %v5414, %v5417
    %vm5420 = vcmask 123904
    %5421 = vst.msk [vmem:[#allocation5] sm:$0x3] %vm5420, %v5419
    // Predicated region
    $region98: #{clip_text_forward.1} parent=1 // pred_check
      _
    $region99: #{clip_text_forward.1} parent=1 // pred_check_branch
      %5423 = sbr.rel (0) target = $region101
    $region100: #{clip_text_forward.1} parent=1 // pred_region
      %5425 = vsyncadd [#allocation4], 0
      %s5427 = sshll.u32 [#allocation5], 4
      %s5428 = int_to_ptr.vmem [resolvable:$true] %s5427
      %s5429 = sshll.u32 %s23, 4
      %s5430 = int_to_ptr.hbm [resolvable:$true] %s5429
      %5432 = dma.vmem_to_hbm [thread:$0]  %s5428, 32, %s5430, [#allocation4]
    $region101: #{clip_text_forward.1} parent=1 // pred_fallthru
      _
    // Predicated region
    $region102: #{clip_text_forward.1} parent=1 // pred_check
      _
    $region103: #{clip_text_forward.1} parent=1 // pred_check_branch
      %5434 = sbr.rel (0) target = $region105
    $region104: #{clip_text_forward.1} parent=1 // pred_region
      _
    $region105: #{clip_text_forward.1} parent=1 // pred_fallthru
      _
    // Predicated region
    $region106: #{clip_text_forward.1} parent=1 // pred_check
      _
    $region107: #{clip_text_forward.1} parent=1 // pred_check_branch
      %5436 = sbr.rel (0) target = $region109
    $region108: #{clip_text_forward.1} parent=1 // pred_region
      %5438 = dma.done [#allocation4], 32
    $region109: #{clip_text_forward.1} parent=1 // pred_fallthru
      _
    // Predicated region
    $region110: #{clip_text_forward.1} parent=1 // pred_check
      _
    $region111: #{clip_text_forward.1} parent=1 // pred_check_branch
      %5440 = sbr.rel (0) target = $region113
    $region112: #{clip_text_forward.1} parent=1 // pred_region
      _
    $region113: #{clip_text_forward.1} parent=1 // pred_fallthru
      _
    %5441 = vsyncpa [#allocation3], 1
    %5442 = vsyncpa [#allocation4], 1

</llo_original>
